<compile_context>
chip_gen: v7x
topology: tpu7x:2x2x1
jax: 0.10.0
libtpu: 0.0.40
codegen_flags: <defaults>
</compile_context>

<pallas_src>
import numpy as np

import jax
import jax.numpy as jnp
from jax.experimental import pallas as pl
from jax.experimental.pallas import tpu as pltpu


# ---------------------------------------------------------------------------
# Small helpers
# ---------------------------------------------------------------------------
def _dot(a, b):
    return jnp.dot(a, b, preferred_element_type=jnp.float32)


def _resident(a):
    """Whole-array VMEM block, constant across the batch grid (stays resident)."""
    n = a.ndim
    return pl.BlockSpec(a.shape, lambda b, _n=n: (0,) * _n)


# ---------------------------------------------------------------------------
# The fused LeNet kernel (one grid step == one image)
# ---------------------------------------------------------------------------
def _lenet_kernel(x_ref, pad_ref, m1_ref, b1_ref, r1_ref, c1_ref,
                  m2_ref, b2_ref, r2_ref, c2_ref,
                  fw1_ref, fb1_ref, fw2_ref, fb2_ref, fw3_ref, fb3_ref,
                  out_ref):
    def conv5x5(x2d, m_ref, bias_row, h_out):
        # x2d:   (H_in, W_in*Cin)        layout [h, w*Cin + ci]
        # m_ref: (25, W_in*Cin, W_out*Cout) tap matrices (column shift + channel
        #        mixing folded in); row shift handled by static slices.
        acc = None
        for ki in range(5):
            s = x2d[ki:ki + h_out, :]
            for kj in range(5):
                y = _dot(s, m_ref[ki * 5 + kj])
                acc = y if acc is None else acc + y
        return acc + bias_row                       # (H_out, W_out*Cout)

    def maxpool2x2(y, r_ref, c_ref):
        # y: (H, W*C) [h, w*C + c] -> (H//2, (W//2)*C), exact 2x2 max pool.
        rm = jnp.maximum(_dot(r_ref[0], y), _dot(r_ref[1], y))      # even/odd rows
        return jnp.maximum(_dot(rm, c_ref[0]), _dot(rm, c_ref[1]))  # even/odd cols

    # conv1 (1->6, k=5, pad=2) + relu + pool --------------------------------
    x2d = x_ref[0, 0, :, :]                         # (28, 28)
    xp = _dot(pad_ref[...], x2d)                    # (32, 28) rows zero-padded by 2
    y1 = conv5x5(xp, m1_ref, b1_ref[...], 28)       # (28, 168) [oh, ow*6 + co]
    y1 = jnp.maximum(y1, 0.0)
    p1 = maxpool2x2(y1, r1_ref, c1_ref)             # (14, 84)  [h, w*6 + c]

    # conv2 (6->16, k=5, valid) + relu + pool -------------------------------
    y2 = conv5x5(p1, m2_ref, b2_ref[...], 10)       # (10, 160) [oh, ow*16 + co]
    y2 = jnp.maximum(y2, 0.0)
    p2 = maxpool2x2(y2, r2_ref, c2_ref)             # (5, 80)   [ph, pw*16 + co]

    # flatten (order handled by the pre-permuted fc1 weight) + fc stack -----
    flat = jnp.concatenate([p2[i:i + 1, :] for i in range(5)], axis=1)  # (1, 400)
    h = jnp.maximum(_dot(flat, fw1_ref[...]) + fb1_ref[...], 0.0)       # (1, 120)
    h = jnp.maximum(_dot(h, fw2_ref[...]) + fb2_ref[...], 0.0)          # (1, 84)
    out_ref[0, :, :] = _dot(h, fw3_ref[...]) + fb3_ref[...]             # (1, 10)


def lenet_forward(x, kparams):
    """x: (B, 1, 28, 28) float32 NCHW -> (B, 10) logits."""
    B = x.shape[0]
    out = pl.pallas_call(
        _lenet_kernel,
        out_shape=jax.ShapeDtypeStruct((B, 1, 10), jnp.float32),
        grid=(B,),
        in_specs=[pl.BlockSpec((1, 1, 28, 28), lambda b: (b, 0, 0, 0))]
                 + [_resident(a) for a in kparams],
        out_specs=pl.BlockSpec((1, 1, 10), lambda b: (b, 0, 0)),
        compiler_params=pltpu.CompilerParams(
            dimension_semantics=("parallel",)),      # one image per core on v7x
    )(x, *kparams)
    return out.reshape(B, 10)


# ---------------------------------------------------------------------------
# One-time (init) conversion of PyTorch-layout params into GEMM-ready form
# ---------------------------------------------------------------------------
def _conv_tap_mats(w, w_in, pad):
    """Tap matrices so conv = sum over 25 (row-sliced input) @ M[tap] matmuls.

    Input  layout: X (H_in, w_in*Cin)   [h,  w*Cin  + ci]   (w = unpadded column)
    Output layout: Y (H_out, W_out*Cout) [oh, ow*Cout + co]
    M[ki*5+kj][w*Cin+ci, ow*Cout+co] = w[co, ci, ki, kj] iff ow == w + pad - kj,
    so column padding and the (ci -> co) mixing are folded into M.
    """
    w = np.asarray(w, np.float32)
    cout, cin, k, _ = w.shape
    w_out = w_in + 2 * pad - k + 1
    m = np.zeros((k * k, w_in * cin, w_out * cout), np.float32)
    for ki in range(k):
        for kj in range(k):
            tap = w[:, :, ki, kj].T                  # (Cin, Cout)
            for wc in range(w_in):
                ow = wc + pad - kj
                if 0 <= ow < w_out:
                    m[ki * k + kj,
                      wc * cin:(wc + 1) * cin,
                      ow * cout:(ow + 1) * cout] = tap
    return m


def _pool_mats(h, w, c):
    """Even/odd row- and column-selection matrices for an exact 2x2 max pool
    on a (h, w*c) [row, w*c + ch] activation."""
    hp, wp = h // 2, w // 2
    r = np.zeros((2, hp, h), np.float32)
    r[0, np.arange(hp), 2 * np.arange(hp)] = 1.0
    r[1, np.arange(hp), 2 * np.arange(hp) + 1] = 1.0
    cm = np.zeros((2, w * c, wp * c), np.float32)
    eye = np.eye(c, dtype=np.float32)
    for pw in range(wp):
        cm[0, (2 * pw) * c:(2 * pw + 1) * c, pw * c:(pw + 1) * c] = eye
        cm[1, (2 * pw + 1) * c:(2 * pw + 2) * c, pw * c:(pw + 1) * c] = eye
    return r, cm


def prepare_params(params):
    """Runs once, outside the jitted hot path."""
    (w1, b1, w2, b2, fw1, fb1, fw2, fb2, fw3, fb3) = [
        np.asarray(p, np.float32) for p in params]

    padrow = np.zeros((32, 28), np.float32)          # zero-pads conv1 rows by 2
    padrow[2:30, :] = np.eye(28, dtype=np.float32)

    m1 = _conv_tap_mats(w1, w_in=28, pad=2)          # (25, 28, 168)
    b1row = np.tile(b1, 28)[None, :]                 # (1, 168)  [ow*6 + co]
    r1, c1 = _pool_mats(28, 28, 6)                   # (2,14,28), (2,168,84)

    m2 = _conv_tap_mats(w2, w_in=14, pad=0)          # (25, 84, 160)
    b2row = np.tile(b2, 10)[None, :]                 # (1, 160)  [ow*16 + co]
    r2, c2 = _pool_mats(10, 10, 16)                  # (2,5,10), (2,160,80)

    # fc1 columns permuted from torch's (co, ph, pw) flatten order to the
    # kernel's (ph, pw, co) order; fc2/fc3 just pre-transposed.
    fw1g = fw1.reshape(120, 16, 5, 5).transpose(2, 3, 1, 0).reshape(400, 120)
    fw2g = fw2.T
    fw3g = fw3.T

    raw = (padrow, m1, b1row, r1, c1, m2, b2row, r2, c2,
           fw1g, fb1[None, :], fw2g, fb2[None, :], fw3g, fb3[None, :])
    return tuple(jnp.asarray(a) for a in raw)


# ---------------------------------------------------------------------------
# Deterministic parameter init (PyTorch-style U(-1/sqrt(fan_in), 1/sqrt(fan_in)))
# ---------------------------------------------------------------------------
def init_params(key):
    def uni(k, shape, fan_in):
        bound = 1.0 / (fan_in ** 0.5)
        return jax.random.uniform(k, shape, jnp.float32, -bound, bound)

    ks = jax.random.split(key, 10)
    w1 = uni(ks[0], (6, 1, 5, 5), 25)
    b1 = uni(ks[1], (6,), 25)
    w2 = uni(ks[2], (16, 6, 5, 5), 150)
    b2 = uni(ks[3], (16,), 150)
    fw1 = uni(ks[4], (120, 400), 400)
    fb1 = uni(ks[5], (120,), 400)
    fw2 = uni(ks[6], (84, 120), 120)
    fb2 = uni(ks[7], (84,), 120)
    fw3 = uni(ks[8], (10, 84), 84)
    fb3 = uni(ks[9], (10,), 84)
    return (w1, b1, w2, b2, fw1, fb1, fw2, fb2, fw3, fb3)


if __name__ == "__main__":
    root = jax.random.PRNGKey(0)
    k_param, k_x = jax.random.split(root)
    params = init_params(k_param)
    kparams = prepare_params(params)      # GEMM-ready weights, built once

    # LeNet's fc1 (400 = 16*5*5) fixes the input to 1 channel, 28x28.
    x = jax.random.normal(k_x, (2, 1, 28, 28), dtype=jnp.float32)

    out = jax.jit(lenet_forward)(x, kparams)
    out = jax.block_until_ready(out)
    assert out.shape == (2, 10) and out.dtype == jnp.float32
    print("KERNEL_OK")
</pallas_src>

<mosaic_0001>
module attributes {stable_mosaic.version = 11 : i64} {
  func.func @_lenet_kernel(%arg0: i32, %arg1: memref<1x1x28x28xf32, #tpu.memory_space<vmem>>, %arg2: memref<32x28xf32, #tpu.memory_space<vmem>>, %arg3: memref<25x28x168xf32, #tpu.memory_space<vmem>>, %arg4: memref<1x168xf32, #tpu.memory_space<vmem>>, %arg5: memref<2x14x28xf32, #tpu.memory_space<vmem>>, %arg6: memref<2x168x84xf32, #tpu.memory_space<vmem>>, %arg7: memref<25x84x160xf32, #tpu.memory_space<vmem>>, %arg8: memref<1x160xf32, #tpu.memory_space<vmem>>, %arg9: memref<2x5x10xf32, #tpu.memory_space<vmem>>, %arg10: memref<2x160x80xf32, #tpu.memory_space<vmem>>, %arg11: memref<400x120xf32, #tpu.memory_space<vmem>>, %arg12: memref<1x120xf32, #tpu.memory_space<vmem>>, %arg13: memref<120x84xf32, #tpu.memory_space<vmem>>, %arg14: memref<1x84xf32, #tpu.memory_space<vmem>>, %arg15: memref<84x10xf32, #tpu.memory_space<vmem>>, %arg16: memref<1x10xf32, #tpu.memory_space<vmem>>, %arg17: memref<1x1x10xf32, #tpu.memory_space<vmem>>) attributes {dimension_semantics = [#tpu.dimension_semantics<parallel>], iteration_bounds = array<i64: 2>, scalar_prefetch = 0 : i64, scratch_operands = 0 : i64, tpu.core_type = #tpu.core_type<tc>, window_params = [{transform_indices = @transform_0, window_bounds = array<i64: 1, 1, 28, 28>}, {pipeline_mode = #tpu.pipeline_mode<synchronous>, transform_indices = @transform_1, window_bounds = array<i64: 32, 28>}, {pipeline_mode = #tpu.pipeline_mode<synchronous>, transform_indices = @transform_2, window_bounds = array<i64: 25, 28, 168>}, {pipeline_mode = #tpu.pipeline_mode<synchronous>, transform_indices = @transform_3, window_bounds = array<i64: 1, 168>}, {pipeline_mode = #tpu.pipeline_mode<synchronous>, transform_indices = @transform_4, window_bounds = array<i64: 2, 14, 28>}, {pipeline_mode = #tpu.pipeline_mode<synchronous>, transform_indices = @transform_5, window_bounds = array<i64: 2, 168, 84>}, {pipeline_mode = #tpu.pipeline_mode<synchronous>, transform_indices = @transform_6, window_bounds = array<i64: 25, 84, 160>}, {pipeline_mode = #tpu.pipeline_mode<synchronous>, transform_indices = @transform_7, window_bounds = array<i64: 1, 160>}, {pipeline_mode = #tpu.pipeline_mode<synchronous>, transform_indices = @transform_8, window_bounds = array<i64: 2, 5, 10>}, {pipeline_mode = #tpu.pipeline_mode<synchronous>, transform_indices = @transform_9, window_bounds = array<i64: 2, 160, 80>}, {pipeline_mode = #tpu.pipeline_mode<synchronous>, transform_indices = @transform_10, window_bounds = array<i64: 400, 120>}, {pipeline_mode = #tpu.pipeline_mode<synchronous>, transform_indices = @transform_11, window_bounds = array<i64: 1, 120>}, {pipeline_mode = #tpu.pipeline_mode<synchronous>, transform_indices = @transform_12, window_bounds = array<i64: 120, 84>}, {pipeline_mode = #tpu.pipeline_mode<synchronous>, transform_indices = @transform_13, window_bounds = array<i64: 1, 84>}, {pipeline_mode = #tpu.pipeline_mode<synchronous>, transform_indices = @transform_14, window_bounds = array<i64: 84, 10>}, {pipeline_mode = #tpu.pipeline_mode<synchronous>, transform_indices = @transform_15, window_bounds = array<i64: 1, 10>}, {transform_indices = @transform_16, window_bounds = array<i64: 1, 1, 10>}]} {
    %c0 = arith.constant 0 : index
    %c0_0 = arith.constant 0 : index
    %c0_1 = arith.constant 0 : index
    %c0_2 = arith.constant 0 : index
    %0 = vector.load %arg1[%c0, %c0_0, %c0_1, %c0_2] : memref<1x1x28x28xf32, #tpu.memory_space<vmem>>, vector<1x1x28x28xf32>
    %1 = vector.shape_cast %0 : vector<1x1x28x28xf32> to vector<28x28xf32>
    %c0_3 = arith.constant 0 : index
    %c0_4 = arith.constant 0 : index
    %2 = vector.load %arg2[%c0_3, %c0_4] : memref<32x28xf32, #tpu.memory_space<vmem>>, vector<32x28xf32>
    %cst = arith.constant dense<0.000000e+00> : vector<32x28xf32>
    %3 = tpu.matmul %2, %1, %cst {dimension_numbers = #tpu.dot_dimension_numbers<[1], [0], [0], [1], [0, 0, 1, 1], [], []>} : vector<32x28xf32>, vector<28x28xf32>, vector<32x28xf32> -> vector<32x28xf32>
    %c0_5 = arith.constant 0 : index
    %c0_6 = arith.constant 0 : index
    %4 = vector.load %arg4[%c0_5, %c0_6] : memref<1x168xf32, #tpu.memory_space<vmem>>, vector<1x168xf32>
    %5 = vector.extract_strided_slice %3 {offsets = [0, 0], sizes = [28, 28], strides = [1, 1]} : vector<32x28xf32> to vector<28x28xf32>
    %c0_7 = arith.constant 0 : index
    %c0_8 = arith.constant 0 : index
    %c0_9 = arith.constant 0 : index
    %6 = vector.load %arg3[%c0_7, %c0_8, %c0_9] : memref<25x28x168xf32, #tpu.memory_space<vmem>>, vector<1x28x168xf32>
    %7 = vector.shape_cast %6 : vector<1x28x168xf32> to vector<28x168xf32>
    %cst_10 = arith.constant dense<0.000000e+00> : vector<28x168xf32>
    %8 = tpu.matmul %5, %7, %cst_10 {dimension_numbers = #tpu.dot_dimension_numbers<[1], [0], [0], [1], [0, 0, 1, 1], [], []>} : vector<28x28xf32>, vector<28x168xf32>, vector<28x168xf32> -> vector<28x168xf32>
    %c1 = arith.constant 1 : index
    %c0_11 = arith.constant 0 : index
    %c0_12 = arith.constant 0 : index
    %9 = vector.load %arg3[%c1, %c0_11, %c0_12] : memref<25x28x168xf32, #tpu.memory_space<vmem>>, vector<1x28x168xf32>
    %10 = vector.shape_cast %9 : vector<1x28x168xf32> to vector<28x168xf32>
    %cst_13 = arith.constant dense<0.000000e+00> : vector<28x168xf32>
    %11 = tpu.matmul %5, %10, %cst_13 {dimension_numbers = #tpu.dot_dimension_numbers<[1], [0], [0], [1], [0, 0, 1, 1], [], []>} : vector<28x28xf32>, vector<28x168xf32>, vector<28x168xf32> -> vector<28x168xf32>
    %12 = arith.addf %8, %11 : vector<28x168xf32>
    %c2 = arith.constant 2 : index
    %c0_14 = arith.constant 0 : index
    %c0_15 = arith.constant 0 : index
    %13 = vector.load %arg3[%c2, %c0_14, %c0_15] : memref<25x28x168xf32, #tpu.memory_space<vmem>>, vector<1x28x168xf32>
    %14 = vector.shape_cast %13 : vector<1x28x168xf32> to vector<28x168xf32>
    %cst_16 = arith.constant dense<0.000000e+00> : vector<28x168xf32>
    %15 = tpu.matmul %5, %14, %cst_16 {dimension_numbers = #tpu.dot_dimension_numbers<[1], [0], [0], [1], [0, 0, 1, 1], [], []>} : vector<28x28xf32>, vector<28x168xf32>, vector<28x168xf32> -> vector<28x168xf32>
    %16 = arith.addf %12, %15 : vector<28x168xf32>
    %c3 = arith.constant 3 : index
    %c0_17 = arith.constant 0 : index
    %c0_18 = arith.constant 0 : index
    %17 = vector.load %arg3[%c3, %c0_17, %c0_18] : memref<25x28x168xf32, #tpu.memory_space<vmem>>, vector<1x28x168xf32>
    %18 = vector.shape_cast %17 : vector<1x28x168xf32> to vector<28x168xf32>
    %cst_19 = arith.constant dense<0.000000e+00> : vector<28x168xf32>
    %19 = tpu.matmul %5, %18, %cst_19 {dimension_numbers = #tpu.dot_dimension_numbers<[1], [0], [0], [1], [0, 0, 1, 1], [], []>} : vector<28x28xf32>, vector<28x168xf32>, vector<28x168xf32> -> vector<28x168xf32>
    %20 = arith.addf %16, %19 : vector<28x168xf32>
    %c4 = arith.constant 4 : index
    %c0_20 = arith.constant 0 : index
    %c0_21 = arith.constant 0 : index
    %21 = vector.load %arg3[%c4, %c0_20, %c0_21] : memref<25x28x168xf32, #tpu.memory_space<vmem>>, vector<1x28x168xf32>
    %22 = vector.shape_cast %21 : vector<1x28x168xf32> to vector<28x168xf32>
    %cst_22 = arith.constant dense<0.000000e+00> : vector<28x168xf32>
    %23 = tpu.matmul %5, %22, %cst_22 {dimension_numbers = #tpu.dot_dimension_numbers<[1], [0], [0], [1], [0, 0, 1, 1], [], []>} : vector<28x28xf32>, vector<28x168xf32>, vector<28x168xf32> -> vector<28x168xf32>
    %24 = arith.addf %20, %23 : vector<28x168xf32>
    %25 = vector.extract_strided_slice %3 {offsets = [1, 0], sizes = [28, 28], strides = [1, 1]} : vector<32x28xf32> to vector<28x28xf32>
    %c5 = arith.constant 5 : index
    %c0_23 = arith.constant 0 : index
    %c0_24 = arith.constant 0 : index
    %26 = vector.load %arg3[%c5, %c0_23, %c0_24] : memref<25x28x168xf32, #tpu.memory_space<vmem>>, vector<1x28x168xf32>
    %27 = vector.shape_cast %26 : vector<1x28x168xf32> to vector<28x168xf32>
    %cst_25 = arith.constant dense<0.000000e+00> : vector<28x168xf32>
    %28 = tpu.matmul %25, %27, %cst_25 {dimension_numbers = #tpu.dot_dimension_numbers<[1], [0], [0], [1], [0, 0, 1, 1], [], []>} : vector<28x28xf32>, vector<28x168xf32>, vector<28x168xf32> -> vector<28x168xf32>
    %29 = arith.addf %24, %28 : vector<28x168xf32>
    %c6 = arith.constant 6 : index
    %c0_26 = arith.constant 0 : index
    %c0_27 = arith.constant 0 : index
    %30 = vector.load %arg3[%c6, %c0_26, %c0_27] : memref<25x28x168xf32, #tpu.memory_space<vmem>>, vector<1x28x168xf32>
    %31 = vector.shape_cast %30 : vector<1x28x168xf32> to vector<28x168xf32>
    %cst_28 = arith.constant dense<0.000000e+00> : vector<28x168xf32>
    %32 = tpu.matmul %25, %31, %cst_28 {dimension_numbers = #tpu.dot_dimension_numbers<[1], [0], [0], [1], [0, 0, 1, 1], [], []>} : vector<28x28xf32>, vector<28x168xf32>, vector<28x168xf32> -> vector<28x168xf32>
    %33 = arith.addf %29, %32 : vector<28x168xf32>
    %c7 = arith.constant 7 : index
    %c0_29 = arith.constant 0 : index
    %c0_30 = arith.constant 0 : index
    %34 = vector.load %arg3[%c7, %c0_29, %c0_30] : memref<25x28x168xf32, #tpu.memory_space<vmem>>, vector<1x28x168xf32>
    %35 = vector.shape_cast %34 : vector<1x28x168xf32> to vector<28x168xf32>
    %cst_31 = arith.constant dense<0.000000e+00> : vector<28x168xf32>
    %36 = tpu.matmul %25, %35, %cst_31 {dimension_numbers = #tpu.dot_dimension_numbers<[1], [0], [0], [1], [0, 0, 1, 1], [], []>} : vector<28x28xf32>, vector<28x168xf32>, vector<28x168xf32> -> vector<28x168xf32>
    %37 = arith.addf %33, %36 : vector<28x168xf32>
    %c8 = arith.constant 8 : index
    %c0_32 = arith.constant 0 : index
    %c0_33 = arith.constant 0 : index
    %38 = vector.load %arg3[%c8, %c0_32, %c0_33] : memref<25x28x168xf32, #tpu.memory_space<vmem>>, vector<1x28x168xf32>
    %39 = vector.shape_cast %38 : vector<1x28x168xf32> to vector<28x168xf32>
    %cst_34 = arith.constant dense<0.000000e+00> : vector<28x168xf32>
    %40 = tpu.matmul %25, %39, %cst_34 {dimension_numbers = #tpu.dot_dimension_numbers<[1], [0], [0], [1], [0, 0, 1, 1], [], []>} : vector<28x28xf32>, vector<28x168xf32>, vector<28x168xf32> -> vector<28x168xf32>
    %41 = arith.addf %37, %40 : vector<28x168xf32>
    %c9 = arith.constant 9 : index
    %c0_35 = arith.constant 0 : index
    %c0_36 = arith.constant 0 : index
    %42 = vector.load %arg3[%c9, %c0_35, %c0_36] : memref<25x28x168xf32, #tpu.memory_space<vmem>>, vector<1x28x168xf32>
    %43 = vector.shape_cast %42 : vector<1x28x168xf32> to vector<28x168xf32>
    %cst_37 = arith.constant dense<0.000000e+00> : vector<28x168xf32>
    %44 = tpu.matmul %25, %43, %cst_37 {dimension_numbers = #tpu.dot_dimension_numbers<[1], [0], [0], [1], [0, 0, 1, 1], [], []>} : vector<28x28xf32>, vector<28x168xf32>, vector<28x168xf32> -> vector<28x168xf32>
    %45 = arith.addf %41, %44 : vector<28x168xf32>
    %46 = vector.extract_strided_slice %3 {offsets = [2, 0], sizes = [28, 28], strides = [1, 1]} : vector<32x28xf32> to vector<28x28xf32>
    %c10 = arith.constant 10 : index
    %c0_38 = arith.constant 0 : index
    %c0_39 = arith.constant 0 : index
    %47 = vector.load %arg3[%c10, %c0_38, %c0_39] : memref<25x28x168xf32, #tpu.memory_space<vmem>>, vector<1x28x168xf32>
    %48 = vector.shape_cast %47 : vector<1x28x168xf32> to vector<28x168xf32>
    %cst_40 = arith.constant dense<0.000000e+00> : vector<28x168xf32>
    %49 = tpu.matmul %46, %48, %cst_40 {dimension_numbers = #tpu.dot_dimension_numbers<[1], [0], [0], [1], [0, 0, 1, 1], [], []>} : vector<28x28xf32>, vector<28x168xf32>, vector<28x168xf32> -> vector<28x168xf32>
    %50 = arith.addf %45, %49 : vector<28x168xf32>
    %c11 = arith.constant 11 : index
    %c0_41 = arith.constant 0 : index
    %c0_42 = arith.constant 0 : index
    %51 = vector.load %arg3[%c11, %c0_41, %c0_42] : memref<25x28x168xf32, #tpu.memory_space<vmem>>, vector<1x28x168xf32>
    %52 = vector.shape_cast %51 : vector<1x28x168xf32> to vector<28x168xf32>
    %cst_43 = arith.constant dense<0.000000e+00> : vector<28x168xf32>
    %53 = tpu.matmul %46, %52, %cst_43 {dimension_numbers = #tpu.dot_dimension_numbers<[1], [0], [0], [1], [0, 0, 1, 1], [], []>} : vector<28x28xf32>, vector<28x168xf32>, vector<28x168xf32> -> vector<28x168xf32>
    %54 = arith.addf %50, %53 : vector<28x168xf32>
    %c12 = arith.constant 12 : index
    %c0_44 = arith.constant 0 : index
    %c0_45 = arith.constant 0 : index
    %55 = vector.load %arg3[%c12, %c0_44, %c0_45] : memref<25x28x168xf32, #tpu.memory_space<vmem>>, vector<1x28x168xf32>
    %56 = vector.shape_cast %55 : vector<1x28x168xf32> to vector<28x168xf32>
    %cst_46 = arith.constant dense<0.000000e+00> : vector<28x168xf32>
    %57 = tpu.matmul %46, %56, %cst_46 {dimension_numbers = #tpu.dot_dimension_numbers<[1], [0], [0], [1], [0, 0, 1, 1], [], []>} : vector<28x28xf32>, vector<28x168xf32>, vector<28x168xf32> -> vector<28x168xf32>
    %58 = arith.addf %54, %57 : vector<28x168xf32>
    %c13 = arith.constant 13 : index
    %c0_47 = arith.constant 0 : index
    %c0_48 = arith.constant 0 : index
    %59 = vector.load %arg3[%c13, %c0_47, %c0_48] : memref<25x28x168xf32, #tpu.memory_space<vmem>>, vector<1x28x168xf32>
    %60 = vector.shape_cast %59 : vector<1x28x168xf32> to vector<28x168xf32>
    %cst_49 = arith.constant dense<0.000000e+00> : vector<28x168xf32>
    %61 = tpu.matmul %46, %60, %cst_49 {dimension_numbers = #tpu.dot_dimension_numbers<[1], [0], [0], [1], [0, 0, 1, 1], [], []>} : vector<28x28xf32>, vector<28x168xf32>, vector<28x168xf32> -> vector<28x168xf32>
    %62 = arith.addf %58, %61 : vector<28x168xf32>
    %c14 = arith.constant 14 : index
    %c0_50 = arith.constant 0 : index
    %c0_51 = arith.constant 0 : index
    %63 = vector.load %arg3[%c14, %c0_50, %c0_51] : memref<25x28x168xf32, #tpu.memory_space<vmem>>, vector<1x28x168xf32>
    %64 = vector.shape_cast %63 : vector<1x28x168xf32> to vector<28x168xf32>
    %cst_52 = arith.constant dense<0.000000e+00> : vector<28x168xf32>
    %65 = tpu.matmul %46, %64, %cst_52 {dimension_numbers = #tpu.dot_dimension_numbers<[1], [0], [0], [1], [0, 0, 1, 1], [], []>} : vector<28x28xf32>, vector<28x168xf32>, vector<28x168xf32> -> vector<28x168xf32>
    %66 = arith.addf %62, %65 : vector<28x168xf32>
    %67 = vector.extract_strided_slice %3 {offsets = [3, 0], sizes = [28, 28], strides = [1, 1]} : vector<32x28xf32> to vector<28x28xf32>
    %c15 = arith.constant 15 : index
    %c0_53 = arith.constant 0 : index
    %c0_54 = arith.constant 0 : index
    %68 = vector.load %arg3[%c15, %c0_53, %c0_54] : memref<25x28x168xf32, #tpu.memory_space<vmem>>, vector<1x28x168xf32>
    %69 = vector.shape_cast %68 : vector<1x28x168xf32> to vector<28x168xf32>
    %cst_55 = arith.constant dense<0.000000e+00> : vector<28x168xf32>
    %70 = tpu.matmul %67, %69, %cst_55 {dimension_numbers = #tpu.dot_dimension_numbers<[1], [0], [0], [1], [0, 0, 1, 1], [], []>} : vector<28x28xf32>, vector<28x168xf32>, vector<28x168xf32> -> vector<28x168xf32>
    %71 = arith.addf %66, %70 : vector<28x168xf32>
    %c16 = arith.constant 16 : index
    %c0_56 = arith.constant 0 : index
    %c0_57 = arith.constant 0 : index
    %72 = vector.load %arg3[%c16, %c0_56, %c0_57] : memref<25x28x168xf32, #tpu.memory_space<vmem>>, vector<1x28x168xf32>
    %73 = vector.shape_cast %72 : vector<1x28x168xf32> to vector<28x168xf32>
    %cst_58 = arith.constant dense<0.000000e+00> : vector<28x168xf32>
    %74 = tpu.matmul %67, %73, %cst_58 {dimension_numbers = #tpu.dot_dimension_numbers<[1], [0], [0], [1], [0, 0, 1, 1], [], []>} : vector<28x28xf32>, vector<28x168xf32>, vector<28x168xf32> -> vector<28x168xf32>
    %75 = arith.addf %71, %74 : vector<28x168xf32>
    %c17 = arith.constant 17 : index
    %c0_59 = arith.constant 0 : index
    %c0_60 = arith.constant 0 : index
    %76 = vector.load %arg3[%c17, %c0_59, %c0_60] : memref<25x28x168xf32, #tpu.memory_space<vmem>>, vector<1x28x168xf32>
    %77 = vector.shape_cast %76 : vector<1x28x168xf32> to vector<28x168xf32>
    %cst_61 = arith.constant dense<0.000000e+00> : vector<28x168xf32>
    %78 = tpu.matmul %67, %77, %cst_61 {dimension_numbers = #tpu.dot_dimension_numbers<[1], [0], [0], [1], [0, 0, 1, 1], [], []>} : vector<28x28xf32>, vector<28x168xf32>, vector<28x168xf32> -> vector<28x168xf32>
    %79 = arith.addf %75, %78 : vector<28x168xf32>
    %c18 = arith.constant 18 : index
    %c0_62 = arith.constant 0 : index
    %c0_63 = arith.constant 0 : index
    %80 = vector.load %arg3[%c18, %c0_62, %c0_63] : memref<25x28x168xf32, #tpu.memory_space<vmem>>, vector<1x28x168xf32>
    %81 = vector.shape_cast %80 : vector<1x28x168xf32> to vector<28x168xf32>
    %cst_64 = arith.constant dense<0.000000e+00> : vector<28x168xf32>
    %82 = tpu.matmul %67, %81, %cst_64 {dimension_numbers = #tpu.dot_dimension_numbers<[1], [0], [0], [1], [0, 0, 1, 1], [], []>} : vector<28x28xf32>, vector<28x168xf32>, vector<28x168xf32> -> vector<28x168xf32>
    %83 = arith.addf %79, %82 : vector<28x168xf32>
    %c19 = arith.constant 19 : index
    %c0_65 = arith.constant 0 : index
    %c0_66 = arith.constant 0 : index
    %84 = vector.load %arg3[%c19, %c0_65, %c0_66] : memref<25x28x168xf32, #tpu.memory_space<vmem>>, vector<1x28x168xf32>
    %85 = vector.shape_cast %84 : vector<1x28x168xf32> to vector<28x168xf32>
    %cst_67 = arith.constant dense<0.000000e+00> : vector<28x168xf32>
    %86 = tpu.matmul %67, %85, %cst_67 {dimension_numbers = #tpu.dot_dimension_numbers<[1], [0], [0], [1], [0, 0, 1, 1], [], []>} : vector<28x28xf32>, vector<28x168xf32>, vector<28x168xf32> -> vector<28x168xf32>
    %87 = arith.addf %83, %86 : vector<28x168xf32>
    %88 = vector.extract_strided_slice %3 {offsets = [4, 0], sizes = [28, 28], strides = [1, 1]} : vector<32x28xf32> to vector<28x28xf32>
    %c20 = arith.constant 20 : index
    %c0_68 = arith.constant 0 : index
    %c0_69 = arith.constant 0 : index
    %89 = vector.load %arg3[%c20, %c0_68, %c0_69] : memref<25x28x168xf32, #tpu.memory_space<vmem>>, vector<1x28x168xf32>
    %90 = vector.shape_cast %89 : vector<1x28x168xf32> to vector<28x168xf32>
    %cst_70 = arith.constant dense<0.000000e+00> : vector<28x168xf32>
    %91 = tpu.matmul %88, %90, %cst_70 {dimension_numbers = #tpu.dot_dimension_numbers<[1], [0], [0], [1], [0, 0, 1, 1], [], []>} : vector<28x28xf32>, vector<28x168xf32>, vector<28x168xf32> -> vector<28x168xf32>
    %92 = arith.addf %87, %91 : vector<28x168xf32>
    %c21 = arith.constant 21 : index
    %c0_71 = arith.constant 0 : index
    %c0_72 = arith.constant 0 : index
    %93 = vector.load %arg3[%c21, %c0_71, %c0_72] : memref<25x28x168xf32, #tpu.memory_space<vmem>>, vector<1x28x168xf32>
    %94 = vector.shape_cast %93 : vector<1x28x168xf32> to vector<28x168xf32>
    %cst_73 = arith.constant dense<0.000000e+00> : vector<28x168xf32>
    %95 = tpu.matmul %88, %94, %cst_73 {dimension_numbers = #tpu.dot_dimension_numbers<[1], [0], [0], [1], [0, 0, 1, 1], [], []>} : vector<28x28xf32>, vector<28x168xf32>, vector<28x168xf32> -> vector<28x168xf32>
    %96 = arith.addf %92, %95 : vector<28x168xf32>
    %c22 = arith.constant 22 : index
    %c0_74 = arith.constant 0 : index
    %c0_75 = arith.constant 0 : index
    %97 = vector.load %arg3[%c22, %c0_74, %c0_75] : memref<25x28x168xf32, #tpu.memory_space<vmem>>, vector<1x28x168xf32>
    %98 = vector.shape_cast %97 : vector<1x28x168xf32> to vector<28x168xf32>
    %cst_76 = arith.constant dense<0.000000e+00> : vector<28x168xf32>
    %99 = tpu.matmul %88, %98, %cst_76 {dimension_numbers = #tpu.dot_dimension_numbers<[1], [0], [0], [1], [0, 0, 1, 1], [], []>} : vector<28x28xf32>, vector<28x168xf32>, vector<28x168xf32> -> vector<28x168xf32>
    %100 = arith.addf %96, %99 : vector<28x168xf32>
    %c23 = arith.constant 23 : index
    %c0_77 = arith.constant 0 : index
    %c0_78 = arith.constant 0 : index
    %101 = vector.load %arg3[%c23, %c0_77, %c0_78] : memref<25x28x168xf32, #tpu.memory_space<vmem>>, vector<1x28x168xf32>
    %102 = vector.shape_cast %101 : vector<1x28x168xf32> to vector<28x168xf32>
    %cst_79 = arith.constant dense<0.000000e+00> : vector<28x168xf32>
    %103 = tpu.matmul %88, %102, %cst_79 {dimension_numbers = #tpu.dot_dimension_numbers<[1], [0], [0], [1], [0, 0, 1, 1], [], []>} : vector<28x28xf32>, vector<28x168xf32>, vector<28x168xf32> -> vector<28x168xf32>
    %104 = arith.addf %100, %103 : vector<28x168xf32>
    %c24 = arith.constant 24 : index
    %c0_80 = arith.constant 0 : index
    %c0_81 = arith.constant 0 : index
    %105 = vector.load %arg3[%c24, %c0_80, %c0_81] : memref<25x28x168xf32, #tpu.memory_space<vmem>>, vector<1x28x168xf32>
    %106 = vector.shape_cast %105 : vector<1x28x168xf32> to vector<28x168xf32>
    %cst_82 = arith.constant dense<0.000000e+00> : vector<28x168xf32>
    %107 = tpu.matmul %88, %106, %cst_82 {dimension_numbers = #tpu.dot_dimension_numbers<[1], [0], [0], [1], [0, 0, 1, 1], [], []>} : vector<28x28xf32>, vector<28x168xf32>, vector<28x168xf32> -> vector<28x168xf32>
    %108 = arith.addf %104, %107 : vector<28x168xf32>
    %109 = vector.broadcast %4 : vector<1x168xf32> to vector<28x168xf32>
    %110 = arith.addf %108, %109 : vector<28x168xf32>
    %cst_83 = arith.constant 0.000000e+00 : f32
    %111 = vector.broadcast %cst_83 : f32 to vector<28x168xf32>
    %112 = arith.maximumf %110, %111 : vector<28x168xf32>
    %c0_84 = arith.constant 0 : index
    %c0_85 = arith.constant 0 : index
    %c0_86 = arith.constant 0 : index
    %113 = vector.load %arg5[%c0_84, %c0_85, %c0_86] : memref<2x14x28xf32, #tpu.memory_space<vmem>>, vector<1x14x28xf32>
    %114 = vector.shape_cast %113 : vector<1x14x28xf32> to vector<14x28xf32>
    %cst_87 = arith.constant dense<0.000000e+00> : vector<14x168xf32>
    %115 = tpu.matmul %114, %112, %cst_87 {dimension_numbers = #tpu.dot_dimension_numbers<[1], [0], [0], [1], [0, 0, 1, 1], [], []>} : vector<14x28xf32>, vector<28x168xf32>, vector<14x168xf32> -> vector<14x168xf32>
    %c1_88 = arith.constant 1 : index
    %c0_89 = arith.constant 0 : index
    %c0_90 = arith.constant 0 : index
    %116 = vector.load %arg5[%c1_88, %c0_89, %c0_90] : memref<2x14x28xf32, #tpu.memory_space<vmem>>, vector<1x14x28xf32>
    %117 = vector.shape_cast %116 : vector<1x14x28xf32> to vector<14x28xf32>
    %cst_91 = arith.constant dense<0.000000e+00> : vector<14x168xf32>
    %118 = tpu.matmul %117, %112, %cst_91 {dimension_numbers = #tpu.dot_dimension_numbers<[1], [0], [0], [1], [0, 0, 1, 1], [], []>} : vector<14x28xf32>, vector<28x168xf32>, vector<14x168xf32> -> vector<14x168xf32>
    %119 = arith.maximumf %115, %118 : vector<14x168xf32>
    %c0_92 = arith.constant 0 : index
    %c0_93 = arith.constant 0 : index
    %c0_94 = arith.constant 0 : index
    %120 = vector.load %arg6[%c0_92, %c0_93, %c0_94] : memref<2x168x84xf32, #tpu.memory_space<vmem>>, vector<1x168x84xf32>
    %121 = vector.shape_cast %120 : vector<1x168x84xf32> to vector<168x84xf32>
    %cst_95 = arith.constant dense<0.000000e+00> : vector<14x84xf32>
    %122 = tpu.matmul %119, %121, %cst_95 {dimension_numbers = #tpu.dot_dimension_numbers<[1], [0], [0], [1], [0, 0, 1, 1], [], []>} : vector<14x168xf32>, vector<168x84xf32>, vector<14x84xf32> -> vector<14x84xf32>
    %c1_96 = arith.constant 1 : index
    %c0_97 = arith.constant 0 : index
    %c0_98 = arith.constant 0 : index
    %123 = vector.load %arg6[%c1_96, %c0_97, %c0_98] : memref<2x168x84xf32, #tpu.memory_space<vmem>>, vector<1x168x84xf32>
    %124 = vector.shape_cast %123 : vector<1x168x84xf32> to vector<168x84xf32>
    %cst_99 = arith.constant dense<0.000000e+00> : vector<14x84xf32>
    %125 = tpu.matmul %119, %124, %cst_99 {dimension_numbers = #tpu.dot_dimension_numbers<[1], [0], [0], [1], [0, 0, 1, 1], [], []>} : vector<14x168xf32>, vector<168x84xf32>, vector<14x84xf32> -> vector<14x84xf32>
    %126 = arith.maximumf %122, %125 : vector<14x84xf32>
    %c0_100 = arith.constant 0 : index
    %c0_101 = arith.constant 0 : index
    %127 = vector.load %arg8[%c0_100, %c0_101] : memref<1x160xf32, #tpu.memory_space<vmem>>, vector<1x160xf32>
    %128 = vector.extract_strided_slice %126 {offsets = [0, 0], sizes = [10, 84], strides = [1, 1]} : vector<14x84xf32> to vector<10x84xf32>
    %c0_102 = arith.constant 0 : index
    %c0_103 = arith.constant 0 : index
    %c0_104 = arith.constant 0 : index
    %129 = vector.load %arg7[%c0_102, %c0_103, %c0_104] : memref<25x84x160xf32, #tpu.memory_space<vmem>>, vector<1x84x160xf32>
    %130 = vector.shape_cast %129 : vector<1x84x160xf32> to vector<84x160xf32>
    %cst_105 = arith.constant dense<0.000000e+00> : vector<10x160xf32>
    %131 = tpu.matmul %128, %130, %cst_105 {dimension_numbers = #tpu.dot_dimension_numbers<[1], [0], [0], [1], [0, 0, 1, 1], [], []>} : vector<10x84xf32>, vector<84x160xf32>, vector<10x160xf32> -> vector<10x160xf32>
    %c1_106 = arith.constant 1 : index
    %c0_107 = arith.constant 0 : index
    %c0_108 = arith.constant 0 : index
    %132 = vector.load %arg7[%c1_106, %c0_107, %c0_108] : memref<25x84x160xf32, #tpu.memory_space<vmem>>, vector<1x84x160xf32>
    %133 = vector.shape_cast %132 : vector<1x84x160xf32> to vector<84x160xf32>
    %cst_109 = arith.constant dense<0.000000e+00> : vector<10x160xf32>
    %134 = tpu.matmul %128, %133, %cst_109 {dimension_numbers = #tpu.dot_dimension_numbers<[1], [0], [0], [1], [0, 0, 1, 1], [], []>} : vector<10x84xf32>, vector<84x160xf32>, vector<10x160xf32> -> vector<10x160xf32>
    %135 = arith.addf %131, %134 : vector<10x160xf32>
    %c2_110 = arith.constant 2 : index
    %c0_111 = arith.constant 0 : index
    %c0_112 = arith.constant 0 : index
    %136 = vector.load %arg7[%c2_110, %c0_111, %c0_112] : memref<25x84x160xf32, #tpu.memory_space<vmem>>, vector<1x84x160xf32>
    %137 = vector.shape_cast %136 : vector<1x84x160xf32> to vector<84x160xf32>
    %cst_113 = arith.constant dense<0.000000e+00> : vector<10x160xf32>
    %138 = tpu.matmul %128, %137, %cst_113 {dimension_numbers = #tpu.dot_dimension_numbers<[1], [0], [0], [1], [0, 0, 1, 1], [], []>} : vector<10x84xf32>, vector<84x160xf32>, vector<10x160xf32> -> vector<10x160xf32>
    %139 = arith.addf %135, %138 : vector<10x160xf32>
    %c3_114 = arith.constant 3 : index
    %c0_115 = arith.constant 0 : index
    %c0_116 = arith.constant 0 : index
    %140 = vector.load %arg7[%c3_114, %c0_115, %c0_116] : memref<25x84x160xf32, #tpu.memory_space<vmem>>, vector<1x84x160xf32>
    %141 = vector.shape_cast %140 : vector<1x84x160xf32> to vector<84x160xf32>
    %cst_117 = arith.constant dense<0.000000e+00> : vector<10x160xf32>
    %142 = tpu.matmul %128, %141, %cst_117 {dimension_numbers = #tpu.dot_dimension_numbers<[1], [0], [0], [1], [0, 0, 1, 1], [], []>} : vector<10x84xf32>, vector<84x160xf32>, vector<10x160xf32> -> vector<10x160xf32>
    %143 = arith.addf %139, %142 : vector<10x160xf32>
    %c4_118 = arith.constant 4 : index
    %c0_119 = arith.constant 0 : index
    %c0_120 = arith.constant 0 : index
    %144 = vector.load %arg7[%c4_118, %c0_119, %c0_120] : memref<25x84x160xf32, #tpu.memory_space<vmem>>, vector<1x84x160xf32>
    %145 = vector.shape_cast %144 : vector<1x84x160xf32> to vector<84x160xf32>
    %cst_121 = arith.constant dense<0.000000e+00> : vector<10x160xf32>
    %146 = tpu.matmul %128, %145, %cst_121 {dimension_numbers = #tpu.dot_dimension_numbers<[1], [0], [0], [1], [0, 0, 1, 1], [], []>} : vector<10x84xf32>, vector<84x160xf32>, vector<10x160xf32> -> vector<10x160xf32>
    %147 = arith.addf %143, %146 : vector<10x160xf32>
    %148 = vector.extract_strided_slice %126 {offsets = [1, 0], sizes = [10, 84], strides = [1, 1]} : vector<14x84xf32> to vector<10x84xf32>
    %c5_122 = arith.constant 5 : index
    %c0_123 = arith.constant 0 : index
    %c0_124 = arith.constant 0 : index
    %149 = vector.load %arg7[%c5_122, %c0_123, %c0_124] : memref<25x84x160xf32, #tpu.memory_space<vmem>>, vector<1x84x160xf32>
    %150 = vector.shape_cast %149 : vector<1x84x160xf32> to vector<84x160xf32>
    %cst_125 = arith.constant dense<0.000000e+00> : vector<10x160xf32>
    %151 = tpu.matmul %148, %150, %cst_125 {dimension_numbers = #tpu.dot_dimension_numbers<[1], [0], [0], [1], [0, 0, 1, 1], [], []>} : vector<10x84xf32>, vector<84x160xf32>, vector<10x160xf32> -> vector<10x160xf32>
    %152 = arith.addf %147, %151 : vector<10x160xf32>
    %c6_126 = arith.constant 6 : index
    %c0_127 = arith.constant 0 : index
    %c0_128 = arith.constant 0 : index
    %153 = vector.load %arg7[%c6_126, %c0_127, %c0_128] : memref<25x84x160xf32, #tpu.memory_space<vmem>>, vector<1x84x160xf32>
    %154 = vector.shape_cast %153 : vector<1x84x160xf32> to vector<84x160xf32>
    %cst_129 = arith.constant dense<0.000000e+00> : vector<10x160xf32>
    %155 = tpu.matmul %148, %154, %cst_129 {dimension_numbers = #tpu.dot_dimension_numbers<[1], [0], [0], [1], [0, 0, 1, 1], [], []>} : vector<10x84xf32>, vector<84x160xf32>, vector<10x160xf32> -> vector<10x160xf32>
    %156 = arith.addf %152, %155 : vector<10x160xf32>
    %c7_130 = arith.constant 7 : index
    %c0_131 = arith.constant 0 : index
    %c0_132 = arith.constant 0 : index
    %157 = vector.load %arg7[%c7_130, %c0_131, %c0_132] : memref<25x84x160xf32, #tpu.memory_space<vmem>>, vector<1x84x160xf32>
    %158 = vector.shape_cast %157 : vector<1x84x160xf32> to vector<84x160xf32>
    %cst_133 = arith.constant dense<0.000000e+00> : vector<10x160xf32>
    %159 = tpu.matmul %148, %158, %cst_133 {dimension_numbers = #tpu.dot_dimension_numbers<[1], [0], [0], [1], [0, 0, 1, 1], [], []>} : vector<10x84xf32>, vector<84x160xf32>, vector<10x160xf32> -> vector<10x160xf32>
    %160 = arith.addf %156, %159 : vector<10x160xf32>
    %c8_134 = arith.constant 8 : index
    %c0_135 = arith.constant 0 : index
    %c0_136 = arith.constant 0 : index
    %161 = vector.load %arg7[%c8_134, %c0_135, %c0_136] : memref<25x84x160xf32, #tpu.memory_space<vmem>>, vector<1x84x160xf32>
    %162 = vector.shape_cast %161 : vector<1x84x160xf32> to vector<84x160xf32>
    %cst_137 = arith.constant dense<0.000000e+00> : vector<10x160xf32>
    %163 = tpu.matmul %148, %162, %cst_137 {dimension_numbers = #tpu.dot_dimension_numbers<[1], [0], [0], [1], [0, 0, 1, 1], [], []>} : vector<10x84xf32>, vector<84x160xf32>, vector<10x160xf32> -> vector<10x160xf32>
    %164 = arith.addf %160, %163 : vector<10x160xf32>
    %c9_138 = arith.constant 9 : index
    %c0_139 = arith.constant 0 : index
    %c0_140 = arith.constant 0 : index
    %165 = vector.load %arg7[%c9_138, %c0_139, %c0_140] : memref<25x84x160xf32, #tpu.memory_space<vmem>>, vector<1x84x160xf32>
    %166 = vector.shape_cast %165 : vector<1x84x160xf32> to vector<84x160xf32>
    %cst_141 = arith.constant dense<0.000000e+00> : vector<10x160xf32>
    %167 = tpu.matmul %148, %166, %cst_141 {dimension_numbers = #tpu.dot_dimension_numbers<[1], [0], [0], [1], [0, 0, 1, 1], [], []>} : vector<10x84xf32>, vector<84x160xf32>, vector<10x160xf32> -> vector<10x160xf32>
    %168 = arith.addf %164, %167 : vector<10x160xf32>
    %169 = vector.extract_strided_slice %126 {offsets = [2, 0], sizes = [10, 84], strides = [1, 1]} : vector<14x84xf32> to vector<10x84xf32>
    %c10_142 = arith.constant 10 : index
    %c0_143 = arith.constant 0 : index
    %c0_144 = arith.constant 0 : index
    %170 = vector.load %arg7[%c10_142, %c0_143, %c0_144] : memref<25x84x160xf32, #tpu.memory_space<vmem>>, vector<1x84x160xf32>
    %171 = vector.shape_cast %170 : vector<1x84x160xf32> to vector<84x160xf32>
    %cst_145 = arith.constant dense<0.000000e+00> : vector<10x160xf32>
    %172 = tpu.matmul %169, %171, %cst_145 {dimension_numbers = #tpu.dot_dimension_numbers<[1], [0], [0], [1], [0, 0, 1, 1], [], []>} : vector<10x84xf32>, vector<84x160xf32>, vector<10x160xf32> -> vector<10x160xf32>
    %173 = arith.addf %168, %172 : vector<10x160xf32>
    %c11_146 = arith.constant 11 : index
    %c0_147 = arith.constant 0 : index
    %c0_148 = arith.constant 0 : index
    %174 = vector.load %arg7[%c11_146, %c0_147, %c0_148] : memref<25x84x160xf32, #tpu.memory_space<vmem>>, vector<1x84x160xf32>
    %175 = vector.shape_cast %174 : vector<1x84x160xf32> to vector<84x160xf32>
    %cst_149 = arith.constant dense<0.000000e+00> : vector<10x160xf32>
    %176 = tpu.matmul %169, %175, %cst_149 {dimension_numbers = #tpu.dot_dimension_numbers<[1], [0], [0], [1], [0, 0, 1, 1], [], []>} : vector<10x84xf32>, vector<84x160xf32>, vector<10x160xf32> -> vector<10x160xf32>
    %177 = arith.addf %173, %176 : vector<10x160xf32>
    %c12_150 = arith.constant 12 : index
    %c0_151 = arith.constant 0 : index
    %c0_152 = arith.constant 0 : index
    %178 = vector.load %arg7[%c12_150, %c0_151, %c0_152] : memref<25x84x160xf32, #tpu.memory_space<vmem>>, vector<1x84x160xf32>
    %179 = vector.shape_cast %178 : vector<1x84x160xf32> to vector<84x160xf32>
    %cst_153 = arith.constant dense<0.000000e+00> : vector<10x160xf32>
    %180 = tpu.matmul %169, %179, %cst_153 {dimension_numbers = #tpu.dot_dimension_numbers<[1], [0], [0], [1], [0, 0, 1, 1], [], []>} : vector<10x84xf32>, vector<84x160xf32>, vector<10x160xf32> -> vector<10x160xf32>
    %181 = arith.addf %177, %180 : vector<10x160xf32>
    %c13_154 = arith.constant 13 : index
    %c0_155 = arith.constant 0 : index
    %c0_156 = arith.constant 0 : index
    %182 = vector.load %arg7[%c13_154, %c0_155, %c0_156] : memref<25x84x160xf32, #tpu.memory_space<vmem>>, vector<1x84x160xf32>
    %183 = vector.shape_cast %182 : vector<1x84x160xf32> to vector<84x160xf32>
    %cst_157 = arith.constant dense<0.000000e+00> : vector<10x160xf32>
    %184 = tpu.matmul %169, %183, %cst_157 {dimension_numbers = #tpu.dot_dimension_numbers<[1], [0], [0], [1], [0, 0, 1, 1], [], []>} : vector<10x84xf32>, vector<84x160xf32>, vector<10x160xf32> -> vector<10x160xf32>
    %185 = arith.addf %181, %184 : vector<10x160xf32>
    %c14_158 = arith.constant 14 : index
    %c0_159 = arith.constant 0 : index
    %c0_160 = arith.constant 0 : index
    %186 = vector.load %arg7[%c14_158, %c0_159, %c0_160] : memref<25x84x160xf32, #tpu.memory_space<vmem>>, vector<1x84x160xf32>
    %187 = vector.shape_cast %186 : vector<1x84x160xf32> to vector<84x160xf32>
    %cst_161 = arith.constant dense<0.000000e+00> : vector<10x160xf32>
    %188 = tpu.matmul %169, %187, %cst_161 {dimension_numbers = #tpu.dot_dimension_numbers<[1], [0], [0], [1], [0, 0, 1, 1], [], []>} : vector<10x84xf32>, vector<84x160xf32>, vector<10x160xf32> -> vector<10x160xf32>
    %189 = arith.addf %185, %188 : vector<10x160xf32>
    %190 = vector.extract_strided_slice %126 {offsets = [3, 0], sizes = [10, 84], strides = [1, 1]} : vector<14x84xf32> to vector<10x84xf32>
    %c15_162 = arith.constant 15 : index
    %c0_163 = arith.constant 0 : index
    %c0_164 = arith.constant 0 : index
    %191 = vector.load %arg7[%c15_162, %c0_163, %c0_164] : memref<25x84x160xf32, #tpu.memory_space<vmem>>, vector<1x84x160xf32>
    %192 = vector.shape_cast %191 : vector<1x84x160xf32> to vector<84x160xf32>
    %cst_165 = arith.constant dense<0.000000e+00> : vector<10x160xf32>
    %193 = tpu.matmul %190, %192, %cst_165 {dimension_numbers = #tpu.dot_dimension_numbers<[1], [0], [0], [1], [0, 0, 1, 1], [], []>} : vector<10x84xf32>, vector<84x160xf32>, vector<10x160xf32> -> vector<10x160xf32>
    %194 = arith.addf %189, %193 : vector<10x160xf32>
    %c16_166 = arith.constant 16 : index
    %c0_167 = arith.constant 0 : index
    %c0_168 = arith.constant 0 : index
    %195 = vector.load %arg7[%c16_166, %c0_167, %c0_168] : memref<25x84x160xf32, #tpu.memory_space<vmem>>, vector<1x84x160xf32>
    %196 = vector.shape_cast %195 : vector<1x84x160xf32> to vector<84x160xf32>
    %cst_169 = arith.constant dense<0.000000e+00> : vector<10x160xf32>
    %197 = tpu.matmul %190, %196, %cst_169 {dimension_numbers = #tpu.dot_dimension_numbers<[1], [0], [0], [1], [0, 0, 1, 1], [], []>} : vector<10x84xf32>, vector<84x160xf32>, vector<10x160xf32> -> vector<10x160xf32>
    %198 = arith.addf %194, %197 : vector<10x160xf32>
    %c17_170 = arith.constant 17 : index
    %c0_171 = arith.constant 0 : index
    %c0_172 = arith.constant 0 : index
    %199 = vector.load %arg7[%c17_170, %c0_171, %c0_172] : memref<25x84x160xf32, #tpu.memory_space<vmem>>, vector<1x84x160xf32>
    %200 = vector.shape_cast %199 : vector<1x84x160xf32> to vector<84x160xf32>
    %cst_173 = arith.constant dense<0.000000e+00> : vector<10x160xf32>
    %201 = tpu.matmul %190, %200, %cst_173 {dimension_numbers = #tpu.dot_dimension_numbers<[1], [0], [0], [1], [0, 0, 1, 1], [], []>} : vector<10x84xf32>, vector<84x160xf32>, vector<10x160xf32> -> vector<10x160xf32>
    %202 = arith.addf %198, %201 : vector<10x160xf32>
    %c18_174 = arith.constant 18 : index
    %c0_175 = arith.constant 0 : index
    %c0_176 = arith.constant 0 : index
    %203 = vector.load %arg7[%c18_174, %c0_175, %c0_176] : memref<25x84x160xf32, #tpu.memory_space<vmem>>, vector<1x84x160xf32>
    %204 = vector.shape_cast %203 : vector<1x84x160xf32> to vector<84x160xf32>
    %cst_177 = arith.constant dense<0.000000e+00> : vector<10x160xf32>
    %205 = tpu.matmul %190, %204, %cst_177 {dimension_numbers = #tpu.dot_dimension_numbers<[1], [0], [0], [1], [0, 0, 1, 1], [], []>} : vector<10x84xf32>, vector<84x160xf32>, vector<10x160xf32> -> vector<10x160xf32>
    %206 = arith.addf %202, %205 : vector<10x160xf32>
    %c19_178 = arith.constant 19 : index
    %c0_179 = arith.constant 0 : index
    %c0_180 = arith.constant 0 : index
    %207 = vector.load %arg7[%c19_178, %c0_179, %c0_180] : memref<25x84x160xf32, #tpu.memory_space<vmem>>, vector<1x84x160xf32>
    %208 = vector.shape_cast %207 : vector<1x84x160xf32> to vector<84x160xf32>
    %cst_181 = arith.constant dense<0.000000e+00> : vector<10x160xf32>
    %209 = tpu.matmul %190, %208, %cst_181 {dimension_numbers = #tpu.dot_dimension_numbers<[1], [0], [0], [1], [0, 0, 1, 1], [], []>} : vector<10x84xf32>, vector<84x160xf32>, vector<10x160xf32> -> vector<10x160xf32>
    %210 = arith.addf %206, %209 : vector<10x160xf32>
    %211 = vector.extract_strided_slice %126 {offsets = [4, 0], sizes = [10, 84], strides = [1, 1]} : vector<14x84xf32> to vector<10x84xf32>
    %c20_182 = arith.constant 20 : index
    %c0_183 = arith.constant 0 : index
    %c0_184 = arith.constant 0 : index
    %212 = vector.load %arg7[%c20_182, %c0_183, %c0_184] : memref<25x84x160xf32, #tpu.memory_space<vmem>>, vector<1x84x160xf32>
    %213 = vector.shape_cast %212 : vector<1x84x160xf32> to vector<84x160xf32>
    %cst_185 = arith.constant dense<0.000000e+00> : vector<10x160xf32>
    %214 = tpu.matmul %211, %213, %cst_185 {dimension_numbers = #tpu.dot_dimension_numbers<[1], [0], [0], [1], [0, 0, 1, 1], [], []>} : vector<10x84xf32>, vector<84x160xf32>, vector<10x160xf32> -> vector<10x160xf32>
    %215 = arith.addf %210, %214 : vector<10x160xf32>
    %c21_186 = arith.constant 21 : index
    %c0_187 = arith.constant 0 : index
    %c0_188 = arith.constant 0 : index
    %216 = vector.load %arg7[%c21_186, %c0_187, %c0_188] : memref<25x84x160xf32, #tpu.memory_space<vmem>>, vector<1x84x160xf32>
    %217 = vector.shape_cast %216 : vector<1x84x160xf32> to vector<84x160xf32>
    %cst_189 = arith.constant dense<0.000000e+00> : vector<10x160xf32>
    %218 = tpu.matmul %211, %217, %cst_189 {dimension_numbers = #tpu.dot_dimension_numbers<[1], [0], [0], [1], [0, 0, 1, 1], [], []>} : vector<10x84xf32>, vector<84x160xf32>, vector<10x160xf32> -> vector<10x160xf32>
    %219 = arith.addf %215, %218 : vector<10x160xf32>
    %c22_190 = arith.constant 22 : index
    %c0_191 = arith.constant 0 : index
    %c0_192 = arith.constant 0 : index
    %220 = vector.load %arg7[%c22_190, %c0_191, %c0_192] : memref<25x84x160xf32, #tpu.memory_space<vmem>>, vector<1x84x160xf32>
    %221 = vector.shape_cast %220 : vector<1x84x160xf32> to vector<84x160xf32>
    %cst_193 = arith.constant dense<0.000000e+00> : vector<10x160xf32>
    %222 = tpu.matmul %211, %221, %cst_193 {dimension_numbers = #tpu.dot_dimension_numbers<[1], [0], [0], [1], [0, 0, 1, 1], [], []>} : vector<10x84xf32>, vector<84x160xf32>, vector<10x160xf32> -> vector<10x160xf32>
    %223 = arith.addf %219, %222 : vector<10x160xf32>
    %c23_194 = arith.constant 23 : index
    %c0_195 = arith.constant 0 : index
    %c0_196 = arith.constant 0 : index
    %224 = vector.load %arg7[%c23_194, %c0_195, %c0_196] : memref<25x84x160xf32, #tpu.memory_space<vmem>>, vector<1x84x160xf32>
    %225 = vector.shape_cast %224 : vector<1x84x160xf32> to vector<84x160xf32>
    %cst_197 = arith.constant dense<0.000000e+00> : vector<10x160xf32>
    %226 = tpu.matmul %211, %225, %cst_197 {dimension_numbers = #tpu.dot_dimension_numbers<[1], [0], [0], [1], [0, 0, 1, 1], [], []>} : vector<10x84xf32>, vector<84x160xf32>, vector<10x160xf32> -> vector<10x160xf32>
    %227 = arith.addf %223, %226 : vector<10x160xf32>
    %c24_198 = arith.constant 24 : index
    %c0_199 = arith.constant 0 : index
    %c0_200 = arith.constant 0 : index
    %228 = vector.load %arg7[%c24_198, %c0_199, %c0_200] : memref<25x84x160xf32, #tpu.memory_space<vmem>>, vector<1x84x160xf32>
    %229 = vector.shape_cast %228 : vector<1x84x160xf32> to vector<84x160xf32>
    %cst_201 = arith.constant dense<0.000000e+00> : vector<10x160xf32>
    %230 = tpu.matmul %211, %229, %cst_201 {dimension_numbers = #tpu.dot_dimension_numbers<[1], [0], [0], [1], [0, 0, 1, 1], [], []>} : vector<10x84xf32>, vector<84x160xf32>, vector<10x160xf32> -> vector<10x160xf32>
    %231 = arith.addf %227, %230 : vector<10x160xf32>
    %232 = vector.broadcast %127 : vector<1x160xf32> to vector<10x160xf32>
    %233 = arith.addf %231, %232 : vector<10x160xf32>
    %cst_202 = arith.constant 0.000000e+00 : f32
    %234 = vector.broadcast %cst_202 : f32 to vector<10x160xf32>
    %235 = arith.maximumf %233, %234 : vector<10x160xf32>
    %c0_203 = arith.constant 0 : index
    %c0_204 = arith.constant 0 : index
    %c0_205 = arith.constant 0 : index
    %236 = vector.load %arg9[%c0_203, %c0_204, %c0_205] : memref<2x5x10xf32, #tpu.memory_space<vmem>>, vector<1x5x10xf32>
    %237 = vector.shape_cast %236 : vector<1x5x10xf32> to vector<5x10xf32>
    %cst_206 = arith.constant dense<0.000000e+00> : vector<5x160xf32>
    %238 = tpu.matmul %237, %235, %cst_206 {dimension_numbers = #tpu.dot_dimension_numbers<[1], [0], [0], [1], [0, 0, 1, 1], [], []>} : vector<5x10xf32>, vector<10x160xf32>, vector<5x160xf32> -> vector<5x160xf32>
    %c1_207 = arith.constant 1 : index
    %c0_208 = arith.constant 0 : index
    %c0_209 = arith.constant 0 : index
    %239 = vector.load %arg9[%c1_207, %c0_208, %c0_209] : memref<2x5x10xf32, #tpu.memory_space<vmem>>, vector<1x5x10xf32>
    %240 = vector.shape_cast %239 : vector<1x5x10xf32> to vector<5x10xf32>
    %cst_210 = arith.constant dense<0.000000e+00> : vector<5x160xf32>
    %241 = tpu.matmul %240, %235, %cst_210 {dimension_numbers = #tpu.dot_dimension_numbers<[1], [0], [0], [1], [0, 0, 1, 1], [], []>} : vector<5x10xf32>, vector<10x160xf32>, vector<5x160xf32> -> vector<5x160xf32>
    %242 = arith.maximumf %238, %241 : vector<5x160xf32>
    %c0_211 = arith.constant 0 : index
    %c0_212 = arith.constant 0 : index
    %c0_213 = arith.constant 0 : index
    %243 = vector.load %arg10[%c0_211, %c0_212, %c0_213] : memref<2x160x80xf32, #tpu.memory_space<vmem>>, vector<1x160x80xf32>
    %244 = vector.shape_cast %243 : vector<1x160x80xf32> to vector<160x80xf32>
    %cst_214 = arith.constant dense<0.000000e+00> : vector<5x80xf32>
    %245 = tpu.matmul %242, %244, %cst_214 {dimension_numbers = #tpu.dot_dimension_numbers<[1], [0], [0], [1], [0, 0, 1, 1], [], []>} : vector<5x160xf32>, vector<160x80xf32>, vector<5x80xf32> -> vector<5x80xf32>
    %c1_215 = arith.constant 1 : index
    %c0_216 = arith.constant 0 : index
    %c0_217 = arith.constant 0 : index
    %246 = vector.load %arg10[%c1_215, %c0_216, %c0_217] : memref<2x160x80xf32, #tpu.memory_space<vmem>>, vector<1x160x80xf32>
    %247 = vector.shape_cast %246 : vector<1x160x80xf32> to vector<160x80xf32>
    %cst_218 = arith.constant dense<0.000000e+00> : vector<5x80xf32>
    %248 = tpu.matmul %242, %247, %cst_218 {dimension_numbers = #tpu.dot_dimension_numbers<[1], [0], [0], [1], [0, 0, 1, 1], [], []>} : vector<5x160xf32>, vector<160x80xf32>, vector<5x80xf32> -> vector<5x80xf32>
    %249 = arith.maximumf %245, %248 : vector<5x80xf32>
    %250 = vector.extract_strided_slice %249 {offsets = [0, 0], sizes = [1, 80], strides = [1, 1]} : vector<5x80xf32> to vector<1x80xf32>
    %251 = vector.extract_strided_slice %249 {offsets = [1, 0], sizes = [1, 80], strides = [1, 1]} : vector<5x80xf32> to vector<1x80xf32>
    %252 = vector.extract_strided_slice %249 {offsets = [2, 0], sizes = [1, 80], strides = [1, 1]} : vector<5x80xf32> to vector<1x80xf32>
    %253 = vector.extract_strided_slice %249 {offsets = [3, 0], sizes = [1, 80], strides = [1, 1]} : vector<5x80xf32> to vector<1x80xf32>
    %254 = vector.extract_strided_slice %249 {offsets = [4, 0], sizes = [1, 80], strides = [1, 1]} : vector<5x80xf32> to vector<1x80xf32>
    %255 = tpu.concatenate %250, %251, %252, %253, %254 in 1 : vector<1x80xf32>, vector<1x80xf32>, vector<1x80xf32>, vector<1x80xf32>, vector<1x80xf32> -> vector<1x400xf32>
    %c0_219 = arith.constant 0 : index
    %c0_220 = arith.constant 0 : index
    %256 = vector.load %arg11[%c0_219, %c0_220] : memref<400x120xf32, #tpu.memory_space<vmem>>, vector<400x120xf32>
    %cst_221 = arith.constant dense<0.000000e+00> : vector<1x120xf32>
    %257 = tpu.matmul %255, %256, %cst_221 {dimension_numbers = #tpu.dot_dimension_numbers<[1], [0], [0], [1], [0, 0, 1, 1], [], []>} : vector<1x400xf32>, vector<400x120xf32>, vector<1x120xf32> -> vector<1x120xf32>
    %c0_222 = arith.constant 0 : index
    %c0_223 = arith.constant 0 : index
    %258 = vector.load %arg12[%c0_222, %c0_223] : memref<1x120xf32, #tpu.memory_space<vmem>>, vector<1x120xf32>
    %259 = arith.addf %257, %258 : vector<1x120xf32>
    %cst_224 = arith.constant 0.000000e+00 : f32
    %260 = vector.broadcast %cst_224 : f32 to vector<1x120xf32>
    %261 = arith.maximumf %259, %260 : vector<1x120xf32>
    %c0_225 = arith.constant 0 : index
    %c0_226 = arith.constant 0 : index
    %262 = vector.load %arg13[%c0_225, %c0_226] : memref<120x84xf32, #tpu.memory_space<vmem>>, vector<120x84xf32>
    %cst_227 = arith.constant dense<0.000000e+00> : vector<1x84xf32>
    %263 = tpu.matmul %261, %262, %cst_227 {dimension_numbers = #tpu.dot_dimension_numbers<[1], [0], [0], [1], [0, 0, 1, 1], [], []>} : vector<1x120xf32>, vector<120x84xf32>, vector<1x84xf32> -> vector<1x84xf32>
    %c0_228 = arith.constant 0 : index
    %c0_229 = arith.constant 0 : index
    %264 = vector.load %arg14[%c0_228, %c0_229] : memref<1x84xf32, #tpu.memory_space<vmem>>, vector<1x84xf32>
    %265 = arith.addf %263, %264 : vector<1x84xf32>
    %cst_230 = arith.constant 0.000000e+00 : f32
    %266 = vector.broadcast %cst_230 : f32 to vector<1x84xf32>
    %267 = arith.maximumf %265, %266 : vector<1x84xf32>
    %c0_231 = arith.constant 0 : index
    %c0_232 = arith.constant 0 : index
    %268 = vector.load %arg15[%c0_231, %c0_232] : memref<84x10xf32, #tpu.memory_space<vmem>>, vector<84x10xf32>
    %cst_233 = arith.constant dense<0.000000e+00> : vector<1x10xf32>
    %269 = tpu.matmul %267, %268, %cst_233 {dimension_numbers = #tpu.dot_dimension_numbers<[1], [0], [0], [1], [0, 0, 1, 1], [], []>} : vector<1x84xf32>, vector<84x10xf32>, vector<1x10xf32> -> vector<1x10xf32>
    %c0_234 = arith.constant 0 : index
    %c0_235 = arith.constant 0 : index
    %270 = vector.load %arg16[%c0_234, %c0_235] : memref<1x10xf32, #tpu.memory_space<vmem>>, vector<1x10xf32>
    %271 = arith.addf %269, %270 : vector<1x10xf32>
    %c0_236 = arith.constant 0 : index
    %c0_237 = arith.constant 0 : index
    %c0_238 = arith.constant 0 : index
    %272 = vector.load %arg17[%c0_236, %c0_237, %c0_238] : memref<1x1x10xf32, #tpu.memory_space<vmem>>, vector<1x1x10xf32>
    %273 = vector.shape_cast %272 : vector<1x1x10xf32> to vector<1x10xf32>
    %274 = vector.shape_cast %271 : vector<1x10xf32> to vector<1x1x10xf32>
    tpu.vector_store %arg17[%c0_236, %c0_237, %c0_238], %274 {strides = array<i32>} : memref<1x1x10xf32, #tpu.memory_space<vmem>>, vector<1x1x10xf32>,
    return
  }
  func.func @transform_0(%arg0: i32) -> (i32, i32, i32, i32) {
    %c0_i32 = arith.constant 0 : i32
    %c0_i32_0 = arith.constant 0 : i32
    %c0_i32_1 = arith.constant 0 : i32
    %c0_i32_2 = arith.constant 0 : i32
    return %arg0, %c0_i32, %c0_i32_0, %c0_i32_1 : i32, i32, i32, i32
  }
  func.func @transform_1(%arg0: i32) -> (i32, i32) {
    %c0_i32 = arith.constant 0 : i32
    %c0_i32_0 = arith.constant 0 : i32
    %c0_i32_1 = arith.constant 0 : i32
    return %c0_i32, %c0_i32_0 : i32, i32
  }
  func.func @transform_2(%arg0: i32) -> (i32, i32, i32) {
    %c0_i32 = arith.constant 0 : i32
    %c0_i32_0 = arith.constant 0 : i32
    %c0_i32_1 = arith.constant 0 : i32
    %c0_i32_2 = arith.constant 0 : i32
    return %c0_i32, %c0_i32_0, %c0_i32_1 : i32, i32, i32
  }
  func.func @transform_3(%arg0: i32) -> (i32, i32) {
    %c0_i32 = arith.constant 0 : i32
    %c0_i32_0 = arith.constant 0 : i32
    %c0_i32_1 = arith.constant 0 : i32
    return %c0_i32, %c0_i32_0 : i32, i32
  }
  func.func @transform_4(%arg0: i32) -> (i32, i32, i32) {
    %c0_i32 = arith.constant 0 : i32
    %c0_i32_0 = arith.constant 0 : i32
    %c0_i32_1 = arith.constant 0 : i32
    %c0_i32_2 = arith.constant 0 : i32
    return %c0_i32, %c0_i32_0, %c0_i32_1 : i32, i32, i32
  }
  func.func @transform_5(%arg0: i32) -> (i32, i32, i32) {
    %c0_i32 = arith.constant 0 : i32
    %c0_i32_0 = arith.constant 0 : i32
    %c0_i32_1 = arith.constant 0 : i32
    %c0_i32_2 = arith.constant 0 : i32
    return %c0_i32, %c0_i32_0, %c0_i32_1 : i32, i32, i32
  }
  func.func @transform_6(%arg0: i32) -> (i32, i32, i32) {
    %c0_i32 = arith.constant 0 : i32
    %c0_i32_0 = arith.constant 0 : i32
    %c0_i32_1 = arith.constant 0 : i32
    %c0_i32_2 = arith.constant 0 : i32
    return %c0_i32, %c0_i32_0, %c0_i32_1 : i32, i32, i32
  }
  func.func @transform_7(%arg0: i32) -> (i32, i32) {
    %c0_i32 = arith.constant 0 : i32
    %c0_i32_0 = arith.constant 0 : i32
    %c0_i32_1 = arith.constant 0 : i32
    return %c0_i32, %c0_i32_0 : i32, i32
  }
  func.func @transform_8(%arg0: i32) -> (i32, i32, i32) {
    %c0_i32 = arith.constant 0 : i32
    %c0_i32_0 = arith.constant 0 : i32
    %c0_i32_1 = arith.constant 0 : i32
    %c0_i32_2 = arith.constant 0 : i32
    return %c0_i32, %c0_i32_0, %c0_i32_1 : i32, i32, i32
  }
  func.func @transform_9(%arg0: i32) -> (i32, i32, i32) {
    %c0_i32 = arith.constant 0 : i32
    %c0_i32_0 = arith.constant 0 : i32
    %c0_i32_1 = arith.constant 0 : i32
    %c0_i32_2 = arith.constant 0 : i32
    return %c0_i32, %c0_i32_0, %c0_i32_1 : i32, i32, i32
  }
  func.func @transform_10(%arg0: i32) -> (i32, i32) {
    %c0_i32 = arith.constant 0 : i32
    %c0_i32_0 = arith.constant 0 : i32
    %c0_i32_1 = arith.constant 0 : i32
    return %c0_i32, %c0_i32_0 : i32, i32
  }
  func.func @transform_11(%arg0: i32) -> (i32, i32) {
    %c0_i32 = arith.constant 0 : i32
    %c0_i32_0 = arith.constant 0 : i32
    %c0_i32_1 = arith.constant 0 : i32
    return %c0_i32, %c0_i32_0 : i32, i32
  }
  func.func @transform_12(%arg0: i32) -> (i32, i32) {
    %c0_i32 = arith.constant 0 : i32
    %c0_i32_0 = arith.constant 0 : i32
    %c0_i32_1 = arith.constant 0 : i32
    return %c0_i32, %c0_i32_0 : i32, i32
  }
  func.func @transform_13(%arg0: i32) -> (i32, i32) {
    %c0_i32 = arith.constant 0 : i32
    %c0_i32_0 = arith.constant 0 : i32
    %c0_i32_1 = arith.constant 0 : i32
    return %c0_i32, %c0_i32_0 : i32, i32
  }
  func.func @transform_14(%arg0: i32) -> (i32, i32) {
    %c0_i32 = arith.constant 0 : i32
    %c0_i32_0 = arith.constant 0 : i32
    %c0_i32_1 = arith.constant 0 : i32
    return %c0_i32, %c0_i32_0 : i32, i32
  }
  func.func @transform_15(%arg0: i32) -> (i32, i32) {
    %c0_i32 = arith.constant 0 : i32
    %c0_i32_0 = arith.constant 0 : i32
    %c0_i32_1 = arith.constant 0 : i32
    return %c0_i32, %c0_i32_0 : i32, i32
  }
  func.func @transform_16(%arg0: i32) -> (i32, i32, i32) {
    %c0_i32 = arith.constant 0 : i32
    %c0_i32_0 = arith.constant 0 : i32
    %c0_i32_1 = arith.constant 0 : i32
    return %arg0, %c0_i32, %c0_i32_0 : i32, i32, i32
  }
}

</mosaic_0001>

<llo_original>
// kernel: lenet_forward.1
$region0: #{lenet_forward.1}
  #allocation0 [shape = 'u32[]', space=smem, size = 0x4, offset = 0x4, fixed_abs, tag = 'smem constant byte address 0x4 - core index']
  #allocation1 [shape = 'u32[144,128]{1,0:T(1,128)}', space=vmem, size = 0x12000, scoped, tag = 'internal scratch']
  %s0 = inlined_call_operand.vmem [shape: f32[2,1,28,28], index: 0, kind: input, shape index: {}]
  %s1 = inlined_call_operand.vmem [shape: f32[32,28], index: 1, kind: input, shape index: {}]
  %s2 = inlined_call_operand.vmem [shape: f32[25,28,168], index: 2, kind: input, shape index: {}]
  %s3 = inlined_call_operand.vmem [shape: f32[1,168], index: 3, kind: input, shape index: {}]
  %s4 = inlined_call_operand.vmem [shape: f32[2,14,28], index: 4, kind: input, shape index: {}]
  %s5 = inlined_call_operand.vmem [shape: f32[2,168,84], index: 5, kind: input, shape index: {}]
  %s6 = inlined_call_operand.vmem [shape: f32[25,84,160], index: 6, kind: input, shape index: {}]
  %s7 = inlined_call_operand.vmem [shape: f32[1,160], index: 7, kind: input, shape index: {}]
  %s8 = inlined_call_operand.vmem [shape: f32[2,5,10], index: 8, kind: input, shape index: {}]
  %s9 = inlined_call_operand.vmem [shape: f32[2,160,80], index: 9, kind: input, shape index: {}]
  %s10 = inlined_call_operand.vmem [shape: f32[400,120], index: 10, kind: input, shape index: {}]
  %s11 = inlined_call_operand.vmem [shape: f32[1,120], index: 11, kind: input, shape index: {}]
  %s12 = inlined_call_operand.vmem [shape: f32[120,84], index: 12, kind: input, shape index: {}]
  %s13 = inlined_call_operand.vmem [shape: f32[1,84], index: 13, kind: input, shape index: {}]
  %s14 = inlined_call_operand.vmem [shape: f32[84,10], index: 14, kind: input, shape index: {}]
  %s15 = inlined_call_operand.vmem [shape: f32[1,10], index: 15, kind: input, shape index: {}]
  %s16 = inlined_call_operand.hbm [shape: f32[2,1,10], index: 16, kind: output, shape index: {}]
  %s17 = sld [smem:[#allocation0]]
  $region97: #{lenet_forward.1} parent=0
    _
  %s19 = ssub.s32 1, %s17
  %s20 = scalar_select 0, %s19, %s17
  $region1: #{lenet_forward.1} parent=0
    #allocation2 [shape = 'u8[1024]{0}', space=vmem, size = 0x400, scoped, tag = 'output window, operand 0']
    #allocation3 [shape = 's32[2]{0}', space=sflag, size = 0x8, scoped, tag = 'scoped memory for lenet_forward.1']
    %21 = vsyncpa [#allocation3], 0
    %s22 = scalar_lea.sflag [#allocation3], 1
    %23 = vsyncpa %s22, 0
    loop: start=0, step=1, limit=4
    $region2: #{lenet_forward.1} parent=1 // loop_pre_header
      _
    $region3: #{lenet_forward.1} parent=1 // loop_header
      %s25 = sphi 0, %s29
      %p26 = scmp.ge.s32.totalorder %s25, 4
      %s35 = sphi 0, %s37
      %s38 = sphi 0, %s35
      %s39 = sphi 0, %s38
      %s55 = sphi 0, %s39
      %s59 = sphi 0, %s59
      %s61 = sphi 0, %s59
      %s62 = sphi 0, %s61
      %s76 = sphi 0, %s62
      %s80 = sphi 0, %s80
      %s82 = sphi 0, %s80
      %s83 = sphi 0, %s82
      %s97 = sphi 0, %s83
      %s101 = sphi 0, %s101
      %s103 = sphi 0, %s101
      %s104 = sphi 0, %s103
      %s118 = sphi 0, %s104
      %s122 = sphi 0, %s122
      %s124 = sphi 0, %s122
      %s125 = sphi 0, %s124
      %s139 = sphi 0, %s125
      %s143 = sphi 0, %s143
      %s145 = sphi 0, %s143
      %s146 = sphi 0, %s145
      %s160 = sphi 0, %s146
      %s164 = sphi 0, %s164
      %s166 = sphi 0, %s164
      %s167 = sphi 0, %s166
      %s181 = sphi 0, %s167
      %s185 = sphi 0, %s185
      %s187 = sphi 0, %s185
      %s188 = sphi 0, %s187
      %s202 = sphi 0, %s188
      %s206 = sphi 0, %s206
      %s208 = sphi 0, %s206
      %s209 = sphi 0, %s208
      %s223 = sphi 0, %s209
      %s227 = sphi 0, %s227
      %s229 = sphi 0, %s227
      %s230 = sphi 0, %s229
      %s244 = sphi 0, %s230
      %s248 = sphi 0, %s248
      %s250 = sphi 0, %s248
      %s251 = sphi 0, %s250
      %s265 = sphi 0, %s251
      %s269 = sphi 0, %s269
      %s271 = sphi 0, %s269
      %s272 = sphi 0, %s271
      %s286 = sphi 0, %s272
      %s290 = sphi 0, %s290
      %s292 = sphi 0, %s290
      %s293 = sphi 0, %s292
      %s307 = sphi 0, %s293
      %s311 = sphi 0, %s311
      %s313 = sphi 0, %s311
      %s314 = sphi 0, %s313
      %s328 = sphi 0, %s314
      %s332 = sphi 0, %s332
      %s334 = sphi 0, %s332
      %s335 = sphi 0, %s334
      %s349 = sphi 0, %s335
      %s353 = sphi 0, %s353
      %s355 = sphi 0, %s353
      %s356 = sphi 0, %s355
      %s370 = sphi 0, %s356
      %s376 = sphi 0, %s378
      %s379 = sphi 0, %s376
      %s380 = sphi 0, %s379
      %s396 = sphi 0, %s380
    $region4: #{lenet_forward.1} parent=1 // loop_header_branch
      %28 = sbr.rel (%p26) target = $region8
    $region5: #{lenet_forward.1} parent=1 // loop_body
      %s30 = ssub.s32 %s25, 1
      %s31 = ssub.s32 %s25, 2
      %s32 = sadd.s32 %s25, 1
      %s33 = ssub.s32 %s25, %s32
      %p34 = scmp.eq.s32.totalorder %s33, 0
      %s36 = sadd.s32 %s35, 1
      %s37 = scalar_select %p34, %s35, %s36
      %p40 = pneg %p34
      %p41 = scmp.eq.s32.totalorder %s25, 1
      %p42 = por %p40, %p41
      %p43 = scmp.ne.s32.totalorder %s35, %s38
      %p44 = scmp.eq.s32.totalorder %s25, 0
      %p45 = por %p43, %p44
      %p46 = scmp.ne.s32.totalorder %s35, %s38
      %p47 = scmp.eq.s32.totalorder %s30, 1
      %p48 = por %p46, %p47
      %p49 = scmp.ne.s32.totalorder %s38, %s39
      %p50 = scmp.eq.s32.totalorder %s30, 0
      %p51 = por %p49, %p50
      %p52 = scmp.ne.s32.totalorder %s38, %s39
      %p53 = scmp.eq.s32.totalorder %s31, 1
      %p54 = por %p52, %p53
      %p56 = scmp.ne.s32.totalorder %s39, %s55
      %p57 = scmp.eq.s32.totalorder %s31, 0
      %p58 = por %p56, %p57
      %s60 = sadd.s32 %s59, 1
      %p63 = scmp.eq.s32.totalorder %s25, 1
      %p64 = scmp.ne.s32.totalorder %s59, %s61
      %p65 = scmp.eq.s32.totalorder %s25, 0
      %p66 = por %p64, %p65
      %p67 = scmp.ne.s32.totalorder %s59, %s61
      %p68 = scmp.eq.s32.totalorder %s30, 1
      %p69 = por %p67, %p68
      %p70 = scmp.ne.s32.totalorder %s61, %s62
      %p71 = scmp.eq.s32.totalorder %s30, 0
      %p72 = por %p70, %p71
      %p73 = scmp.ne.s32.totalorder %s61, %s62
      %p74 = scmp.eq.s32.totalorder %s31, 1
      %p75 = por %p73, %p74
      %p77 = scmp.ne.s32.totalorder %s62, %s76
      %p78 = scmp.eq.s32.totalorder %s31, 0
      %p79 = por %p77, %p78
      %s81 = sadd.s32 %s80, 1
      %p84 = scmp.eq.s32.totalorder %s25, 1
      %p85 = scmp.ne.s32.totalorder %s80, %s82
      %p86 = scmp.eq.s32.totalorder %s25, 0
      %p87 = por %p85, %p86
      %p88 = scmp.ne.s32.totalorder %s80, %s82
      %p89 = scmp.eq.s32.totalorder %s30, 1
      %p90 = por %p88, %p89
      %p91 = scmp.ne.s32.totalorder %s82, %s83
      %p92 = scmp.eq.s32.totalorder %s30, 0
      %p93 = por %p91, %p92
      %p94 = scmp.ne.s32.totalorder %s82, %s83
      %p95 = scmp.eq.s32.totalorder %s31, 1
      %p96 = por %p94, %p95
      %p98 = scmp.ne.s32.totalorder %s83, %s97
      %p99 = scmp.eq.s32.totalorder %s31, 0
      %p100 = por %p98, %p99
      %s102 = sadd.s32 %s101, 1
      %p105 = scmp.eq.s32.totalorder %s25, 1
      %p106 = scmp.ne.s32.totalorder %s101, %s103
      %p107 = scmp.eq.s32.totalorder %s25, 0
      %p108 = por %p106, %p107
      %p109 = scmp.ne.s32.totalorder %s101, %s103
      %p110 = scmp.eq.s32.totalorder %s30, 1
      %p111 = por %p109, %p110
      %p112 = scmp.ne.s32.totalorder %s103, %s104
      %p113 = scmp.eq.s32.totalorder %s30, 0
      %p114 = por %p112, %p113
      %p115 = scmp.ne.s32.totalorder %s103, %s104
      %p116 = scmp.eq.s32.totalorder %s31, 1
      %p117 = por %p115, %p116
      %p119 = scmp.ne.s32.totalorder %s104, %s118
      %p120 = scmp.eq.s32.totalorder %s31, 0
      %p121 = por %p119, %p120
      %s123 = sadd.s32 %s122, 1
      %p126 = scmp.eq.s32.totalorder %s25, 1
      %p127 = scmp.ne.s32.totalorder %s122, %s124
      %p128 = scmp.eq.s32.totalorder %s25, 0
      %p129 = por %p127, %p128
      %p130 = scmp.ne.s32.totalorder %s122, %s124
      %p131 = scmp.eq.s32.totalorder %s30, 1
      %p132 = por %p130, %p131
      %p133 = scmp.ne.s32.totalorder %s124, %s125
      %p134 = scmp.eq.s32.totalorder %s30, 0
      %p135 = por %p133, %p134
      %p136 = scmp.ne.s32.totalorder %s124, %s125
      %p137 = scmp.eq.s32.totalorder %s31, 1
      %p138 = por %p136, %p137
      %p140 = scmp.ne.s32.totalorder %s125, %s139
      %p141 = scmp.eq.s32.totalorder %s31, 0
      %p142 = por %p140, %p141
      %s144 = sadd.s32 %s143, 1
      %p147 = scmp.eq.s32.totalorder %s25, 1
      %p148 = scmp.ne.s32.totalorder %s143, %s145
      %p149 = scmp.eq.s32.totalorder %s25, 0
      %p150 = por %p148, %p149
      %p151 = scmp.ne.s32.totalorder %s143, %s145
      %p152 = scmp.eq.s32.totalorder %s30, 1
      %p153 = por %p151, %p152
      %p154 = scmp.ne.s32.totalorder %s145, %s146
      %p155 = scmp.eq.s32.totalorder %s30, 0
      %p156 = por %p154, %p155
      %p157 = scmp.ne.s32.totalorder %s145, %s146
      %p158 = scmp.eq.s32.totalorder %s31, 1
      %p159 = por %p157, %p158
      %p161 = scmp.ne.s32.totalorder %s146, %s160
      %p162 = scmp.eq.s32.totalorder %s31, 0
      %p163 = por %p161, %p162
      %s165 = sadd.s32 %s164, 1
      %p168 = scmp.eq.s32.totalorder %s25, 1
      %p169 = scmp.ne.s32.totalorder %s164, %s166
      %p170 = scmp.eq.s32.totalorder %s25, 0
      %p171 = por %p169, %p170
      %p172 = scmp.ne.s32.totalorder %s164, %s166
      %p173 = scmp.eq.s32.totalorder %s30, 1
      %p174 = por %p172, %p173
      %p175 = scmp.ne.s32.totalorder %s166, %s167
      %p176 = scmp.eq.s32.totalorder %s30, 0
      %p177 = por %p175, %p176
      %p178 = scmp.ne.s32.totalorder %s166, %s167
      %p179 = scmp.eq.s32.totalorder %s31, 1
      %p180 = por %p178, %p179
      %p182 = scmp.ne.s32.totalorder %s167, %s181
      %p183 = scmp.eq.s32.totalorder %s31, 0
      %p184 = por %p182, %p183
      %s186 = sadd.s32 %s185, 1
      %p189 = scmp.eq.s32.totalorder %s25, 1
      %p190 = scmp.ne.s32.totalorder %s185, %s187
      %p191 = scmp.eq.s32.totalorder %s25, 0
      %p192 = por %p190, %p191
      %p193 = scmp.ne.s32.totalorder %s185, %s187
      %p194 = scmp.eq.s32.totalorder %s30, 1
      %p195 = por %p193, %p194
      %p196 = scmp.ne.s32.totalorder %s187, %s188
      %p197 = scmp.eq.s32.totalorder %s30, 0
      %p198 = por %p196, %p197
      %p199 = scmp.ne.s32.totalorder %s187, %s188
      %p200 = scmp.eq.s32.totalorder %s31, 1
      %p201 = por %p199, %p200
      %p203 = scmp.ne.s32.totalorder %s188, %s202
      %p204 = scmp.eq.s32.totalorder %s31, 0
      %p205 = por %p203, %p204
      %s207 = sadd.s32 %s206, 1
      %p210 = scmp.eq.s32.totalorder %s25, 1
      %p211 = scmp.ne.s32.totalorder %s206, %s208
      %p212 = scmp.eq.s32.totalorder %s25, 0
      %p213 = por %p211, %p212
      %p214 = scmp.ne.s32.totalorder %s206, %s208
      %p215 = scmp.eq.s32.totalorder %s30, 1
      %p216 = por %p214, %p215
      %p217 = scmp.ne.s32.totalorder %s208, %s209
      %p218 = scmp.eq.s32.totalorder %s30, 0
      %p219 = por %p217, %p218
      %p220 = scmp.ne.s32.totalorder %s208, %s209
      %p221 = scmp.eq.s32.totalorder %s31, 1
      %p222 = por %p220, %p221
      %p224 = scmp.ne.s32.totalorder %s209, %s223
      %p225 = scmp.eq.s32.totalorder %s31, 0
      %p226 = por %p224, %p225
      %s228 = sadd.s32 %s227, 1
      %p231 = scmp.eq.s32.totalorder %s25, 1
      %p232 = scmp.ne.s32.totalorder %s227, %s229
      %p233 = scmp.eq.s32.totalorder %s25, 0
      %p234 = por %p232, %p233
      %p235 = scmp.ne.s32.totalorder %s227, %s229
      %p236 = scmp.eq.s32.totalorder %s30, 1
      %p237 = por %p235, %p236
      %p238 = scmp.ne.s32.totalorder %s229, %s230
      %p239 = scmp.eq.s32.totalorder %s30, 0
      %p240 = por %p238, %p239
      %p241 = scmp.ne.s32.totalorder %s229, %s230
      %p242 = scmp.eq.s32.totalorder %s31, 1
      %p243 = por %p241, %p242
      %p245 = scmp.ne.s32.totalorder %s230, %s244
      %p246 = scmp.eq.s32.totalorder %s31, 0
      %p247 = por %p245, %p246
      %s249 = sadd.s32 %s248, 1
      %p252 = scmp.eq.s32.totalorder %s25, 1
      %p253 = scmp.ne.s32.totalorder %s248, %s250
      %p254 = scmp.eq.s32.totalorder %s25, 0
      %p255 = por %p253, %p254
      %p256 = scmp.ne.s32.totalorder %s248, %s250
      %p257 = scmp.eq.s32.totalorder %s30, 1
      %p258 = por %p256, %p257
      %p259 = scmp.ne.s32.totalorder %s250, %s251
      %p260 = scmp.eq.s32.totalorder %s30, 0
      %p261 = por %p259, %p260
      %p262 = scmp.ne.s32.totalorder %s250, %s251
      %p263 = scmp.eq.s32.totalorder %s31, 1
      %p264 = por %p262, %p263
      %p266 = scmp.ne.s32.totalorder %s251, %s265
      %p267 = scmp.eq.s32.totalorder %s31, 0
      %p268 = por %p266, %p267
      %s270 = sadd.s32 %s269, 1
      %p273 = scmp.eq.s32.totalorder %s25, 1
      %p274 = scmp.ne.s32.totalorder %s269, %s271
      %p275 = scmp.eq.s32.totalorder %s25, 0
      %p276 = por %p274, %p275
      %p277 = scmp.ne.s32.totalorder %s269, %s271
      %p278 = scmp.eq.s32.totalorder %s30, 1
      %p279 = por %p277, %p278
      %p280 = scmp.ne.s32.totalorder %s271, %s272
      %p281 = scmp.eq.s32.totalorder %s30, 0
      %p282 = por %p280, %p281
      %p283 = scmp.ne.s32.totalorder %s271, %s272
      %p284 = scmp.eq.s32.totalorder %s31, 1
      %p285 = por %p283, %p284
      %p287 = scmp.ne.s32.totalorder %s272, %s286
      %p288 = scmp.eq.s32.totalorder %s31, 0
      %p289 = por %p287, %p288
      %s291 = sadd.s32 %s290, 1
      %p294 = scmp.eq.s32.totalorder %s25, 1
      %p295 = scmp.ne.s32.totalorder %s290, %s292
      %p296 = scmp.eq.s32.totalorder %s25, 0
      %p297 = por %p295, %p296
      %p298 = scmp.ne.s32.totalorder %s290, %s292
      %p299 = scmp.eq.s32.totalorder %s30, 1
      %p300 = por %p298, %p299
      %p301 = scmp.ne.s32.totalorder %s292, %s293
      %p302 = scmp.eq.s32.totalorder %s30, 0
      %p303 = por %p301, %p302
      %p304 = scmp.ne.s32.totalorder %s292, %s293
      %p305 = scmp.eq.s32.totalorder %s31, 1
      %p306 = por %p304, %p305
      %p308 = scmp.ne.s32.totalorder %s293, %s307
      %p309 = scmp.eq.s32.totalorder %s31, 0
      %p310 = por %p308, %p309
      %s312 = sadd.s32 %s311, 1
      %p315 = scmp.eq.s32.totalorder %s25, 1
      %p316 = scmp.ne.s32.totalorder %s311, %s313
      %p317 = scmp.eq.s32.totalorder %s25, 0
      %p318 = por %p316, %p317
      %p319 = scmp.ne.s32.totalorder %s311, %s313
      %p320 = scmp.eq.s32.totalorder %s30, 1
      %p321 = por %p319, %p320
      %p322 = scmp.ne.s32.totalorder %s313, %s314
      %p323 = scmp.eq.s32.totalorder %s30, 0
      %p324 = por %p322, %p323
      %p325 = scmp.ne.s32.totalorder %s313, %s314
      %p326 = scmp.eq.s32.totalorder %s31, 1
      %p327 = por %p325, %p326
      %p329 = scmp.ne.s32.totalorder %s314, %s328
      %p330 = scmp.eq.s32.totalorder %s31, 0
      %p331 = por %p329, %p330
      %s333 = sadd.s32 %s332, 1
      %p336 = scmp.eq.s32.totalorder %s25, 1
      %p337 = scmp.ne.s32.totalorder %s332, %s334
      %p338 = scmp.eq.s32.totalorder %s25, 0
      %p339 = por %p337, %p338
      %p340 = scmp.ne.s32.totalorder %s332, %s334
      %p341 = scmp.eq.s32.totalorder %s30, 1
      %p342 = por %p340, %p341
      %p343 = scmp.ne.s32.totalorder %s334, %s335
      %p344 = scmp.eq.s32.totalorder %s30, 0
      %p345 = por %p343, %p344
      %p346 = scmp.ne.s32.totalorder %s334, %s335
      %p347 = scmp.eq.s32.totalorder %s31, 1
      %p348 = por %p346, %p347
      %p350 = scmp.ne.s32.totalorder %s335, %s349
      %p351 = scmp.eq.s32.totalorder %s31, 0
      %p352 = por %p350, %p351
      %s354 = sadd.s32 %s353, 1
      %p357 = scmp.eq.s32.totalorder %s25, 1
      %p358 = scmp.ne.s32.totalorder %s353, %s355
      %p359 = scmp.eq.s32.totalorder %s25, 0
      %p360 = por %p358, %p359
      %p361 = scmp.ne.s32.totalorder %s353, %s355
      %p362 = scmp.eq.s32.totalorder %s30, 1
      %p363 = por %p361, %p362
      %p364 = scmp.ne.s32.totalorder %s355, %s356
      %p365 = scmp.eq.s32.totalorder %s30, 0
      %p366 = por %p364, %p365
      %p367 = scmp.ne.s32.totalorder %s355, %s356
      %p368 = scmp.eq.s32.totalorder %s31, 1
      %p369 = por %p367, %p368
      %p371 = scmp.ne.s32.totalorder %s356, %s370
      %p372 = scmp.eq.s32.totalorder %s31, 0
      %p373 = por %p371, %p372
      %s374 = ssub.s32 %s25, %s32
      %p375 = scmp.eq.s32.totalorder %s374, 0
      %s377 = sadd.s32 %s376, 1
      %s378 = scalar_select %p375, %s376, %s377
      %p381 = pneg %p375
      %p382 = scmp.eq.s32.totalorder %s25, 1
      %p383 = por %p381, %p382
      %p384 = scmp.ne.s32.totalorder %s376, %s379
      %p385 = scmp.eq.s32.totalorder %s25, 0
      %p386 = por %p384, %p385
      %p387 = scmp.ne.s32.totalorder %s376, %s379
      %p388 = scmp.eq.s32.totalorder %s30, 1
      %p389 = por %p387, %p388
      %p390 = scmp.ne.s32.totalorder %s379, %s380
      %p391 = scmp.eq.s32.totalorder %s30, 0
      %p392 = por %p390, %p391
      %p393 = scmp.ne.s32.totalorder %s379, %s380
      %p394 = scmp.eq.s32.totalorder %s31, 1
      %p395 = por %p393, %p394
      %p397 = scmp.ne.s32.totalorder %s380, %s396
      %p398 = scmp.eq.s32.totalorder %s31, 0
      %p399 = por %p397, %p398
      %p400 = scmp.le.s32.totalorder 1, %s25
      %p401 = scmp.lt.s32.totalorder %s25, 3
      %p402 = pnand %p400, %p401
      %p403 = pneg %p402
      // Predicated region
      $region9: #{lenet_forward.1} parent=5 // pred_check
        _
      $region10: #{lenet_forward.1} parent=5 // pred_check_branch
        %405 = sbr.rel (%p402) target = $region12
      $region11: #{lenet_forward.1} parent=5 // pred_region
        %s406 = ssub.s32 %s25, 1
        // Predicated region
        $region13: #{lenet_forward.1} parent=11 // pred_check
          %p407 = pneg %p72
        $region14: #{lenet_forward.1} parent=11 // pred_check_branch
          %409 = sbr.rel (%p407) target = $region16
        $region15: #{lenet_forward.1} parent=11 // pred_region
          _
        $region16: #{lenet_forward.1} parent=11 // pred_fallthru
          _
        // Predicated region
        $region17: #{lenet_forward.1} parent=11 // pred_check
          %p410 = pneg %p93
        $region18: #{lenet_forward.1} parent=11 // pred_check_branch
          %412 = sbr.rel (%p410) target = $region20
        $region19: #{lenet_forward.1} parent=11 // pred_region
          _
        $region20: #{lenet_forward.1} parent=11 // pred_fallthru
          _
        // Predicated region
        $region21: #{lenet_forward.1} parent=11 // pred_check
          %p413 = pneg %p114
        $region22: #{lenet_forward.1} parent=11 // pred_check_branch
          %415 = sbr.rel (%p413) target = $region24
        $region23: #{lenet_forward.1} parent=11 // pred_region
          _
        $region24: #{lenet_forward.1} parent=11 // pred_fallthru
          _
        // Predicated region
        $region25: #{lenet_forward.1} parent=11 // pred_check
          %p416 = pneg %p135
        $region26: #{lenet_forward.1} parent=11 // pred_check_branch
          %418 = sbr.rel (%p416) target = $region28
        $region27: #{lenet_forward.1} parent=11 // pred_region
          _
        $region28: #{lenet_forward.1} parent=11 // pred_fallthru
          _
        // Predicated region
        $region29: #{lenet_forward.1} parent=11 // pred_check
          %p419 = pneg %p156
        $region30: #{lenet_forward.1} parent=11 // pred_check_branch
          %421 = sbr.rel (%p419) target = $region32
        $region31: #{lenet_forward.1} parent=11 // pred_region
          _
        $region32: #{lenet_forward.1} parent=11 // pred_fallthru
          _
        // Predicated region
        $region33: #{lenet_forward.1} parent=11 // pred_check
          %p422 = pneg %p177
        $region34: #{lenet_forward.1} parent=11 // pred_check_branch
          %424 = sbr.rel (%p422) target = $region36
        $region35: #{lenet_forward.1} parent=11 // pred_region
          _
        $region36: #{lenet_forward.1} parent=11 // pred_fallthru
          _
        // Predicated region
        $region37: #{lenet_forward.1} parent=11 // pred_check
          %p425 = pneg %p198
        $region38: #{lenet_forward.1} parent=11 // pred_check_branch
          %427 = sbr.rel (%p425) target = $region40
        $region39: #{lenet_forward.1} parent=11 // pred_region
          _
        $region40: #{lenet_forward.1} parent=11 // pred_fallthru
          _
        // Predicated region
        $region41: #{lenet_forward.1} parent=11 // pred_check
          %p428 = pneg %p219
        $region42: #{lenet_forward.1} parent=11 // pred_check_branch
          %430 = sbr.rel (%p428) target = $region44
        $region43: #{lenet_forward.1} parent=11 // pred_region
          _
        $region44: #{lenet_forward.1} parent=11 // pred_fallthru
          _
        // Predicated region
        $region45: #{lenet_forward.1} parent=11 // pred_check
          %p431 = pneg %p240
        $region46: #{lenet_forward.1} parent=11 // pred_check_branch
          %433 = sbr.rel (%p431) target = $region48
        $region47: #{lenet_forward.1} parent=11 // pred_region
          _
        $region48: #{lenet_forward.1} parent=11 // pred_fallthru
          _
        // Predicated region
        $region49: #{lenet_forward.1} parent=11 // pred_check
          %p434 = pneg %p261
        $region50: #{lenet_forward.1} parent=11 // pred_check_branch
          %436 = sbr.rel (%p434) target = $region52
        $region51: #{lenet_forward.1} parent=11 // pred_region
          _
        $region52: #{lenet_forward.1} parent=11 // pred_fallthru
          _
        // Predicated region
        $region53: #{lenet_forward.1} parent=11 // pred_check
          %p437 = pneg %p282
        $region54: #{lenet_forward.1} parent=11 // pred_check_branch
          %439 = sbr.rel (%p437) target = $region56
        $region55: #{lenet_forward.1} parent=11 // pred_region
          _
        $region56: #{lenet_forward.1} parent=11 // pred_fallthru
          _
        // Predicated region
        $region57: #{lenet_forward.1} parent=11 // pred_check
          %p440 = pneg %p303
        $region58: #{lenet_forward.1} parent=11 // pred_check_branch
          %442 = sbr.rel (%p440) target = $region60
        $region59: #{lenet_forward.1} parent=11 // pred_region
          _
        $region60: #{lenet_forward.1} parent=11 // pred_fallthru
          _
        // Predicated region
        $region61: #{lenet_forward.1} parent=11 // pred_check
          %p443 = pneg %p324
        $region62: #{lenet_forward.1} parent=11 // pred_check_branch
          %445 = sbr.rel (%p443) target = $region64
        $region63: #{lenet_forward.1} parent=11 // pred_region
          _
        $region64: #{lenet_forward.1} parent=11 // pred_fallthru
          _
        // Predicated region
        $region65: #{lenet_forward.1} parent=11 // pred_check
          %p446 = pneg %p345
        $region66: #{lenet_forward.1} parent=11 // pred_check_branch
          %448 = sbr.rel (%p446) target = $region68
        $region67: #{lenet_forward.1} parent=11 // pred_region
          _
        $region68: #{lenet_forward.1} parent=11 // pred_fallthru
          _
        // Predicated region
        $region69: #{lenet_forward.1} parent=11 // pred_check
          %p449 = pneg %p366
        $region70: #{lenet_forward.1} parent=11 // pred_check_branch
          %451 = sbr.rel (%p449) target = $region72
        $region71: #{lenet_forward.1} parent=11 // pred_region
          _
        $region72: #{lenet_forward.1} parent=11 // pred_fallthru
          _
      $region12: #{lenet_forward.1} parent=5 // pred_fallthru
        _
      %p452 = scmp.lt.s32.totalorder %s25, 2
      // Predicated region
      $region73: #{lenet_forward.1} parent=5 // pred_check
        %p453 = pneg %p452
      $region74: #{lenet_forward.1} parent=5 // pred_check_branch
        %455 = sbr.rel (%p453) target = $region76
      $region75: #{lenet_forward.1} parent=5 // pred_region
        // Predicated region
        $region77: #{lenet_forward.1} parent=75 // pred_check
          %p456 = pneg %p45
        $region78: #{lenet_forward.1} parent=75 // pred_check_branch
          %458 = sbr.rel (%p456) target = $region80
        $region79: #{lenet_forward.1} parent=75 // pred_region
          %p459 = scmp.lt.s32.totalorder %s25, 1
          %s460 = scalar_select %p459, %s25, 1
          %s461 = smul.addr %s460, 4
          %s462 = smul.addr %s461, 8
          %s463 = scalar_lea.vmem %s0, %s462
        $region80: #{lenet_forward.1} parent=75 // pred_fallthru
          _
      $region76: #{lenet_forward.1} parent=5 // pred_fallthru
        _
      %p464 = scmp.le.s32.totalorder 1, %s25
      %p465 = scmp.lt.s32.totalorder %s25, 3
      %p466 = pnand %p464, %p465
      %p467 = pneg %p466
      // Predicated region
      $region81: #{lenet_forward.1} parent=5 // pred_check
        _
      $region82: #{lenet_forward.1} parent=5 // pred_check_branch
        %469 = sbr.rel (%p466) target = $region84
      $region83: #{lenet_forward.1} parent=5 // pred_region
        %s470 = ssub.s32 %s25, 1
        %p471 = scmp.lt.s32.totalorder %s30, 1
        %s472 = scalar_select %p471, %s30, 1
        %s473 = smul.addr %s472, 4
        %s474 = smul.addr %s473, 8
        %s475 = scalar_lea.vmem %s0, %s474
        %p476 = pneg %p51
        %p477 = pneg %p48
        %p478 = pneg %p72
        %p479 = pneg %p69
        %p480 = pneg %p93
        %p481 = pneg %p90
        %p482 = pneg %p114
        %p483 = pneg %p111
        %p484 = pneg %p135
        %p485 = pneg %p132
        %p486 = pneg %p156
        %p487 = pneg %p153
        %p488 = pneg %p177
        %p489 = pneg %p174
        %p490 = pneg %p198
        %p491 = pneg %p195
        %p492 = pneg %p219
        %p493 = pneg %p216
        %p494 = pneg %p240
        %p495 = pneg %p237
        %p496 = pneg %p261
        %p497 = pneg %p258
        %p498 = pneg %p282
        %p499 = pneg %p279
        %p500 = pneg %p303
        %p501 = pneg %p300
        %p502 = pneg %p324
        %p503 = pneg %p321
        %p504 = pneg %p345
        %p505 = pneg %p342
        %p506 = pneg %p366
        %p507 = pneg %p363
        %p508 = pneg %p392
        %p509 = pneg %p389
        %s510 = sand.u32 %s379, 1
        %s511 = scalar_lea.sflag [#allocation3], %s510
        %s512 = sand.u32 %s379, 1
        %s513 = scalar_lea.vmem [#allocation2], %s512
        %p514 = scmp.lt.s32.totalorder %s30, 1
        %s515 = scalar_select %p514, %s30, 1
        %s516 = smul.addr %s515, 4
        %s517 = smul.addr %s516, 8
        %s518 = scalar_lea.vmem %s0, %s517
        %v519 = vld [vmem:[%s518] sm:$0xff]
        %v520 = vld [vmem:[%s518 + $0x8] sm:$0xff]
        %v521 = vld [vmem:[%s518 + $0x10] sm:$0xff]
        %v522 = vld [vmem:[%s518 + $0x18] sm:$0xf]
        %v523 = vld [vmem:[%s1] sm:$0xff]
        %v524 = vld [vmem:[%s1 + $0x8] sm:$0xff]
        %v525 = vld [vmem:[%s1 + $0x10] sm:$0xff]
        %v526 = vld [vmem:[%s1 + $0x18] sm:$0xff]
        %vm527 = vcmask 228352
        %v529 = vsel %vm527, %v523, 0
        %v532 = vsel %vm527, %v524, 0
        %v535 = vsel %vm527, %v525, 0
        %v538 = vsel %vm527, %v526, 0
        %vm540 = vcmask 1043456
        %v542 = vsel %vm540, %v522, 0
        %544 = vmatprep.subr.mxu0 0.0
        %545 = vmatpush1.msra.mxu0 %v519
        %546 = vmatprep.subr.mxu0 0.0
        %547 = vmatpush1.msra.mxu0 %v520
        %548 = vmatprep.subr.mxu0 0.0
        %549 = vmatpush1.msra.mxu0 %v521
        %550 = vmatprep.subr.mxu0 0.0
        %551 = vmatpush1.msra.mxu0 %v542
        %552 = vmatprep.subr.mxu0 0.0
        %553 = vmatpush1.msra.mxu0 0.0
        %554 = vmatprep.subr.mxu0 0.0
        %555 = vmatpush1.msra.mxu0 0.0
        %556 = vmatprep.subr.mxu0 0.0
        %557 = vmatpush1.msra.mxu0 0.0
        %558 = vmatprep.subr.mxu0 0.0
        %559 = vmatpush1.msra.mxu0 0.0
        %560 = vmatprep.subr.mxu0 0.0
        %561 = vmatpush1.msra.mxu0 0.0
        %562 = vmatprep.subr.mxu0 0.0
        %563 = vmatpush1.msra.mxu0 0.0
        %564 = vmatprep.subr.mxu0 0.0
        %565 = vmatpush1.msra.mxu0 0.0
        %566 = vmatprep.subr.mxu0 0.0
        %567 = vmatpush1.msra.mxu0 0.0
        %568 = vmatprep.subr.mxu0 0.0
        %569 = vmatpush1.msra.mxu0 0.0
        %570 = vmatprep.subr.mxu0 0.0
        %571 = vmatpush1.msra.mxu0 0.0
        %572 = vmatprep.subr.mxu0 0.0
        %573 = vmatpush1.msra.mxu0 0.0
        %574 = vmatprep.subr.mxu0 0.0
        %575 = vmatpush1.msra.mxu0 0.0
        %576 = vmatprep.subr.mxu0 0.0
        %577 = vmatpush1.msra.mxu0 0.0
        %578 = vmatprep.subr.mxu0 0.0
        %579 = vmatpush1.msra.mxu0 0.0
        %580 = vmatprep.subr.mxu0 0.0
        %581 = vmatpush1.msra.mxu0 0.0
        %582 = vmatprep.subr.mxu0 0.0
        %583 = vmatpush1.msra.mxu0 0.0
        %584 = vmatprep.subr.mxu0 0.0
        %585 = vmatpush1.msra.mxu0 0.0
        %586 = vmatprep.subr.mxu0 0.0
        %587 = vmatpush1.msra.mxu0 0.0
        %588 = vmatprep.subr.mxu0 0.0
        %589 = vmatpush1.msra.mxu0 0.0
        %590 = vmatprep.subr.mxu0 0.0
        %591 = vmatpush1.msra.mxu0 0.0
        %592 = vmatprep.subr.mxu0 0.0
        %593 = vmatpush1.msra.mxu0 0.0
        %594 = vmatprep.subr.mxu0 0.0
        %595 = vmatpush1.msra.mxu0 0.0
        %596 = vmatprep.subr.mxu0 0.0
        %597 = vmatpush1.msra.mxu0 0.0
        %598 = vmatprep.subr.mxu0 0.0
        %599 = vmatpush1.msra.mxu0 0.0
        %600 = vmatprep.subr.mxu0 0.0
        %601 = vmatpush1.msra.mxu0 0.0
        %602 = vmatprep.subr.mxu0 0.0
        %603 = vmatpush1.msra.mxu0 0.0
        %604 = vmatprep.subr.mxu0 0.0
        %605 = vmatpush1.msra.mxu0 0.0
        %606 = vmatprep.subr.mxu0 0.0
        %607 = vmatpush1.msra.mxu0 0.0
        %608 = vmatprep.mubr.f32.mxu0 0.0
        %609 = vmatmul.mubr.f32.gmra.mrb[0].mxu0 %v529
        %v610 = vpop.f32.mrb[0].mxu0
        %v611 = vadd.f32 0.0, %v610
        %v612 = vpop.f32.mrb[0].mxu0
        %613 = vmatprep.mubr.f32.mxu0 0.0
        %614 = vmatmul.mubr.f32.gmra.mrb[0].mxu0 %v532
        %v615 = vpop.f32.mrb[0].mxu0
        %v616 = vadd.f32 0.0, %v615
        %v617 = vpop.f32.mrb[0].mxu0
        %618 = vmatprep.mubr.f32.mxu0 0.0
        %619 = vmatmul.mubr.f32.gmra.mrb[0].mxu0 %v535
        %v620 = vpop.f32.mrb[0].mxu0
        %v621 = vadd.f32 0.0, %v620
        %v622 = vpop.f32.mrb[0].mxu0
        %623 = vmatprep.mubr.f32.mxu0 0.0
        %624 = vmatmul.mubr.f32.gmra.mrb[0].mxu0 %v538
        %v625 = vpop.f32.mrb[0].mxu0
        %v626 = vadd.f32 0.0, %v625
        %v627 = vpop.f32.mrb[0].mxu0
        %628 = vdwg.mxu0
        %v629 = vld [vmem:[%s3] sm:$0x3]
        %v630 = vld [vmem:[%s2] sm:$0xff]
        %v631 = vld [vmem:[%s2 + $0x8] sm:$0xff]
        %v632 = vld [vmem:[%s2 + $0x10] sm:$0xff]
        %v633 = vld [vmem:[%s2 + $0x18] sm:$0xff]
        %v634 = vld [vmem:[%s2 + $0x20] sm:$0xff]
        %v635 = vld [vmem:[%s2 + $0x28] sm:$0xff]
        %v636 = vld [vmem:[%s2 + $0x30] sm:$0xf]
        %v637 = vld [vmem:[%s2 + $0x38] sm:$0xf]
        %s638 = scalar_lea.vmem %s2, 64
        %v639 = vld [vmem:[%s638] sm:$0xff]
        %v640 = vld [vmem:[%s638 + $0x8] sm:$0xff]
        %v641 = vld [vmem:[%s638 + $0x10] sm:$0xff]
        %v642 = vld [vmem:[%s638 + $0x18] sm:$0xff]
        %v643 = vld [vmem:[%s638 + $0x20] sm:$0xff]
        %v644 = vld [vmem:[%s638 + $0x28] sm:$0xff]
        %v645 = vld [vmem:[%s638 + $0x30] sm:$0xf]
        %v646 = vld [vmem:[%s638 + $0x38] sm:$0xf]
        %v648 = vsel %vm527, %v611, 0
        %v651 = vsel %vm527, %v616, 0
        %v654 = vsel %vm527, %v621, 0
        %v657 = vsel %vm527, %v626, 0
        %v660 = vsel %vm540, %v645, 0
        %v663 = vsel %vm540, %v646, 0
        %665 = vmatprep.subr.mxu0 %v640
        %666 = vmatpush1.msra.mxu0 %v639
        %667 = vmatprep.subr.mxu0 %v642
        %668 = vmatpush1.msra.mxu0 %v641
        %669 = vmatprep.subr.mxu0 %v644
        %670 = vmatpush1.msra.mxu0 %v643
        %671 = vmatprep.subr.mxu0 %v663
        %672 = vmatpush1.msra.mxu0 %v660
        %673 = vmatprep.subr.mxu0 0.0
        %674 = vmatpush1.msra.mxu0 0.0
        %675 = vmatprep.subr.mxu0 0.0
        %676 = vmatpush1.msra.mxu0 0.0
        %677 = vmatprep.subr.mxu0 0.0
        %678 = vmatpush1.msra.mxu0 0.0
        %679 = vmatprep.subr.mxu0 0.0
        %680 = vmatpush1.msra.mxu0 0.0
        %681 = vmatprep.subr.mxu0 0.0
        %682 = vmatpush1.msra.mxu0 0.0
        %683 = vmatprep.subr.mxu0 0.0
        %684 = vmatpush1.msra.mxu0 0.0
        %685 = vmatprep.subr.mxu0 0.0
        %686 = vmatpush1.msra.mxu0 0.0
        %687 = vmatprep.subr.mxu0 0.0
        %688 = vmatpush1.msra.mxu0 0.0
        %689 = vmatprep.subr.mxu0 0.0
        %690 = vmatpush1.msra.mxu0 0.0
        %691 = vmatprep.subr.mxu0 0.0
        %692 = vmatpush1.msra.mxu0 0.0
        %693 = vmatprep.subr.mxu0 0.0
        %694 = vmatpush1.msra.mxu0 0.0
        %695 = vmatprep.subr.mxu0 0.0
        %696 = vmatpush1.msra.mxu0 0.0
        %697 = vmatprep.subr.mxu0 0.0
        %698 = vmatpush1.msra.mxu0 0.0
        %699 = vmatprep.subr.mxu0 0.0
        %700 = vmatpush1.msra.mxu0 0.0
        %701 = vmatprep.subr.mxu0 0.0
        %702 = vmatpush1.msra.mxu0 0.0
        %703 = vmatprep.subr.mxu0 0.0
        %704 = vmatpush1.msra.mxu0 0.0
        %705 = vmatprep.subr.mxu0 0.0
        %706 = vmatpush1.msra.mxu0 0.0
        %707 = vmatprep.subr.mxu0 0.0
        %708 = vmatpush1.msra.mxu0 0.0
        %709 = vmatprep.subr.mxu0 0.0
        %710 = vmatpush1.msra.mxu0 0.0
        %711 = vmatprep.subr.mxu0 0.0
        %712 = vmatpush1.msra.mxu0 0.0
        %713 = vmatprep.subr.mxu0 0.0
        %714 = vmatpush1.msra.mxu0 0.0
        %715 = vmatprep.subr.mxu0 0.0
        %716 = vmatpush1.msra.mxu0 0.0
        %717 = vmatprep.subr.mxu0 0.0
        %718 = vmatpush1.msra.mxu0 0.0
        %719 = vmatprep.subr.mxu0 0.0
        %720 = vmatpush1.msra.mxu0 0.0
        %721 = vmatprep.subr.mxu0 0.0
        %722 = vmatpush1.msra.mxu0 0.0
        %723 = vmatprep.subr.mxu0 0.0
        %724 = vmatpush1.msra.mxu0 0.0
        %725 = vmatprep.subr.mxu0 0.0
        %726 = vmatpush1.msra.mxu0 0.0
        %727 = vmatprep.subr.mxu0 0.0
        %728 = vmatpush1.msra.mxu0 0.0
        %729 = vmatprep.mubr.f32.mxu0 0.0
        %730 = vmatmul.mubr.f32.gmra.mrb[0].mxu0 %v648
        %v731 = vpop.f32.mrb[0].mxu0
        %v732 = vadd.f32 0.0, %v731
        %v733 = vpop.f32.mrb[0].mxu0
        %v734 = vadd.f32 0.0, %v733
        %735 = vmatprep.mubr.f32.mxu0 0.0
        %736 = vmatmul.mubr.f32.gmra.mrb[0].mxu0 %v651
        %v737 = vpop.f32.mrb[0].mxu0
        %v738 = vadd.f32 0.0, %v737
        %v739 = vpop.f32.mrb[0].mxu0
        %v740 = vadd.f32 0.0, %v739
        %741 = vmatprep.mubr.f32.mxu0 0.0
        %742 = vmatmul.mubr.f32.gmra.mrb[0].mxu0 %v654
        %v743 = vpop.f32.mrb[0].mxu0
        %v744 = vadd.f32 0.0, %v743
        %v745 = vpop.f32.mrb[0].mxu0
        %v746 = vadd.f32 0.0, %v745
        %747 = vmatprep.mubr.f32.mxu0 0.0
        %748 = vmatmul.mubr.f32.gmra.mrb[0].mxu0 %v657
        %v749 = vpop.f32.mrb[0].mxu0
        %v750 = vadd.f32 0.0, %v749
        %v751 = vpop.f32.mrb[0].mxu0
        %v752 = vadd.f32 0.0, %v751
        %753 = vdwg.mxu0
        %v755 = vsel %vm540, %v636, 0
        %v758 = vsel %vm540, %v637, 0
        %760 = vmatprep.subr.mxu0 %v631
        %761 = vmatpush1.msra.mxu0 %v630
        %762 = vmatprep.subr.mxu0 %v633
        %763 = vmatpush1.msra.mxu0 %v632
        %764 = vmatprep.subr.mxu0 %v635
        %765 = vmatpush1.msra.mxu0 %v634
        %766 = vmatprep.subr.mxu0 %v758
        %767 = vmatpush1.msra.mxu0 %v755
        %768 = vmatprep.subr.mxu0 0.0
        %769 = vmatpush1.msra.mxu0 0.0
        %770 = vmatprep.subr.mxu0 0.0
        %771 = vmatpush1.msra.mxu0 0.0
        %772 = vmatprep.subr.mxu0 0.0
        %773 = vmatpush1.msra.mxu0 0.0
        %774 = vmatprep.subr.mxu0 0.0
        %775 = vmatpush1.msra.mxu0 0.0
        %776 = vmatprep.subr.mxu0 0.0
        %777 = vmatpush1.msra.mxu0 0.0
        %778 = vmatprep.subr.mxu0 0.0
        %779 = vmatpush1.msra.mxu0 0.0
        %780 = vmatprep.subr.mxu0 0.0
        %781 = vmatpush1.msra.mxu0 0.0
        %782 = vmatprep.subr.mxu0 0.0
        %783 = vmatpush1.msra.mxu0 0.0
        %784 = vmatprep.subr.mxu0 0.0
        %785 = vmatpush1.msra.mxu0 0.0
        %786 = vmatprep.subr.mxu0 0.0
        %787 = vmatpush1.msra.mxu0 0.0
        %788 = vmatprep.subr.mxu0 0.0
        %789 = vmatpush1.msra.mxu0 0.0
        %790 = vmatprep.subr.mxu0 0.0
        %791 = vmatpush1.msra.mxu0 0.0
        %792 = vmatprep.subr.mxu0 0.0
        %793 = vmatpush1.msra.mxu0 0.0
        %794 = vmatprep.subr.mxu0 0.0
        %795 = vmatpush1.msra.mxu0 0.0
        %796 = vmatprep.subr.mxu0 0.0
        %797 = vmatpush1.msra.mxu0 0.0
        %798 = vmatprep.subr.mxu0 0.0
        %799 = vmatpush1.msra.mxu0 0.0
        %800 = vmatprep.subr.mxu0 0.0
        %801 = vmatpush1.msra.mxu0 0.0
        %802 = vmatprep.subr.mxu0 0.0
        %803 = vmatpush1.msra.mxu0 0.0
        %804 = vmatprep.subr.mxu0 0.0
        %805 = vmatpush1.msra.mxu0 0.0
        %806 = vmatprep.subr.mxu0 0.0
        %807 = vmatpush1.msra.mxu0 0.0
        %808 = vmatprep.subr.mxu0 0.0
        %809 = vmatpush1.msra.mxu0 0.0
        %810 = vmatprep.subr.mxu0 0.0
        %811 = vmatpush1.msra.mxu0 0.0
        %812 = vmatprep.subr.mxu0 0.0
        %813 = vmatpush1.msra.mxu0 0.0
        %814 = vmatprep.subr.mxu0 0.0
        %815 = vmatpush1.msra.mxu0 0.0
        %816 = vmatprep.subr.mxu0 0.0
        %817 = vmatpush1.msra.mxu0 0.0
        %818 = vmatprep.subr.mxu0 0.0
        %819 = vmatpush1.msra.mxu0 0.0
        %820 = vmatprep.subr.mxu0 0.0
        %821 = vmatpush1.msra.mxu0 0.0
        %822 = vmatprep.subr.mxu0 0.0
        %823 = vmatpush1.msra.mxu0 0.0
        %824 = vmatprep.mubr.f32.mxu0 0.0
        %825 = vmatmul.mubr.f32.gmra.mrb[0].mxu0 %v648
        %v826 = vpop.f32.mrb[0].mxu0
        %v827 = vadd.f32 %v732, %v826
        %v828 = vpop.f32.mrb[0].mxu0
        %v829 = vadd.f32 %v734, %v828
        %830 = vmatprep.mubr.f32.mxu0 0.0
        %831 = vmatmul.mubr.f32.gmra.mrb[0].mxu0 %v651
        %v832 = vpop.f32.mrb[0].mxu0
        %v833 = vadd.f32 %v738, %v832
        %v834 = vpop.f32.mrb[0].mxu0
        %v835 = vadd.f32 %v740, %v834
        %836 = vmatprep.mubr.f32.mxu0 0.0
        %837 = vmatmul.mubr.f32.gmra.mrb[0].mxu0 %v654
        %v838 = vpop.f32.mrb[0].mxu0
        %v839 = vadd.f32 %v744, %v838
        %v840 = vpop.f32.mrb[0].mxu0
        %v841 = vadd.f32 %v746, %v840
        %842 = vmatprep.mubr.f32.mxu0 0.0
        %843 = vmatmul.mubr.f32.gmra.mrb[0].mxu0 %v657
        %v844 = vpop.f32.mrb[0].mxu0
        %v845 = vadd.f32 %v750, %v844
        %v846 = vpop.f32.mrb[0].mxu0
        %v847 = vadd.f32 %v752, %v846
        %848 = vdwg.mxu0
        %s849 = scalar_lea.vmem %s2, 128
        %v850 = vld [vmem:[%s849] sm:$0xff]
        %v851 = vld [vmem:[%s849 + $0x8] sm:$0xff]
        %v852 = vld [vmem:[%s849 + $0x10] sm:$0xff]
        %v853 = vld [vmem:[%s849 + $0x18] sm:$0xff]
        %v854 = vld [vmem:[%s849 + $0x20] sm:$0xff]
        %v855 = vld [vmem:[%s849 + $0x28] sm:$0xff]
        %v856 = vld [vmem:[%s849 + $0x30] sm:$0xf]
        %v857 = vld [vmem:[%s849 + $0x38] sm:$0xf]
        %v859 = vsel %vm540, %v856, 0
        %v862 = vsel %vm540, %v857, 0
        %864 = vmatprep.subr.mxu0 %v851
        %865 = vmatpush1.msra.mxu0 %v850
        %866 = vmatprep.subr.mxu0 %v853
        %867 = vmatpush1.msra.mxu0 %v852
        %868 = vmatprep.subr.mxu0 %v855
        %869 = vmatpush1.msra.mxu0 %v854
        %870 = vmatprep.subr.mxu0 %v862
        %871 = vmatpush1.msra.mxu0 %v859
        %872 = vmatprep.subr.mxu0 0.0
        %873 = vmatpush1.msra.mxu0 0.0
        %874 = vmatprep.subr.mxu0 0.0
        %875 = vmatpush1.msra.mxu0 0.0
        %876 = vmatprep.subr.mxu0 0.0
        %877 = vmatpush1.msra.mxu0 0.0
        %878 = vmatprep.subr.mxu0 0.0
        %879 = vmatpush1.msra.mxu0 0.0
        %880 = vmatprep.subr.mxu0 0.0
        %881 = vmatpush1.msra.mxu0 0.0
        %882 = vmatprep.subr.mxu0 0.0
        %883 = vmatpush1.msra.mxu0 0.0
        %884 = vmatprep.subr.mxu0 0.0
        %885 = vmatpush1.msra.mxu0 0.0
        %886 = vmatprep.subr.mxu0 0.0
        %887 = vmatpush1.msra.mxu0 0.0
        %888 = vmatprep.subr.mxu0 0.0
        %889 = vmatpush1.msra.mxu0 0.0
        %890 = vmatprep.subr.mxu0 0.0
        %891 = vmatpush1.msra.mxu0 0.0
        %892 = vmatprep.subr.mxu0 0.0
        %893 = vmatpush1.msra.mxu0 0.0
        %894 = vmatprep.subr.mxu0 0.0
        %895 = vmatpush1.msra.mxu0 0.0
        %896 = vmatprep.subr.mxu0 0.0
        %897 = vmatpush1.msra.mxu0 0.0
        %898 = vmatprep.subr.mxu0 0.0
        %899 = vmatpush1.msra.mxu0 0.0
        %900 = vmatprep.subr.mxu0 0.0
        %901 = vmatpush1.msra.mxu0 0.0
        %902 = vmatprep.subr.mxu0 0.0
        %903 = vmatpush1.msra.mxu0 0.0
        %904 = vmatprep.subr.mxu0 0.0
        %905 = vmatpush1.msra.mxu0 0.0
        %906 = vmatprep.subr.mxu0 0.0
        %907 = vmatpush1.msra.mxu0 0.0
        %908 = vmatprep.subr.mxu0 0.0
        %909 = vmatpush1.msra.mxu0 0.0
        %910 = vmatprep.subr.mxu0 0.0
        %911 = vmatpush1.msra.mxu0 0.0
        %912 = vmatprep.subr.mxu0 0.0
        %913 = vmatpush1.msra.mxu0 0.0
        %914 = vmatprep.subr.mxu0 0.0
        %915 = vmatpush1.msra.mxu0 0.0
        %916 = vmatprep.subr.mxu0 0.0
        %917 = vmatpush1.msra.mxu0 0.0
        %918 = vmatprep.subr.mxu0 0.0
        %919 = vmatpush1.msra.mxu0 0.0
        %920 = vmatprep.subr.mxu0 0.0
        %921 = vmatpush1.msra.mxu0 0.0
        %922 = vmatprep.subr.mxu0 0.0
        %923 = vmatpush1.msra.mxu0 0.0
        %924 = vmatprep.subr.mxu0 0.0
        %925 = vmatpush1.msra.mxu0 0.0
        %926 = vmatprep.subr.mxu0 0.0
        %927 = vmatpush1.msra.mxu0 0.0
        %928 = vmatprep.mubr.f32.mxu0 0.0
        %929 = vmatmul.mubr.f32.gmra.mrb[0].mxu0 %v648
        %v930 = vpop.f32.mrb[0].mxu0
        %v931 = vadd.f32 0.0, %v930
        %v932 = vpop.f32.mrb[0].mxu0
        %v933 = vadd.f32 0.0, %v932
        %934 = vmatprep.mubr.f32.mxu0 0.0
        %935 = vmatmul.mubr.f32.gmra.mrb[0].mxu0 %v651
        %v936 = vpop.f32.mrb[0].mxu0
        %v937 = vadd.f32 0.0, %v936
        %v938 = vpop.f32.mrb[0].mxu0
        %v939 = vadd.f32 0.0, %v938
        %940 = vmatprep.mubr.f32.mxu0 0.0
        %941 = vmatmul.mubr.f32.gmra.mrb[0].mxu0 %v654
        %v942 = vpop.f32.mrb[0].mxu0
        %v943 = vadd.f32 0.0, %v942
        %v944 = vpop.f32.mrb[0].mxu0
        %v945 = vadd.f32 0.0, %v944
        %946 = vmatprep.mubr.f32.mxu0 0.0
        %947 = vmatmul.mubr.f32.gmra.mrb[0].mxu0 %v657
        %v948 = vpop.f32.mrb[0].mxu0
        %v949 = vadd.f32 0.0, %v948
        %v950 = vpop.f32.mrb[0].mxu0
        %v951 = vadd.f32 0.0, %v950
        %952 = vdwg.mxu0
        %v953 = vadd.f32 %v827, %v931
        %v954 = vadd.f32 %v829, %v933
        %v955 = vadd.f32 %v833, %v937
        %v956 = vadd.f32 %v835, %v939
        %v957 = vadd.f32 %v839, %v943
        %v958 = vadd.f32 %v841, %v945
        %v959 = vadd.f32 %v845, %v949
        %v960 = vadd.f32 %v847, %v951
        %s961 = scalar_lea.vmem %s2, 192
        %v962 = vld [vmem:[%s961] sm:$0xff]
        %v963 = vld [vmem:[%s961 + $0x8] sm:$0xff]
        %v964 = vld [vmem:[%s961 + $0x10] sm:$0xff]
        %v965 = vld [vmem:[%s961 + $0x18] sm:$0xff]
        %v966 = vld [vmem:[%s961 + $0x20] sm:$0xff]
        %v967 = vld [vmem:[%s961 + $0x28] sm:$0xff]
        %v968 = vld [vmem:[%s961 + $0x30] sm:$0xf]
        %v969 = vld [vmem:[%s961 + $0x38] sm:$0xf]
        %v971 = vsel %vm540, %v968, 0
        %v974 = vsel %vm540, %v969, 0
        %976 = vmatprep.subr.mxu0 %v963
        %977 = vmatpush1.msra.mxu0 %v962
        %978 = vmatprep.subr.mxu0 %v965
        %979 = vmatpush1.msra.mxu0 %v964
        %980 = vmatprep.subr.mxu0 %v967
        %981 = vmatpush1.msra.mxu0 %v966
        %982 = vmatprep.subr.mxu0 %v974
        %983 = vmatpush1.msra.mxu0 %v971
        %984 = vmatprep.subr.mxu0 0.0
        %985 = vmatpush1.msra.mxu0 0.0
        %986 = vmatprep.subr.mxu0 0.0
        %987 = vmatpush1.msra.mxu0 0.0
        %988 = vmatprep.subr.mxu0 0.0
        %989 = vmatpush1.msra.mxu0 0.0
        %990 = vmatprep.subr.mxu0 0.0
        %991 = vmatpush1.msra.mxu0 0.0
        %992 = vmatprep.subr.mxu0 0.0
        %993 = vmatpush1.msra.mxu0 0.0
        %994 = vmatprep.subr.mxu0 0.0
        %995 = vmatpush1.msra.mxu0 0.0
        %996 = vmatprep.subr.mxu0 0.0
        %997 = vmatpush1.msra.mxu0 0.0
        %998 = vmatprep.subr.mxu0 0.0
        %999 = vmatpush1.msra.mxu0 0.0
        %1000 = vmatprep.subr.mxu0 0.0
        %1001 = vmatpush1.msra.mxu0 0.0
        %1002 = vmatprep.subr.mxu0 0.0
        %1003 = vmatpush1.msra.mxu0 0.0
        %1004 = vmatprep.subr.mxu0 0.0
        %1005 = vmatpush1.msra.mxu0 0.0
        %1006 = vmatprep.subr.mxu0 0.0
        %1007 = vmatpush1.msra.mxu0 0.0
        %1008 = vmatprep.subr.mxu0 0.0
        %1009 = vmatpush1.msra.mxu0 0.0
        %1010 = vmatprep.subr.mxu0 0.0
        %1011 = vmatpush1.msra.mxu0 0.0
        %1012 = vmatprep.subr.mxu0 0.0
        %1013 = vmatpush1.msra.mxu0 0.0
        %1014 = vmatprep.subr.mxu0 0.0
        %1015 = vmatpush1.msra.mxu0 0.0
        %1016 = vmatprep.subr.mxu0 0.0
        %1017 = vmatpush1.msra.mxu0 0.0
        %1018 = vmatprep.subr.mxu0 0.0
        %1019 = vmatpush1.msra.mxu0 0.0
        %1020 = vmatprep.subr.mxu0 0.0
        %1021 = vmatpush1.msra.mxu0 0.0
        %1022 = vmatprep.subr.mxu0 0.0
        %1023 = vmatpush1.msra.mxu0 0.0
        %1024 = vmatprep.subr.mxu0 0.0
        %1025 = vmatpush1.msra.mxu0 0.0
        %1026 = vmatprep.subr.mxu0 0.0
        %1027 = vmatpush1.msra.mxu0 0.0
        %1028 = vmatprep.subr.mxu0 0.0
        %1029 = vmatpush1.msra.mxu0 0.0
        %1030 = vmatprep.subr.mxu0 0.0
        %1031 = vmatpush1.msra.mxu0 0.0
        %1032 = vmatprep.subr.mxu0 0.0
        %1033 = vmatpush1.msra.mxu0 0.0
        %1034 = vmatprep.subr.mxu0 0.0
        %1035 = vmatpush1.msra.mxu0 0.0
        %1036 = vmatprep.subr.mxu0 0.0
        %1037 = vmatpush1.msra.mxu0 0.0
        %1038 = vmatprep.subr.mxu0 0.0
        %1039 = vmatpush1.msra.mxu0 0.0
        %1040 = vmatprep.mubr.f32.mxu0 0.0
        %1041 = vmatmul.mubr.f32.gmra.mrb[0].mxu0 %v648
        %v1042 = vpop.f32.mrb[0].mxu0
        %v1043 = vadd.f32 0.0, %v1042
        %v1044 = vpop.f32.mrb[0].mxu0
        %v1045 = vadd.f32 0.0, %v1044
        %1046 = vmatprep.mubr.f32.mxu0 0.0
        %1047 = vmatmul.mubr.f32.gmra.mrb[0].mxu0 %v651
        %v1048 = vpop.f32.mrb[0].mxu0
        %v1049 = vadd.f32 0.0, %v1048
        %v1050 = vpop.f32.mrb[0].mxu0
        %v1051 = vadd.f32 0.0, %v1050
        %1052 = vmatprep.mubr.f32.mxu0 0.0
        %1053 = vmatmul.mubr.f32.gmra.mrb[0].mxu0 %v654
        %v1054 = vpop.f32.mrb[0].mxu0
        %v1055 = vadd.f32 0.0, %v1054
        %v1056 = vpop.f32.mrb[0].mxu0
        %v1057 = vadd.f32 0.0, %v1056
        %1058 = vmatprep.mubr.f32.mxu0 0.0
        %1059 = vmatmul.mubr.f32.gmra.mrb[0].mxu0 %v657
        %v1060 = vpop.f32.mrb[0].mxu0
        %v1061 = vadd.f32 0.0, %v1060
        %v1062 = vpop.f32.mrb[0].mxu0
        %v1063 = vadd.f32 0.0, %v1062
        %1064 = vdwg.mxu0
        %v1065 = vadd.f32 %v953, %v1043
        %v1066 = vadd.f32 %v954, %v1045
        %v1067 = vadd.f32 %v955, %v1049
        %v1068 = vadd.f32 %v956, %v1051
        %v1069 = vadd.f32 %v957, %v1055
        %v1070 = vadd.f32 %v958, %v1057
        %v1071 = vadd.f32 %v959, %v1061
        %v1072 = vadd.f32 %v960, %v1063
        %s1073 = scalar_lea.vmem %s2, 256
        %v1074 = vld [vmem:[%s1073] sm:$0xff]
        %v1075 = vld [vmem:[%s1073 + $0x8] sm:$0xff]
        %v1076 = vld [vmem:[%s1073 + $0x10] sm:$0xff]
        %v1077 = vld [vmem:[%s1073 + $0x18] sm:$0xff]
        %v1078 = vld [vmem:[%s1073 + $0x20] sm:$0xff]
        %v1079 = vld [vmem:[%s1073 + $0x28] sm:$0xff]
        %v1080 = vld [vmem:[%s1073 + $0x30] sm:$0xf]
        %v1081 = vld [vmem:[%s1073 + $0x38] sm:$0xf]
        %v1083 = vsel %vm540, %v1080, 0
        %v1086 = vsel %vm540, %v1081, 0
        %1088 = vmatprep.subr.mxu0 %v1075
        %1089 = vmatpush1.msra.mxu0 %v1074
        %1090 = vmatprep.subr.mxu0 %v1077
        %1091 = vmatpush1.msra.mxu0 %v1076
        %1092 = vmatprep.subr.mxu0 %v1079
        %1093 = vmatpush1.msra.mxu0 %v1078
        %1094 = vmatprep.subr.mxu0 %v1086
        %1095 = vmatpush1.msra.mxu0 %v1083
        %1096 = vmatprep.subr.mxu0 0.0
        %1097 = vmatpush1.msra.mxu0 0.0
        %1098 = vmatprep.subr.mxu0 0.0
        %1099 = vmatpush1.msra.mxu0 0.0
        %1100 = vmatprep.subr.mxu0 0.0
        %1101 = vmatpush1.msra.mxu0 0.0
        %1102 = vmatprep.subr.mxu0 0.0
        %1103 = vmatpush1.msra.mxu0 0.0
        %1104 = vmatprep.subr.mxu0 0.0
        %1105 = vmatpush1.msra.mxu0 0.0
        %1106 = vmatprep.subr.mxu0 0.0
        %1107 = vmatpush1.msra.mxu0 0.0
        %1108 = vmatprep.subr.mxu0 0.0
        %1109 = vmatpush1.msra.mxu0 0.0
        %1110 = vmatprep.subr.mxu0 0.0
        %1111 = vmatpush1.msra.mxu0 0.0
        %1112 = vmatprep.subr.mxu0 0.0
        %1113 = vmatpush1.msra.mxu0 0.0
        %1114 = vmatprep.subr.mxu0 0.0
        %1115 = vmatpush1.msra.mxu0 0.0
        %1116 = vmatprep.subr.mxu0 0.0
        %1117 = vmatpush1.msra.mxu0 0.0
        %1118 = vmatprep.subr.mxu0 0.0
        %1119 = vmatpush1.msra.mxu0 0.0
        %1120 = vmatprep.subr.mxu0 0.0
        %1121 = vmatpush1.msra.mxu0 0.0
        %1122 = vmatprep.subr.mxu0 0.0
        %1123 = vmatpush1.msra.mxu0 0.0
        %1124 = vmatprep.subr.mxu0 0.0
        %1125 = vmatpush1.msra.mxu0 0.0
        %1126 = vmatprep.subr.mxu0 0.0
        %1127 = vmatpush1.msra.mxu0 0.0
        %1128 = vmatprep.subr.mxu0 0.0
        %1129 = vmatpush1.msra.mxu0 0.0
        %1130 = vmatprep.subr.mxu0 0.0
        %1131 = vmatpush1.msra.mxu0 0.0
        %1132 = vmatprep.subr.mxu0 0.0
        %1133 = vmatpush1.msra.mxu0 0.0
        %1134 = vmatprep.subr.mxu0 0.0
        %1135 = vmatpush1.msra.mxu0 0.0
        %1136 = vmatprep.subr.mxu0 0.0
        %1137 = vmatpush1.msra.mxu0 0.0
        %1138 = vmatprep.subr.mxu0 0.0
        %1139 = vmatpush1.msra.mxu0 0.0
        %1140 = vmatprep.subr.mxu0 0.0
        %1141 = vmatpush1.msra.mxu0 0.0
        %1142 = vmatprep.subr.mxu0 0.0
        %1143 = vmatpush1.msra.mxu0 0.0
        %1144 = vmatprep.subr.mxu0 0.0
        %1145 = vmatpush1.msra.mxu0 0.0
        %1146 = vmatprep.subr.mxu0 0.0
        %1147 = vmatpush1.msra.mxu0 0.0
        %1148 = vmatprep.subr.mxu0 0.0
        %1149 = vmatpush1.msra.mxu0 0.0
        %1150 = vmatprep.subr.mxu0 0.0
        %1151 = vmatpush1.msra.mxu0 0.0
        %1152 = vmatprep.mubr.f32.mxu0 0.0
        %1153 = vmatmul.mubr.f32.gmra.mrb[0].mxu0 %v648
        %v1154 = vpop.f32.mrb[0].mxu0
        %v1155 = vadd.f32 0.0, %v1154
        %v1156 = vpop.f32.mrb[0].mxu0
        %v1157 = vadd.f32 0.0, %v1156
        %1158 = vmatprep.mubr.f32.mxu0 0.0
        %1159 = vmatmul.mubr.f32.gmra.mrb[0].mxu0 %v651
        %v1160 = vpop.f32.mrb[0].mxu0
        %v1161 = vadd.f32 0.0, %v1160
        %v1162 = vpop.f32.mrb[0].mxu0
        %v1163 = vadd.f32 0.0, %v1162
        %1164 = vmatprep.mubr.f32.mxu0 0.0
        %1165 = vmatmul.mubr.f32.gmra.mrb[0].mxu0 %v654
        %v1166 = vpop.f32.mrb[0].mxu0
        %v1167 = vadd.f32 0.0, %v1166
        %v1168 = vpop.f32.mrb[0].mxu0
        %v1169 = vadd.f32 0.0, %v1168
        %1170 = vmatprep.mubr.f32.mxu0 0.0
        %1171 = vmatmul.mubr.f32.gmra.mrb[0].mxu0 %v657
        %v1172 = vpop.f32.mrb[0].mxu0
        %v1173 = vadd.f32 0.0, %v1172
        %v1174 = vpop.f32.mrb[0].mxu0
        %v1175 = vadd.f32 0.0, %v1174
        %1176 = vdwg.mxu0
        %v1177 = vadd.f32 %v1065, %v1155
        %v1178 = vadd.f32 %v1066, %v1157
        %v1179 = vadd.f32 %v1067, %v1161
        %v1180 = vadd.f32 %v1068, %v1163
        %v1181 = vadd.f32 %v1069, %v1167
        %v1182 = vadd.f32 %v1070, %v1169
        %v1183 = vadd.f32 %v1071, %v1173
        %v1184 = vadd.f32 %v1072, %v1175
        %s1185 = scalar_lea.vmem %s2, 320
        %v1186 = vld [vmem:[%s1185] sm:$0xff]
        %v1187 = vld [vmem:[%s1185 + $0x8] sm:$0xff]
        %v1188 = vld [vmem:[%s1185 + $0x10] sm:$0xff]
        %v1189 = vld [vmem:[%s1185 + $0x18] sm:$0xff]
        %v1190 = vld [vmem:[%s1185 + $0x20] sm:$0xff]
        %v1191 = vld [vmem:[%s1185 + $0x28] sm:$0xff]
        %v1192 = vld [vmem:[%s1185 + $0x30] sm:$0xf]
        %v1193 = vld [vmem:[%s1185 + $0x38] sm:$0xf]
        %vm1194 = vcmask 1046528
        %v1195 = vrot.slane %v611, 1
        %v1196 = vrot.slane %v616, 1
        %v1197 = vsel %vm1194, %v1195, %v1196
        %v1198 = vrot.slane %v621, 1
        %v1199 = vsel %vm1194, %v1196, %v1198
        %v1200 = vrot.slane %v626, 1
        %v1201 = vsel %vm1194, %v1198, %v1200
        %v1202 = vsel %vm527, %v1197, 0
        %v1204 = vsel %vm527, %v1199, 0
        %v1206 = vsel %vm527, %v1201, 0
        %v1208 = vsel %vm527, %v1200, 0
        %v1211 = vsel %vm540, %v1192, 0
        %v1214 = vsel %vm540, %v1193, 0
        %1216 = vmatprep.subr.mxu0 %v1187
        %1217 = vmatpush1.msra.mxu0 %v1186
        %1218 = vmatprep.subr.mxu0 %v1189
        %1219 = vmatpush1.msra.mxu0 %v1188
        %1220 = vmatprep.subr.mxu0 %v1191
        %1221 = vmatpush1.msra.mxu0 %v1190
        %1222 = vmatprep.subr.mxu0 %v1214
        %1223 = vmatpush1.msra.mxu0 %v1211
        %1224 = vmatprep.subr.mxu0 0.0
        %1225 = vmatpush1.msra.mxu0 0.0
        %1226 = vmatprep.subr.mxu0 0.0
        %1227 = vmatpush1.msra.mxu0 0.0
        %1228 = vmatprep.subr.mxu0 0.0
        %1229 = vmatpush1.msra.mxu0 0.0
        %1230 = vmatprep.subr.mxu0 0.0
        %1231 = vmatpush1.msra.mxu0 0.0
        %1232 = vmatprep.subr.mxu0 0.0
        %1233 = vmatpush1.msra.mxu0 0.0
        %1234 = vmatprep.subr.mxu0 0.0
        %1235 = vmatpush1.msra.mxu0 0.0
        %1236 = vmatprep.subr.mxu0 0.0
        %1237 = vmatpush1.msra.mxu0 0.0
        %1238 = vmatprep.subr.mxu0 0.0
        %1239 = vmatpush1.msra.mxu0 0.0
        %1240 = vmatprep.subr.mxu0 0.0
        %1241 = vmatpush1.msra.mxu0 0.0
        %1242 = vmatprep.subr.mxu0 0.0
        %1243 = vmatpush1.msra.mxu0 0.0
        %1244 = vmatprep.subr.mxu0 0.0
        %1245 = vmatpush1.msra.mxu0 0.0
        %1246 = vmatprep.subr.mxu0 0.0
        %1247 = vmatpush1.msra.mxu0 0.0
        %1248 = vmatprep.subr.mxu0 0.0
        %1249 = vmatpush1.msra.mxu0 0.0
        %1250 = vmatprep.subr.mxu0 0.0
        %1251 = vmatpush1.msra.mxu0 0.0
        %1252 = vmatprep.subr.mxu0 0.0
        %1253 = vmatpush1.msra.mxu0 0.0
        %1254 = vmatprep.subr.mxu0 0.0
        %1255 = vmatpush1.msra.mxu0 0.0
        %1256 = vmatprep.subr.mxu0 0.0
        %1257 = vmatpush1.msra.mxu0 0.0
        %1258 = vmatprep.subr.mxu0 0.0
        %1259 = vmatpush1.msra.mxu0 0.0
        %1260 = vmatprep.subr.mxu0 0.0
        %1261 = vmatpush1.msra.mxu0 0.0
        %1262 = vmatprep.subr.mxu0 0.0
        %1263 = vmatpush1.msra.mxu0 0.0
        %1264 = vmatprep.subr.mxu0 0.0
        %1265 = vmatpush1.msra.mxu0 0.0
        %1266 = vmatprep.subr.mxu0 0.0
        %1267 = vmatpush1.msra.mxu0 0.0
        %1268 = vmatprep.subr.mxu0 0.0
        %1269 = vmatpush1.msra.mxu0 0.0
        %1270 = vmatprep.subr.mxu0 0.0
        %1271 = vmatpush1.msra.mxu0 0.0
        %1272 = vmatprep.subr.mxu0 0.0
        %1273 = vmatpush1.msra.mxu0 0.0
        %1274 = vmatprep.subr.mxu0 0.0
        %1275 = vmatpush1.msra.mxu0 0.0
        %1276 = vmatprep.subr.mxu0 0.0
        %1277 = vmatpush1.msra.mxu0 0.0
        %1278 = vmatprep.subr.mxu0 0.0
        %1279 = vmatpush1.msra.mxu0 0.0
        %1280 = vmatprep.mubr.f32.mxu0 0.0
        %1281 = vmatmul.mubr.f32.gmra.mrb[0].mxu0 %v1202
        %v1282 = vpop.f32.mrb[0].mxu0
        %v1283 = vadd.f32 0.0, %v1282
        %v1284 = vpop.f32.mrb[0].mxu0
        %v1285 = vadd.f32 0.0, %v1284
        %1286 = vmatprep.mubr.f32.mxu0 0.0
        %1287 = vmatmul.mubr.f32.gmra.mrb[0].mxu0 %v1204
        %v1288 = vpop.f32.mrb[0].mxu0
        %v1289 = vadd.f32 0.0, %v1288
        %v1290 = vpop.f32.mrb[0].mxu0
        %v1291 = vadd.f32 0.0, %v1290
        %1292 = vmatprep.mubr.f32.mxu0 0.0
        %1293 = vmatmul.mubr.f32.gmra.mrb[0].mxu0 %v1206
        %v1294 = vpop.f32.mrb[0].mxu0
        %v1295 = vadd.f32 0.0, %v1294
        %v1296 = vpop.f32.mrb[0].mxu0
        %v1297 = vadd.f32 0.0, %v1296
        %1298 = vmatprep.mubr.f32.mxu0 0.0
        %1299 = vmatmul.mubr.f32.gmra.mrb[0].mxu0 %v1208
        %v1300 = vpop.f32.mrb[0].mxu0
        %v1301 = vadd.f32 0.0, %v1300
        %v1302 = vpop.f32.mrb[0].mxu0
        %v1303 = vadd.f32 0.0, %v1302
        %1304 = vdwg.mxu0
        %v1305 = vadd.f32 %v1177, %v1283
        %v1306 = vadd.f32 %v1178, %v1285
        %v1307 = vadd.f32 %v1179, %v1289
        %v1308 = vadd.f32 %v1180, %v1291
        %v1309 = vadd.f32 %v1181, %v1295
        %v1310 = vadd.f32 %v1182, %v1297
        %v1311 = vadd.f32 %v1183, %v1301
        %v1312 = vadd.f32 %v1184, %v1303
        %s1313 = scalar_lea.vmem %s2, 384
        %v1314 = vld [vmem:[%s1313] sm:$0xff]
        %v1315 = vld [vmem:[%s1313 + $0x8] sm:$0xff]
        %v1316 = vld [vmem:[%s1313 + $0x10] sm:$0xff]
        %v1317 = vld [vmem:[%s1313 + $0x18] sm:$0xff]
        %v1318 = vld [vmem:[%s1313 + $0x20] sm:$0xff]
        %v1319 = vld [vmem:[%s1313 + $0x28] sm:$0xff]
        %v1320 = vld [vmem:[%s1313 + $0x30] sm:$0xf]
        %v1321 = vld [vmem:[%s1313 + $0x38] sm:$0xf]
        %v1323 = vsel %vm540, %v1320, 0
        %v1326 = vsel %vm540, %v1321, 0
        %1328 = vmatprep.subr.mxu0 %v1315
        %1329 = vmatpush1.msra.mxu0 %v1314
        %1330 = vmatprep.subr.mxu0 %v1317
        %1331 = vmatpush1.msra.mxu0 %v1316
        %1332 = vmatprep.subr.mxu0 %v1319
        %1333 = vmatpush1.msra.mxu0 %v1318
        %1334 = vmatprep.subr.mxu0 %v1326
        %1335 = vmatpush1.msra.mxu0 %v1323
        %1336 = vmatprep.subr.mxu0 0.0
        %1337 = vmatpush1.msra.mxu0 0.0
        %1338 = vmatprep.subr.mxu0 0.0
        %1339 = vmatpush1.msra.mxu0 0.0
        %1340 = vmatprep.subr.mxu0 0.0
        %1341 = vmatpush1.msra.mxu0 0.0
        %1342 = vmatprep.subr.mxu0 0.0
        %1343 = vmatpush1.msra.mxu0 0.0
        %1344 = vmatprep.subr.mxu0 0.0
        %1345 = vmatpush1.msra.mxu0 0.0
        %1346 = vmatprep.subr.mxu0 0.0
        %1347 = vmatpush1.msra.mxu0 0.0
        %1348 = vmatprep.subr.mxu0 0.0
        %1349 = vmatpush1.msra.mxu0 0.0
        %1350 = vmatprep.subr.mxu0 0.0
        %1351 = vmatpush1.msra.mxu0 0.0
        %1352 = vmatprep.subr.mxu0 0.0
        %1353 = vmatpush1.msra.mxu0 0.0
        %1354 = vmatprep.subr.mxu0 0.0
        %1355 = vmatpush1.msra.mxu0 0.0
        %1356 = vmatprep.subr.mxu0 0.0
        %1357 = vmatpush1.msra.mxu0 0.0
        %1358 = vmatprep.subr.mxu0 0.0
        %1359 = vmatpush1.msra.mxu0 0.0
        %1360 = vmatprep.subr.mxu0 0.0
        %1361 = vmatpush1.msra.mxu0 0.0
        %1362 = vmatprep.subr.mxu0 0.0
        %1363 = vmatpush1.msra.mxu0 0.0
        %1364 = vmatprep.subr.mxu0 0.0
        %1365 = vmatpush1.msra.mxu0 0.0
        %1366 = vmatprep.subr.mxu0 0.0
        %1367 = vmatpush1.msra.mxu0 0.0
        %1368 = vmatprep.subr.mxu0 0.0
        %1369 = vmatpush1.msra.mxu0 0.0
        %1370 = vmatprep.subr.mxu0 0.0
        %1371 = vmatpush1.msra.mxu0 0.0
        %1372 = vmatprep.subr.mxu0 0.0
        %1373 = vmatpush1.msra.mxu0 0.0
        %1374 = vmatprep.subr.mxu0 0.0
        %1375 = vmatpush1.msra.mxu0 0.0
        %1376 = vmatprep.subr.mxu0 0.0
        %1377 = vmatpush1.msra.mxu0 0.0
        %1378 = vmatprep.subr.mxu0 0.0
        %1379 = vmatpush1.msra.mxu0 0.0
        %1380 = vmatprep.subr.mxu0 0.0
        %1381 = vmatpush1.msra.mxu0 0.0
        %1382 = vmatprep.subr.mxu0 0.0
        %1383 = vmatpush1.msra.mxu0 0.0
        %1384 = vmatprep.subr.mxu0 0.0
        %1385 = vmatpush1.msra.mxu0 0.0
        %1386 = vmatprep.subr.mxu0 0.0
        %1387 = vmatpush1.msra.mxu0 0.0
        %1388 = vmatprep.subr.mxu0 0.0
        %1389 = vmatpush1.msra.mxu0 0.0
        %1390 = vmatprep.subr.mxu0 0.0
        %1391 = vmatpush1.msra.mxu0 0.0
        %1392 = vmatprep.mubr.f32.mxu0 0.0
        %1393 = vmatmul.mubr.f32.gmra.mrb[0].mxu0 %v1202
        %v1394 = vpop.f32.mrb[0].mxu0
        %v1395 = vadd.f32 0.0, %v1394
        %v1396 = vpop.f32.mrb[0].mxu0
        %v1397 = vadd.f32 0.0, %v1396
        %1398 = vmatprep.mubr.f32.mxu0 0.0
        %1399 = vmatmul.mubr.f32.gmra.mrb[0].mxu0 %v1204
        %v1400 = vpop.f32.mrb[0].mxu0
        %v1401 = vadd.f32 0.0, %v1400
        %v1402 = vpop.f32.mrb[0].mxu0
        %v1403 = vadd.f32 0.0, %v1402
        %1404 = vmatprep.mubr.f32.mxu0 0.0
        %1405 = vmatmul.mubr.f32.gmra.mrb[0].mxu0 %v1206
        %v1406 = vpop.f32.mrb[0].mxu0
        %v1407 = vadd.f32 0.0, %v1406
        %v1408 = vpop.f32.mrb[0].mxu0
        %v1409 = vadd.f32 0.0, %v1408
        %1410 = vmatprep.mubr.f32.mxu0 0.0
        %1411 = vmatmul.mubr.f32.gmra.mrb[0].mxu0 %v1208
        %v1412 = vpop.f32.mrb[0].mxu0
        %v1413 = vadd.f32 0.0, %v1412
        %v1414 = vpop.f32.mrb[0].mxu0
        %v1415 = vadd.f32 0.0, %v1414
        %1416 = vdwg.mxu0
        %v1417 = vadd.f32 %v1305, %v1395
        %v1418 = vadd.f32 %v1306, %v1397
        %v1419 = vadd.f32 %v1307, %v1401
        %v1420 = vadd.f32 %v1308, %v1403
        %v1421 = vadd.f32 %v1309, %v1407
        %v1422 = vadd.f32 %v1310, %v1409
        %v1423 = vadd.f32 %v1311, %v1413
        %v1424 = vadd.f32 %v1312, %v1415
        %s1425 = scalar_lea.vmem %s2, 448
        %v1426 = vld [vmem:[%s1425] sm:$0xff]
        %v1427 = vld [vmem:[%s1425 + $0x8] sm:$0xff]
        %v1428 = vld [vmem:[%s1425 + $0x10] sm:$0xff]
        %v1429 = vld [vmem:[%s1425 + $0x18] sm:$0xff]
        %v1430 = vld [vmem:[%s1425 + $0x20] sm:$0xff]
        %v1431 = vld [vmem:[%s1425 + $0x28] sm:$0xff]
        %v1432 = vld [vmem:[%s1425 + $0x30] sm:$0xf]
        %v1433 = vld [vmem:[%s1425 + $0x38] sm:$0xf]
        %v1435 = vsel %vm540, %v1432, 0
        %v1438 = vsel %vm540, %v1433, 0
        %1440 = vmatprep.subr.mxu0 %v1427
        %1441 = vmatpush1.msra.mxu0 %v1426
        %1442 = vmatprep.subr.mxu0 %v1429
        %1443 = vmatpush1.msra.mxu0 %v1428
        %1444 = vmatprep.subr.mxu0 %v1431
        %1445 = vmatpush1.msra.mxu0 %v1430
        %1446 = vmatprep.subr.mxu0 %v1438
        %1447 = vmatpush1.msra.mxu0 %v1435
        %1448 = vmatprep.subr.mxu0 0.0
        %1449 = vmatpush1.msra.mxu0 0.0
        %1450 = vmatprep.subr.mxu0 0.0
        %1451 = vmatpush1.msra.mxu0 0.0
        %1452 = vmatprep.subr.mxu0 0.0
        %1453 = vmatpush1.msra.mxu0 0.0
        %1454 = vmatprep.subr.mxu0 0.0
        %1455 = vmatpush1.msra.mxu0 0.0
        %1456 = vmatprep.subr.mxu0 0.0
        %1457 = vmatpush1.msra.mxu0 0.0
        %1458 = vmatprep.subr.mxu0 0.0
        %1459 = vmatpush1.msra.mxu0 0.0
        %1460 = vmatprep.subr.mxu0 0.0
        %1461 = vmatpush1.msra.mxu0 0.0
        %1462 = vmatprep.subr.mxu0 0.0
        %1463 = vmatpush1.msra.mxu0 0.0
        %1464 = vmatprep.subr.mxu0 0.0
        %1465 = vmatpush1.msra.mxu0 0.0
        %1466 = vmatprep.subr.mxu0 0.0
        %1467 = vmatpush1.msra.mxu0 0.0
        %1468 = vmatprep.subr.mxu0 0.0
        %1469 = vmatpush1.msra.mxu0 0.0
        %1470 = vmatprep.subr.mxu0 0.0
        %1471 = vmatpush1.msra.mxu0 0.0
        %1472 = vmatprep.subr.mxu0 0.0
        %1473 = vmatpush1.msra.mxu0 0.0
        %1474 = vmatprep.subr.mxu0 0.0
        %1475 = vmatpush1.msra.mxu0 0.0
        %1476 = vmatprep.subr.mxu0 0.0
        %1477 = vmatpush1.msra.mxu0 0.0
        %1478 = vmatprep.subr.mxu0 0.0
        %1479 = vmatpush1.msra.mxu0 0.0
        %1480 = vmatprep.subr.mxu0 0.0
        %1481 = vmatpush1.msra.mxu0 0.0
        %1482 = vmatprep.subr.mxu0 0.0
        %1483 = vmatpush1.msra.mxu0 0.0
        %1484 = vmatprep.subr.mxu0 0.0
        %1485 = vmatpush1.msra.mxu0 0.0
        %1486 = vmatprep.subr.mxu0 0.0
        %1487 = vmatpush1.msra.mxu0 0.0
        %1488 = vmatprep.subr.mxu0 0.0
        %1489 = vmatpush1.msra.mxu0 0.0
        %1490 = vmatprep.subr.mxu0 0.0
        %1491 = vmatpush1.msra.mxu0 0.0
        %1492 = vmatprep.subr.mxu0 0.0
        %1493 = vmatpush1.msra.mxu0 0.0
        %1494 = vmatprep.subr.mxu0 0.0
        %1495 = vmatpush1.msra.mxu0 0.0
        %1496 = vmatprep.subr.mxu0 0.0
        %1497 = vmatpush1.msra.mxu0 0.0
        %1498 = vmatprep.subr.mxu0 0.0
        %1499 = vmatpush1.msra.mxu0 0.0
        %1500 = vmatprep.subr.mxu0 0.0
        %1501 = vmatpush1.msra.mxu0 0.0
        %1502 = vmatprep.subr.mxu0 0.0
        %1503 = vmatpush1.msra.mxu0 0.0
        %1504 = vmatprep.mubr.f32.mxu0 0.0
        %1505 = vmatmul.mubr.f32.gmra.mrb[0].mxu0 %v1202
        %v1506 = vpop.f32.mrb[0].mxu0
        %v1507 = vadd.f32 0.0, %v1506
        %v1508 = vpop.f32.mrb[0].mxu0
        %v1509 = vadd.f32 0.0, %v1508
        %1510 = vmatprep.mubr.f32.mxu0 0.0
        %1511 = vmatmul.mubr.f32.gmra.mrb[0].mxu0 %v1204
        %v1512 = vpop.f32.mrb[0].mxu0
        %v1513 = vadd.f32 0.0, %v1512
        %v1514 = vpop.f32.mrb[0].mxu0
        %v1515 = vadd.f32 0.0, %v1514
        %1516 = vmatprep.mubr.f32.mxu0 0.0
        %1517 = vmatmul.mubr.f32.gmra.mrb[0].mxu0 %v1206
        %v1518 = vpop.f32.mrb[0].mxu0
        %v1519 = vadd.f32 0.0, %v1518
        %v1520 = vpop.f32.mrb[0].mxu0
        %v1521 = vadd.f32 0.0, %v1520
        %1522 = vmatprep.mubr.f32.mxu0 0.0
        %1523 = vmatmul.mubr.f32.gmra.mrb[0].mxu0 %v1208
        %v1524 = vpop.f32.mrb[0].mxu0
        %v1525 = vadd.f32 0.0, %v1524
        %v1526 = vpop.f32.mrb[0].mxu0
        %v1527 = vadd.f32 0.0, %v1526
        %1528 = vdwg.mxu0
        %v1529 = vadd.f32 %v1417, %v1507
        %v1530 = vadd.f32 %v1418, %v1509
        %v1531 = vadd.f32 %v1419, %v1513
        %v1532 = vadd.f32 %v1420, %v1515
        %v1533 = vadd.f32 %v1421, %v1519
        %v1534 = vadd.f32 %v1422, %v1521
        %v1535 = vadd.f32 %v1423, %v1525
        %v1536 = vadd.f32 %v1424, %v1527
        %s1537 = scalar_lea.vmem %s2, 512
        %v1538 = vld [vmem:[%s1537] sm:$0xff]
        %v1539 = vld [vmem:[%s1537 + $0x8] sm:$0xff]
        %v1540 = vld [vmem:[%s1537 + $0x10] sm:$0xff]
        %v1541 = vld [vmem:[%s1537 + $0x18] sm:$0xff]
        %v1542 = vld [vmem:[%s1537 + $0x20] sm:$0xff]
        %v1543 = vld [vmem:[%s1537 + $0x28] sm:$0xff]
        %v1544 = vld [vmem:[%s1537 + $0x30] sm:$0xf]
        %v1545 = vld [vmem:[%s1537 + $0x38] sm:$0xf]
        %v1547 = vsel %vm540, %v1544, 0
        %v1550 = vsel %vm540, %v1545, 0
        %1552 = vmatprep.subr.mxu0 %v1539
        %1553 = vmatpush1.msra.mxu0 %v1538
        %1554 = vmatprep.subr.mxu0 %v1541
        %1555 = vmatpush1.msra.mxu0 %v1540
        %1556 = vmatprep.subr.mxu0 %v1543
        %1557 = vmatpush1.msra.mxu0 %v1542
        %1558 = vmatprep.subr.mxu0 %v1550
        %1559 = vmatpush1.msra.mxu0 %v1547
        %1560 = vmatprep.subr.mxu0 0.0
        %1561 = vmatpush1.msra.mxu0 0.0
        %1562 = vmatprep.subr.mxu0 0.0
        %1563 = vmatpush1.msra.mxu0 0.0
        %1564 = vmatprep.subr.mxu0 0.0
        %1565 = vmatpush1.msra.mxu0 0.0
        %1566 = vmatprep.subr.mxu0 0.0
        %1567 = vmatpush1.msra.mxu0 0.0
        %1568 = vmatprep.subr.mxu0 0.0
        %1569 = vmatpush1.msra.mxu0 0.0
        %1570 = vmatprep.subr.mxu0 0.0
        %1571 = vmatpush1.msra.mxu0 0.0
        %1572 = vmatprep.subr.mxu0 0.0
        %1573 = vmatpush1.msra.mxu0 0.0
        %1574 = vmatprep.subr.mxu0 0.0
        %1575 = vmatpush1.msra.mxu0 0.0
        %1576 = vmatprep.subr.mxu0 0.0
        %1577 = vmatpush1.msra.mxu0 0.0
        %1578 = vmatprep.subr.mxu0 0.0
        %1579 = vmatpush1.msra.mxu0 0.0
        %1580 = vmatprep.subr.mxu0 0.0
        %1581 = vmatpush1.msra.mxu0 0.0
        %1582 = vmatprep.subr.mxu0 0.0
        %1583 = vmatpush1.msra.mxu0 0.0
        %1584 = vmatprep.subr.mxu0 0.0
        %1585 = vmatpush1.msra.mxu0 0.0
        %1586 = vmatprep.subr.mxu0 0.0
        %1587 = vmatpush1.msra.mxu0 0.0
        %1588 = vmatprep.subr.mxu0 0.0
        %1589 = vmatpush1.msra.mxu0 0.0
        %1590 = vmatprep.subr.mxu0 0.0
        %1591 = vmatpush1.msra.mxu0 0.0
        %1592 = vmatprep.subr.mxu0 0.0
        %1593 = vmatpush1.msra.mxu0 0.0
        %1594 = vmatprep.subr.mxu0 0.0
        %1595 = vmatpush1.msra.mxu0 0.0
        %1596 = vmatprep.subr.mxu0 0.0
        %1597 = vmatpush1.msra.mxu0 0.0
        %1598 = vmatprep.subr.mxu0 0.0
        %1599 = vmatpush1.msra.mxu0 0.0
        %1600 = vmatprep.subr.mxu0 0.0
        %1601 = vmatpush1.msra.mxu0 0.0
        %1602 = vmatprep.subr.mxu0 0.0
        %1603 = vmatpush1.msra.mxu0 0.0
        %1604 = vmatprep.subr.mxu0 0.0
        %1605 = vmatpush1.msra.mxu0 0.0
        %1606 = vmatprep.subr.mxu0 0.0
        %1607 = vmatpush1.msra.mxu0 0.0
        %1608 = vmatprep.subr.mxu0 0.0
        %1609 = vmatpush1.msra.mxu0 0.0
        %1610 = vmatprep.subr.mxu0 0.0
        %1611 = vmatpush1.msra.mxu0 0.0
        %1612 = vmatprep.subr.mxu0 0.0
        %1613 = vmatpush1.msra.mxu0 0.0
        %1614 = vmatprep.subr.mxu0 0.0
        %1615 = vmatpush1.msra.mxu0 0.0
        %1616 = vmatprep.mubr.f32.mxu0 0.0
        %1617 = vmatmul.mubr.f32.gmra.mrb[0].mxu0 %v1202
        %v1618 = vpop.f32.mrb[0].mxu0
        %v1619 = vadd.f32 0.0, %v1618
        %v1620 = vpop.f32.mrb[0].mxu0
        %v1621 = vadd.f32 0.0, %v1620
        %1622 = vmatprep.mubr.f32.mxu0 0.0
        %1623 = vmatmul.mubr.f32.gmra.mrb[0].mxu0 %v1204
        %v1624 = vpop.f32.mrb[0].mxu0
        %v1625 = vadd.f32 0.0, %v1624
        %v1626 = vpop.f32.mrb[0].mxu0
        %v1627 = vadd.f32 0.0, %v1626
        %1628 = vmatprep.mubr.f32.mxu0 0.0
        %1629 = vmatmul.mubr.f32.gmra.mrb[0].mxu0 %v1206
        %v1630 = vpop.f32.mrb[0].mxu0
        %v1631 = vadd.f32 0.0, %v1630
        %v1632 = vpop.f32.mrb[0].mxu0
        %v1633 = vadd.f32 0.0, %v1632
        %1634 = vmatprep.mubr.f32.mxu0 0.0
        %1635 = vmatmul.mubr.f32.gmra.mrb[0].mxu0 %v1208
        %v1636 = vpop.f32.mrb[0].mxu0
        %v1637 = vadd.f32 0.0, %v1636
        %v1638 = vpop.f32.mrb[0].mxu0
        %v1639 = vadd.f32 0.0, %v1638
        %1640 = vdwg.mxu0
        %v1641 = vadd.f32 %v1529, %v1619
        %v1642 = vadd.f32 %v1530, %v1621
        %v1643 = vadd.f32 %v1531, %v1625
        %v1644 = vadd.f32 %v1532, %v1627
        %v1645 = vadd.f32 %v1533, %v1631
        %v1646 = vadd.f32 %v1534, %v1633
        %v1647 = vadd.f32 %v1535, %v1637
        %v1648 = vadd.f32 %v1536, %v1639
        %s1649 = scalar_lea.vmem %s2, 576
        %v1650 = vld [vmem:[%s1649] sm:$0xff]
        %v1651 = vld [vmem:[%s1649 + $0x8] sm:$0xff]
        %v1652 = vld [vmem:[%s1649 + $0x10] sm:$0xff]
        %v1653 = vld [vmem:[%s1649 + $0x18] sm:$0xff]
        %v1654 = vld [vmem:[%s1649 + $0x20] sm:$0xff]
        %v1655 = vld [vmem:[%s1649 + $0x28] sm:$0xff]
        %v1656 = vld [vmem:[%s1649 + $0x30] sm:$0xf]
        %v1657 = vld [vmem:[%s1649 + $0x38] sm:$0xf]
        %v1659 = vsel %vm540, %v1656, 0
        %v1662 = vsel %vm540, %v1657, 0
        %1664 = vmatprep.subr.mxu0 %v1651
        %1665 = vmatpush1.msra.mxu0 %v1650
        %1666 = vmatprep.subr.mxu0 %v1653
        %1667 = vmatpush1.msra.mxu0 %v1652
        %1668 = vmatprep.subr.mxu0 %v1655
        %1669 = vmatpush1.msra.mxu0 %v1654
        %1670 = vmatprep.subr.mxu0 %v1662
        %1671 = vmatpush1.msra.mxu0 %v1659
        %1672 = vmatprep.subr.mxu0 0.0
        %1673 = vmatpush1.msra.mxu0 0.0
        %1674 = vmatprep.subr.mxu0 0.0
        %1675 = vmatpush1.msra.mxu0 0.0
        %1676 = vmatprep.subr.mxu0 0.0
        %1677 = vmatpush1.msra.mxu0 0.0
        %1678 = vmatprep.subr.mxu0 0.0
        %1679 = vmatpush1.msra.mxu0 0.0
        %1680 = vmatprep.subr.mxu0 0.0
        %1681 = vmatpush1.msra.mxu0 0.0
        %1682 = vmatprep.subr.mxu0 0.0
        %1683 = vmatpush1.msra.mxu0 0.0
        %1684 = vmatprep.subr.mxu0 0.0
        %1685 = vmatpush1.msra.mxu0 0.0
        %1686 = vmatprep.subr.mxu0 0.0
        %1687 = vmatpush1.msra.mxu0 0.0
        %1688 = vmatprep.subr.mxu0 0.0
        %1689 = vmatpush1.msra.mxu0 0.0
        %1690 = vmatprep.subr.mxu0 0.0
        %1691 = vmatpush1.msra.mxu0 0.0
        %1692 = vmatprep.subr.mxu0 0.0
        %1693 = vmatpush1.msra.mxu0 0.0
        %1694 = vmatprep.subr.mxu0 0.0
        %1695 = vmatpush1.msra.mxu0 0.0
        %1696 = vmatprep.subr.mxu0 0.0
        %1697 = vmatpush1.msra.mxu0 0.0
        %1698 = vmatprep.subr.mxu0 0.0
        %1699 = vmatpush1.msra.mxu0 0.0
        %1700 = vmatprep.subr.mxu0 0.0
        %1701 = vmatpush1.msra.mxu0 0.0
        %1702 = vmatprep.subr.mxu0 0.0
        %1703 = vmatpush1.msra.mxu0 0.0
        %1704 = vmatprep.subr.mxu0 0.0
        %1705 = vmatpush1.msra.mxu0 0.0
        %1706 = vmatprep.subr.mxu0 0.0
        %1707 = vmatpush1.msra.mxu0 0.0
        %1708 = vmatprep.subr.mxu0 0.0
        %1709 = vmatpush1.msra.mxu0 0.0
        %1710 = vmatprep.subr.mxu0 0.0
        %1711 = vmatpush1.msra.mxu0 0.0
        %1712 = vmatprep.subr.mxu0 0.0
        %1713 = vmatpush1.msra.mxu0 0.0
        %1714 = vmatprep.subr.mxu0 0.0
        %1715 = vmatpush1.msra.mxu0 0.0
        %1716 = vmatprep.subr.mxu0 0.0
        %1717 = vmatpush1.msra.mxu0 0.0
        %1718 = vmatprep.subr.mxu0 0.0
        %1719 = vmatpush1.msra.mxu0 0.0
        %1720 = vmatprep.subr.mxu0 0.0
        %1721 = vmatpush1.msra.mxu0 0.0
        %1722 = vmatprep.subr.mxu0 0.0
        %1723 = vmatpush1.msra.mxu0 0.0
        %1724 = vmatprep.subr.mxu0 0.0
        %1725 = vmatpush1.msra.mxu0 0.0
        %1726 = vmatprep.subr.mxu0 0.0
        %1727 = vmatpush1.msra.mxu0 0.0
        %1728 = vmatprep.mubr.f32.mxu0 0.0
        %1729 = vmatmul.mubr.f32.gmra.mrb[0].mxu0 %v1202
        %v1730 = vpop.f32.mrb[0].mxu0
        %v1731 = vadd.f32 0.0, %v1730
        %v1732 = vpop.f32.mrb[0].mxu0
        %v1733 = vadd.f32 0.0, %v1732
        %1734 = vmatprep.mubr.f32.mxu0 0.0
        %1735 = vmatmul.mubr.f32.gmra.mrb[0].mxu0 %v1204
        %v1736 = vpop.f32.mrb[0].mxu0
        %v1737 = vadd.f32 0.0, %v1736
        %v1738 = vpop.f32.mrb[0].mxu0
        %v1739 = vadd.f32 0.0, %v1738
        %1740 = vmatprep.mubr.f32.mxu0 0.0
        %1741 = vmatmul.mubr.f32.gmra.mrb[0].mxu0 %v1206
        %v1742 = vpop.f32.mrb[0].mxu0
        %v1743 = vadd.f32 0.0, %v1742
        %v1744 = vpop.f32.mrb[0].mxu0
        %v1745 = vadd.f32 0.0, %v1744
        %1746 = vmatprep.mubr.f32.mxu0 0.0
        %1747 = vmatmul.mubr.f32.gmra.mrb[0].mxu0 %v1208
        %v1748 = vpop.f32.mrb[0].mxu0
        %v1749 = vadd.f32 0.0, %v1748
        %v1750 = vpop.f32.mrb[0].mxu0
        %v1751 = vadd.f32 0.0, %v1750
        %1752 = vdwg.mxu0
        %v1753 = vadd.f32 %v1641, %v1731
        %v1754 = vadd.f32 %v1642, %v1733
        %v1755 = vadd.f32 %v1643, %v1737
        %v1756 = vadd.f32 %v1644, %v1739
        %v1757 = vadd.f32 %v1645, %v1743
        %v1758 = vadd.f32 %v1646, %v1745
        %v1759 = vadd.f32 %v1647, %v1749
        %v1760 = vadd.f32 %v1648, %v1751
        %s1761 = scalar_lea.vmem %s2, 640
        %v1762 = vld [vmem:[%s1761] sm:$0xff]
        %v1763 = vld [vmem:[%s1761 + $0x8] sm:$0xff]
        %v1764 = vld [vmem:[%s1761 + $0x10] sm:$0xff]
        %v1765 = vld [vmem:[%s1761 + $0x18] sm:$0xff]
        %v1766 = vld [vmem:[%s1761 + $0x20] sm:$0xff]
        %v1767 = vld [vmem:[%s1761 + $0x28] sm:$0xff]
        %v1768 = vld [vmem:[%s1761 + $0x30] sm:$0xf]
        %v1769 = vld [vmem:[%s1761 + $0x38] sm:$0xf]
        %vm1770 = vcmask 1045504
        %v1771 = vrot.slane %v611, 2
        %v1772 = vrot.slane %v616, 2
        %v1773 = vsel %vm1770, %v1771, %v1772
        %v1774 = vrot.slane %v621, 2
        %v1775 = vsel %vm1770, %v1772, %v1774
        %v1776 = vrot.slane %v626, 2
        %v1777 = vsel %vm1770, %v1774, %v1776
        %v1778 = vsel %vm527, %v1773, 0
        %v1780 = vsel %vm527, %v1775, 0
        %v1782 = vsel %vm527, %v1777, 0
        %v1784 = vsel %vm527, %v1776, 0
        %v1787 = vsel %vm540, %v1768, 0
        %v1790 = vsel %vm540, %v1769, 0
        %1792 = vmatprep.subr.mxu0 %v1763
        %1793 = vmatpush1.msra.mxu0 %v1762
        %1794 = vmatprep.subr.mxu0 %v1765
        %1795 = vmatpush1.msra.mxu0 %v1764
        %1796 = vmatprep.subr.mxu0 %v1767
        %1797 = vmatpush1.msra.mxu0 %v1766
        %1798 = vmatprep.subr.mxu0 %v1790
        %1799 = vmatpush1.msra.mxu0 %v1787
        %1800 = vmatprep.subr.mxu0 0.0
        %1801 = vmatpush1.msra.mxu0 0.0
        %1802 = vmatprep.subr.mxu0 0.0
        %1803 = vmatpush1.msra.mxu0 0.0
        %1804 = vmatprep.subr.mxu0 0.0
        %1805 = vmatpush1.msra.mxu0 0.0
        %1806 = vmatprep.subr.mxu0 0.0
        %1807 = vmatpush1.msra.mxu0 0.0
        %1808 = vmatprep.subr.mxu0 0.0
        %1809 = vmatpush1.msra.mxu0 0.0
        %1810 = vmatprep.subr.mxu0 0.0
        %1811 = vmatpush1.msra.mxu0 0.0
        %1812 = vmatprep.subr.mxu0 0.0
        %1813 = vmatpush1.msra.mxu0 0.0
        %1814 = vmatprep.subr.mxu0 0.0
        %1815 = vmatpush1.msra.mxu0 0.0
        %1816 = vmatprep.subr.mxu0 0.0
        %1817 = vmatpush1.msra.mxu0 0.0
        %1818 = vmatprep.subr.mxu0 0.0
        %1819 = vmatpush1.msra.mxu0 0.0
        %1820 = vmatprep.subr.mxu0 0.0
        %1821 = vmatpush1.msra.mxu0 0.0
        %1822 = vmatprep.subr.mxu0 0.0
        %1823 = vmatpush1.msra.mxu0 0.0
        %1824 = vmatprep.subr.mxu0 0.0
        %1825 = vmatpush1.msra.mxu0 0.0
        %1826 = vmatprep.subr.mxu0 0.0
        %1827 = vmatpush1.msra.mxu0 0.0
        %1828 = vmatprep.subr.mxu0 0.0
        %1829 = vmatpush1.msra.mxu0 0.0
        %1830 = vmatprep.subr.mxu0 0.0
        %1831 = vmatpush1.msra.mxu0 0.0
        %1832 = vmatprep.subr.mxu0 0.0
        %1833 = vmatpush1.msra.mxu0 0.0
        %1834 = vmatprep.subr.mxu0 0.0
        %1835 = vmatpush1.msra.mxu0 0.0
        %1836 = vmatprep.subr.mxu0 0.0
        %1837 = vmatpush1.msra.mxu0 0.0
        %1838 = vmatprep.subr.mxu0 0.0
        %1839 = vmatpush1.msra.mxu0 0.0
        %1840 = vmatprep.subr.mxu0 0.0
        %1841 = vmatpush1.msra.mxu0 0.0
        %1842 = vmatprep.subr.mxu0 0.0
        %1843 = vmatpush1.msra.mxu0 0.0
        %1844 = vmatprep.subr.mxu0 0.0
        %1845 = vmatpush1.msra.mxu0 0.0
        %1846 = vmatprep.subr.mxu0 0.0
        %1847 = vmatpush1.msra.mxu0 0.0
        %1848 = vmatprep.subr.mxu0 0.0
        %1849 = vmatpush1.msra.mxu0 0.0
        %1850 = vmatprep.subr.mxu0 0.0
        %1851 = vmatpush1.msra.mxu0 0.0
        %1852 = vmatprep.subr.mxu0 0.0
        %1853 = vmatpush1.msra.mxu0 0.0
        %1854 = vmatprep.subr.mxu0 0.0
        %1855 = vmatpush1.msra.mxu0 0.0
        %1856 = vmatprep.mubr.f32.mxu0 0.0
        %1857 = vmatmul.mubr.f32.gmra.mrb[0].mxu0 %v1778
        %v1858 = vpop.f32.mrb[0].mxu0
        %v1859 = vadd.f32 0.0, %v1858
        %v1860 = vpop.f32.mrb[0].mxu0
        %v1861 = vadd.f32 0.0, %v1860
        %1862 = vmatprep.mubr.f32.mxu0 0.0
        %1863 = vmatmul.mubr.f32.gmra.mrb[0].mxu0 %v1780
        %v1864 = vpop.f32.mrb[0].mxu0
        %v1865 = vadd.f32 0.0, %v1864
        %v1866 = vpop.f32.mrb[0].mxu0
        %v1867 = vadd.f32 0.0, %v1866
        %1868 = vmatprep.mubr.f32.mxu0 0.0
        %1869 = vmatmul.mubr.f32.gmra.mrb[0].mxu0 %v1782
        %v1870 = vpop.f32.mrb[0].mxu0
        %v1871 = vadd.f32 0.0, %v1870
        %v1872 = vpop.f32.mrb[0].mxu0
        %v1873 = vadd.f32 0.0, %v1872
        %1874 = vmatprep.mubr.f32.mxu0 0.0
        %1875 = vmatmul.mubr.f32.gmra.mrb[0].mxu0 %v1784
        %v1876 = vpop.f32.mrb[0].mxu0
        %v1877 = vadd.f32 0.0, %v1876
        %v1878 = vpop.f32.mrb[0].mxu0
        %v1879 = vadd.f32 0.0, %v1878
        %1880 = vdwg.mxu0
        %v1881 = vadd.f32 %v1753, %v1859
        %v1882 = vadd.f32 %v1754, %v1861
        %v1883 = vadd.f32 %v1755, %v1865
        %v1884 = vadd.f32 %v1756, %v1867
        %v1885 = vadd.f32 %v1757, %v1871
        %v1886 = vadd.f32 %v1758, %v1873
        %v1887 = vadd.f32 %v1759, %v1877
        %v1888 = vadd.f32 %v1760, %v1879
        %s1889 = scalar_lea.vmem %s2, 704
        %v1890 = vld [vmem:[%s1889] sm:$0xff]
        %v1891 = vld [vmem:[%s1889 + $0x8] sm:$0xff]
        %v1892 = vld [vmem:[%s1889 + $0x10] sm:$0xff]
        %v1893 = vld [vmem:[%s1889 + $0x18] sm:$0xff]
        %v1894 = vld [vmem:[%s1889 + $0x20] sm:$0xff]
        %v1895 = vld [vmem:[%s1889 + $0x28] sm:$0xff]
        %v1896 = vld [vmem:[%s1889 + $0x30] sm:$0xf]
        %v1897 = vld [vmem:[%s1889 + $0x38] sm:$0xf]
        %v1899 = vsel %vm540, %v1896, 0
        %v1902 = vsel %vm540, %v1897, 0
        %1904 = vmatprep.subr.mxu0 %v1891
        %1905 = vmatpush1.msra.mxu0 %v1890
        %1906 = vmatprep.subr.mxu0 %v1893
        %1907 = vmatpush1.msra.mxu0 %v1892
        %1908 = vmatprep.subr.mxu0 %v1895
        %1909 = vmatpush1.msra.mxu0 %v1894
        %1910 = vmatprep.subr.mxu0 %v1902
        %1911 = vmatpush1.msra.mxu0 %v1899
        %1912 = vmatprep.subr.mxu0 0.0
        %1913 = vmatpush1.msra.mxu0 0.0
        %1914 = vmatprep.subr.mxu0 0.0
        %1915 = vmatpush1.msra.mxu0 0.0
        %1916 = vmatprep.subr.mxu0 0.0
        %1917 = vmatpush1.msra.mxu0 0.0
        %1918 = vmatprep.subr.mxu0 0.0
        %1919 = vmatpush1.msra.mxu0 0.0
        %1920 = vmatprep.subr.mxu0 0.0
        %1921 = vmatpush1.msra.mxu0 0.0
        %1922 = vmatprep.subr.mxu0 0.0
        %1923 = vmatpush1.msra.mxu0 0.0
        %1924 = vmatprep.subr.mxu0 0.0
        %1925 = vmatpush1.msra.mxu0 0.0
        %1926 = vmatprep.subr.mxu0 0.0
        %1927 = vmatpush1.msra.mxu0 0.0
        %1928 = vmatprep.subr.mxu0 0.0
        %1929 = vmatpush1.msra.mxu0 0.0
        %1930 = vmatprep.subr.mxu0 0.0
        %1931 = vmatpush1.msra.mxu0 0.0
        %1932 = vmatprep.subr.mxu0 0.0
        %1933 = vmatpush1.msra.mxu0 0.0
        %1934 = vmatprep.subr.mxu0 0.0
        %1935 = vmatpush1.msra.mxu0 0.0
        %1936 = vmatprep.subr.mxu0 0.0
        %1937 = vmatpush1.msra.mxu0 0.0
        %1938 = vmatprep.subr.mxu0 0.0
        %1939 = vmatpush1.msra.mxu0 0.0
        %1940 = vmatprep.subr.mxu0 0.0
        %1941 = vmatpush1.msra.mxu0 0.0
        %1942 = vmatprep.subr.mxu0 0.0
        %1943 = vmatpush1.msra.mxu0 0.0
        %1944 = vmatprep.subr.mxu0 0.0
        %1945 = vmatpush1.msra.mxu0 0.0
        %1946 = vmatprep.subr.mxu0 0.0
        %1947 = vmatpush1.msra.mxu0 0.0
        %1948 = vmatprep.subr.mxu0 0.0
        %1949 = vmatpush1.msra.mxu0 0.0
        %1950 = vmatprep.subr.mxu0 0.0
        %1951 = vmatpush1.msra.mxu0 0.0
        %1952 = vmatprep.subr.mxu0 0.0
        %1953 = vmatpush1.msra.mxu0 0.0
        %1954 = vmatprep.subr.mxu0 0.0
        %1955 = vmatpush1.msra.mxu0 0.0
        %1956 = vmatprep.subr.mxu0 0.0
        %1957 = vmatpush1.msra.mxu0 0.0
        %1958 = vmatprep.subr.mxu0 0.0
        %1959 = vmatpush1.msra.mxu0 0.0
        %1960 = vmatprep.subr.mxu0 0.0
        %1961 = vmatpush1.msra.mxu0 0.0
        %1962 = vmatprep.subr.mxu0 0.0
        %1963 = vmatpush1.msra.mxu0 0.0
        %1964 = vmatprep.subr.mxu0 0.0
        %1965 = vmatpush1.msra.mxu0 0.0
        %1966 = vmatprep.subr.mxu0 0.0
        %1967 = vmatpush1.msra.mxu0 0.0
        %1968 = vmatprep.mubr.f32.mxu0 0.0
        %1969 = vmatmul.mubr.f32.gmra.mrb[0].mxu0 %v1778
        %v1970 = vpop.f32.mrb[0].mxu0
        %v1971 = vadd.f32 0.0, %v1970
        %v1972 = vpop.f32.mrb[0].mxu0
        %v1973 = vadd.f32 0.0, %v1972
        %1974 = vmatprep.mubr.f32.mxu0 0.0
        %1975 = vmatmul.mubr.f32.gmra.mrb[0].mxu0 %v1780
        %v1976 = vpop.f32.mrb[0].mxu0
        %v1977 = vadd.f32 0.0, %v1976
        %v1978 = vpop.f32.mrb[0].mxu0
        %v1979 = vadd.f32 0.0, %v1978
        %1980 = vmatprep.mubr.f32.mxu0 0.0
        %1981 = vmatmul.mubr.f32.gmra.mrb[0].mxu0 %v1782
        %v1982 = vpop.f32.mrb[0].mxu0
        %v1983 = vadd.f32 0.0, %v1982
        %v1984 = vpop.f32.mrb[0].mxu0
        %v1985 = vadd.f32 0.0, %v1984
        %1986 = vmatprep.mubr.f32.mxu0 0.0
        %1987 = vmatmul.mubr.f32.gmra.mrb[0].mxu0 %v1784
        %v1988 = vpop.f32.mrb[0].mxu0
        %v1989 = vadd.f32 0.0, %v1988
        %v1990 = vpop.f32.mrb[0].mxu0
        %v1991 = vadd.f32 0.0, %v1990
        %1992 = vdwg.mxu0
        %v1993 = vadd.f32 %v1881, %v1971
        %v1994 = vadd.f32 %v1882, %v1973
        %v1995 = vadd.f32 %v1883, %v1977
        %v1996 = vadd.f32 %v1884, %v1979
        %v1997 = vadd.f32 %v1885, %v1983
        %v1998 = vadd.f32 %v1886, %v1985
        %v1999 = vadd.f32 %v1887, %v1989
        %v2000 = vadd.f32 %v1888, %v1991
        %s2001 = scalar_lea.vmem %s2, 768
        %v2002 = vld [vmem:[%s2001] sm:$0xff]
        %v2003 = vld [vmem:[%s2001 + $0x8] sm:$0xff]
        %v2004 = vld [vmem:[%s2001 + $0x10] sm:$0xff]
        %v2005 = vld [vmem:[%s2001 + $0x18] sm:$0xff]
        %v2006 = vld [vmem:[%s2001 + $0x20] sm:$0xff]
        %v2007 = vld [vmem:[%s2001 + $0x28] sm:$0xff]
        %v2008 = vld [vmem:[%s2001 + $0x30] sm:$0xf]
        %v2009 = vld [vmem:[%s2001 + $0x38] sm:$0xf]
        %v2011 = vsel %vm540, %v2008, 0
        %v2014 = vsel %vm540, %v2009, 0
        %2016 = vmatprep.subr.mxu0 %v2003
        %2017 = vmatpush1.msra.mxu0 %v2002
        %2018 = vmatprep.subr.mxu0 %v2005
        %2019 = vmatpush1.msra.mxu0 %v2004
        %2020 = vmatprep.subr.mxu0 %v2007
        %2021 = vmatpush1.msra.mxu0 %v2006
        %2022 = vmatprep.subr.mxu0 %v2014
        %2023 = vmatpush1.msra.mxu0 %v2011
        %2024 = vmatprep.subr.mxu0 0.0
        %2025 = vmatpush1.msra.mxu0 0.0
        %2026 = vmatprep.subr.mxu0 0.0
        %2027 = vmatpush1.msra.mxu0 0.0
        %2028 = vmatprep.subr.mxu0 0.0
        %2029 = vmatpush1.msra.mxu0 0.0
        %2030 = vmatprep.subr.mxu0 0.0
        %2031 = vmatpush1.msra.mxu0 0.0
        %2032 = vmatprep.subr.mxu0 0.0
        %2033 = vmatpush1.msra.mxu0 0.0
        %2034 = vmatprep.subr.mxu0 0.0
        %2035 = vmatpush1.msra.mxu0 0.0
        %2036 = vmatprep.subr.mxu0 0.0
        %2037 = vmatpush1.msra.mxu0 0.0
        %2038 = vmatprep.subr.mxu0 0.0
        %2039 = vmatpush1.msra.mxu0 0.0
        %2040 = vmatprep.subr.mxu0 0.0
        %2041 = vmatpush1.msra.mxu0 0.0
        %2042 = vmatprep.subr.mxu0 0.0
        %2043 = vmatpush1.msra.mxu0 0.0
        %2044 = vmatprep.subr.mxu0 0.0
        %2045 = vmatpush1.msra.mxu0 0.0
        %2046 = vmatprep.subr.mxu0 0.0
        %2047 = vmatpush1.msra.mxu0 0.0
        %2048 = vmatprep.subr.mxu0 0.0
        %2049 = vmatpush1.msra.mxu0 0.0
        %2050 = vmatprep.subr.mxu0 0.0
        %2051 = vmatpush1.msra.mxu0 0.0
        %2052 = vmatprep.subr.mxu0 0.0
        %2053 = vmatpush1.msra.mxu0 0.0
        %2054 = vmatprep.subr.mxu0 0.0
        %2055 = vmatpush1.msra.mxu0 0.0
        %2056 = vmatprep.subr.mxu0 0.0
        %2057 = vmatpush1.msra.mxu0 0.0
        %2058 = vmatprep.subr.mxu0 0.0
        %2059 = vmatpush1.msra.mxu0 0.0
        %2060 = vmatprep.subr.mxu0 0.0
        %2061 = vmatpush1.msra.mxu0 0.0
        %2062 = vmatprep.subr.mxu0 0.0
        %2063 = vmatpush1.msra.mxu0 0.0
        %2064 = vmatprep.subr.mxu0 0.0
        %2065 = vmatpush1.msra.mxu0 0.0
        %2066 = vmatprep.subr.mxu0 0.0
        %2067 = vmatpush1.msra.mxu0 0.0
        %2068 = vmatprep.subr.mxu0 0.0
        %2069 = vmatpush1.msra.mxu0 0.0
        %2070 = vmatprep.subr.mxu0 0.0
        %2071 = vmatpush1.msra.mxu0 0.0
        %2072 = vmatprep.subr.mxu0 0.0
        %2073 = vmatpush1.msra.mxu0 0.0
        %2074 = vmatprep.subr.mxu0 0.0
        %2075 = vmatpush1.msra.mxu0 0.0
        %2076 = vmatprep.subr.mxu0 0.0
        %2077 = vmatpush1.msra.mxu0 0.0
        %2078 = vmatprep.subr.mxu0 0.0
        %2079 = vmatpush1.msra.mxu0 0.0
        %2080 = vmatprep.mubr.f32.mxu0 0.0
        %2081 = vmatmul.mubr.f32.gmra.mrb[0].mxu0 %v1778
        %v2082 = vpop.f32.mrb[0].mxu0
        %v2083 = vadd.f32 0.0, %v2082
        %v2084 = vpop.f32.mrb[0].mxu0
        %v2085 = vadd.f32 0.0, %v2084
        %2086 = vmatprep.mubr.f32.mxu0 0.0
        %2087 = vmatmul.mubr.f32.gmra.mrb[0].mxu0 %v1780
        %v2088 = vpop.f32.mrb[0].mxu0
        %v2089 = vadd.f32 0.0, %v2088
        %v2090 = vpop.f32.mrb[0].mxu0
        %v2091 = vadd.f32 0.0, %v2090
        %2092 = vmatprep.mubr.f32.mxu0 0.0
        %2093 = vmatmul.mubr.f32.gmra.mrb[0].mxu0 %v1782
        %v2094 = vpop.f32.mrb[0].mxu0
        %v2095 = vadd.f32 0.0, %v2094
        %v2096 = vpop.f32.mrb[0].mxu0
        %v2097 = vadd.f32 0.0, %v2096
        %2098 = vmatprep.mubr.f32.mxu0 0.0
        %2099 = vmatmul.mubr.f32.gmra.mrb[0].mxu0 %v1784
        %v2100 = vpop.f32.mrb[0].mxu0
        %v2101 = vadd.f32 0.0, %v2100
        %v2102 = vpop.f32.mrb[0].mxu0
        %v2103 = vadd.f32 0.0, %v2102
        %2104 = vdwg.mxu0
        %v2105 = vadd.f32 %v1993, %v2083
        %v2106 = vadd.f32 %v1994, %v2085
        %v2107 = vadd.f32 %v1995, %v2089
        %v2108 = vadd.f32 %v1996, %v2091
        %v2109 = vadd.f32 %v1997, %v2095
        %v2110 = vadd.f32 %v1998, %v2097
        %v2111 = vadd.f32 %v1999, %v2101
        %v2112 = vadd.f32 %v2000, %v2103
        %s2113 = scalar_lea.vmem %s2, 832
        %v2114 = vld [vmem:[%s2113] sm:$0xff]
        %v2115 = vld [vmem:[%s2113 + $0x8] sm:$0xff]
        %v2116 = vld [vmem:[%s2113 + $0x10] sm:$0xff]
        %v2117 = vld [vmem:[%s2113 + $0x18] sm:$0xff]
        %v2118 = vld [vmem:[%s2113 + $0x20] sm:$0xff]
        %v2119 = vld [vmem:[%s2113 + $0x28] sm:$0xff]
        %v2120 = vld [vmem:[%s2113 + $0x30] sm:$0xf]
        %v2121 = vld [vmem:[%s2113 + $0x38] sm:$0xf]
        %v2123 = vsel %vm540, %v2120, 0
        %v2126 = vsel %vm540, %v2121, 0
        %2128 = vmatprep.subr.mxu0 %v2115
        %2129 = vmatpush1.msra.mxu0 %v2114
        %2130 = vmatprep.subr.mxu0 %v2117
        %2131 = vmatpush1.msra.mxu0 %v2116
        %2132 = vmatprep.subr.mxu0 %v2119
        %2133 = vmatpush1.msra.mxu0 %v2118
        %2134 = vmatprep.subr.mxu0 %v2126
        %2135 = vmatpush1.msra.mxu0 %v2123
        %2136 = vmatprep.subr.mxu0 0.0
        %2137 = vmatpush1.msra.mxu0 0.0
        %2138 = vmatprep.subr.mxu0 0.0
        %2139 = vmatpush1.msra.mxu0 0.0
        %2140 = vmatprep.subr.mxu0 0.0
        %2141 = vmatpush1.msra.mxu0 0.0
        %2142 = vmatprep.subr.mxu0 0.0
        %2143 = vmatpush1.msra.mxu0 0.0
        %2144 = vmatprep.subr.mxu0 0.0
        %2145 = vmatpush1.msra.mxu0 0.0
        %2146 = vmatprep.subr.mxu0 0.0
        %2147 = vmatpush1.msra.mxu0 0.0
        %2148 = vmatprep.subr.mxu0 0.0
        %2149 = vmatpush1.msra.mxu0 0.0
        %2150 = vmatprep.subr.mxu0 0.0
        %2151 = vmatpush1.msra.mxu0 0.0
        %2152 = vmatprep.subr.mxu0 0.0
        %2153 = vmatpush1.msra.mxu0 0.0
        %2154 = vmatprep.subr.mxu0 0.0
        %2155 = vmatpush1.msra.mxu0 0.0
        %2156 = vmatprep.subr.mxu0 0.0
        %2157 = vmatpush1.msra.mxu0 0.0
        %2158 = vmatprep.subr.mxu0 0.0
        %2159 = vmatpush1.msra.mxu0 0.0
        %2160 = vmatprep.subr.mxu0 0.0
        %2161 = vmatpush1.msra.mxu0 0.0
        %2162 = vmatprep.subr.mxu0 0.0
        %2163 = vmatpush1.msra.mxu0 0.0
        %2164 = vmatprep.subr.mxu0 0.0
        %2165 = vmatpush1.msra.mxu0 0.0
        %2166 = vmatprep.subr.mxu0 0.0
        %2167 = vmatpush1.msra.mxu0 0.0
        %2168 = vmatprep.subr.mxu0 0.0
        %2169 = vmatpush1.msra.mxu0 0.0
        %2170 = vmatprep.subr.mxu0 0.0
        %2171 = vmatpush1.msra.mxu0 0.0
        %2172 = vmatprep.subr.mxu0 0.0
        %2173 = vmatpush1.msra.mxu0 0.0
        %2174 = vmatprep.subr.mxu0 0.0
        %2175 = vmatpush1.msra.mxu0 0.0
        %2176 = vmatprep.subr.mxu0 0.0
        %2177 = vmatpush1.msra.mxu0 0.0
        %2178 = vmatprep.subr.mxu0 0.0
        %2179 = vmatpush1.msra.mxu0 0.0
        %2180 = vmatprep.subr.mxu0 0.0
        %2181 = vmatpush1.msra.mxu0 0.0
        %2182 = vmatprep.subr.mxu0 0.0
        %2183 = vmatpush1.msra.mxu0 0.0
        %2184 = vmatprep.subr.mxu0 0.0
        %2185 = vmatpush1.msra.mxu0 0.0
        %2186 = vmatprep.subr.mxu0 0.0
        %2187 = vmatpush1.msra.mxu0 0.0
        %2188 = vmatprep.subr.mxu0 0.0
        %2189 = vmatpush1.msra.mxu0 0.0
        %2190 = vmatprep.subr.mxu0 0.0
        %2191 = vmatpush1.msra.mxu0 0.0
        %2192 = vmatprep.mubr.f32.mxu0 0.0
        %2193 = vmatmul.mubr.f32.gmra.mrb[0].mxu0 %v1778
        %v2194 = vpop.f32.mrb[0].mxu0
        %v2195 = vadd.f32 0.0, %v2194
        %v2196 = vpop.f32.mrb[0].mxu0
        %v2197 = vadd.f32 0.0, %v2196
        %2198 = vmatprep.mubr.f32.mxu0 0.0
        %2199 = vmatmul.mubr.f32.gmra.mrb[0].mxu0 %v1780
        %v2200 = vpop.f32.mrb[0].mxu0
        %v2201 = vadd.f32 0.0, %v2200
        %v2202 = vpop.f32.mrb[0].mxu0
        %v2203 = vadd.f32 0.0, %v2202
        %2204 = vmatprep.mubr.f32.mxu0 0.0
        %2205 = vmatmul.mubr.f32.gmra.mrb[0].mxu0 %v1782
        %v2206 = vpop.f32.mrb[0].mxu0
        %v2207 = vadd.f32 0.0, %v2206
        %v2208 = vpop.f32.mrb[0].mxu0
        %v2209 = vadd.f32 0.0, %v2208
        %2210 = vmatprep.mubr.f32.mxu0 0.0
        %2211 = vmatmul.mubr.f32.gmra.mrb[0].mxu0 %v1784
        %v2212 = vpop.f32.mrb[0].mxu0
        %v2213 = vadd.f32 0.0, %v2212
        %v2214 = vpop.f32.mrb[0].mxu0
        %v2215 = vadd.f32 0.0, %v2214
        %2216 = vdwg.mxu0
        %v2217 = vadd.f32 %v2105, %v2195
        %v2218 = vadd.f32 %v2106, %v2197
        %v2219 = vadd.f32 %v2107, %v2201
        %v2220 = vadd.f32 %v2108, %v2203
        %v2221 = vadd.f32 %v2109, %v2207
        %v2222 = vadd.f32 %v2110, %v2209
        %v2223 = vadd.f32 %v2111, %v2213
        %v2224 = vadd.f32 %v2112, %v2215
        %s2225 = scalar_lea.vmem %s2, 896
        %v2226 = vld [vmem:[%s2225] sm:$0xff]
        %v2227 = vld [vmem:[%s2225 + $0x8] sm:$0xff]
        %v2228 = vld [vmem:[%s2225 + $0x10] sm:$0xff]
        %v2229 = vld [vmem:[%s2225 + $0x18] sm:$0xff]
        %v2230 = vld [vmem:[%s2225 + $0x20] sm:$0xff]
        %v2231 = vld [vmem:[%s2225 + $0x28] sm:$0xff]
        %v2232 = vld [vmem:[%s2225 + $0x30] sm:$0xf]
        %v2233 = vld [vmem:[%s2225 + $0x38] sm:$0xf]
        %v2235 = vsel %vm540, %v2232, 0
        %v2238 = vsel %vm540, %v2233, 0
        %2240 = vmatprep.subr.mxu0 %v2227
        %2241 = vmatpush1.msra.mxu0 %v2226
        %2242 = vmatprep.subr.mxu0 %v2229
        %2243 = vmatpush1.msra.mxu0 %v2228
        %2244 = vmatprep.subr.mxu0 %v2231
        %2245 = vmatpush1.msra.mxu0 %v2230
        %2246 = vmatprep.subr.mxu0 %v2238
        %2247 = vmatpush1.msra.mxu0 %v2235
        %2248 = vmatprep.subr.mxu0 0.0
        %2249 = vmatpush1.msra.mxu0 0.0
        %2250 = vmatprep.subr.mxu0 0.0
        %2251 = vmatpush1.msra.mxu0 0.0
        %2252 = vmatprep.subr.mxu0 0.0
        %2253 = vmatpush1.msra.mxu0 0.0
        %2254 = vmatprep.subr.mxu0 0.0
        %2255 = vmatpush1.msra.mxu0 0.0
        %2256 = vmatprep.subr.mxu0 0.0
        %2257 = vmatpush1.msra.mxu0 0.0
        %2258 = vmatprep.subr.mxu0 0.0
        %2259 = vmatpush1.msra.mxu0 0.0
        %2260 = vmatprep.subr.mxu0 0.0
        %2261 = vmatpush1.msra.mxu0 0.0
        %2262 = vmatprep.subr.mxu0 0.0
        %2263 = vmatpush1.msra.mxu0 0.0
        %2264 = vmatprep.subr.mxu0 0.0
        %2265 = vmatpush1.msra.mxu0 0.0
        %2266 = vmatprep.subr.mxu0 0.0
        %2267 = vmatpush1.msra.mxu0 0.0
        %2268 = vmatprep.subr.mxu0 0.0
        %2269 = vmatpush1.msra.mxu0 0.0
        %2270 = vmatprep.subr.mxu0 0.0
        %2271 = vmatpush1.msra.mxu0 0.0
        %2272 = vmatprep.subr.mxu0 0.0
        %2273 = vmatpush1.msra.mxu0 0.0
        %2274 = vmatprep.subr.mxu0 0.0
        %2275 = vmatpush1.msra.mxu0 0.0
        %2276 = vmatprep.subr.mxu0 0.0
        %2277 = vmatpush1.msra.mxu0 0.0
        %2278 = vmatprep.subr.mxu0 0.0
        %2279 = vmatpush1.msra.mxu0 0.0
        %2280 = vmatprep.subr.mxu0 0.0
        %2281 = vmatpush1.msra.mxu0 0.0
        %2282 = vmatprep.subr.mxu0 0.0
        %2283 = vmatpush1.msra.mxu0 0.0
        %2284 = vmatprep.subr.mxu0 0.0
        %2285 = vmatpush1.msra.mxu0 0.0
        %2286 = vmatprep.subr.mxu0 0.0
        %2287 = vmatpush1.msra.mxu0 0.0
        %2288 = vmatprep.subr.mxu0 0.0
        %2289 = vmatpush1.msra.mxu0 0.0
        %2290 = vmatprep.subr.mxu0 0.0
        %2291 = vmatpush1.msra.mxu0 0.0
        %2292 = vmatprep.subr.mxu0 0.0
        %2293 = vmatpush1.msra.mxu0 0.0
        %2294 = vmatprep.subr.mxu0 0.0
        %2295 = vmatpush1.msra.mxu0 0.0
        %2296 = vmatprep.subr.mxu0 0.0
        %2297 = vmatpush1.msra.mxu0 0.0
        %2298 = vmatprep.subr.mxu0 0.0
        %2299 = vmatpush1.msra.mxu0 0.0
        %2300 = vmatprep.subr.mxu0 0.0
        %2301 = vmatpush1.msra.mxu0 0.0
        %2302 = vmatprep.subr.mxu0 0.0
        %2303 = vmatpush1.msra.mxu0 0.0
        %2304 = vmatprep.mubr.f32.mxu0 0.0
        %2305 = vmatmul.mubr.f32.gmra.mrb[0].mxu0 %v1778
        %v2306 = vpop.f32.mrb[0].mxu0
        %v2307 = vadd.f32 0.0, %v2306
        %v2308 = vpop.f32.mrb[0].mxu0
        %v2309 = vadd.f32 0.0, %v2308
        %2310 = vmatprep.mubr.f32.mxu0 0.0
        %2311 = vmatmul.mubr.f32.gmra.mrb[0].mxu0 %v1780
        %v2312 = vpop.f32.mrb[0].mxu0
        %v2313 = vadd.f32 0.0, %v2312
        %v2314 = vpop.f32.mrb[0].mxu0
        %v2315 = vadd.f32 0.0, %v2314
        %2316 = vmatprep.mubr.f32.mxu0 0.0
        %2317 = vmatmul.mubr.f32.gmra.mrb[0].mxu0 %v1782
        %v2318 = vpop.f32.mrb[0].mxu0
        %v2319 = vadd.f32 0.0, %v2318
        %v2320 = vpop.f32.mrb[0].mxu0
        %v2321 = vadd.f32 0.0, %v2320
        %2322 = vmatprep.mubr.f32.mxu0 0.0
        %2323 = vmatmul.mubr.f32.gmra.mrb[0].mxu0 %v1784
        %v2324 = vpop.f32.mrb[0].mxu0
        %v2325 = vadd.f32 0.0, %v2324
        %v2326 = vpop.f32.mrb[0].mxu0
        %v2327 = vadd.f32 0.0, %v2326
        %2328 = vdwg.mxu0
        %v2329 = vadd.f32 %v2217, %v2307
        %v2330 = vadd.f32 %v2218, %v2309
        %v2331 = vadd.f32 %v2219, %v2313
        %v2332 = vadd.f32 %v2220, %v2315
        %v2333 = vadd.f32 %v2221, %v2319
        %v2334 = vadd.f32 %v2222, %v2321
        %v2335 = vadd.f32 %v2223, %v2325
        %v2336 = vadd.f32 %v2224, %v2327
        %s2337 = scalar_lea.vmem %s2, 960
        %v2338 = vld [vmem:[%s2337] sm:$0xff]
        %v2339 = vld [vmem:[%s2337 + $0x8] sm:$0xff]
        %v2340 = vld [vmem:[%s2337 + $0x10] sm:$0xff]
        %v2341 = vld [vmem:[%s2337 + $0x18] sm:$0xff]
        %v2342 = vld [vmem:[%s2337 + $0x20] sm:$0xff]
        %v2343 = vld [vmem:[%s2337 + $0x28] sm:$0xff]
        %v2344 = vld [vmem:[%s2337 + $0x30] sm:$0xf]
        %v2345 = vld [vmem:[%s2337 + $0x38] sm:$0xf]
        %vm2346 = vcmask 1044480
        %v2347 = vrot.slane %v611, 3
        %v2348 = vrot.slane %v616, 3
        %v2349 = vsel %vm2346, %v2347, %v2348
        %v2350 = vrot.slane %v621, 3
        %v2351 = vsel %vm2346, %v2348, %v2350
        %v2352 = vrot.slane %v626, 3
        %v2353 = vsel %vm2346, %v2350, %v2352
        %v2354 = vsel %vm527, %v2349, 0
        %v2356 = vsel %vm527, %v2351, 0
        %v2358 = vsel %vm527, %v2353, 0
        %v2360 = vsel %vm527, %v2352, 0
        %v2363 = vsel %vm540, %v2344, 0
        %v2366 = vsel %vm540, %v2345, 0
        %2368 = vmatprep.subr.mxu0 %v2339
        %2369 = vmatpush1.msra.mxu0 %v2338
        %2370 = vmatprep.subr.mxu0 %v2341
        %2371 = vmatpush1.msra.mxu0 %v2340
        %2372 = vmatprep.subr.mxu0 %v2343
        %2373 = vmatpush1.msra.mxu0 %v2342
        %2374 = vmatprep.subr.mxu0 %v2366
        %2375 = vmatpush1.msra.mxu0 %v2363
        %2376 = vmatprep.subr.mxu0 0.0
        %2377 = vmatpush1.msra.mxu0 0.0
        %2378 = vmatprep.subr.mxu0 0.0
        %2379 = vmatpush1.msra.mxu0 0.0
        %2380 = vmatprep.subr.mxu0 0.0
        %2381 = vmatpush1.msra.mxu0 0.0
        %2382 = vmatprep.subr.mxu0 0.0
        %2383 = vmatpush1.msra.mxu0 0.0
        %2384 = vmatprep.subr.mxu0 0.0
        %2385 = vmatpush1.msra.mxu0 0.0
        %2386 = vmatprep.subr.mxu0 0.0
        %2387 = vmatpush1.msra.mxu0 0.0
        %2388 = vmatprep.subr.mxu0 0.0
        %2389 = vmatpush1.msra.mxu0 0.0
        %2390 = vmatprep.subr.mxu0 0.0
        %2391 = vmatpush1.msra.mxu0 0.0
        %2392 = vmatprep.subr.mxu0 0.0
        %2393 = vmatpush1.msra.mxu0 0.0
        %2394 = vmatprep.subr.mxu0 0.0
        %2395 = vmatpush1.msra.mxu0 0.0
        %2396 = vmatprep.subr.mxu0 0.0
        %2397 = vmatpush1.msra.mxu0 0.0
        %2398 = vmatprep.subr.mxu0 0.0
        %2399 = vmatpush1.msra.mxu0 0.0
        %2400 = vmatprep.subr.mxu0 0.0
        %2401 = vmatpush1.msra.mxu0 0.0
        %2402 = vmatprep.subr.mxu0 0.0
        %2403 = vmatpush1.msra.mxu0 0.0
        %2404 = vmatprep.subr.mxu0 0.0
        %2405 = vmatpush1.msra.mxu0 0.0
        %2406 = vmatprep.subr.mxu0 0.0
        %2407 = vmatpush1.msra.mxu0 0.0
        %2408 = vmatprep.subr.mxu0 0.0
        %2409 = vmatpush1.msra.mxu0 0.0
        %2410 = vmatprep.subr.mxu0 0.0
        %2411 = vmatpush1.msra.mxu0 0.0
        %2412 = vmatprep.subr.mxu0 0.0
        %2413 = vmatpush1.msra.mxu0 0.0
        %2414 = vmatprep.subr.mxu0 0.0
        %2415 = vmatpush1.msra.mxu0 0.0
        %2416 = vmatprep.subr.mxu0 0.0
        %2417 = vmatpush1.msra.mxu0 0.0
        %2418 = vmatprep.subr.mxu0 0.0
        %2419 = vmatpush1.msra.mxu0 0.0
        %2420 = vmatprep.subr.mxu0 0.0
        %2421 = vmatpush1.msra.mxu0 0.0
        %2422 = vmatprep.subr.mxu0 0.0
        %2423 = vmatpush1.msra.mxu0 0.0
        %2424 = vmatprep.subr.mxu0 0.0
        %2425 = vmatpush1.msra.mxu0 0.0
        %2426 = vmatprep.subr.mxu0 0.0
        %2427 = vmatpush1.msra.mxu0 0.0
        %2428 = vmatprep.subr.mxu0 0.0
        %2429 = vmatpush1.msra.mxu0 0.0
        %2430 = vmatprep.subr.mxu0 0.0
        %2431 = vmatpush1.msra.mxu0 0.0
        %2432 = vmatprep.mubr.f32.mxu0 0.0
        %2433 = vmatmul.mubr.f32.gmra.mrb[0].mxu0 %v2354
        %v2434 = vpop.f32.mrb[0].mxu0
        %v2435 = vadd.f32 0.0, %v2434
        %v2436 = vpop.f32.mrb[0].mxu0
        %v2437 = vadd.f32 0.0, %v2436
        %2438 = vmatprep.mubr.f32.mxu0 0.0
        %2439 = vmatmul.mubr.f32.gmra.mrb[0].mxu0 %v2356
        %v2440 = vpop.f32.mrb[0].mxu0
        %v2441 = vadd.f32 0.0, %v2440
        %v2442 = vpop.f32.mrb[0].mxu0
        %v2443 = vadd.f32 0.0, %v2442
        %2444 = vmatprep.mubr.f32.mxu0 0.0
        %2445 = vmatmul.mubr.f32.gmra.mrb[0].mxu0 %v2358
        %v2446 = vpop.f32.mrb[0].mxu0
        %v2447 = vadd.f32 0.0, %v2446
        %v2448 = vpop.f32.mrb[0].mxu0
        %v2449 = vadd.f32 0.0, %v2448
        %2450 = vmatprep.mubr.f32.mxu0 0.0
        %2451 = vmatmul.mubr.f32.gmra.mrb[0].mxu0 %v2360
        %v2452 = vpop.f32.mrb[0].mxu0
        %v2453 = vadd.f32 0.0, %v2452
        %v2454 = vpop.f32.mrb[0].mxu0
        %v2455 = vadd.f32 0.0, %v2454
        %2456 = vdwg.mxu0
        %v2457 = vadd.f32 %v2329, %v2435
        %v2458 = vadd.f32 %v2330, %v2437
        %v2459 = vadd.f32 %v2331, %v2441
        %v2460 = vadd.f32 %v2332, %v2443
        %v2461 = vadd.f32 %v2333, %v2447
        %v2462 = vadd.f32 %v2334, %v2449
        %v2463 = vadd.f32 %v2335, %v2453
        %v2464 = vadd.f32 %v2336, %v2455
        %s2465 = scalar_lea.vmem %s2, 1024
        %v2466 = vld [vmem:[%s2465] sm:$0xff]
        %v2467 = vld [vmem:[%s2465 + $0x8] sm:$0xff]
        %v2468 = vld [vmem:[%s2465 + $0x10] sm:$0xff]
        %v2469 = vld [vmem:[%s2465 + $0x18] sm:$0xff]
        %v2470 = vld [vmem:[%s2465 + $0x20] sm:$0xff]
        %v2471 = vld [vmem:[%s2465 + $0x28] sm:$0xff]
        %v2472 = vld [vmem:[%s2465 + $0x30] sm:$0xf]
        %v2473 = vld [vmem:[%s2465 + $0x38] sm:$0xf]
        %v2475 = vsel %vm540, %v2472, 0
        %v2478 = vsel %vm540, %v2473, 0
        %2480 = vmatprep.subr.mxu0 %v2467
        %2481 = vmatpush1.msra.mxu0 %v2466
        %2482 = vmatprep.subr.mxu0 %v2469
        %2483 = vmatpush1.msra.mxu0 %v2468
        %2484 = vmatprep.subr.mxu0 %v2471
        %2485 = vmatpush1.msra.mxu0 %v2470
        %2486 = vmatprep.subr.mxu0 %v2478
        %2487 = vmatpush1.msra.mxu0 %v2475
        %2488 = vmatprep.subr.mxu0 0.0
        %2489 = vmatpush1.msra.mxu0 0.0
        %2490 = vmatprep.subr.mxu0 0.0
        %2491 = vmatpush1.msra.mxu0 0.0
        %2492 = vmatprep.subr.mxu0 0.0
        %2493 = vmatpush1.msra.mxu0 0.0
        %2494 = vmatprep.subr.mxu0 0.0
        %2495 = vmatpush1.msra.mxu0 0.0
        %2496 = vmatprep.subr.mxu0 0.0
        %2497 = vmatpush1.msra.mxu0 0.0
        %2498 = vmatprep.subr.mxu0 0.0
        %2499 = vmatpush1.msra.mxu0 0.0
        %2500 = vmatprep.subr.mxu0 0.0
        %2501 = vmatpush1.msra.mxu0 0.0
        %2502 = vmatprep.subr.mxu0 0.0
        %2503 = vmatpush1.msra.mxu0 0.0
        %2504 = vmatprep.subr.mxu0 0.0
        %2505 = vmatpush1.msra.mxu0 0.0
        %2506 = vmatprep.subr.mxu0 0.0
        %2507 = vmatpush1.msra.mxu0 0.0
        %2508 = vmatprep.subr.mxu0 0.0
        %2509 = vmatpush1.msra.mxu0 0.0
        %2510 = vmatprep.subr.mxu0 0.0
        %2511 = vmatpush1.msra.mxu0 0.0
        %2512 = vmatprep.subr.mxu0 0.0
        %2513 = vmatpush1.msra.mxu0 0.0
        %2514 = vmatprep.subr.mxu0 0.0
        %2515 = vmatpush1.msra.mxu0 0.0
        %2516 = vmatprep.subr.mxu0 0.0
        %2517 = vmatpush1.msra.mxu0 0.0
        %2518 = vmatprep.subr.mxu0 0.0
        %2519 = vmatpush1.msra.mxu0 0.0
        %2520 = vmatprep.subr.mxu0 0.0
        %2521 = vmatpush1.msra.mxu0 0.0
        %2522 = vmatprep.subr.mxu0 0.0
        %2523 = vmatpush1.msra.mxu0 0.0
        %2524 = vmatprep.subr.mxu0 0.0
        %2525 = vmatpush1.msra.mxu0 0.0
        %2526 = vmatprep.subr.mxu0 0.0
        %2527 = vmatpush1.msra.mxu0 0.0
        %2528 = vmatprep.subr.mxu0 0.0
        %2529 = vmatpush1.msra.mxu0 0.0
        %2530 = vmatprep.subr.mxu0 0.0
        %2531 = vmatpush1.msra.mxu0 0.0
        %2532 = vmatprep.subr.mxu0 0.0
        %2533 = vmatpush1.msra.mxu0 0.0
        %2534 = vmatprep.subr.mxu0 0.0
        %2535 = vmatpush1.msra.mxu0 0.0
        %2536 = vmatprep.subr.mxu0 0.0
        %2537 = vmatpush1.msra.mxu0 0.0
        %2538 = vmatprep.subr.mxu0 0.0
        %2539 = vmatpush1.msra.mxu0 0.0
        %2540 = vmatprep.subr.mxu0 0.0
        %2541 = vmatpush1.msra.mxu0 0.0
        %2542 = vmatprep.subr.mxu0 0.0
        %2543 = vmatpush1.msra.mxu0 0.0
        %2544 = vmatprep.mubr.f32.mxu0 0.0
        %2545 = vmatmul.mubr.f32.gmra.mrb[0].mxu0 %v2354
        %v2546 = vpop.f32.mrb[0].mxu0
        %v2547 = vadd.f32 0.0, %v2546
        %v2548 = vpop.f32.mrb[0].mxu0
        %v2549 = vadd.f32 0.0, %v2548
        %2550 = vmatprep.mubr.f32.mxu0 0.0
        %2551 = vmatmul.mubr.f32.gmra.mrb[0].mxu0 %v2356
        %v2552 = vpop.f32.mrb[0].mxu0
        %v2553 = vadd.f32 0.0, %v2552
        %v2554 = vpop.f32.mrb[0].mxu0
        %v2555 = vadd.f32 0.0, %v2554
        %2556 = vmatprep.mubr.f32.mxu0 0.0
        %2557 = vmatmul.mubr.f32.gmra.mrb[0].mxu0 %v2358
        %v2558 = vpop.f32.mrb[0].mxu0
        %v2559 = vadd.f32 0.0, %v2558
        %v2560 = vpop.f32.mrb[0].mxu0
        %v2561 = vadd.f32 0.0, %v2560
        %2562 = vmatprep.mubr.f32.mxu0 0.0
        %2563 = vmatmul.mubr.f32.gmra.mrb[0].mxu0 %v2360
        %v2564 = vpop.f32.mrb[0].mxu0
        %v2565 = vadd.f32 0.0, %v2564
        %v2566 = vpop.f32.mrb[0].mxu0
        %v2567 = vadd.f32 0.0, %v2566
        %2568 = vdwg.mxu0
        %v2569 = vadd.f32 %v2457, %v2547
        %v2570 = vadd.f32 %v2458, %v2549
        %v2571 = vadd.f32 %v2459, %v2553
        %v2572 = vadd.f32 %v2460, %v2555
        %v2573 = vadd.f32 %v2461, %v2559
        %v2574 = vadd.f32 %v2462, %v2561
        %v2575 = vadd.f32 %v2463, %v2565
        %v2576 = vadd.f32 %v2464, %v2567
        %s2577 = scalar_lea.vmem %s2, 1088
        %v2578 = vld [vmem:[%s2577] sm:$0xff]
        %v2579 = vld [vmem:[%s2577 + $0x8] sm:$0xff]
        %v2580 = vld [vmem:[%s2577 + $0x10] sm:$0xff]
        %v2581 = vld [vmem:[%s2577 + $0x18] sm:$0xff]
        %v2582 = vld [vmem:[%s2577 + $0x20] sm:$0xff]
        %v2583 = vld [vmem:[%s2577 + $0x28] sm:$0xff]
        %v2584 = vld [vmem:[%s2577 + $0x30] sm:$0xf]
        %v2585 = vld [vmem:[%s2577 + $0x38] sm:$0xf]
        %v2587 = vsel %vm540, %v2584, 0
        %v2590 = vsel %vm540, %v2585, 0
        %2592 = vmatprep.subr.mxu0 %v2579
        %2593 = vmatpush1.msra.mxu0 %v2578
        %2594 = vmatprep.subr.mxu0 %v2581
        %2595 = vmatpush1.msra.mxu0 %v2580
        %2596 = vmatprep.subr.mxu0 %v2583
        %2597 = vmatpush1.msra.mxu0 %v2582
        %2598 = vmatprep.subr.mxu0 %v2590
        %2599 = vmatpush1.msra.mxu0 %v2587
        %2600 = vmatprep.subr.mxu0 0.0
        %2601 = vmatpush1.msra.mxu0 0.0
        %2602 = vmatprep.subr.mxu0 0.0
        %2603 = vmatpush1.msra.mxu0 0.0
        %2604 = vmatprep.subr.mxu0 0.0
        %2605 = vmatpush1.msra.mxu0 0.0
        %2606 = vmatprep.subr.mxu0 0.0
        %2607 = vmatpush1.msra.mxu0 0.0
        %2608 = vmatprep.subr.mxu0 0.0
        %2609 = vmatpush1.msra.mxu0 0.0
        %2610 = vmatprep.subr.mxu0 0.0
        %2611 = vmatpush1.msra.mxu0 0.0
        %2612 = vmatprep.subr.mxu0 0.0
        %2613 = vmatpush1.msra.mxu0 0.0
        %2614 = vmatprep.subr.mxu0 0.0
        %2615 = vmatpush1.msra.mxu0 0.0
        %2616 = vmatprep.subr.mxu0 0.0
        %2617 = vmatpush1.msra.mxu0 0.0
        %2618 = vmatprep.subr.mxu0 0.0
        %2619 = vmatpush1.msra.mxu0 0.0
        %2620 = vmatprep.subr.mxu0 0.0
        %2621 = vmatpush1.msra.mxu0 0.0
        %2622 = vmatprep.subr.mxu0 0.0
        %2623 = vmatpush1.msra.mxu0 0.0
        %2624 = vmatprep.subr.mxu0 0.0
        %2625 = vmatpush1.msra.mxu0 0.0
        %2626 = vmatprep.subr.mxu0 0.0
        %2627 = vmatpush1.msra.mxu0 0.0
        %2628 = vmatprep.subr.mxu0 0.0
        %2629 = vmatpush1.msra.mxu0 0.0
        %2630 = vmatprep.subr.mxu0 0.0
        %2631 = vmatpush1.msra.mxu0 0.0
        %2632 = vmatprep.subr.mxu0 0.0
        %2633 = vmatpush1.msra.mxu0 0.0
        %2634 = vmatprep.subr.mxu0 0.0
        %2635 = vmatpush1.msra.mxu0 0.0
        %2636 = vmatprep.subr.mxu0 0.0
        %2637 = vmatpush1.msra.mxu0 0.0
        %2638 = vmatprep.subr.mxu0 0.0
        %2639 = vmatpush1.msra.mxu0 0.0
        %2640 = vmatprep.subr.mxu0 0.0
        %2641 = vmatpush1.msra.mxu0 0.0
        %2642 = vmatprep.subr.mxu0 0.0
        %2643 = vmatpush1.msra.mxu0 0.0
        %2644 = vmatprep.subr.mxu0 0.0
        %2645 = vmatpush1.msra.mxu0 0.0
        %2646 = vmatprep.subr.mxu0 0.0
        %2647 = vmatpush1.msra.mxu0 0.0
        %2648 = vmatprep.subr.mxu0 0.0
        %2649 = vmatpush1.msra.mxu0 0.0
        %2650 = vmatprep.subr.mxu0 0.0
        %2651 = vmatpush1.msra.mxu0 0.0
        %2652 = vmatprep.subr.mxu0 0.0
        %2653 = vmatpush1.msra.mxu0 0.0
        %2654 = vmatprep.subr.mxu0 0.0
        %2655 = vmatpush1.msra.mxu0 0.0
        %2656 = vmatprep.mubr.f32.mxu0 0.0
        %2657 = vmatmul.mubr.f32.gmra.mrb[0].mxu0 %v2354
        %v2658 = vpop.f32.mrb[0].mxu0
        %v2659 = vadd.f32 0.0, %v2658
        %v2660 = vpop.f32.mrb[0].mxu0
        %v2661 = vadd.f32 0.0, %v2660
        %2662 = vmatprep.mubr.f32.mxu0 0.0
        %2663 = vmatmul.mubr.f32.gmra.mrb[0].mxu0 %v2356
        %v2664 = vpop.f32.mrb[0].mxu0
        %v2665 = vadd.f32 0.0, %v2664
        %v2666 = vpop.f32.mrb[0].mxu0
        %v2667 = vadd.f32 0.0, %v2666
        %2668 = vmatprep.mubr.f32.mxu0 0.0
        %2669 = vmatmul.mubr.f32.gmra.mrb[0].mxu0 %v2358
        %v2670 = vpop.f32.mrb[0].mxu0
        %v2671 = vadd.f32 0.0, %v2670
        %v2672 = vpop.f32.mrb[0].mxu0
        %v2673 = vadd.f32 0.0, %v2672
        %2674 = vmatprep.mubr.f32.mxu0 0.0
        %2675 = vmatmul.mubr.f32.gmra.mrb[0].mxu0 %v2360
        %v2676 = vpop.f32.mrb[0].mxu0
        %v2677 = vadd.f32 0.0, %v2676
        %v2678 = vpop.f32.mrb[0].mxu0
        %v2679 = vadd.f32 0.0, %v2678
        %2680 = vdwg.mxu0
        %v2681 = vadd.f32 %v2569, %v2659
        %v2682 = vadd.f32 %v2570, %v2661
        %v2683 = vadd.f32 %v2571, %v2665
        %v2684 = vadd.f32 %v2572, %v2667
        %v2685 = vadd.f32 %v2573, %v2671
        %v2686 = vadd.f32 %v2574, %v2673
        %v2687 = vadd.f32 %v2575, %v2677
        %v2688 = vadd.f32 %v2576, %v2679
        %s2689 = scalar_lea.vmem %s2, 1152
        %v2690 = vld [vmem:[%s2689] sm:$0xff]
        %v2691 = vld [vmem:[%s2689 + $0x8] sm:$0xff]
        %v2692 = vld [vmem:[%s2689 + $0x10] sm:$0xff]
        %v2693 = vld [vmem:[%s2689 + $0x18] sm:$0xff]
        %v2694 = vld [vmem:[%s2689 + $0x20] sm:$0xff]
        %v2695 = vld [vmem:[%s2689 + $0x28] sm:$0xff]
        %v2696 = vld [vmem:[%s2689 + $0x30] sm:$0xf]
        %v2697 = vld [vmem:[%s2689 + $0x38] sm:$0xf]
        %v2699 = vsel %vm540, %v2696, 0
        %v2702 = vsel %vm540, %v2697, 0
        %2704 = vmatprep.subr.mxu0 %v2691
        %2705 = vmatpush1.msra.mxu0 %v2690
        %2706 = vmatprep.subr.mxu0 %v2693
        %2707 = vmatpush1.msra.mxu0 %v2692
        %2708 = vmatprep.subr.mxu0 %v2695
        %2709 = vmatpush1.msra.mxu0 %v2694
        %2710 = vmatprep.subr.mxu0 %v2702
        %2711 = vmatpush1.msra.mxu0 %v2699
        %2712 = vmatprep.subr.mxu0 0.0
        %2713 = vmatpush1.msra.mxu0 0.0
        %2714 = vmatprep.subr.mxu0 0.0
        %2715 = vmatpush1.msra.mxu0 0.0
        %2716 = vmatprep.subr.mxu0 0.0
        %2717 = vmatpush1.msra.mxu0 0.0
        %2718 = vmatprep.subr.mxu0 0.0
        %2719 = vmatpush1.msra.mxu0 0.0
        %2720 = vmatprep.subr.mxu0 0.0
        %2721 = vmatpush1.msra.mxu0 0.0
        %2722 = vmatprep.subr.mxu0 0.0
        %2723 = vmatpush1.msra.mxu0 0.0
        %2724 = vmatprep.subr.mxu0 0.0
        %2725 = vmatpush1.msra.mxu0 0.0
        %2726 = vmatprep.subr.mxu0 0.0
        %2727 = vmatpush1.msra.mxu0 0.0
        %2728 = vmatprep.subr.mxu0 0.0
        %2729 = vmatpush1.msra.mxu0 0.0
        %2730 = vmatprep.subr.mxu0 0.0
        %2731 = vmatpush1.msra.mxu0 0.0
        %2732 = vmatprep.subr.mxu0 0.0
        %2733 = vmatpush1.msra.mxu0 0.0
        %2734 = vmatprep.subr.mxu0 0.0
        %2735 = vmatpush1.msra.mxu0 0.0
        %2736 = vmatprep.subr.mxu0 0.0
        %2737 = vmatpush1.msra.mxu0 0.0
        %2738 = vmatprep.subr.mxu0 0.0
        %2739 = vmatpush1.msra.mxu0 0.0
        %2740 = vmatprep.subr.mxu0 0.0
        %2741 = vmatpush1.msra.mxu0 0.0
        %2742 = vmatprep.subr.mxu0 0.0
        %2743 = vmatpush1.msra.mxu0 0.0
        %2744 = vmatprep.subr.mxu0 0.0
        %2745 = vmatpush1.msra.mxu0 0.0
        %2746 = vmatprep.subr.mxu0 0.0
        %2747 = vmatpush1.msra.mxu0 0.0
        %2748 = vmatprep.subr.mxu0 0.0
        %2749 = vmatpush1.msra.mxu0 0.0
        %2750 = vmatprep.subr.mxu0 0.0
        %2751 = vmatpush1.msra.mxu0 0.0
        %2752 = vmatprep.subr.mxu0 0.0
        %2753 = vmatpush1.msra.mxu0 0.0
        %2754 = vmatprep.subr.mxu0 0.0
        %2755 = vmatpush1.msra.mxu0 0.0
        %2756 = vmatprep.subr.mxu0 0.0
        %2757 = vmatpush1.msra.mxu0 0.0
        %2758 = vmatprep.subr.mxu0 0.0
        %2759 = vmatpush1.msra.mxu0 0.0
        %2760 = vmatprep.subr.mxu0 0.0
        %2761 = vmatpush1.msra.mxu0 0.0
        %2762 = vmatprep.subr.mxu0 0.0
        %2763 = vmatpush1.msra.mxu0 0.0
        %2764 = vmatprep.subr.mxu0 0.0
        %2765 = vmatpush1.msra.mxu0 0.0
        %2766 = vmatprep.subr.mxu0 0.0
        %2767 = vmatpush1.msra.mxu0 0.0
        %2768 = vmatprep.mubr.f32.mxu0 0.0
        %2769 = vmatmul.mubr.f32.gmra.mrb[0].mxu0 %v2354
        %v2770 = vpop.f32.mrb[0].mxu0
        %v2771 = vadd.f32 0.0, %v2770
        %v2772 = vpop.f32.mrb[0].mxu0
        %v2773 = vadd.f32 0.0, %v2772
        %2774 = vmatprep.mubr.f32.mxu0 0.0
        %2775 = vmatmul.mubr.f32.gmra.mrb[0].mxu0 %v2356
        %v2776 = vpop.f32.mrb[0].mxu0
        %v2777 = vadd.f32 0.0, %v2776
        %v2778 = vpop.f32.mrb[0].mxu0
        %v2779 = vadd.f32 0.0, %v2778
        %2780 = vmatprep.mubr.f32.mxu0 0.0
        %2781 = vmatmul.mubr.f32.gmra.mrb[0].mxu0 %v2358
        %v2782 = vpop.f32.mrb[0].mxu0
        %v2783 = vadd.f32 0.0, %v2782
        %v2784 = vpop.f32.mrb[0].mxu0
        %v2785 = vadd.f32 0.0, %v2784
        %2786 = vmatprep.mubr.f32.mxu0 0.0
        %2787 = vmatmul.mubr.f32.gmra.mrb[0].mxu0 %v2360
        %v2788 = vpop.f32.mrb[0].mxu0
        %v2789 = vadd.f32 0.0, %v2788
        %v2790 = vpop.f32.mrb[0].mxu0
        %v2791 = vadd.f32 0.0, %v2790
        %2792 = vdwg.mxu0
        %v2793 = vadd.f32 %v2681, %v2771
        %v2794 = vadd.f32 %v2682, %v2773
        %v2795 = vadd.f32 %v2683, %v2777
        %v2796 = vadd.f32 %v2684, %v2779
        %v2797 = vadd.f32 %v2685, %v2783
        %v2798 = vadd.f32 %v2686, %v2785
        %v2799 = vadd.f32 %v2687, %v2789
        %v2800 = vadd.f32 %v2688, %v2791
        %s2801 = scalar_lea.vmem %s2, 1216
        %v2802 = vld [vmem:[%s2801] sm:$0xff]
        %v2803 = vld [vmem:[%s2801 + $0x8] sm:$0xff]
        %v2804 = vld [vmem:[%s2801 + $0x10] sm:$0xff]
        %v2805 = vld [vmem:[%s2801 + $0x18] sm:$0xff]
        %v2806 = vld [vmem:[%s2801 + $0x20] sm:$0xff]
        %v2807 = vld [vmem:[%s2801 + $0x28] sm:$0xff]
        %v2808 = vld [vmem:[%s2801 + $0x30] sm:$0xf]
        %v2809 = vld [vmem:[%s2801 + $0x38] sm:$0xf]
        %v2811 = vsel %vm540, %v2808, 0
        %v2814 = vsel %vm540, %v2809, 0
        %2816 = vmatprep.subr.mxu0 %v2803
        %2817 = vmatpush1.msra.mxu0 %v2802
        %2818 = vmatprep.subr.mxu0 %v2805
        %2819 = vmatpush1.msra.mxu0 %v2804
        %2820 = vmatprep.subr.mxu0 %v2807
        %2821 = vmatpush1.msra.mxu0 %v2806
        %2822 = vmatprep.subr.mxu0 %v2814
        %2823 = vmatpush1.msra.mxu0 %v2811
        %2824 = vmatprep.subr.mxu0 0.0
        %2825 = vmatpush1.msra.mxu0 0.0
        %2826 = vmatprep.subr.mxu0 0.0
        %2827 = vmatpush1.msra.mxu0 0.0
        %2828 = vmatprep.subr.mxu0 0.0
        %2829 = vmatpush1.msra.mxu0 0.0
        %2830 = vmatprep.subr.mxu0 0.0
        %2831 = vmatpush1.msra.mxu0 0.0
        %2832 = vmatprep.subr.mxu0 0.0
        %2833 = vmatpush1.msra.mxu0 0.0
        %2834 = vmatprep.subr.mxu0 0.0
        %2835 = vmatpush1.msra.mxu0 0.0
        %2836 = vmatprep.subr.mxu0 0.0
        %2837 = vmatpush1.msra.mxu0 0.0
        %2838 = vmatprep.subr.mxu0 0.0
        %2839 = vmatpush1.msra.mxu0 0.0
        %2840 = vmatprep.subr.mxu0 0.0
        %2841 = vmatpush1.msra.mxu0 0.0
        %2842 = vmatprep.subr.mxu0 0.0
        %2843 = vmatpush1.msra.mxu0 0.0
        %2844 = vmatprep.subr.mxu0 0.0
        %2845 = vmatpush1.msra.mxu0 0.0
        %2846 = vmatprep.subr.mxu0 0.0
        %2847 = vmatpush1.msra.mxu0 0.0
        %2848 = vmatprep.subr.mxu0 0.0
        %2849 = vmatpush1.msra.mxu0 0.0
        %2850 = vmatprep.subr.mxu0 0.0
        %2851 = vmatpush1.msra.mxu0 0.0
        %2852 = vmatprep.subr.mxu0 0.0
        %2853 = vmatpush1.msra.mxu0 0.0
        %2854 = vmatprep.subr.mxu0 0.0
        %2855 = vmatpush1.msra.mxu0 0.0
        %2856 = vmatprep.subr.mxu0 0.0
        %2857 = vmatpush1.msra.mxu0 0.0
        %2858 = vmatprep.subr.mxu0 0.0
        %2859 = vmatpush1.msra.mxu0 0.0
        %2860 = vmatprep.subr.mxu0 0.0
        %2861 = vmatpush1.msra.mxu0 0.0
        %2862 = vmatprep.subr.mxu0 0.0
        %2863 = vmatpush1.msra.mxu0 0.0
        %2864 = vmatprep.subr.mxu0 0.0
        %2865 = vmatpush1.msra.mxu0 0.0
        %2866 = vmatprep.subr.mxu0 0.0
        %2867 = vmatpush1.msra.mxu0 0.0
        %2868 = vmatprep.subr.mxu0 0.0
        %2869 = vmatpush1.msra.mxu0 0.0
        %2870 = vmatprep.subr.mxu0 0.0
        %2871 = vmatpush1.msra.mxu0 0.0
        %2872 = vmatprep.subr.mxu0 0.0
        %2873 = vmatpush1.msra.mxu0 0.0
        %2874 = vmatprep.subr.mxu0 0.0
        %2875 = vmatpush1.msra.mxu0 0.0
        %2876 = vmatprep.subr.mxu0 0.0
        %2877 = vmatpush1.msra.mxu0 0.0
        %2878 = vmatprep.subr.mxu0 0.0
        %2879 = vmatpush1.msra.mxu0 0.0
        %2880 = vmatprep.mubr.f32.mxu0 0.0
        %2881 = vmatmul.mubr.f32.gmra.mrb[0].mxu0 %v2354
        %v2882 = vpop.f32.mrb[0].mxu0
        %v2883 = vadd.f32 0.0, %v2882
        %v2884 = vpop.f32.mrb[0].mxu0
        %v2885 = vadd.f32 0.0, %v2884
        %2886 = vmatprep.mubr.f32.mxu0 0.0
        %2887 = vmatmul.mubr.f32.gmra.mrb[0].mxu0 %v2356
        %v2888 = vpop.f32.mrb[0].mxu0
        %v2889 = vadd.f32 0.0, %v2888
        %v2890 = vpop.f32.mrb[0].mxu0
        %v2891 = vadd.f32 0.0, %v2890
        %2892 = vmatprep.mubr.f32.mxu0 0.0
        %2893 = vmatmul.mubr.f32.gmra.mrb[0].mxu0 %v2358
        %v2894 = vpop.f32.mrb[0].mxu0
        %v2895 = vadd.f32 0.0, %v2894
        %v2896 = vpop.f32.mrb[0].mxu0
        %v2897 = vadd.f32 0.0, %v2896
        %2898 = vmatprep.mubr.f32.mxu0 0.0
        %2899 = vmatmul.mubr.f32.gmra.mrb[0].mxu0 %v2360
        %v2900 = vpop.f32.mrb[0].mxu0
        %v2901 = vadd.f32 0.0, %v2900
        %v2902 = vpop.f32.mrb[0].mxu0
        %v2903 = vadd.f32 0.0, %v2902
        %2904 = vdwg.mxu0
        %v2905 = vadd.f32 %v2793, %v2883
        %v2906 = vadd.f32 %v2794, %v2885
        %v2907 = vadd.f32 %v2795, %v2889
        %v2908 = vadd.f32 %v2796, %v2891
        %v2909 = vadd.f32 %v2797, %v2895
        %v2910 = vadd.f32 %v2798, %v2897
        %v2911 = vadd.f32 %v2799, %v2901
        %v2912 = vadd.f32 %v2800, %v2903
        %s2913 = scalar_lea.vmem %s2, 1280
        %v2914 = vld [vmem:[%s2913] sm:$0xff]
        %v2915 = vld [vmem:[%s2913 + $0x8] sm:$0xff]
        %v2916 = vld [vmem:[%s2913 + $0x10] sm:$0xff]
        %v2917 = vld [vmem:[%s2913 + $0x18] sm:$0xff]
        %v2918 = vld [vmem:[%s2913 + $0x20] sm:$0xff]
        %v2919 = vld [vmem:[%s2913 + $0x28] sm:$0xff]
        %v2920 = vld [vmem:[%s2913 + $0x30] sm:$0xf]
        %v2921 = vld [vmem:[%s2913 + $0x38] sm:$0xf]
        %v2922 = vrot.slane %v611, 4
        %v2923 = vrot.slane %v616, 4
        %v2924 = vsel %vm540, %v2922, %v2923
        %v2925 = vrot.slane %v621, 4
        %v2926 = vsel %vm540, %v2923, %v2925
        %v2927 = vrot.slane %v626, 4
        %v2928 = vsel %vm540, %v2925, %v2927
        %v2929 = vsel %vm527, %v2924, 0
        %v2931 = vsel %vm527, %v2926, 0
        %v2933 = vsel %vm527, %v2928, 0
        %v2935 = vsel %vm527, %v2927, 0
        %v2938 = vsel %vm540, %v2920, 0
        %v2941 = vsel %vm540, %v2921, 0
        %2943 = vmatprep.subr.mxu0 %v2915
        %2944 = vmatpush1.msra.mxu0 %v2914
        %2945 = vmatprep.subr.mxu0 %v2917
        %2946 = vmatpush1.msra.mxu0 %v2916
        %2947 = vmatprep.subr.mxu0 %v2919
        %2948 = vmatpush1.msra.mxu0 %v2918
        %2949 = vmatprep.subr.mxu0 %v2941
        %2950 = vmatpush1.msra.mxu0 %v2938
        %2951 = vmatprep.subr.mxu0 0.0
        %2952 = vmatpush1.msra.mxu0 0.0
        %2953 = vmatprep.subr.mxu0 0.0
        %2954 = vmatpush1.msra.mxu0 0.0
        %2955 = vmatprep.subr.mxu0 0.0
        %2956 = vmatpush1.msra.mxu0 0.0
        %2957 = vmatprep.subr.mxu0 0.0
        %2958 = vmatpush1.msra.mxu0 0.0
        %2959 = vmatprep.subr.mxu0 0.0
        %2960 = vmatpush1.msra.mxu0 0.0
        %2961 = vmatprep.subr.mxu0 0.0
        %2962 = vmatpush1.msra.mxu0 0.0
        %2963 = vmatprep.subr.mxu0 0.0
        %2964 = vmatpush1.msra.mxu0 0.0
        %2965 = vmatprep.subr.mxu0 0.0
        %2966 = vmatpush1.msra.mxu0 0.0
        %2967 = vmatprep.subr.mxu0 0.0
        %2968 = vmatpush1.msra.mxu0 0.0
        %2969 = vmatprep.subr.mxu0 0.0
        %2970 = vmatpush1.msra.mxu0 0.0
        %2971 = vmatprep.subr.mxu0 0.0
        %2972 = vmatpush1.msra.mxu0 0.0
        %2973 = vmatprep.subr.mxu0 0.0
        %2974 = vmatpush1.msra.mxu0 0.0
        %2975 = vmatprep.subr.mxu0 0.0
        %2976 = vmatpush1.msra.mxu0 0.0
        %2977 = vmatprep.subr.mxu0 0.0
        %2978 = vmatpush1.msra.mxu0 0.0
        %2979 = vmatprep.subr.mxu0 0.0
        %2980 = vmatpush1.msra.mxu0 0.0
        %2981 = vmatprep.subr.mxu0 0.0
        %2982 = vmatpush1.msra.mxu0 0.0
        %2983 = vmatprep.subr.mxu0 0.0
        %2984 = vmatpush1.msra.mxu0 0.0
        %2985 = vmatprep.subr.mxu0 0.0
        %2986 = vmatpush1.msra.mxu0 0.0
        %2987 = vmatprep.subr.mxu0 0.0
        %2988 = vmatpush1.msra.mxu0 0.0
        %2989 = vmatprep.subr.mxu0 0.0
        %2990 = vmatpush1.msra.mxu0 0.0
        %2991 = vmatprep.subr.mxu0 0.0
        %2992 = vmatpush1.msra.mxu0 0.0
        %2993 = vmatprep.subr.mxu0 0.0
        %2994 = vmatpush1.msra.mxu0 0.0
        %2995 = vmatprep.subr.mxu0 0.0
        %2996 = vmatpush1.msra.mxu0 0.0
        %2997 = vmatprep.subr.mxu0 0.0
        %2998 = vmatpush1.msra.mxu0 0.0
        %2999 = vmatprep.subr.mxu0 0.0
        %3000 = vmatpush1.msra.mxu0 0.0
        %3001 = vmatprep.subr.mxu0 0.0
        %3002 = vmatpush1.msra.mxu0 0.0
        %3003 = vmatprep.subr.mxu0 0.0
        %3004 = vmatpush1.msra.mxu0 0.0
        %3005 = vmatprep.subr.mxu0 0.0
        %3006 = vmatpush1.msra.mxu0 0.0
        %3007 = vmatprep.mubr.f32.mxu0 0.0
        %3008 = vmatmul.mubr.f32.gmra.mrb[0].mxu0 %v2929
        %v3009 = vpop.f32.mrb[0].mxu0
        %v3010 = vadd.f32 0.0, %v3009
        %v3011 = vpop.f32.mrb[0].mxu0
        %v3012 = vadd.f32 0.0, %v3011
        %3013 = vmatprep.mubr.f32.mxu0 0.0
        %3014 = vmatmul.mubr.f32.gmra.mrb[0].mxu0 %v2931
        %v3015 = vpop.f32.mrb[0].mxu0
        %v3016 = vadd.f32 0.0, %v3015
        %v3017 = vpop.f32.mrb[0].mxu0
        %v3018 = vadd.f32 0.0, %v3017
        %3019 = vmatprep.mubr.f32.mxu0 0.0
        %3020 = vmatmul.mubr.f32.gmra.mrb[0].mxu0 %v2933
        %v3021 = vpop.f32.mrb[0].mxu0
        %v3022 = vadd.f32 0.0, %v3021
        %v3023 = vpop.f32.mrb[0].mxu0
        %v3024 = vadd.f32 0.0, %v3023
        %3025 = vmatprep.mubr.f32.mxu0 0.0
        %3026 = vmatmul.mubr.f32.gmra.mrb[0].mxu0 %v2935
        %v3027 = vpop.f32.mrb[0].mxu0
        %v3028 = vadd.f32 0.0, %v3027
        %v3029 = vpop.f32.mrb[0].mxu0
        %v3030 = vadd.f32 0.0, %v3029
        %3031 = vdwg.mxu0
        %v3032 = vadd.f32 %v2905, %v3010
        %v3033 = vadd.f32 %v2906, %v3012
        %v3034 = vadd.f32 %v2907, %v3016
        %v3035 = vadd.f32 %v2908, %v3018
        %v3036 = vadd.f32 %v2909, %v3022
        %v3037 = vadd.f32 %v2910, %v3024
        %v3038 = vadd.f32 %v2911, %v3028
        %v3039 = vadd.f32 %v2912, %v3030
        %s3040 = scalar_lea.vmem %s2, 1344
        %v3041 = vld [vmem:[%s3040] sm:$0xff]
        %v3042 = vld [vmem:[%s3040 + $0x8] sm:$0xff]
        %v3043 = vld [vmem:[%s3040 + $0x10] sm:$0xff]
        %v3044 = vld [vmem:[%s3040 + $0x18] sm:$0xff]
        %v3045 = vld [vmem:[%s3040 + $0x20] sm:$0xff]
        %v3046 = vld [vmem:[%s3040 + $0x28] sm:$0xff]
        %v3047 = vld [vmem:[%s3040 + $0x30] sm:$0xf]
        %v3048 = vld [vmem:[%s3040 + $0x38] sm:$0xf]
        %v3050 = vsel %vm540, %v3047, 0
        %v3053 = vsel %vm540, %v3048, 0
        %3055 = vmatprep.subr.mxu0 %v3042
        %3056 = vmatpush1.msra.mxu0 %v3041
        %3057 = vmatprep.subr.mxu0 %v3044
        %3058 = vmatpush1.msra.mxu0 %v3043
        %3059 = vmatprep.subr.mxu0 %v3046
        %3060 = vmatpush1.msra.mxu0 %v3045
        %3061 = vmatprep.subr.mxu0 %v3053
        %3062 = vmatpush1.msra.mxu0 %v3050
        %3063 = vmatprep.subr.mxu0 0.0
        %3064 = vmatpush1.msra.mxu0 0.0
        %3065 = vmatprep.subr.mxu0 0.0
        %3066 = vmatpush1.msra.mxu0 0.0
        %3067 = vmatprep.subr.mxu0 0.0
        %3068 = vmatpush1.msra.mxu0 0.0
        %3069 = vmatprep.subr.mxu0 0.0
        %3070 = vmatpush1.msra.mxu0 0.0
        %3071 = vmatprep.subr.mxu0 0.0
        %3072 = vmatpush1.msra.mxu0 0.0
        %3073 = vmatprep.subr.mxu0 0.0
        %3074 = vmatpush1.msra.mxu0 0.0
        %3075 = vmatprep.subr.mxu0 0.0
        %3076 = vmatpush1.msra.mxu0 0.0
        %3077 = vmatprep.subr.mxu0 0.0
        %3078 = vmatpush1.msra.mxu0 0.0
        %3079 = vmatprep.subr.mxu0 0.0
        %3080 = vmatpush1.msra.mxu0 0.0
        %3081 = vmatprep.subr.mxu0 0.0
        %3082 = vmatpush1.msra.mxu0 0.0
        %3083 = vmatprep.subr.mxu0 0.0
        %3084 = vmatpush1.msra.mxu0 0.0
        %3085 = vmatprep.subr.mxu0 0.0
        %3086 = vmatpush1.msra.mxu0 0.0
        %3087 = vmatprep.subr.mxu0 0.0
        %3088 = vmatpush1.msra.mxu0 0.0
        %3089 = vmatprep.subr.mxu0 0.0
        %3090 = vmatpush1.msra.mxu0 0.0
        %3091 = vmatprep.subr.mxu0 0.0
        %3092 = vmatpush1.msra.mxu0 0.0
        %3093 = vmatprep.subr.mxu0 0.0
        %3094 = vmatpush1.msra.mxu0 0.0
        %3095 = vmatprep.subr.mxu0 0.0
        %3096 = vmatpush1.msra.mxu0 0.0
        %3097 = vmatprep.subr.mxu0 0.0
        %3098 = vmatpush1.msra.mxu0 0.0
        %3099 = vmatprep.subr.mxu0 0.0
        %3100 = vmatpush1.msra.mxu0 0.0
        %3101 = vmatprep.subr.mxu0 0.0
        %3102 = vmatpush1.msra.mxu0 0.0
        %3103 = vmatprep.subr.mxu0 0.0
        %3104 = vmatpush1.msra.mxu0 0.0
        %3105 = vmatprep.subr.mxu0 0.0
        %3106 = vmatpush1.msra.mxu0 0.0
        %3107 = vmatprep.subr.mxu0 0.0
        %3108 = vmatpush1.msra.mxu0 0.0
        %3109 = vmatprep.subr.mxu0 0.0
        %3110 = vmatpush1.msra.mxu0 0.0
        %3111 = vmatprep.subr.mxu0 0.0
        %3112 = vmatpush1.msra.mxu0 0.0
        %3113 = vmatprep.subr.mxu0 0.0
        %3114 = vmatpush1.msra.mxu0 0.0
        %3115 = vmatprep.subr.mxu0 0.0
        %3116 = vmatpush1.msra.mxu0 0.0
        %3117 = vmatprep.subr.mxu0 0.0
        %3118 = vmatpush1.msra.mxu0 0.0
        %3119 = vmatprep.mubr.f32.mxu0 0.0
        %3120 = vmatmul.mubr.f32.gmra.mrb[0].mxu0 %v2929
        %v3121 = vpop.f32.mrb[0].mxu0
        %v3122 = vadd.f32 0.0, %v3121
        %v3123 = vpop.f32.mrb[0].mxu0
        %v3124 = vadd.f32 0.0, %v3123
        %3125 = vmatprep.mubr.f32.mxu0 0.0
        %3126 = vmatmul.mubr.f32.gmra.mrb[0].mxu0 %v2931
        %v3127 = vpop.f32.mrb[0].mxu0
        %v3128 = vadd.f32 0.0, %v3127
        %v3129 = vpop.f32.mrb[0].mxu0
        %v3130 = vadd.f32 0.0, %v3129
        %3131 = vmatprep.mubr.f32.mxu0 0.0
        %3132 = vmatmul.mubr.f32.gmra.mrb[0].mxu0 %v2933
        %v3133 = vpop.f32.mrb[0].mxu0
        %v3134 = vadd.f32 0.0, %v3133
        %v3135 = vpop.f32.mrb[0].mxu0
        %v3136 = vadd.f32 0.0, %v3135
        %3137 = vmatprep.mubr.f32.mxu0 0.0
        %3138 = vmatmul.mubr.f32.gmra.mrb[0].mxu0 %v2935
        %v3139 = vpop.f32.mrb[0].mxu0
        %v3140 = vadd.f32 0.0, %v3139
        %v3141 = vpop.f32.mrb[0].mxu0
        %v3142 = vadd.f32 0.0, %v3141
        %3143 = vdwg.mxu0
        %v3144 = vadd.f32 %v3032, %v3122
        %v3145 = vadd.f32 %v3033, %v3124
        %v3146 = vadd.f32 %v3034, %v3128
        %v3147 = vadd.f32 %v3035, %v3130
        %v3148 = vadd.f32 %v3036, %v3134
        %v3149 = vadd.f32 %v3037, %v3136
        %v3150 = vadd.f32 %v3038, %v3140
        %v3151 = vadd.f32 %v3039, %v3142
        %s3152 = scalar_lea.vmem %s2, 1408
        %v3153 = vld [vmem:[%s3152] sm:$0xff]
        %v3154 = vld [vmem:[%s3152 + $0x8] sm:$0xff]
        %v3155 = vld [vmem:[%s3152 + $0x10] sm:$0xff]
        %v3156 = vld [vmem:[%s3152 + $0x18] sm:$0xff]
        %v3157 = vld [vmem:[%s3152 + $0x20] sm:$0xff]
        %v3158 = vld [vmem:[%s3152 + $0x28] sm:$0xff]
        %v3159 = vld [vmem:[%s3152 + $0x30] sm:$0xf]
        %v3160 = vld [vmem:[%s3152 + $0x38] sm:$0xf]
        %v3162 = vsel %vm540, %v3159, 0
        %v3165 = vsel %vm540, %v3160, 0
        %3167 = vmatprep.subr.mxu0 %v3154
        %3168 = vmatpush1.msra.mxu0 %v3153
        %3169 = vmatprep.subr.mxu0 %v3156
        %3170 = vmatpush1.msra.mxu0 %v3155
        %3171 = vmatprep.subr.mxu0 %v3158
        %3172 = vmatpush1.msra.mxu0 %v3157
        %3173 = vmatprep.subr.mxu0 %v3165
        %3174 = vmatpush1.msra.mxu0 %v3162
        %3175 = vmatprep.subr.mxu0 0.0
        %3176 = vmatpush1.msra.mxu0 0.0
        %3177 = vmatprep.subr.mxu0 0.0
        %3178 = vmatpush1.msra.mxu0 0.0
        %3179 = vmatprep.subr.mxu0 0.0
        %3180 = vmatpush1.msra.mxu0 0.0
        %3181 = vmatprep.subr.mxu0 0.0
        %3182 = vmatpush1.msra.mxu0 0.0
        %3183 = vmatprep.subr.mxu0 0.0
        %3184 = vmatpush1.msra.mxu0 0.0
        %3185 = vmatprep.subr.mxu0 0.0
        %3186 = vmatpush1.msra.mxu0 0.0
        %3187 = vmatprep.subr.mxu0 0.0
        %3188 = vmatpush1.msra.mxu0 0.0
        %3189 = vmatprep.subr.mxu0 0.0
        %3190 = vmatpush1.msra.mxu0 0.0
        %3191 = vmatprep.subr.mxu0 0.0
        %3192 = vmatpush1.msra.mxu0 0.0
        %3193 = vmatprep.subr.mxu0 0.0
        %3194 = vmatpush1.msra.mxu0 0.0
        %3195 = vmatprep.subr.mxu0 0.0
        %3196 = vmatpush1.msra.mxu0 0.0
        %3197 = vmatprep.subr.mxu0 0.0
        %3198 = vmatpush1.msra.mxu0 0.0
        %3199 = vmatprep.subr.mxu0 0.0
        %3200 = vmatpush1.msra.mxu0 0.0
        %3201 = vmatprep.subr.mxu0 0.0
        %3202 = vmatpush1.msra.mxu0 0.0
        %3203 = vmatprep.subr.mxu0 0.0
        %3204 = vmatpush1.msra.mxu0 0.0
        %3205 = vmatprep.subr.mxu0 0.0
        %3206 = vmatpush1.msra.mxu0 0.0
        %3207 = vmatprep.subr.mxu0 0.0
        %3208 = vmatpush1.msra.mxu0 0.0
        %3209 = vmatprep.subr.mxu0 0.0
        %3210 = vmatpush1.msra.mxu0 0.0
        %3211 = vmatprep.subr.mxu0 0.0
        %3212 = vmatpush1.msra.mxu0 0.0
        %3213 = vmatprep.subr.mxu0 0.0
        %3214 = vmatpush1.msra.mxu0 0.0
        %3215 = vmatprep.subr.mxu0 0.0
        %3216 = vmatpush1.msra.mxu0 0.0
        %3217 = vmatprep.subr.mxu0 0.0
        %3218 = vmatpush1.msra.mxu0 0.0
        %3219 = vmatprep.subr.mxu0 0.0
        %3220 = vmatpush1.msra.mxu0 0.0
        %3221 = vmatprep.subr.mxu0 0.0
        %3222 = vmatpush1.msra.mxu0 0.0
        %3223 = vmatprep.subr.mxu0 0.0
        %3224 = vmatpush1.msra.mxu0 0.0
        %3225 = vmatprep.subr.mxu0 0.0
        %3226 = vmatpush1.msra.mxu0 0.0
        %3227 = vmatprep.subr.mxu0 0.0
        %3228 = vmatpush1.msra.mxu0 0.0
        %3229 = vmatprep.subr.mxu0 0.0
        %3230 = vmatpush1.msra.mxu0 0.0
        %3231 = vmatprep.mubr.f32.mxu0 0.0
        %3232 = vmatmul.mubr.f32.gmra.mrb[0].mxu0 %v2929
        %v3233 = vpop.f32.mrb[0].mxu0
        %v3234 = vadd.f32 0.0, %v3233
        %v3235 = vpop.f32.mrb[0].mxu0
        %v3236 = vadd.f32 0.0, %v3235
        %3237 = vmatprep.mubr.f32.mxu0 0.0
        %3238 = vmatmul.mubr.f32.gmra.mrb[0].mxu0 %v2931
        %v3239 = vpop.f32.mrb[0].mxu0
        %v3240 = vadd.f32 0.0, %v3239
        %v3241 = vpop.f32.mrb[0].mxu0
        %v3242 = vadd.f32 0.0, %v3241
        %3243 = vmatprep.mubr.f32.mxu0 0.0
        %3244 = vmatmul.mubr.f32.gmra.mrb[0].mxu0 %v2933
        %v3245 = vpop.f32.mrb[0].mxu0
        %v3246 = vadd.f32 0.0, %v3245
        %v3247 = vpop.f32.mrb[0].mxu0
        %v3248 = vadd.f32 0.0, %v3247
        %3249 = vmatprep.mubr.f32.mxu0 0.0
        %3250 = vmatmul.mubr.f32.gmra.mrb[0].mxu0 %v2935
        %v3251 = vpop.f32.mrb[0].mxu0
        %v3252 = vadd.f32 0.0, %v3251
        %v3253 = vpop.f32.mrb[0].mxu0
        %v3254 = vadd.f32 0.0, %v3253
        %3255 = vdwg.mxu0
        %v3256 = vadd.f32 %v3144, %v3234
        %v3257 = vadd.f32 %v3145, %v3236
        %v3258 = vadd.f32 %v3146, %v3240
        %v3259 = vadd.f32 %v3147, %v3242
        %v3260 = vadd.f32 %v3148, %v3246
        %v3261 = vadd.f32 %v3149, %v3248
        %v3262 = vadd.f32 %v3150, %v3252
        %v3263 = vadd.f32 %v3151, %v3254
        %s3264 = scalar_lea.vmem %s2, 1472
        %v3265 = vld [vmem:[%s3264] sm:$0xff]
        %v3266 = vld [vmem:[%s3264 + $0x8] sm:$0xff]
        %v3267 = vld [vmem:[%s3264 + $0x10] sm:$0xff]
        %v3268 = vld [vmem:[%s3264 + $0x18] sm:$0xff]
        %v3269 = vld [vmem:[%s3264 + $0x20] sm:$0xff]
        %v3270 = vld [vmem:[%s3264 + $0x28] sm:$0xff]
        %v3271 = vld [vmem:[%s3264 + $0x30] sm:$0xf]
        %v3272 = vld [vmem:[%s3264 + $0x38] sm:$0xf]
        %v3274 = vsel %vm540, %v3271, 0
        %v3277 = vsel %vm540, %v3272, 0
        %3279 = vmatprep.subr.mxu0 %v3266
        %3280 = vmatpush1.msra.mxu0 %v3265
        %3281 = vmatprep.subr.mxu0 %v3268
        %3282 = vmatpush1.msra.mxu0 %v3267
        %3283 = vmatprep.subr.mxu0 %v3270
        %3284 = vmatpush1.msra.mxu0 %v3269
        %3285 = vmatprep.subr.mxu0 %v3277
        %3286 = vmatpush1.msra.mxu0 %v3274
        %3287 = vmatprep.subr.mxu0 0.0
        %3288 = vmatpush1.msra.mxu0 0.0
        %3289 = vmatprep.subr.mxu0 0.0
        %3290 = vmatpush1.msra.mxu0 0.0
        %3291 = vmatprep.subr.mxu0 0.0
        %3292 = vmatpush1.msra.mxu0 0.0
        %3293 = vmatprep.subr.mxu0 0.0
        %3294 = vmatpush1.msra.mxu0 0.0
        %3295 = vmatprep.subr.mxu0 0.0
        %3296 = vmatpush1.msra.mxu0 0.0
        %3297 = vmatprep.subr.mxu0 0.0
        %3298 = vmatpush1.msra.mxu0 0.0
        %3299 = vmatprep.subr.mxu0 0.0
        %3300 = vmatpush1.msra.mxu0 0.0
        %3301 = vmatprep.subr.mxu0 0.0
        %3302 = vmatpush1.msra.mxu0 0.0
        %3303 = vmatprep.subr.mxu0 0.0
        %3304 = vmatpush1.msra.mxu0 0.0
        %3305 = vmatprep.subr.mxu0 0.0
        %3306 = vmatpush1.msra.mxu0 0.0
        %3307 = vmatprep.subr.mxu0 0.0
        %3308 = vmatpush1.msra.mxu0 0.0
        %3309 = vmatprep.subr.mxu0 0.0
        %3310 = vmatpush1.msra.mxu0 0.0
        %3311 = vmatprep.subr.mxu0 0.0
        %3312 = vmatpush1.msra.mxu0 0.0
        %3313 = vmatprep.subr.mxu0 0.0
        %3314 = vmatpush1.msra.mxu0 0.0
        %3315 = vmatprep.subr.mxu0 0.0
        %3316 = vmatpush1.msra.mxu0 0.0
        %3317 = vmatprep.subr.mxu0 0.0
        %3318 = vmatpush1.msra.mxu0 0.0
        %3319 = vmatprep.subr.mxu0 0.0
        %3320 = vmatpush1.msra.mxu0 0.0
        %3321 = vmatprep.subr.mxu0 0.0
        %3322 = vmatpush1.msra.mxu0 0.0
        %3323 = vmatprep.subr.mxu0 0.0
        %3324 = vmatpush1.msra.mxu0 0.0
        %3325 = vmatprep.subr.mxu0 0.0
        %3326 = vmatpush1.msra.mxu0 0.0
        %3327 = vmatprep.subr.mxu0 0.0
        %3328 = vmatpush1.msra.mxu0 0.0
        %3329 = vmatprep.subr.mxu0 0.0
        %3330 = vmatpush1.msra.mxu0 0.0
        %3331 = vmatprep.subr.mxu0 0.0
        %3332 = vmatpush1.msra.mxu0 0.0
        %3333 = vmatprep.subr.mxu0 0.0
        %3334 = vmatpush1.msra.mxu0 0.0
        %3335 = vmatprep.subr.mxu0 0.0
        %3336 = vmatpush1.msra.mxu0 0.0
        %3337 = vmatprep.subr.mxu0 0.0
        %3338 = vmatpush1.msra.mxu0 0.0
        %3339 = vmatprep.subr.mxu0 0.0
        %3340 = vmatpush1.msra.mxu0 0.0
        %3341 = vmatprep.subr.mxu0 0.0
        %3342 = vmatpush1.msra.mxu0 0.0
        %3343 = vmatprep.mubr.f32.mxu0 0.0
        %3344 = vmatmul.mubr.f32.gmra.mrb[0].mxu0 %v2929
        %v3345 = vpop.f32.mrb[0].mxu0
        %v3346 = vadd.f32 0.0, %v3345
        %v3347 = vpop.f32.mrb[0].mxu0
        %v3348 = vadd.f32 0.0, %v3347
        %3349 = vmatprep.mubr.f32.mxu0 0.0
        %3350 = vmatmul.mubr.f32.gmra.mrb[0].mxu0 %v2931
        %v3351 = vpop.f32.mrb[0].mxu0
        %v3352 = vadd.f32 0.0, %v3351
        %v3353 = vpop.f32.mrb[0].mxu0
        %v3354 = vadd.f32 0.0, %v3353
        %3355 = vmatprep.mubr.f32.mxu0 0.0
        %3356 = vmatmul.mubr.f32.gmra.mrb[0].mxu0 %v2933
        %v3357 = vpop.f32.mrb[0].mxu0
        %v3358 = vadd.f32 0.0, %v3357
        %v3359 = vpop.f32.mrb[0].mxu0
        %v3360 = vadd.f32 0.0, %v3359
        %3361 = vmatprep.mubr.f32.mxu0 0.0
        %3362 = vmatmul.mubr.f32.gmra.mrb[0].mxu0 %v2935
        %v3363 = vpop.f32.mrb[0].mxu0
        %v3364 = vadd.f32 0.0, %v3363
        %v3365 = vpop.f32.mrb[0].mxu0
        %v3366 = vadd.f32 0.0, %v3365
        %3367 = vdwg.mxu0
        %v3368 = vadd.f32 %v3256, %v3346
        %v3369 = vadd.f32 %v3257, %v3348
        %v3370 = vadd.f32 %v3258, %v3352
        %v3371 = vadd.f32 %v3259, %v3354
        %v3372 = vadd.f32 %v3260, %v3358
        %v3373 = vadd.f32 %v3261, %v3360
        %v3374 = vadd.f32 %v3262, %v3364
        %v3375 = vadd.f32 %v3263, %v3366
        %s3376 = scalar_lea.vmem %s2, 1536
        %v3377 = vld [vmem:[%s3376] sm:$0xff]
        %v3378 = vld [vmem:[%s3376 + $0x8] sm:$0xff]
        %v3379 = vld [vmem:[%s3376 + $0x10] sm:$0xff]
        %v3380 = vld [vmem:[%s3376 + $0x18] sm:$0xff]
        %v3381 = vld [vmem:[%s3376 + $0x20] sm:$0xff]
        %v3382 = vld [vmem:[%s3376 + $0x28] sm:$0xff]
        %v3383 = vld [vmem:[%s3376 + $0x30] sm:$0xf]
        %v3384 = vld [vmem:[%s3376 + $0x38] sm:$0xf]
        %v3386 = vsel %vm540, %v3383, 0
        %v3389 = vsel %vm540, %v3384, 0
        %3391 = vmatprep.subr.mxu0 %v3378
        %3392 = vmatpush1.msra.mxu0 %v3377
        %3393 = vmatprep.subr.mxu0 %v3380
        %3394 = vmatpush1.msra.mxu0 %v3379
        %3395 = vmatprep.subr.mxu0 %v3382
        %3396 = vmatpush1.msra.mxu0 %v3381
        %3397 = vmatprep.subr.mxu0 %v3389
        %3398 = vmatpush1.msra.mxu0 %v3386
        %3399 = vmatprep.subr.mxu0 0.0
        %3400 = vmatpush1.msra.mxu0 0.0
        %3401 = vmatprep.subr.mxu0 0.0
        %3402 = vmatpush1.msra.mxu0 0.0
        %3403 = vmatprep.subr.mxu0 0.0
        %3404 = vmatpush1.msra.mxu0 0.0
        %3405 = vmatprep.subr.mxu0 0.0
        %3406 = vmatpush1.msra.mxu0 0.0
        %3407 = vmatprep.subr.mxu0 0.0
        %3408 = vmatpush1.msra.mxu0 0.0
        %3409 = vmatprep.subr.mxu0 0.0
        %3410 = vmatpush1.msra.mxu0 0.0
        %3411 = vmatprep.subr.mxu0 0.0
        %3412 = vmatpush1.msra.mxu0 0.0
        %3413 = vmatprep.subr.mxu0 0.0
        %3414 = vmatpush1.msra.mxu0 0.0
        %3415 = vmatprep.subr.mxu0 0.0
        %3416 = vmatpush1.msra.mxu0 0.0
        %3417 = vmatprep.subr.mxu0 0.0
        %3418 = vmatpush1.msra.mxu0 0.0
        %3419 = vmatprep.subr.mxu0 0.0
        %3420 = vmatpush1.msra.mxu0 0.0
        %3421 = vmatprep.subr.mxu0 0.0
        %3422 = vmatpush1.msra.mxu0 0.0
        %3423 = vmatprep.subr.mxu0 0.0
        %3424 = vmatpush1.msra.mxu0 0.0
        %3425 = vmatprep.subr.mxu0 0.0
        %3426 = vmatpush1.msra.mxu0 0.0
        %3427 = vmatprep.subr.mxu0 0.0
        %3428 = vmatpush1.msra.mxu0 0.0
        %3429 = vmatprep.subr.mxu0 0.0
        %3430 = vmatpush1.msra.mxu0 0.0
        %3431 = vmatprep.subr.mxu0 0.0
        %3432 = vmatpush1.msra.mxu0 0.0
        %3433 = vmatprep.subr.mxu0 0.0
        %3434 = vmatpush1.msra.mxu0 0.0
        %3435 = vmatprep.subr.mxu0 0.0
        %3436 = vmatpush1.msra.mxu0 0.0
        %3437 = vmatprep.subr.mxu0 0.0
        %3438 = vmatpush1.msra.mxu0 0.0
        %3439 = vmatprep.subr.mxu0 0.0
        %3440 = vmatpush1.msra.mxu0 0.0
        %3441 = vmatprep.subr.mxu0 0.0
        %3442 = vmatpush1.msra.mxu0 0.0
        %3443 = vmatprep.subr.mxu0 0.0
        %3444 = vmatpush1.msra.mxu0 0.0
        %3445 = vmatprep.subr.mxu0 0.0
        %3446 = vmatpush1.msra.mxu0 0.0
        %3447 = vmatprep.subr.mxu0 0.0
        %3448 = vmatpush1.msra.mxu0 0.0
        %3449 = vmatprep.subr.mxu0 0.0
        %3450 = vmatpush1.msra.mxu0 0.0
        %3451 = vmatprep.subr.mxu0 0.0
        %3452 = vmatpush1.msra.mxu0 0.0
        %3453 = vmatprep.subr.mxu0 0.0
        %3454 = vmatpush1.msra.mxu0 0.0
        %3455 = vmatprep.mubr.f32.mxu0 0.0
        %3456 = vmatmul.mubr.f32.gmra.mrb[0].mxu0 %v2929
        %v3457 = vpop.f32.mrb[0].mxu0
        %v3458 = vadd.f32 0.0, %v3457
        %v3459 = vpop.f32.mrb[0].mxu0
        %v3460 = vadd.f32 0.0, %v3459
        %3461 = vmatprep.mubr.f32.mxu0 0.0
        %3462 = vmatmul.mubr.f32.gmra.mrb[0].mxu0 %v2931
        %v3463 = vpop.f32.mrb[0].mxu0
        %v3464 = vadd.f32 0.0, %v3463
        %v3465 = vpop.f32.mrb[0].mxu0
        %v3466 = vadd.f32 0.0, %v3465
        %3467 = vmatprep.mubr.f32.mxu0 0.0
        %3468 = vmatmul.mubr.f32.gmra.mrb[0].mxu0 %v2933
        %v3469 = vpop.f32.mrb[0].mxu0
        %v3470 = vadd.f32 0.0, %v3469
        %v3471 = vpop.f32.mrb[0].mxu0
        %v3472 = vadd.f32 0.0, %v3471
        %3473 = vmatprep.mubr.f32.mxu0 0.0
        %3474 = vmatmul.mubr.f32.gmra.mrb[0].mxu0 %v2935
        %v3475 = vpop.f32.mrb[0].mxu0
        %v3476 = vadd.f32 0.0, %v3475
        %v3477 = vpop.f32.mrb[0].mxu0
        %v3478 = vadd.f32 0.0, %v3477
        %3479 = vdwg.mxu0
        %v3480 = vadd.f32 %v3368, %v3458
        %v3481 = vadd.f32 %v3369, %v3460
        %v3482 = vadd.f32 %v3370, %v3464
        %v3483 = vadd.f32 %v3371, %v3466
        %v3484 = vadd.f32 %v3372, %v3470
        %v3485 = vadd.f32 %v3373, %v3472
        %v3486 = vadd.f32 %v3374, %v3476
        %v3487 = vadd.f32 %v3375, %v3478
        %v3489 = vlaneseq
        %v3490 = vshrl.u32 %v3489, 7
        %v3491 = vsub.s32 0, %v3490
        %v3492 = vrot.slane %v629, %v3491
        %v3493 = vlaneseq
        %v3494 = vshrl.u32 %v3493, 7
        %v3495 = vsub.s32 1, %v3494
        %v3496 = vrot.slane %v629, %v3495
        %v3499 = vadd.f32 %v3480, %v3492
        %v3500 = vadd.f32 %v3481, %v3496
        %v3501 = vadd.f32 %v3482, %v3492
        %v3502 = vadd.f32 %v3483, %v3496
        %v3503 = vadd.f32 %v3484, %v3492
        %v3504 = vadd.f32 %v3485, %v3496
        %v3505 = vadd.f32 %v3486, %v3492
        %v3506 = vadd.f32 %v3487, %v3496
        %v3507 = vmax.f32 %v3499, 0.0
        %v3508 = vmax.f32 %v3500, 0.0
        %v3509 = vmax.f32 %v3501, 0.0
        %v3510 = vmax.f32 %v3502, 0.0
        %v3511 = vmax.f32 %v3503, 0.0
        %v3512 = vmax.f32 %v3504, 0.0
        %v3513 = vmax.f32 %v3505, 0.0
        %v3514 = vmax.f32 %v3506, 0.0
        %v3515 = vld [vmem:[%s4] sm:$0xff]
        %v3516 = vld [vmem:[%s4 + $0x8] sm:$0x3f]
        %v3518 = vsel %vm527, %v3515, 0
        %v3521 = vsel %vm527, %v3516, 0
        %v3524 = vsel %vm540, %v3513, 0
        %v3527 = vsel %vm540, %v3514, 0
        %3529 = vmatprep.subr.mxu0 %v3508
        %3530 = vmatpush1.msra.mxu0 %v3507
        %3531 = vmatprep.subr.mxu0 %v3510
        %3532 = vmatpush1.msra.mxu0 %v3509
        %3533 = vmatprep.subr.mxu0 %v3512
        %3534 = vmatpush1.msra.mxu0 %v3511
        %3535 = vmatprep.subr.mxu0 %v3527
        %3536 = vmatpush1.msra.mxu0 %v3524
        %3537 = vmatprep.subr.mxu0 0.0
        %3538 = vmatpush1.msra.mxu0 0.0
        %3539 = vmatprep.subr.mxu0 0.0
        %3540 = vmatpush1.msra.mxu0 0.0
        %3541 = vmatprep.subr.mxu0 0.0
        %3542 = vmatpush1.msra.mxu0 0.0
        %3543 = vmatprep.subr.mxu0 0.0
        %3544 = vmatpush1.msra.mxu0 0.0
        %3545 = vmatprep.subr.mxu0 0.0
        %3546 = vmatpush1.msra.mxu0 0.0
        %3547 = vmatprep.subr.mxu0 0.0
        %3548 = vmatpush1.msra.mxu0 0.0
        %3549 = vmatprep.subr.mxu0 0.0
        %3550 = vmatpush1.msra.mxu0 0.0
        %3551 = vmatprep.subr.mxu0 0.0
        %3552 = vmatpush1.msra.mxu0 0.0
        %3553 = vmatprep.subr.mxu0 0.0
        %3554 = vmatpush1.msra.mxu0 0.0
        %3555 = vmatprep.subr.mxu0 0.0
        %3556 = vmatpush1.msra.mxu0 0.0
        %3557 = vmatprep.subr.mxu0 0.0
        %3558 = vmatpush1.msra.mxu0 0.0
        %3559 = vmatprep.subr.mxu0 0.0
        %3560 = vmatpush1.msra.mxu0 0.0
        %3561 = vmatprep.subr.mxu0 0.0
        %3562 = vmatpush1.msra.mxu0 0.0
        %3563 = vmatprep.subr.mxu0 0.0
        %3564 = vmatpush1.msra.mxu0 0.0
        %3565 = vmatprep.subr.mxu0 0.0
        %3566 = vmatpush1.msra.mxu0 0.0
        %3567 = vmatprep.subr.mxu0 0.0
        %3568 = vmatpush1.msra.mxu0 0.0
        %3569 = vmatprep.subr.mxu0 0.0
        %3570 = vmatpush1.msra.mxu0 0.0
        %3571 = vmatprep.subr.mxu0 0.0
        %3572 = vmatpush1.msra.mxu0 0.0
        %3573 = vmatprep.subr.mxu0 0.0
        %3574 = vmatpush1.msra.mxu0 0.0
        %3575 = vmatprep.subr.mxu0 0.0
        %3576 = vmatpush1.msra.mxu0 0.0
        %3577 = vmatprep.subr.mxu0 0.0
        %3578 = vmatpush1.msra.mxu0 0.0
        %3579 = vmatprep.subr.mxu0 0.0
        %3580 = vmatpush1.msra.mxu0 0.0
        %3581 = vmatprep.subr.mxu0 0.0
        %3582 = vmatpush1.msra.mxu0 0.0
        %3583 = vmatprep.subr.mxu0 0.0
        %3584 = vmatpush1.msra.mxu0 0.0
        %3585 = vmatprep.subr.mxu0 0.0
        %3586 = vmatpush1.msra.mxu0 0.0
        %3587 = vmatprep.subr.mxu0 0.0
        %3588 = vmatpush1.msra.mxu0 0.0
        %3589 = vmatprep.subr.mxu0 0.0
        %3590 = vmatpush1.msra.mxu0 0.0
        %3591 = vmatprep.subr.mxu0 0.0
        %3592 = vmatpush1.msra.mxu0 0.0
        %3593 = vmatprep.mubr.f32.mxu0 0.0
        %3594 = vmatmul.mubr.f32.gmra.mrb[0].mxu0 %v3518
        %v3595 = vpop.f32.mrb[0].mxu0
        %v3596 = vadd.f32 0.0, %v3595
        %v3597 = vpop.f32.mrb[0].mxu0
        %v3598 = vadd.f32 0.0, %v3597
        %3599 = vmatprep.mubr.f32.mxu0 0.0
        %3600 = vmatmul.mubr.f32.gmra.mrb[0].mxu0 %v3521
        %v3601 = vpop.f32.mrb[0].mxu0
        %v3602 = vadd.f32 0.0, %v3601
        %v3603 = vpop.f32.mrb[0].mxu0
        %v3604 = vadd.f32 0.0, %v3603
        %3605 = vdwg.mxu0
        %s3606 = scalar_lea.vmem %s4, 16
        %v3607 = vld [vmem:[%s3606] sm:$0xff]
        %v3608 = vld [vmem:[%s3606 + $0x8] sm:$0x3f]
        %v3610 = vsel %vm527, %v3607, 0
        %v3613 = vsel %vm527, %v3608, 0
        %3615 = vmatprep.subr.mxu0 %v3508
        %3616 = vmatpush1.msra.mxu0 %v3507
        %3617 = vmatprep.subr.mxu0 %v3510
        %3618 = vmatpush1.msra.mxu0 %v3509
        %3619 = vmatprep.subr.mxu0 %v3512
        %3620 = vmatpush1.msra.mxu0 %v3511
        %3621 = vmatprep.subr.mxu0 %v3527
        %3622 = vmatpush1.msra.mxu0 %v3524
        %3623 = vmatprep.subr.mxu0 0.0
        %3624 = vmatpush1.msra.mxu0 0.0
        %3625 = vmatprep.subr.mxu0 0.0
        %3626 = vmatpush1.msra.mxu0 0.0
        %3627 = vmatprep.subr.mxu0 0.0
        %3628 = vmatpush1.msra.mxu0 0.0
        %3629 = vmatprep.subr.mxu0 0.0
        %3630 = vmatpush1.msra.mxu0 0.0
        %3631 = vmatprep.subr.mxu0 0.0
        %3632 = vmatpush1.msra.mxu0 0.0
        %3633 = vmatprep.subr.mxu0 0.0
        %3634 = vmatpush1.msra.mxu0 0.0
        %3635 = vmatprep.subr.mxu0 0.0
        %3636 = vmatpush1.msra.mxu0 0.0
        %3637 = vmatprep.subr.mxu0 0.0
        %3638 = vmatpush1.msra.mxu0 0.0
        %3639 = vmatprep.subr.mxu0 0.0
        %3640 = vmatpush1.msra.mxu0 0.0
        %3641 = vmatprep.subr.mxu0 0.0
        %3642 = vmatpush1.msra.mxu0 0.0
        %3643 = vmatprep.subr.mxu0 0.0
        %3644 = vmatpush1.msra.mxu0 0.0
        %3645 = vmatprep.subr.mxu0 0.0
        %3646 = vmatpush1.msra.mxu0 0.0
        %3647 = vmatprep.subr.mxu0 0.0
        %3648 = vmatpush1.msra.mxu0 0.0
        %3649 = vmatprep.subr.mxu0 0.0
        %3650 = vmatpush1.msra.mxu0 0.0
        %3651 = vmatprep.subr.mxu0 0.0
        %3652 = vmatpush1.msra.mxu0 0.0
        %3653 = vmatprep.subr.mxu0 0.0
        %3654 = vmatpush1.msra.mxu0 0.0
        %3655 = vmatprep.subr.mxu0 0.0
        %3656 = vmatpush1.msra.mxu0 0.0
        %3657 = vmatprep.subr.mxu0 0.0
        %3658 = vmatpush1.msra.mxu0 0.0
        %3659 = vmatprep.subr.mxu0 0.0
        %3660 = vmatpush1.msra.mxu0 0.0
        %3661 = vmatprep.subr.mxu0 0.0
        %3662 = vmatpush1.msra.mxu0 0.0
        %3663 = vmatprep.subr.mxu0 0.0
        %3664 = vmatpush1.msra.mxu0 0.0
        %3665 = vmatprep.subr.mxu0 0.0
        %3666 = vmatpush1.msra.mxu0 0.0
        %3667 = vmatprep.subr.mxu0 0.0
        %3668 = vmatpush1.msra.mxu0 0.0
        %3669 = vmatprep.subr.mxu0 0.0
        %3670 = vmatpush1.msra.mxu0 0.0
        %3671 = vmatprep.subr.mxu0 0.0
        %3672 = vmatpush1.msra.mxu0 0.0
        %3673 = vmatprep.subr.mxu0 0.0
        %3674 = vmatpush1.msra.mxu0 0.0
        %3675 = vmatprep.subr.mxu0 0.0
        %3676 = vmatpush1.msra.mxu0 0.0
        %3677 = vmatprep.subr.mxu0 0.0
        %3678 = vmatpush1.msra.mxu0 0.0
        %3679 = vmatprep.mubr.f32.mxu0 0.0
        %3680 = vmatmul.mubr.f32.gmra.mrb[0].mxu0 %v3610
        %v3681 = vpop.f32.mrb[0].mxu0
        %v3682 = vadd.f32 0.0, %v3681
        %v3683 = vpop.f32.mrb[0].mxu0
        %v3684 = vadd.f32 0.0, %v3683
        %3685 = vmatprep.mubr.f32.mxu0 0.0
        %3686 = vmatmul.mubr.f32.gmra.mrb[0].mxu0 %v3613
        %v3687 = vpop.f32.mrb[0].mxu0
        %v3688 = vadd.f32 0.0, %v3687
        %v3689 = vpop.f32.mrb[0].mxu0
        %v3690 = vadd.f32 0.0, %v3689
        %3691 = vdwg.mxu0
        %v3692 = vmax.f32 %v3596, %v3682
        %v3693 = vmax.f32 %v3598, %v3684
        %v3694 = vmax.f32 %v3602, %v3688
        %v3695 = vmax.f32 %v3604, %v3690
        %v3696 = vld [vmem:[%s5] sm:$0xff]
        %v3697 = vld [vmem:[%s5 + $0x8] sm:$0xff]
        %v3698 = vld [vmem:[%s5 + $0x10] sm:$0xff]
        %v3699 = vld [vmem:[%s5 + $0x18] sm:$0xff]
        %v3700 = vld [vmem:[%s5 + $0x20] sm:$0xff]
        %v3701 = vld [vmem:[%s5 + $0x28] sm:$0xff]
        %v3702 = vld [vmem:[%s5 + $0x30] sm:$0xff]
        %v3703 = vld [vmem:[%s5 + $0x38] sm:$0xff]
        %v3704 = vld [vmem:[%s5 + $0x40] sm:$0xff]
        %v3705 = vld [vmem:[%s5 + $0x48] sm:$0xff]
        %v3706 = vld [vmem:[%s5 + $0x50] sm:$0xff]
        %v3707 = vld [vmem:[%s5 + $0x58] sm:$0xff]
        %v3708 = vld [vmem:[%s5 + $0x60] sm:$0xff]
        %v3709 = vld [vmem:[%s5 + $0x68] sm:$0xff]
        %v3710 = vld [vmem:[%s5 + $0x70] sm:$0xff]
        %v3711 = vld [vmem:[%s5 + $0x78] sm:$0xff]
        %v3712 = vld [vmem:[%s5 + $0x80] sm:$0xff]
        %v3713 = vld [vmem:[%s5 + $0x88] sm:$0xff]
        %v3714 = vld [vmem:[%s5 + $0x90] sm:$0xff]
        %v3715 = vld [vmem:[%s5 + $0x98] sm:$0xff]
        %v3716 = vld [vmem:[%s5 + $0xa0] sm:$0xff]
        %vm3717 = vcmask 326656
        %v3719 = vsel %vm3717, %v3693, 0
        %v3722 = vsel %vm3717, %v3695, 0
        %3724 = vmatprep.subr.mxu0 0.0
        %3725 = vmatpush1.msra.mxu0 %v3696
        %3726 = vmatprep.subr.mxu0 0.0
        %3727 = vmatpush1.msra.mxu0 %v3697
        %3728 = vmatprep.subr.mxu0 0.0
        %3729 = vmatpush1.msra.mxu0 %v3698
        %3730 = vmatprep.subr.mxu0 0.0
        %3731 = vmatpush1.msra.mxu0 %v3699
        %3732 = vmatprep.subr.mxu0 0.0
        %3733 = vmatpush1.msra.mxu0 %v3700
        %3734 = vmatprep.subr.mxu0 0.0
        %3735 = vmatpush1.msra.mxu0 %v3701
        %3736 = vmatprep.subr.mxu0 0.0
        %3737 = vmatpush1.msra.mxu0 %v3702
        %3738 = vmatprep.subr.mxu0 0.0
        %3739 = vmatpush1.msra.mxu0 %v3703
        %3740 = vmatprep.subr.mxu0 0.0
        %3741 = vmatpush1.msra.mxu0 %v3704
        %3742 = vmatprep.subr.mxu0 0.0
        %3743 = vmatpush1.msra.mxu0 %v3705
        %3744 = vmatprep.subr.mxu0 0.0
        %3745 = vmatpush1.msra.mxu0 %v3706
        %3746 = vmatprep.subr.mxu0 0.0
        %3747 = vmatpush1.msra.mxu0 %v3707
        %3748 = vmatprep.subr.mxu0 0.0
        %3749 = vmatpush1.msra.mxu0 %v3708
        %3750 = vmatprep.subr.mxu0 0.0
        %3751 = vmatpush1.msra.mxu0 %v3709
        %3752 = vmatprep.subr.mxu0 0.0
        %3753 = vmatpush1.msra.mxu0 %v3710
        %3754 = vmatprep.subr.mxu0 0.0
        %3755 = vmatpush1.msra.mxu0 %v3711
        %3756 = vmatprep.subr.mxu0 0.0
        %3757 = vmatpush1.msra.mxu0 %v3712
        %3758 = vmatprep.subr.mxu0 0.0
        %3759 = vmatpush1.msra.mxu0 %v3713
        %3760 = vmatprep.subr.mxu0 0.0
        %3761 = vmatpush1.msra.mxu0 %v3714
        %3762 = vmatprep.subr.mxu0 0.0
        %3763 = vmatpush1.msra.mxu0 %v3715
        %3764 = vmatprep.subr.mxu0 0.0
        %3765 = vmatpush1.msra.mxu0 %v3716
        %3766 = vmatprep.subr.mxu0 0.0
        %3767 = vmatpush1.msra.mxu0 0.0
        %3768 = vmatprep.subr.mxu0 0.0
        %3769 = vmatpush1.msra.mxu0 0.0
        %3770 = vmatprep.subr.mxu0 0.0
        %3771 = vmatpush1.msra.mxu0 0.0
        %3772 = vmatprep.subr.mxu0 0.0
        %3773 = vmatpush1.msra.mxu0 0.0
        %3774 = vmatprep.subr.mxu0 0.0
        %3775 = vmatpush1.msra.mxu0 0.0
        %3776 = vmatprep.subr.mxu0 0.0
        %3777 = vmatpush1.msra.mxu0 0.0
        %3778 = vmatprep.subr.mxu0 0.0
        %3779 = vmatpush1.msra.mxu0 0.0
        %3780 = vmatprep.subr.mxu0 0.0
        %3781 = vmatpush1.msra.mxu0 0.0
        %3782 = vmatprep.subr.mxu0 0.0
        %3783 = vmatpush1.msra.mxu0 0.0
        %3784 = vmatprep.subr.mxu0 0.0
        %3785 = vmatpush1.msra.mxu0 0.0
        %3786 = vmatprep.subr.mxu0 0.0
        %3787 = vmatpush1.msra.mxu0 0.0
        %3788 = vmatprep.mubr.f32.mxu0 %v3719
        %3789 = vmatmul.mubr.f32.gmra.mrb[0].mxu0 %v3692
        %v3790 = vpop.f32.mrb[0].mxu0
        %v3791 = vadd.f32 0.0, %v3790
        %v3792 = vpop.f32.mrb[0].mxu0
        %3793 = vmatprep.mubr.f32.mxu0 %v3722
        %3794 = vmatmul.mubr.f32.gmra.mrb[0].mxu0 %v3694
        %v3795 = vpop.f32.mrb[0].mxu0
        %v3796 = vadd.f32 0.0, %v3795
        %v3797 = vpop.f32.mrb[0].mxu0
        %3798 = vdwg.mxu0
        %s3799 = scalar_lea.vmem %s5, 168
        %v3800 = vld [vmem:[%s3799] sm:$0xff]
        %v3801 = vld [vmem:[%s3799 + $0x8] sm:$0xff]
        %v3802 = vld [vmem:[%s3799 + $0x10] sm:$0xff]
        %v3803 = vld [vmem:[%s3799 + $0x18] sm:$0xff]
        %v3804 = vld [vmem:[%s3799 + $0x20] sm:$0xff]
        %v3805 = vld [vmem:[%s3799 + $0x28] sm:$0xff]
        %v3806 = vld [vmem:[%s3799 + $0x30] sm:$0xff]
        %v3807 = vld [vmem:[%s3799 + $0x38] sm:$0xff]
        %v3808 = vld [vmem:[%s3799 + $0x40] sm:$0xff]
        %v3809 = vld [vmem:[%s3799 + $0x48] sm:$0xff]
        %v3810 = vld [vmem:[%s3799 + $0x50] sm:$0xff]
        %v3811 = vld [vmem:[%s3799 + $0x58] sm:$0xff]
        %v3812 = vld [vmem:[%s3799 + $0x60] sm:$0xff]
        %v3813 = vld [vmem:[%s3799 + $0x68] sm:$0xff]
        %v3814 = vld [vmem:[%s3799 + $0x70] sm:$0xff]
        %v3815 = vld [vmem:[%s3799 + $0x78] sm:$0xff]
        %v3816 = vld [vmem:[%s3799 + $0x80] sm:$0xff]
        %v3817 = vld [vmem:[%s3799 + $0x88] sm:$0xff]
        %v3818 = vld [vmem:[%s3799 + $0x90] sm:$0xff]
        %v3819 = vld [vmem:[%s3799 + $0x98] sm:$0xff]
        %v3820 = vld [vmem:[%s3799 + $0xa0] sm:$0xff]
        %3821 = vmatprep.subr.mxu0 0.0
        %3822 = vmatpush1.msra.mxu0 %v3800
        %3823 = vmatprep.subr.mxu0 0.0
        %3824 = vmatpush1.msra.mxu0 %v3801
        %3825 = vmatprep.subr.mxu0 0.0
        %3826 = vmatpush1.msra.mxu0 %v3802
        %3827 = vmatprep.subr.mxu0 0.0
        %3828 = vmatpush1.msra.mxu0 %v3803
        %3829 = vmatprep.subr.mxu0 0.0
        %3830 = vmatpush1.msra.mxu0 %v3804
        %3831 = vmatprep.subr.mxu0 0.0
        %3832 = vmatpush1.msra.mxu0 %v3805
        %3833 = vmatprep.subr.mxu0 0.0
        %3834 = vmatpush1.msra.mxu0 %v3806
        %3835 = vmatprep.subr.mxu0 0.0
        %3836 = vmatpush1.msra.mxu0 %v3807
        %3837 = vmatprep.subr.mxu0 0.0
        %3838 = vmatpush1.msra.mxu0 %v3808
        %3839 = vmatprep.subr.mxu0 0.0
        %3840 = vmatpush1.msra.mxu0 %v3809
        %3841 = vmatprep.subr.mxu0 0.0
        %3842 = vmatpush1.msra.mxu0 %v3810
        %3843 = vmatprep.subr.mxu0 0.0
        %3844 = vmatpush1.msra.mxu0 %v3811
        %3845 = vmatprep.subr.mxu0 0.0
        %3846 = vmatpush1.msra.mxu0 %v3812
        %3847 = vmatprep.subr.mxu0 0.0
        %3848 = vmatpush1.msra.mxu0 %v3813
        %3849 = vmatprep.subr.mxu0 0.0
        %3850 = vmatpush1.msra.mxu0 %v3814
        %3851 = vmatprep.subr.mxu0 0.0
        %3852 = vmatpush1.msra.mxu0 %v3815
        %3853 = vmatprep.subr.mxu0 0.0
        %3854 = vmatpush1.msra.mxu0 %v3816
        %3855 = vmatprep.subr.mxu0 0.0
        %3856 = vmatpush1.msra.mxu0 %v3817
        %3857 = vmatprep.subr.mxu0 0.0
        %3858 = vmatpush1.msra.mxu0 %v3818
        %3859 = vmatprep.subr.mxu0 0.0
        %3860 = vmatpush1.msra.mxu0 %v3819
        %3861 = vmatprep.subr.mxu0 0.0
        %3862 = vmatpush1.msra.mxu0 %v3820
        %3863 = vmatprep.subr.mxu0 0.0
        %3864 = vmatpush1.msra.mxu0 0.0
        %3865 = vmatprep.subr.mxu0 0.0
        %3866 = vmatpush1.msra.mxu0 0.0
        %3867 = vmatprep.subr.mxu0 0.0
        %3868 = vmatpush1.msra.mxu0 0.0
        %3869 = vmatprep.subr.mxu0 0.0
        %3870 = vmatpush1.msra.mxu0 0.0
        %3871 = vmatprep.subr.mxu0 0.0
        %3872 = vmatpush1.msra.mxu0 0.0
        %3873 = vmatprep.subr.mxu0 0.0
        %3874 = vmatpush1.msra.mxu0 0.0
        %3875 = vmatprep.subr.mxu0 0.0
        %3876 = vmatpush1.msra.mxu0 0.0
        %3877 = vmatprep.subr.mxu0 0.0
        %3878 = vmatpush1.msra.mxu0 0.0
        %3879 = vmatprep.subr.mxu0 0.0
        %3880 = vmatpush1.msra.mxu0 0.0
        %3881 = vmatprep.subr.mxu0 0.0
        %3882 = vmatpush1.msra.mxu0 0.0
        %3883 = vmatprep.subr.mxu0 0.0
        %3884 = vmatpush1.msra.mxu0 0.0
        %3885 = vmatprep.mubr.f32.mxu0 %v3719
        %3886 = vmatmul.mubr.f32.gmra.mrb[0].mxu0 %v3692
        %v3887 = vpop.f32.mrb[0].mxu0
        %v3888 = vadd.f32 0.0, %v3887
        %v3889 = vpop.f32.mrb[0].mxu0
        %3890 = vmatprep.mubr.f32.mxu0 %v3722
        %3891 = vmatmul.mubr.f32.gmra.mrb[0].mxu0 %v3694
        %v3892 = vpop.f32.mrb[0].mxu0
        %v3893 = vadd.f32 0.0, %v3892
        %v3894 = vpop.f32.mrb[0].mxu0
        %3895 = vdwg.mxu0
        %v3896 = vmax.f32 %v3791, %v3888
        %v3897 = vmax.f32 %v3796, %v3893
        %v3898 = vld [vmem:[%s7] sm:$0x3]
        %v3899 = vld [vmem:[%s6] sm:$0xff]
        %v3900 = vld [vmem:[%s6 + $0x8] sm:$0xff]
        %v3901 = vld [vmem:[%s6 + $0x10] sm:$0xff]
        %v3902 = vld [vmem:[%s6 + $0x18] sm:$0xff]
        %v3903 = vld [vmem:[%s6 + $0x20] sm:$0xff]
        %v3904 = vld [vmem:[%s6 + $0x28] sm:$0xff]
        %v3905 = vld [vmem:[%s6 + $0x30] sm:$0xff]
        %v3906 = vld [vmem:[%s6 + $0x38] sm:$0xff]
        %v3907 = vld [vmem:[%s6 + $0x40] sm:$0xff]
        %v3908 = vld [vmem:[%s6 + $0x48] sm:$0xff]
        %v3909 = vld [vmem:[%s6 + $0x50] sm:$0xff]
        %v3910 = vld [vmem:[%s6 + $0x58] sm:$0xff]
        %v3911 = vld [vmem:[%s6 + $0x60] sm:$0xff]
        %v3912 = vld [vmem:[%s6 + $0x68] sm:$0xff]
        %v3913 = vld [vmem:[%s6 + $0x70] sm:$0xff]
        %v3914 = vld [vmem:[%s6 + $0x78] sm:$0xff]
        %v3915 = vld [vmem:[%s6 + $0x80] sm:$0xff]
        %v3916 = vld [vmem:[%s6 + $0x88] sm:$0xff]
        %v3917 = vld [vmem:[%s6 + $0x90] sm:$0xff]
        %v3918 = vld [vmem:[%s6 + $0x98] sm:$0xff]
        %v3919 = vld [vmem:[%s6 + $0xa0] sm:$0xf]
        %v3920 = vld [vmem:[%s6 + $0xa8] sm:$0xf]
        %s3921 = scalar_lea.vmem %s6, 176
        %v3922 = vld [vmem:[%s3921] sm:$0xff]
        %v3923 = vld [vmem:[%s3921 + $0x8] sm:$0xff]
        %v3924 = vld [vmem:[%s3921 + $0x10] sm:$0xff]
        %v3925 = vld [vmem:[%s3921 + $0x18] sm:$0xff]
        %v3926 = vld [vmem:[%s3921 + $0x20] sm:$0xff]
        %v3927 = vld [vmem:[%s3921 + $0x28] sm:$0xff]
        %v3928 = vld [vmem:[%s3921 + $0x30] sm:$0xff]
        %v3929 = vld [vmem:[%s3921 + $0x38] sm:$0xff]
        %v3930 = vld [vmem:[%s3921 + $0x40] sm:$0xff]
        %v3931 = vld [vmem:[%s3921 + $0x48] sm:$0xff]
        %v3932 = vld [vmem:[%s3921 + $0x50] sm:$0xff]
        %v3933 = vld [vmem:[%s3921 + $0x58] sm:$0xff]
        %v3934 = vld [vmem:[%s3921 + $0x60] sm:$0xff]
        %v3935 = vld [vmem:[%s3921 + $0x68] sm:$0xff]
        %v3936 = vld [vmem:[%s3921 + $0x70] sm:$0xff]
        %v3937 = vld [vmem:[%s3921 + $0x78] sm:$0xff]
        %v3938 = vld [vmem:[%s3921 + $0x80] sm:$0xff]
        %v3939 = vld [vmem:[%s3921 + $0x88] sm:$0xff]
        %v3940 = vld [vmem:[%s3921 + $0x90] sm:$0xff]
        %v3941 = vld [vmem:[%s3921 + $0x98] sm:$0xff]
        %v3942 = vld [vmem:[%s3921 + $0xa0] sm:$0xf]
        %v3943 = vld [vmem:[%s3921 + $0xa8] sm:$0xf]
        %vm3944 = vcmask 687104
        %v3946 = vsel %vm3944, %v3896, 0
        %v3949 = vsel %vm3944, %v3897, 0
        %v3952 = vsel %vm540, %v3942, 0
        %v3955 = vsel %vm540, %v3943, 0
        %3957 = vmatprep.subr.mxu0 %v3923
        %3958 = vmatpush1.msra.mxu0 %v3922
        %3959 = vmatprep.subr.mxu0 %v3925
        %3960 = vmatpush1.msra.mxu0 %v3924
        %3961 = vmatprep.subr.mxu0 %v3927
        %3962 = vmatpush1.msra.mxu0 %v3926
        %3963 = vmatprep.subr.mxu0 %v3929
        %3964 = vmatpush1.msra.mxu0 %v3928
        %3965 = vmatprep.subr.mxu0 %v3931
        %3966 = vmatpush1.msra.mxu0 %v3930
        %3967 = vmatprep.subr.mxu0 %v3933
        %3968 = vmatpush1.msra.mxu0 %v3932
        %3969 = vmatprep.subr.mxu0 %v3935
        %3970 = vmatpush1.msra.mxu0 %v3934
        %3971 = vmatprep.subr.mxu0 %v3937
        %3972 = vmatpush1.msra.mxu0 %v3936
        %3973 = vmatprep.subr.mxu0 %v3939
        %3974 = vmatpush1.msra.mxu0 %v3938
        %3975 = vmatprep.subr.mxu0 %v3941
        %3976 = vmatpush1.msra.mxu0 %v3940
        %3977 = vmatprep.subr.mxu0 %v3955
        %3978 = vmatpush1.msra.mxu0 %v3952
        %3979 = vmatprep.subr.mxu0 0.0
        %3980 = vmatpush1.msra.mxu0 0.0
        %3981 = vmatprep.subr.mxu0 0.0
        %3982 = vmatpush1.msra.mxu0 0.0
        %3983 = vmatprep.subr.mxu0 0.0
        %3984 = vmatpush1.msra.mxu0 0.0
        %3985 = vmatprep.subr.mxu0 0.0
        %3986 = vmatpush1.msra.mxu0 0.0
        %3987 = vmatprep.subr.mxu0 0.0
        %3988 = vmatpush1.msra.mxu0 0.0
        %3989 = vmatprep.subr.mxu0 0.0
        %3990 = vmatpush1.msra.mxu0 0.0
        %3991 = vmatprep.subr.mxu0 0.0
        %3992 = vmatpush1.msra.mxu0 0.0
        %3993 = vmatprep.subr.mxu0 0.0
        %3994 = vmatpush1.msra.mxu0 0.0
        %3995 = vmatprep.subr.mxu0 0.0
        %3996 = vmatpush1.msra.mxu0 0.0
        %3997 = vmatprep.subr.mxu0 0.0
        %3998 = vmatpush1.msra.mxu0 0.0
        %3999 = vmatprep.subr.mxu0 0.0
        %4000 = vmatpush1.msra.mxu0 0.0
        %4001 = vmatprep.subr.mxu0 0.0
        %4002 = vmatpush1.msra.mxu0 0.0
        %4003 = vmatprep.subr.mxu0 0.0
        %4004 = vmatpush1.msra.mxu0 0.0
        %4005 = vmatprep.subr.mxu0 0.0
        %4006 = vmatpush1.msra.mxu0 0.0
        %4007 = vmatprep.subr.mxu0 0.0
        %4008 = vmatpush1.msra.mxu0 0.0
        %4009 = vmatprep.subr.mxu0 0.0
        %4010 = vmatpush1.msra.mxu0 0.0
        %4011 = vmatprep.subr.mxu0 0.0
        %4012 = vmatpush1.msra.mxu0 0.0
        %4013 = vmatprep.subr.mxu0 0.0
        %4014 = vmatpush1.msra.mxu0 0.0
        %4015 = vmatprep.subr.mxu0 0.0
        %4016 = vmatpush1.msra.mxu0 0.0
        %4017 = vmatprep.subr.mxu0 0.0
        %4018 = vmatpush1.msra.mxu0 0.0
        %4019 = vmatprep.subr.mxu0 0.0
        %4020 = vmatpush1.msra.mxu0 0.0
        %4021 = vmatprep.mubr.f32.mxu0 0.0
        %4022 = vmatmul.mubr.f32.gmra.mrb[0].mxu0 %v3946
        %v4023 = vpop.f32.mrb[0].mxu0
        %v4024 = vadd.f32 0.0, %v4023
        %v4025 = vpop.f32.mrb[0].mxu0
        %v4026 = vadd.f32 0.0, %v4025
        %4027 = vmatprep.mubr.f32.mxu0 0.0
        %4028 = vmatmul.mubr.f32.gmra.mrb[0].mxu0 %v3949
        %v4029 = vpop.f32.mrb[0].mxu0
        %v4030 = vadd.f32 0.0, %v4029
        %v4031 = vpop.f32.mrb[0].mxu0
        %v4032 = vadd.f32 0.0, %v4031
        %4033 = vdwg.mxu0
        %v4035 = vsel %vm540, %v3919, 0
        %v4038 = vsel %vm540, %v3920, 0
        %4040 = vmatprep.subr.mxu0 %v3900
        %4041 = vmatpush1.msra.mxu0 %v3899
        %4042 = vmatprep.subr.mxu0 %v3902
        %4043 = vmatpush1.msra.mxu0 %v3901
        %4044 = vmatprep.subr.mxu0 %v3904
        %4045 = vmatpush1.msra.mxu0 %v3903
        %4046 = vmatprep.subr.mxu0 %v3906
        %4047 = vmatpush1.msra.mxu0 %v3905
        %4048 = vmatprep.subr.mxu0 %v3908
        %4049 = vmatpush1.msra.mxu0 %v3907
        %4050 = vmatprep.subr.mxu0 %v3910
        %4051 = vmatpush1.msra.mxu0 %v3909
        %4052 = vmatprep.subr.mxu0 %v3912
        %4053 = vmatpush1.msra.mxu0 %v3911
        %4054 = vmatprep.subr.mxu0 %v3914
        %4055 = vmatpush1.msra.mxu0 %v3913
        %4056 = vmatprep.subr.mxu0 %v3916
        %4057 = vmatpush1.msra.mxu0 %v3915
        %4058 = vmatprep.subr.mxu0 %v3918
        %4059 = vmatpush1.msra.mxu0 %v3917
        %4060 = vmatprep.subr.mxu0 %v4038
        %4061 = vmatpush1.msra.mxu0 %v4035
        %4062 = vmatprep.subr.mxu0 0.0
        %4063 = vmatpush1.msra.mxu0 0.0
        %4064 = vmatprep.subr.mxu0 0.0
        %4065 = vmatpush1.msra.mxu0 0.0
        %4066 = vmatprep.subr.mxu0 0.0
        %4067 = vmatpush1.msra.mxu0 0.0
        %4068 = vmatprep.subr.mxu0 0.0
        %4069 = vmatpush1.msra.mxu0 0.0
        %4070 = vmatprep.subr.mxu0 0.0
        %4071 = vmatpush1.msra.mxu0 0.0
        %4072 = vmatprep.subr.mxu0 0.0
        %4073 = vmatpush1.msra.mxu0 0.0
        %4074 = vmatprep.subr.mxu0 0.0
        %4075 = vmatpush1.msra.mxu0 0.0
        %4076 = vmatprep.subr.mxu0 0.0
        %4077 = vmatpush1.msra.mxu0 0.0
        %4078 = vmatprep.subr.mxu0 0.0
        %4079 = vmatpush1.msra.mxu0 0.0
        %4080 = vmatprep.subr.mxu0 0.0
        %4081 = vmatpush1.msra.mxu0 0.0
        %4082 = vmatprep.subr.mxu0 0.0
        %4083 = vmatpush1.msra.mxu0 0.0
        %4084 = vmatprep.subr.mxu0 0.0
        %4085 = vmatpush1.msra.mxu0 0.0
        %4086 = vmatprep.subr.mxu0 0.0
        %4087 = vmatpush1.msra.mxu0 0.0
        %4088 = vmatprep.subr.mxu0 0.0
        %4089 = vmatpush1.msra.mxu0 0.0
        %4090 = vmatprep.subr.mxu0 0.0
        %4091 = vmatpush1.msra.mxu0 0.0
        %4092 = vmatprep.subr.mxu0 0.0
        %4093 = vmatpush1.msra.mxu0 0.0
        %4094 = vmatprep.subr.mxu0 0.0
        %4095 = vmatpush1.msra.mxu0 0.0
        %4096 = vmatprep.subr.mxu0 0.0
        %4097 = vmatpush1.msra.mxu0 0.0
        %4098 = vmatprep.subr.mxu0 0.0
        %4099 = vmatpush1.msra.mxu0 0.0
        %4100 = vmatprep.subr.mxu0 0.0
        %4101 = vmatpush1.msra.mxu0 0.0
        %4102 = vmatprep.subr.mxu0 0.0
        %4103 = vmatpush1.msra.mxu0 0.0
        %4104 = vmatprep.mubr.f32.mxu0 0.0
        %4105 = vmatmul.mubr.f32.gmra.mrb[0].mxu0 %v3946
        %v4106 = vpop.f32.mrb[0].mxu0
        %v4107 = vadd.f32 %v4024, %v4106
        %v4108 = vpop.f32.mrb[0].mxu0
        %v4109 = vadd.f32 %v4026, %v4108
        %4110 = vmatprep.mubr.f32.mxu0 0.0
        %4111 = vmatmul.mubr.f32.gmra.mrb[0].mxu0 %v3949
        %v4112 = vpop.f32.mrb[0].mxu0
        %v4113 = vadd.f32 %v4030, %v4112
        %v4114 = vpop.f32.mrb[0].mxu0
        %v4115 = vadd.f32 %v4032, %v4114
        %4116 = vdwg.mxu0
        %s4117 = scalar_lea.vmem %s6, 352
        %v4118 = vld [vmem:[%s4117] sm:$0xff]
        %v4119 = vld [vmem:[%s4117 + $0x8] sm:$0xff]
        %v4120 = vld [vmem:[%s4117 + $0x10] sm:$0xff]
        %v4121 = vld [vmem:[%s4117 + $0x18] sm:$0xff]
        %v4122 = vld [vmem:[%s4117 + $0x20] sm:$0xff]
        %v4123 = vld [vmem:[%s4117 + $0x28] sm:$0xff]
        %v4124 = vld [vmem:[%s4117 + $0x30] sm:$0xff]
        %v4125 = vld [vmem:[%s4117 + $0x38] sm:$0xff]
        %v4126 = vld [vmem:[%s4117 + $0x40] sm:$0xff]
        %v4127 = vld [vmem:[%s4117 + $0x48] sm:$0xff]
        %v4128 = vld [vmem:[%s4117 + $0x50] sm:$0xff]
        %v4129 = vld [vmem:[%s4117 + $0x58] sm:$0xff]
        %v4130 = vld [vmem:[%s4117 + $0x60] sm:$0xff]
        %v4131 = vld [vmem:[%s4117 + $0x68] sm:$0xff]
        %v4132 = vld [vmem:[%s4117 + $0x70] sm:$0xff]
        %v4133 = vld [vmem:[%s4117 + $0x78] sm:$0xff]
        %v4134 = vld [vmem:[%s4117 + $0x80] sm:$0xff]
        %v4135 = vld [vmem:[%s4117 + $0x88] sm:$0xff]
        %v4136 = vld [vmem:[%s4117 + $0x90] sm:$0xff]
        %v4137 = vld [vmem:[%s4117 + $0x98] sm:$0xff]
        %v4138 = vld [vmem:[%s4117 + $0xa0] sm:$0xf]
        %v4139 = vld [vmem:[%s4117 + $0xa8] sm:$0xf]
        %v4141 = vsel %vm540, %v4138, 0
        %v4144 = vsel %vm540, %v4139, 0
        %4146 = vmatprep.subr.mxu0 %v4119
        %4147 = vmatpush1.msra.mxu0 %v4118
        %4148 = vmatprep.subr.mxu0 %v4121
        %4149 = vmatpush1.msra.mxu0 %v4120
        %4150 = vmatprep.subr.mxu0 %v4123
        %4151 = vmatpush1.msra.mxu0 %v4122
        %4152 = vmatprep.subr.mxu0 %v4125
        %4153 = vmatpush1.msra.mxu0 %v4124
        %4154 = vmatprep.subr.mxu0 %v4127
        %4155 = vmatpush1.msra.mxu0 %v4126
        %4156 = vmatprep.subr.mxu0 %v4129
        %4157 = vmatpush1.msra.mxu0 %v4128
        %4158 = vmatprep.subr.mxu0 %v4131
        %4159 = vmatpush1.msra.mxu0 %v4130
        %4160 = vmatprep.subr.mxu0 %v4133
        %4161 = vmatpush1.msra.mxu0 %v4132
        %4162 = vmatprep.subr.mxu0 %v4135
        %4163 = vmatpush1.msra.mxu0 %v4134
        %4164 = vmatprep.subr.mxu0 %v4137
        %4165 = vmatpush1.msra.mxu0 %v4136
        %4166 = vmatprep.subr.mxu0 %v4144
        %4167 = vmatpush1.msra.mxu0 %v4141
        %4168 = vmatprep.subr.mxu0 0.0
        %4169 = vmatpush1.msra.mxu0 0.0
        %4170 = vmatprep.subr.mxu0 0.0
        %4171 = vmatpush1.msra.mxu0 0.0
        %4172 = vmatprep.subr.mxu0 0.0
        %4173 = vmatpush1.msra.mxu0 0.0
        %4174 = vmatprep.subr.mxu0 0.0
        %4175 = vmatpush1.msra.mxu0 0.0
        %4176 = vmatprep.subr.mxu0 0.0
        %4177 = vmatpush1.msra.mxu0 0.0
        %4178 = vmatprep.subr.mxu0 0.0
        %4179 = vmatpush1.msra.mxu0 0.0
        %4180 = vmatprep.subr.mxu0 0.0
        %4181 = vmatpush1.msra.mxu0 0.0
        %4182 = vmatprep.subr.mxu0 0.0
        %4183 = vmatpush1.msra.mxu0 0.0
        %4184 = vmatprep.subr.mxu0 0.0
        %4185 = vmatpush1.msra.mxu0 0.0
        %4186 = vmatprep.subr.mxu0 0.0
        %4187 = vmatpush1.msra.mxu0 0.0
        %4188 = vmatprep.subr.mxu0 0.0
        %4189 = vmatpush1.msra.mxu0 0.0
        %4190 = vmatprep.subr.mxu0 0.0
        %4191 = vmatpush1.msra.mxu0 0.0
        %4192 = vmatprep.subr.mxu0 0.0
        %4193 = vmatpush1.msra.mxu0 0.0
        %4194 = vmatprep.subr.mxu0 0.0
        %4195 = vmatpush1.msra.mxu0 0.0
        %4196 = vmatprep.subr.mxu0 0.0
        %4197 = vmatpush1.msra.mxu0 0.0
        %4198 = vmatprep.subr.mxu0 0.0
        %4199 = vmatpush1.msra.mxu0 0.0
        %4200 = vmatprep.subr.mxu0 0.0
        %4201 = vmatpush1.msra.mxu0 0.0
        %4202 = vmatprep.subr.mxu0 0.0
        %4203 = vmatpush1.msra.mxu0 0.0
        %4204 = vmatprep.subr.mxu0 0.0
        %4205 = vmatpush1.msra.mxu0 0.0
        %4206 = vmatprep.subr.mxu0 0.0
        %4207 = vmatpush1.msra.mxu0 0.0
        %4208 = vmatprep.subr.mxu0 0.0
        %4209 = vmatpush1.msra.mxu0 0.0
        %4210 = vmatprep.mubr.f32.mxu0 0.0
        %4211 = vmatmul.mubr.f32.gmra.mrb[0].mxu0 %v3946
        %v4212 = vpop.f32.mrb[0].mxu0
        %v4213 = vadd.f32 0.0, %v4212
        %v4214 = vpop.f32.mrb[0].mxu0
        %v4215 = vadd.f32 0.0, %v4214
        %4216 = vmatprep.mubr.f32.mxu0 0.0
        %4217 = vmatmul.mubr.f32.gmra.mrb[0].mxu0 %v3949
        %v4218 = vpop.f32.mrb[0].mxu0
        %v4219 = vadd.f32 0.0, %v4218
        %v4220 = vpop.f32.mrb[0].mxu0
        %v4221 = vadd.f32 0.0, %v4220
        %4222 = vdwg.mxu0
        %v4223 = vadd.f32 %v4107, %v4213
        %v4224 = vadd.f32 %v4109, %v4215
        %v4225 = vadd.f32 %v4113, %v4219
        %v4226 = vadd.f32 %v4115, %v4221
        %s4227 = scalar_lea.vmem %s6, 528
        %v4228 = vld [vmem:[%s4227] sm:$0xff]
        %v4229 = vld [vmem:[%s4227 + $0x8] sm:$0xff]
        %v4230 = vld [vmem:[%s4227 + $0x10] sm:$0xff]
        %v4231 = vld [vmem:[%s4227 + $0x18] sm:$0xff]
        %v4232 = vld [vmem:[%s4227 + $0x20] sm:$0xff]
        %v4233 = vld [vmem:[%s4227 + $0x28] sm:$0xff]
        %v4234 = vld [vmem:[%s4227 + $0x30] sm:$0xff]
        %v4235 = vld [vmem:[%s4227 + $0x38] sm:$0xff]
        %v4236 = vld [vmem:[%s4227 + $0x40] sm:$0xff]
        %v4237 = vld [vmem:[%s4227 + $0x48] sm:$0xff]
        %v4238 = vld [vmem:[%s4227 + $0x50] sm:$0xff]
        %v4239 = vld [vmem:[%s4227 + $0x58] sm:$0xff]
        %v4240 = vld [vmem:[%s4227 + $0x60] sm:$0xff]
        %v4241 = vld [vmem:[%s4227 + $0x68] sm:$0xff]
        %v4242 = vld [vmem:[%s4227 + $0x70] sm:$0xff]
        %v4243 = vld [vmem:[%s4227 + $0x78] sm:$0xff]
        %v4244 = vld [vmem:[%s4227 + $0x80] sm:$0xff]
        %v4245 = vld [vmem:[%s4227 + $0x88] sm:$0xff]
        %v4246 = vld [vmem:[%s4227 + $0x90] sm:$0xff]
        %v4247 = vld [vmem:[%s4227 + $0x98] sm:$0xff]
        %v4248 = vld [vmem:[%s4227 + $0xa0] sm:$0xf]
        %v4249 = vld [vmem:[%s4227 + $0xa8] sm:$0xf]
        %v4251 = vsel %vm540, %v4248, 0
        %v4254 = vsel %vm540, %v4249, 0
        %4256 = vmatprep.subr.mxu0 %v4229
        %4257 = vmatpush1.msra.mxu0 %v4228
        %4258 = vmatprep.subr.mxu0 %v4231
        %4259 = vmatpush1.msra.mxu0 %v4230
        %4260 = vmatprep.subr.mxu0 %v4233
        %4261 = vmatpush1.msra.mxu0 %v4232
        %4262 = vmatprep.subr.mxu0 %v4235
        %4263 = vmatpush1.msra.mxu0 %v4234
        %4264 = vmatprep.subr.mxu0 %v4237
        %4265 = vmatpush1.msra.mxu0 %v4236
        %4266 = vmatprep.subr.mxu0 %v4239
        %4267 = vmatpush1.msra.mxu0 %v4238
        %4268 = vmatprep.subr.mxu0 %v4241
        %4269 = vmatpush1.msra.mxu0 %v4240
        %4270 = vmatprep.subr.mxu0 %v4243
        %4271 = vmatpush1.msra.mxu0 %v4242
        %4272 = vmatprep.subr.mxu0 %v4245
        %4273 = vmatpush1.msra.mxu0 %v4244
        %4274 = vmatprep.subr.mxu0 %v4247
        %4275 = vmatpush1.msra.mxu0 %v4246
        %4276 = vmatprep.subr.mxu0 %v4254
        %4277 = vmatpush1.msra.mxu0 %v4251
        %4278 = vmatprep.subr.mxu0 0.0
        %4279 = vmatpush1.msra.mxu0 0.0
        %4280 = vmatprep.subr.mxu0 0.0
        %4281 = vmatpush1.msra.mxu0 0.0
        %4282 = vmatprep.subr.mxu0 0.0
        %4283 = vmatpush1.msra.mxu0 0.0
        %4284 = vmatprep.subr.mxu0 0.0
        %4285 = vmatpush1.msra.mxu0 0.0
        %4286 = vmatprep.subr.mxu0 0.0
        %4287 = vmatpush1.msra.mxu0 0.0
        %4288 = vmatprep.subr.mxu0 0.0
        %4289 = vmatpush1.msra.mxu0 0.0
        %4290 = vmatprep.subr.mxu0 0.0
        %4291 = vmatpush1.msra.mxu0 0.0
        %4292 = vmatprep.subr.mxu0 0.0
        %4293 = vmatpush1.msra.mxu0 0.0
        %4294 = vmatprep.subr.mxu0 0.0
        %4295 = vmatpush1.msra.mxu0 0.0
        %4296 = vmatprep.subr.mxu0 0.0
        %4297 = vmatpush1.msra.mxu0 0.0
        %4298 = vmatprep.subr.mxu0 0.0
        %4299 = vmatpush1.msra.mxu0 0.0
        %4300 = vmatprep.subr.mxu0 0.0
        %4301 = vmatpush1.msra.mxu0 0.0
        %4302 = vmatprep.subr.mxu0 0.0
        %4303 = vmatpush1.msra.mxu0 0.0
        %4304 = vmatprep.subr.mxu0 0.0
        %4305 = vmatpush1.msra.mxu0 0.0
        %4306 = vmatprep.subr.mxu0 0.0
        %4307 = vmatpush1.msra.mxu0 0.0
        %4308 = vmatprep.subr.mxu0 0.0
        %4309 = vmatpush1.msra.mxu0 0.0
        %4310 = vmatprep.subr.mxu0 0.0
        %4311 = vmatpush1.msra.mxu0 0.0
        %4312 = vmatprep.subr.mxu0 0.0
        %4313 = vmatpush1.msra.mxu0 0.0
        %4314 = vmatprep.subr.mxu0 0.0
        %4315 = vmatpush1.msra.mxu0 0.0
        %4316 = vmatprep.subr.mxu0 0.0
        %4317 = vmatpush1.msra.mxu0 0.0
        %4318 = vmatprep.subr.mxu0 0.0
        %4319 = vmatpush1.msra.mxu0 0.0
        %4320 = vmatprep.mubr.f32.mxu0 0.0
        %4321 = vmatmul.mubr.f32.gmra.mrb[0].mxu0 %v3946
        %v4322 = vpop.f32.mrb[0].mxu0
        %v4323 = vadd.f32 0.0, %v4322
        %v4324 = vpop.f32.mrb[0].mxu0
        %v4325 = vadd.f32 0.0, %v4324
        %4326 = vmatprep.mubr.f32.mxu0 0.0
        %4327 = vmatmul.mubr.f32.gmra.mrb[0].mxu0 %v3949
        %v4328 = vpop.f32.mrb[0].mxu0
        %v4329 = vadd.f32 0.0, %v4328
        %v4330 = vpop.f32.mrb[0].mxu0
        %v4331 = vadd.f32 0.0, %v4330
        %4332 = vdwg.mxu0
        %v4333 = vadd.f32 %v4223, %v4323
        %v4334 = vadd.f32 %v4224, %v4325
        %v4335 = vadd.f32 %v4225, %v4329
        %v4336 = vadd.f32 %v4226, %v4331
        %s4337 = scalar_lea.vmem %s6, 704
        %v4338 = vld [vmem:[%s4337] sm:$0xff]
        %v4339 = vld [vmem:[%s4337 + $0x8] sm:$0xff]
        %v4340 = vld [vmem:[%s4337 + $0x10] sm:$0xff]
        %v4341 = vld [vmem:[%s4337 + $0x18] sm:$0xff]
        %v4342 = vld [vmem:[%s4337 + $0x20] sm:$0xff]
        %v4343 = vld [vmem:[%s4337 + $0x28] sm:$0xff]
        %v4344 = vld [vmem:[%s4337 + $0x30] sm:$0xff]
        %v4345 = vld [vmem:[%s4337 + $0x38] sm:$0xff]
        %v4346 = vld [vmem:[%s4337 + $0x40] sm:$0xff]
        %v4347 = vld [vmem:[%s4337 + $0x48] sm:$0xff]
        %v4348 = vld [vmem:[%s4337 + $0x50] sm:$0xff]
        %v4349 = vld [vmem:[%s4337 + $0x58] sm:$0xff]
        %v4350 = vld [vmem:[%s4337 + $0x60] sm:$0xff]
        %v4351 = vld [vmem:[%s4337 + $0x68] sm:$0xff]
        %v4352 = vld [vmem:[%s4337 + $0x70] sm:$0xff]
        %v4353 = vld [vmem:[%s4337 + $0x78] sm:$0xff]
        %v4354 = vld [vmem:[%s4337 + $0x80] sm:$0xff]
        %v4355 = vld [vmem:[%s4337 + $0x88] sm:$0xff]
        %v4356 = vld [vmem:[%s4337 + $0x90] sm:$0xff]
        %v4357 = vld [vmem:[%s4337 + $0x98] sm:$0xff]
        %v4358 = vld [vmem:[%s4337 + $0xa0] sm:$0xf]
        %v4359 = vld [vmem:[%s4337 + $0xa8] sm:$0xf]
        %v4361 = vsel %vm540, %v4358, 0
        %v4364 = vsel %vm540, %v4359, 0
        %4366 = vmatprep.subr.mxu0 %v4339
        %4367 = vmatpush1.msra.mxu0 %v4338
        %4368 = vmatprep.subr.mxu0 %v4341
        %4369 = vmatpush1.msra.mxu0 %v4340
        %4370 = vmatprep.subr.mxu0 %v4343
        %4371 = vmatpush1.msra.mxu0 %v4342
        %4372 = vmatprep.subr.mxu0 %v4345
        %4373 = vmatpush1.msra.mxu0 %v4344
        %4374 = vmatprep.subr.mxu0 %v4347
        %4375 = vmatpush1.msra.mxu0 %v4346
        %4376 = vmatprep.subr.mxu0 %v4349
        %4377 = vmatpush1.msra.mxu0 %v4348
        %4378 = vmatprep.subr.mxu0 %v4351
        %4379 = vmatpush1.msra.mxu0 %v4350
        %4380 = vmatprep.subr.mxu0 %v4353
        %4381 = vmatpush1.msra.mxu0 %v4352
        %4382 = vmatprep.subr.mxu0 %v4355
        %4383 = vmatpush1.msra.mxu0 %v4354
        %4384 = vmatprep.subr.mxu0 %v4357
        %4385 = vmatpush1.msra.mxu0 %v4356
        %4386 = vmatprep.subr.mxu0 %v4364
        %4387 = vmatpush1.msra.mxu0 %v4361
        %4388 = vmatprep.subr.mxu0 0.0
        %4389 = vmatpush1.msra.mxu0 0.0
        %4390 = vmatprep.subr.mxu0 0.0
        %4391 = vmatpush1.msra.mxu0 0.0
        %4392 = vmatprep.subr.mxu0 0.0
        %4393 = vmatpush1.msra.mxu0 0.0
        %4394 = vmatprep.subr.mxu0 0.0
        %4395 = vmatpush1.msra.mxu0 0.0
        %4396 = vmatprep.subr.mxu0 0.0
        %4397 = vmatpush1.msra.mxu0 0.0
        %4398 = vmatprep.subr.mxu0 0.0
        %4399 = vmatpush1.msra.mxu0 0.0
        %4400 = vmatprep.subr.mxu0 0.0
        %4401 = vmatpush1.msra.mxu0 0.0
        %4402 = vmatprep.subr.mxu0 0.0
        %4403 = vmatpush1.msra.mxu0 0.0
        %4404 = vmatprep.subr.mxu0 0.0
        %4405 = vmatpush1.msra.mxu0 0.0
        %4406 = vmatprep.subr.mxu0 0.0
        %4407 = vmatpush1.msra.mxu0 0.0
        %4408 = vmatprep.subr.mxu0 0.0
        %4409 = vmatpush1.msra.mxu0 0.0
        %4410 = vmatprep.subr.mxu0 0.0
        %4411 = vmatpush1.msra.mxu0 0.0
        %4412 = vmatprep.subr.mxu0 0.0
        %4413 = vmatpush1.msra.mxu0 0.0
        %4414 = vmatprep.subr.mxu0 0.0
        %4415 = vmatpush1.msra.mxu0 0.0
        %4416 = vmatprep.subr.mxu0 0.0
        %4417 = vmatpush1.msra.mxu0 0.0
        %4418 = vmatprep.subr.mxu0 0.0
        %4419 = vmatpush1.msra.mxu0 0.0
        %4420 = vmatprep.subr.mxu0 0.0
        %4421 = vmatpush1.msra.mxu0 0.0
        %4422 = vmatprep.subr.mxu0 0.0
        %4423 = vmatpush1.msra.mxu0 0.0
        %4424 = vmatprep.subr.mxu0 0.0
        %4425 = vmatpush1.msra.mxu0 0.0
        %4426 = vmatprep.subr.mxu0 0.0
        %4427 = vmatpush1.msra.mxu0 0.0
        %4428 = vmatprep.subr.mxu0 0.0
        %4429 = vmatpush1.msra.mxu0 0.0
        %4430 = vmatprep.mubr.f32.mxu0 0.0
        %4431 = vmatmul.mubr.f32.gmra.mrb[0].mxu0 %v3946
        %v4432 = vpop.f32.mrb[0].mxu0
        %v4433 = vadd.f32 0.0, %v4432
        %v4434 = vpop.f32.mrb[0].mxu0
        %v4435 = vadd.f32 0.0, %v4434
        %4436 = vmatprep.mubr.f32.mxu0 0.0
        %4437 = vmatmul.mubr.f32.gmra.mrb[0].mxu0 %v3949
        %v4438 = vpop.f32.mrb[0].mxu0
        %v4439 = vadd.f32 0.0, %v4438
        %v4440 = vpop.f32.mrb[0].mxu0
        %v4441 = vadd.f32 0.0, %v4440
        %4442 = vdwg.mxu0
        %v4443 = vadd.f32 %v4333, %v4433
        %v4444 = vadd.f32 %v4334, %v4435
        %v4445 = vadd.f32 %v4335, %v4439
        %v4446 = vadd.f32 %v4336, %v4441
        %s4447 = scalar_lea.vmem %s6, 880
        %v4448 = vld [vmem:[%s4447] sm:$0xff]
        %v4449 = vld [vmem:[%s4447 + $0x8] sm:$0xff]
        %v4450 = vld [vmem:[%s4447 + $0x10] sm:$0xff]
        %v4451 = vld [vmem:[%s4447 + $0x18] sm:$0xff]
        %v4452 = vld [vmem:[%s4447 + $0x20] sm:$0xff]
        %v4453 = vld [vmem:[%s4447 + $0x28] sm:$0xff]
        %v4454 = vld [vmem:[%s4447 + $0x30] sm:$0xff]
        %v4455 = vld [vmem:[%s4447 + $0x38] sm:$0xff]
        %v4456 = vld [vmem:[%s4447 + $0x40] sm:$0xff]
        %v4457 = vld [vmem:[%s4447 + $0x48] sm:$0xff]
        %v4458 = vld [vmem:[%s4447 + $0x50] sm:$0xff]
        %v4459 = vld [vmem:[%s4447 + $0x58] sm:$0xff]
        %v4460 = vld [vmem:[%s4447 + $0x60] sm:$0xff]
        %v4461 = vld [vmem:[%s4447 + $0x68] sm:$0xff]
        %v4462 = vld [vmem:[%s4447 + $0x70] sm:$0xff]
        %v4463 = vld [vmem:[%s4447 + $0x78] sm:$0xff]
        %v4464 = vld [vmem:[%s4447 + $0x80] sm:$0xff]
        %v4465 = vld [vmem:[%s4447 + $0x88] sm:$0xff]
        %v4466 = vld [vmem:[%s4447 + $0x90] sm:$0xff]
        %v4467 = vld [vmem:[%s4447 + $0x98] sm:$0xff]
        %v4468 = vld [vmem:[%s4447 + $0xa0] sm:$0xf]
        %v4469 = vld [vmem:[%s4447 + $0xa8] sm:$0xf]
        %v4470 = vrot.slane %v3896, 1
        %v4471 = vrot.slane %v3897, 1
        %v4472 = vsel %vm1194, %v4470, %v4471
        %v4473 = vsel %vm3944, %v4472, 0
        %v4475 = vsel %vm3944, %v4471, 0
        %v4478 = vsel %vm540, %v4468, 0
        %v4481 = vsel %vm540, %v4469, 0
        %4483 = vmatprep.subr.mxu0 %v4449
        %4484 = vmatpush1.msra.mxu0 %v4448
        %4485 = vmatprep.subr.mxu0 %v4451
        %4486 = vmatpush1.msra.mxu0 %v4450
        %4487 = vmatprep.subr.mxu0 %v4453
        %4488 = vmatpush1.msra.mxu0 %v4452
        %4489 = vmatprep.subr.mxu0 %v4455
        %4490 = vmatpush1.msra.mxu0 %v4454
        %4491 = vmatprep.subr.mxu0 %v4457
        %4492 = vmatpush1.msra.mxu0 %v4456
        %4493 = vmatprep.subr.mxu0 %v4459
        %4494 = vmatpush1.msra.mxu0 %v4458
        %4495 = vmatprep.subr.mxu0 %v4461
        %4496 = vmatpush1.msra.mxu0 %v4460
        %4497 = vmatprep.subr.mxu0 %v4463
        %4498 = vmatpush1.msra.mxu0 %v4462
        %4499 = vmatprep.subr.mxu0 %v4465
        %4500 = vmatpush1.msra.mxu0 %v4464
        %4501 = vmatprep.subr.mxu0 %v4467
        %4502 = vmatpush1.msra.mxu0 %v4466
        %4503 = vmatprep.subr.mxu0 %v4481
        %4504 = vmatpush1.msra.mxu0 %v4478
        %4505 = vmatprep.subr.mxu0 0.0
        %4506 = vmatpush1.msra.mxu0 0.0
        %4507 = vmatprep.subr.mxu0 0.0
        %4508 = vmatpush1.msra.mxu0 0.0
        %4509 = vmatprep.subr.mxu0 0.0
        %4510 = vmatpush1.msra.mxu0 0.0
        %4511 = vmatprep.subr.mxu0 0.0
        %4512 = vmatpush1.msra.mxu0 0.0
        %4513 = vmatprep.subr.mxu0 0.0
        %4514 = vmatpush1.msra.mxu0 0.0
        %4515 = vmatprep.subr.mxu0 0.0
        %4516 = vmatpush1.msra.mxu0 0.0
        %4517 = vmatprep.subr.mxu0 0.0
        %4518 = vmatpush1.msra.mxu0 0.0
        %4519 = vmatprep.subr.mxu0 0.0
        %4520 = vmatpush1.msra.mxu0 0.0
        %4521 = vmatprep.subr.mxu0 0.0
        %4522 = vmatpush1.msra.mxu0 0.0
        %4523 = vmatprep.subr.mxu0 0.0
        %4524 = vmatpush1.msra.mxu0 0.0
        %4525 = vmatprep.subr.mxu0 0.0
        %4526 = vmatpush1.msra.mxu0 0.0
        %4527 = vmatprep.subr.mxu0 0.0
        %4528 = vmatpush1.msra.mxu0 0.0
        %4529 = vmatprep.subr.mxu0 0.0
        %4530 = vmatpush1.msra.mxu0 0.0
        %4531 = vmatprep.subr.mxu0 0.0
        %4532 = vmatpush1.msra.mxu0 0.0
        %4533 = vmatprep.subr.mxu0 0.0
        %4534 = vmatpush1.msra.mxu0 0.0
        %4535 = vmatprep.subr.mxu0 0.0
        %4536 = vmatpush1.msra.mxu0 0.0
        %4537 = vmatprep.subr.mxu0 0.0
        %4538 = vmatpush1.msra.mxu0 0.0
        %4539 = vmatprep.subr.mxu0 0.0
        %4540 = vmatpush1.msra.mxu0 0.0
        %4541 = vmatprep.subr.mxu0 0.0
        %4542 = vmatpush1.msra.mxu0 0.0
        %4543 = vmatprep.subr.mxu0 0.0
        %4544 = vmatpush1.msra.mxu0 0.0
        %4545 = vmatprep.subr.mxu0 0.0
        %4546 = vmatpush1.msra.mxu0 0.0
        %4547 = vmatprep.mubr.f32.mxu0 0.0
        %4548 = vmatmul.mubr.f32.gmra.mrb[0].mxu0 %v4473
        %v4549 = vpop.f32.mrb[0].mxu0
        %v4550 = vadd.f32 0.0, %v4549
        %v4551 = vpop.f32.mrb[0].mxu0
        %v4552 = vadd.f32 0.0, %v4551
        %4553 = vmatprep.mubr.f32.mxu0 0.0
        %4554 = vmatmul.mubr.f32.gmra.mrb[0].mxu0 %v4475
        %v4555 = vpop.f32.mrb[0].mxu0
        %v4556 = vadd.f32 0.0, %v4555
        %v4557 = vpop.f32.mrb[0].mxu0
        %v4558 = vadd.f32 0.0, %v4557
        %4559 = vdwg.mxu0
        %v4560 = vadd.f32 %v4443, %v4550
        %v4561 = vadd.f32 %v4444, %v4552
        %v4562 = vadd.f32 %v4445, %v4556
        %v4563 = vadd.f32 %v4446, %v4558
        %s4564 = scalar_lea.vmem %s6, 1056
        %v4565 = vld [vmem:[%s4564] sm:$0xff]
        %v4566 = vld [vmem:[%s4564 + $0x8] sm:$0xff]
        %v4567 = vld [vmem:[%s4564 + $0x10] sm:$0xff]
        %v4568 = vld [vmem:[%s4564 + $0x18] sm:$0xff]
        %v4569 = vld [vmem:[%s4564 + $0x20] sm:$0xff]
        %v4570 = vld [vmem:[%s4564 + $0x28] sm:$0xff]
        %v4571 = vld [vmem:[%s4564 + $0x30] sm:$0xff]
        %v4572 = vld [vmem:[%s4564 + $0x38] sm:$0xff]
        %v4573 = vld [vmem:[%s4564 + $0x40] sm:$0xff]
        %v4574 = vld [vmem:[%s4564 + $0x48] sm:$0xff]
        %v4575 = vld [vmem:[%s4564 + $0x50] sm:$0xff]
        %v4576 = vld [vmem:[%s4564 + $0x58] sm:$0xff]
        %v4577 = vld [vmem:[%s4564 + $0x60] sm:$0xff]
        %v4578 = vld [vmem:[%s4564 + $0x68] sm:$0xff]
        %v4579 = vld [vmem:[%s4564 + $0x70] sm:$0xff]
        %v4580 = vld [vmem:[%s4564 + $0x78] sm:$0xff]
        %v4581 = vld [vmem:[%s4564 + $0x80] sm:$0xff]
        %v4582 = vld [vmem:[%s4564 + $0x88] sm:$0xff]
        %v4583 = vld [vmem:[%s4564 + $0x90] sm:$0xff]
        %v4584 = vld [vmem:[%s4564 + $0x98] sm:$0xff]
        %v4585 = vld [vmem:[%s4564 + $0xa0] sm:$0xf]
        %v4586 = vld [vmem:[%s4564 + $0xa8] sm:$0xf]
        %v4588 = vsel %vm540, %v4585, 0
        %v4591 = vsel %vm540, %v4586, 0
        %4593 = vmatprep.subr.mxu0 %v4566
        %4594 = vmatpush1.msra.mxu0 %v4565
        %4595 = vmatprep.subr.mxu0 %v4568
        %4596 = vmatpush1.msra.mxu0 %v4567
        %4597 = vmatprep.subr.mxu0 %v4570
        %4598 = vmatpush1.msra.mxu0 %v4569
        %4599 = vmatprep.subr.mxu0 %v4572
        %4600 = vmatpush1.msra.mxu0 %v4571
        %4601 = vmatprep.subr.mxu0 %v4574
        %4602 = vmatpush1.msra.mxu0 %v4573
        %4603 = vmatprep.subr.mxu0 %v4576
        %4604 = vmatpush1.msra.mxu0 %v4575
        %4605 = vmatprep.subr.mxu0 %v4578
        %4606 = vmatpush1.msra.mxu0 %v4577
        %4607 = vmatprep.subr.mxu0 %v4580
        %4608 = vmatpush1.msra.mxu0 %v4579
        %4609 = vmatprep.subr.mxu0 %v4582
        %4610 = vmatpush1.msra.mxu0 %v4581
        %4611 = vmatprep.subr.mxu0 %v4584
        %4612 = vmatpush1.msra.mxu0 %v4583
        %4613 = vmatprep.subr.mxu0 %v4591
        %4614 = vmatpush1.msra.mxu0 %v4588
        %4615 = vmatprep.subr.mxu0 0.0
        %4616 = vmatpush1.msra.mxu0 0.0
        %4617 = vmatprep.subr.mxu0 0.0
        %4618 = vmatpush1.msra.mxu0 0.0
        %4619 = vmatprep.subr.mxu0 0.0
        %4620 = vmatpush1.msra.mxu0 0.0
        %4621 = vmatprep.subr.mxu0 0.0
        %4622 = vmatpush1.msra.mxu0 0.0
        %4623 = vmatprep.subr.mxu0 0.0
        %4624 = vmatpush1.msra.mxu0 0.0
        %4625 = vmatprep.subr.mxu0 0.0
        %4626 = vmatpush1.msra.mxu0 0.0
        %4627 = vmatprep.subr.mxu0 0.0
        %4628 = vmatpush1.msra.mxu0 0.0
        %4629 = vmatprep.subr.mxu0 0.0
        %4630 = vmatpush1.msra.mxu0 0.0
        %4631 = vmatprep.subr.mxu0 0.0
        %4632 = vmatpush1.msra.mxu0 0.0
        %4633 = vmatprep.subr.mxu0 0.0
        %4634 = vmatpush1.msra.mxu0 0.0
        %4635 = vmatprep.subr.mxu0 0.0
        %4636 = vmatpush1.msra.mxu0 0.0
        %4637 = vmatprep.subr.mxu0 0.0
        %4638 = vmatpush1.msra.mxu0 0.0
        %4639 = vmatprep.subr.mxu0 0.0
        %4640 = vmatpush1.msra.mxu0 0.0
        %4641 = vmatprep.subr.mxu0 0.0
        %4642 = vmatpush1.msra.mxu0 0.0
        %4643 = vmatprep.subr.mxu0 0.0
        %4644 = vmatpush1.msra.mxu0 0.0
        %4645 = vmatprep.subr.mxu0 0.0
        %4646 = vmatpush1.msra.mxu0 0.0
        %4647 = vmatprep.subr.mxu0 0.0
        %4648 = vmatpush1.msra.mxu0 0.0
        %4649 = vmatprep.subr.mxu0 0.0
        %4650 = vmatpush1.msra.mxu0 0.0
        %4651 = vmatprep.subr.mxu0 0.0
        %4652 = vmatpush1.msra.mxu0 0.0
        %4653 = vmatprep.subr.mxu0 0.0
        %4654 = vmatpush1.msra.mxu0 0.0
        %4655 = vmatprep.subr.mxu0 0.0
        %4656 = vmatpush1.msra.mxu0 0.0
        %4657 = vmatprep.mubr.f32.mxu0 0.0
        %4658 = vmatmul.mubr.f32.gmra.mrb[0].mxu0 %v4473
        %v4659 = vpop.f32.mrb[0].mxu0
        %v4660 = vadd.f32 0.0, %v4659
        %v4661 = vpop.f32.mrb[0].mxu0
        %v4662 = vadd.f32 0.0, %v4661
        %4663 = vmatprep.mubr.f32.mxu0 0.0
        %4664 = vmatmul.mubr.f32.gmra.mrb[0].mxu0 %v4475
        %v4665 = vpop.f32.mrb[0].mxu0
        %v4666 = vadd.f32 0.0, %v4665
        %v4667 = vpop.f32.mrb[0].mxu0
        %v4668 = vadd.f32 0.0, %v4667
        %4669 = vdwg.mxu0
        %v4670 = vadd.f32 %v4560, %v4660
        %v4671 = vadd.f32 %v4561, %v4662
        %v4672 = vadd.f32 %v4562, %v4666
        %v4673 = vadd.f32 %v4563, %v4668
        %s4674 = scalar_lea.vmem %s6, 1232
        %v4675 = vld [vmem:[%s4674] sm:$0xff]
        %v4676 = vld [vmem:[%s4674 + $0x8] sm:$0xff]
        %v4677 = vld [vmem:[%s4674 + $0x10] sm:$0xff]
        %v4678 = vld [vmem:[%s4674 + $0x18] sm:$0xff]
        %v4679 = vld [vmem:[%s4674 + $0x20] sm:$0xff]
        %v4680 = vld [vmem:[%s4674 + $0x28] sm:$0xff]
        %v4681 = vld [vmem:[%s4674 + $0x30] sm:$0xff]
        %v4682 = vld [vmem:[%s4674 + $0x38] sm:$0xff]
        %v4683 = vld [vmem:[%s4674 + $0x40] sm:$0xff]
        %v4684 = vld [vmem:[%s4674 + $0x48] sm:$0xff]
        %v4685 = vld [vmem:[%s4674 + $0x50] sm:$0xff]
        %v4686 = vld [vmem:[%s4674 + $0x58] sm:$0xff]
        %v4687 = vld [vmem:[%s4674 + $0x60] sm:$0xff]
        %v4688 = vld [vmem:[%s4674 + $0x68] sm:$0xff]
        %v4689 = vld [vmem:[%s4674 + $0x70] sm:$0xff]
        %v4690 = vld [vmem:[%s4674 + $0x78] sm:$0xff]
        %v4691 = vld [vmem:[%s4674 + $0x80] sm:$0xff]
        %v4692 = vld [vmem:[%s4674 + $0x88] sm:$0xff]
        %v4693 = vld [vmem:[%s4674 + $0x90] sm:$0xff]
        %v4694 = vld [vmem:[%s4674 + $0x98] sm:$0xff]
        %v4695 = vld [vmem:[%s4674 + $0xa0] sm:$0xf]
        %v4696 = vld [vmem:[%s4674 + $0xa8] sm:$0xf]
        %v4698 = vsel %vm540, %v4695, 0
        %v4701 = vsel %vm540, %v4696, 0
        %4703 = vmatprep.subr.mxu0 %v4676
        %4704 = vmatpush1.msra.mxu0 %v4675
        %4705 = vmatprep.subr.mxu0 %v4678
        %4706 = vmatpush1.msra.mxu0 %v4677
        %4707 = vmatprep.subr.mxu0 %v4680
        %4708 = vmatpush1.msra.mxu0 %v4679
        %4709 = vmatprep.subr.mxu0 %v4682
        %4710 = vmatpush1.msra.mxu0 %v4681
        %4711 = vmatprep.subr.mxu0 %v4684
        %4712 = vmatpush1.msra.mxu0 %v4683
        %4713 = vmatprep.subr.mxu0 %v4686
        %4714 = vmatpush1.msra.mxu0 %v4685
        %4715 = vmatprep.subr.mxu0 %v4688
        %4716 = vmatpush1.msra.mxu0 %v4687
        %4717 = vmatprep.subr.mxu0 %v4690
        %4718 = vmatpush1.msra.mxu0 %v4689
        %4719 = vmatprep.subr.mxu0 %v4692
        %4720 = vmatpush1.msra.mxu0 %v4691
        %4721 = vmatprep.subr.mxu0 %v4694
        %4722 = vmatpush1.msra.mxu0 %v4693
        %4723 = vmatprep.subr.mxu0 %v4701
        %4724 = vmatpush1.msra.mxu0 %v4698
        %4725 = vmatprep.subr.mxu0 0.0
        %4726 = vmatpush1.msra.mxu0 0.0
        %4727 = vmatprep.subr.mxu0 0.0
        %4728 = vmatpush1.msra.mxu0 0.0
        %4729 = vmatprep.subr.mxu0 0.0
        %4730 = vmatpush1.msra.mxu0 0.0
        %4731 = vmatprep.subr.mxu0 0.0
        %4732 = vmatpush1.msra.mxu0 0.0
        %4733 = vmatprep.subr.mxu0 0.0
        %4734 = vmatpush1.msra.mxu0 0.0
        %4735 = vmatprep.subr.mxu0 0.0
        %4736 = vmatpush1.msra.mxu0 0.0
        %4737 = vmatprep.subr.mxu0 0.0
        %4738 = vmatpush1.msra.mxu0 0.0
        %4739 = vmatprep.subr.mxu0 0.0
        %4740 = vmatpush1.msra.mxu0 0.0
        %4741 = vmatprep.subr.mxu0 0.0
        %4742 = vmatpush1.msra.mxu0 0.0
        %4743 = vmatprep.subr.mxu0 0.0
        %4744 = vmatpush1.msra.mxu0 0.0
        %4745 = vmatprep.subr.mxu0 0.0
        %4746 = vmatpush1.msra.mxu0 0.0
        %4747 = vmatprep.subr.mxu0 0.0
        %4748 = vmatpush1.msra.mxu0 0.0
        %4749 = vmatprep.subr.mxu0 0.0
        %4750 = vmatpush1.msra.mxu0 0.0
        %4751 = vmatprep.subr.mxu0 0.0
        %4752 = vmatpush1.msra.mxu0 0.0
        %4753 = vmatprep.subr.mxu0 0.0
        %4754 = vmatpush1.msra.mxu0 0.0
        %4755 = vmatprep.subr.mxu0 0.0
        %4756 = vmatpush1.msra.mxu0 0.0
        %4757 = vmatprep.subr.mxu0 0.0
        %4758 = vmatpush1.msra.mxu0 0.0
        %4759 = vmatprep.subr.mxu0 0.0
        %4760 = vmatpush1.msra.mxu0 0.0
        %4761 = vmatprep.subr.mxu0 0.0
        %4762 = vmatpush1.msra.mxu0 0.0
        %4763 = vmatprep.subr.mxu0 0.0
        %4764 = vmatpush1.msra.mxu0 0.0
        %4765 = vmatprep.subr.mxu0 0.0
        %4766 = vmatpush1.msra.mxu0 0.0
        %4767 = vmatprep.mubr.f32.mxu0 0.0
        %4768 = vmatmul.mubr.f32.gmra.mrb[0].mxu0 %v4473
        %v4769 = vpop.f32.mrb[0].mxu0
        %v4770 = vadd.f32 0.0, %v4769
        %v4771 = vpop.f32.mrb[0].mxu0
        %v4772 = vadd.f32 0.0, %v4771
        %4773 = vmatprep.mubr.f32.mxu0 0.0
        %4774 = vmatmul.mubr.f32.gmra.mrb[0].mxu0 %v4475
        %v4775 = vpop.f32.mrb[0].mxu0
        %v4776 = vadd.f32 0.0, %v4775
        %v4777 = vpop.f32.mrb[0].mxu0
        %v4778 = vadd.f32 0.0, %v4777
        %4779 = vdwg.mxu0
        %v4780 = vadd.f32 %v4670, %v4770
        %v4781 = vadd.f32 %v4671, %v4772
        %v4782 = vadd.f32 %v4672, %v4776
        %v4783 = vadd.f32 %v4673, %v4778
        %s4784 = scalar_lea.vmem %s6, 1408
        %v4785 = vld [vmem:[%s4784] sm:$0xff]
        %v4786 = vld [vmem:[%s4784 + $0x8] sm:$0xff]
        %v4787 = vld [vmem:[%s4784 + $0x10] sm:$0xff]
        %v4788 = vld [vmem:[%s4784 + $0x18] sm:$0xff]
        %v4789 = vld [vmem:[%s4784 + $0x20] sm:$0xff]
        %v4790 = vld [vmem:[%s4784 + $0x28] sm:$0xff]
        %v4791 = vld [vmem:[%s4784 + $0x30] sm:$0xff]
        %v4792 = vld [vmem:[%s4784 + $0x38] sm:$0xff]
        %v4793 = vld [vmem:[%s4784 + $0x40] sm:$0xff]
        %v4794 = vld [vmem:[%s4784 + $0x48] sm:$0xff]
        %v4795 = vld [vmem:[%s4784 + $0x50] sm:$0xff]
        %v4796 = vld [vmem:[%s4784 + $0x58] sm:$0xff]
        %v4797 = vld [vmem:[%s4784 + $0x60] sm:$0xff]
        %v4798 = vld [vmem:[%s4784 + $0x68] sm:$0xff]
        %v4799 = vld [vmem:[%s4784 + $0x70] sm:$0xff]
        %v4800 = vld [vmem:[%s4784 + $0x78] sm:$0xff]
        %v4801 = vld [vmem:[%s4784 + $0x80] sm:$0xff]
        %v4802 = vld [vmem:[%s4784 + $0x88] sm:$0xff]
        %v4803 = vld [vmem:[%s4784 + $0x90] sm:$0xff]
        %v4804 = vld [vmem:[%s4784 + $0x98] sm:$0xff]
        %v4805 = vld [vmem:[%s4784 + $0xa0] sm:$0xf]
        %v4806 = vld [vmem:[%s4784 + $0xa8] sm:$0xf]
        %v4808 = vsel %vm540, %v4805, 0
        %v4811 = vsel %vm540, %v4806, 0
        %4813 = vmatprep.subr.mxu0 %v4786
        %4814 = vmatpush1.msra.mxu0 %v4785
        %4815 = vmatprep.subr.mxu0 %v4788
        %4816 = vmatpush1.msra.mxu0 %v4787
        %4817 = vmatprep.subr.mxu0 %v4790
        %4818 = vmatpush1.msra.mxu0 %v4789
        %4819 = vmatprep.subr.mxu0 %v4792
        %4820 = vmatpush1.msra.mxu0 %v4791
        %4821 = vmatprep.subr.mxu0 %v4794
        %4822 = vmatpush1.msra.mxu0 %v4793
        %4823 = vmatprep.subr.mxu0 %v4796
        %4824 = vmatpush1.msra.mxu0 %v4795
        %4825 = vmatprep.subr.mxu0 %v4798
        %4826 = vmatpush1.msra.mxu0 %v4797
        %4827 = vmatprep.subr.mxu0 %v4800
        %4828 = vmatpush1.msra.mxu0 %v4799
        %4829 = vmatprep.subr.mxu0 %v4802
        %4830 = vmatpush1.msra.mxu0 %v4801
        %4831 = vmatprep.subr.mxu0 %v4804
        %4832 = vmatpush1.msra.mxu0 %v4803
        %4833 = vmatprep.subr.mxu0 %v4811
        %4834 = vmatpush1.msra.mxu0 %v4808
        %4835 = vmatprep.subr.mxu0 0.0
        %4836 = vmatpush1.msra.mxu0 0.0
        %4837 = vmatprep.subr.mxu0 0.0
        %4838 = vmatpush1.msra.mxu0 0.0
        %4839 = vmatprep.subr.mxu0 0.0
        %4840 = vmatpush1.msra.mxu0 0.0
        %4841 = vmatprep.subr.mxu0 0.0
        %4842 = vmatpush1.msra.mxu0 0.0
        %4843 = vmatprep.subr.mxu0 0.0
        %4844 = vmatpush1.msra.mxu0 0.0
        %4845 = vmatprep.subr.mxu0 0.0
        %4846 = vmatpush1.msra.mxu0 0.0
        %4847 = vmatprep.subr.mxu0 0.0
        %4848 = vmatpush1.msra.mxu0 0.0
        %4849 = vmatprep.subr.mxu0 0.0
        %4850 = vmatpush1.msra.mxu0 0.0
        %4851 = vmatprep.subr.mxu0 0.0
        %4852 = vmatpush1.msra.mxu0 0.0
        %4853 = vmatprep.subr.mxu0 0.0
        %4854 = vmatpush1.msra.mxu0 0.0
        %4855 = vmatprep.subr.mxu0 0.0
        %4856 = vmatpush1.msra.mxu0 0.0
        %4857 = vmatprep.subr.mxu0 0.0
        %4858 = vmatpush1.msra.mxu0 0.0
        %4859 = vmatprep.subr.mxu0 0.0
        %4860 = vmatpush1.msra.mxu0 0.0
        %4861 = vmatprep.subr.mxu0 0.0
        %4862 = vmatpush1.msra.mxu0 0.0
        %4863 = vmatprep.subr.mxu0 0.0
        %4864 = vmatpush1.msra.mxu0 0.0
        %4865 = vmatprep.subr.mxu0 0.0
        %4866 = vmatpush1.msra.mxu0 0.0
        %4867 = vmatprep.subr.mxu0 0.0
        %4868 = vmatpush1.msra.mxu0 0.0
        %4869 = vmatprep.subr.mxu0 0.0
        %4870 = vmatpush1.msra.mxu0 0.0
        %4871 = vmatprep.subr.mxu0 0.0
        %4872 = vmatpush1.msra.mxu0 0.0
        %4873 = vmatprep.subr.mxu0 0.0
        %4874 = vmatpush1.msra.mxu0 0.0
        %4875 = vmatprep.subr.mxu0 0.0
        %4876 = vmatpush1.msra.mxu0 0.0
        %4877 = vmatprep.mubr.f32.mxu0 0.0
        %4878 = vmatmul.mubr.f32.gmra.mrb[0].mxu0 %v4473
        %v4879 = vpop.f32.mrb[0].mxu0
        %v4880 = vadd.f32 0.0, %v4879
        %v4881 = vpop.f32.mrb[0].mxu0
        %v4882 = vadd.f32 0.0, %v4881
        %4883 = vmatprep.mubr.f32.mxu0 0.0
        %4884 = vmatmul.mubr.f32.gmra.mrb[0].mxu0 %v4475
        %v4885 = vpop.f32.mrb[0].mxu0
        %v4886 = vadd.f32 0.0, %v4885
        %v4887 = vpop.f32.mrb[0].mxu0
        %v4888 = vadd.f32 0.0, %v4887
        %4889 = vdwg.mxu0
        %v4890 = vadd.f32 %v4780, %v4880
        %v4891 = vadd.f32 %v4781, %v4882
        %v4892 = vadd.f32 %v4782, %v4886
        %v4893 = vadd.f32 %v4783, %v4888
        %s4894 = scalar_lea.vmem %s6, 1584
        %v4895 = vld [vmem:[%s4894] sm:$0xff]
        %v4896 = vld [vmem:[%s4894 + $0x8] sm:$0xff]
        %v4897 = vld [vmem:[%s4894 + $0x10] sm:$0xff]
        %v4898 = vld [vmem:[%s4894 + $0x18] sm:$0xff]
        %v4899 = vld [vmem:[%s4894 + $0x20] sm:$0xff]
        %v4900 = vld [vmem:[%s4894 + $0x28] sm:$0xff]
        %v4901 = vld [vmem:[%s4894 + $0x30] sm:$0xff]
        %v4902 = vld [vmem:[%s4894 + $0x38] sm:$0xff]
        %v4903 = vld [vmem:[%s4894 + $0x40] sm:$0xff]
        %v4904 = vld [vmem:[%s4894 + $0x48] sm:$0xff]
        %v4905 = vld [vmem:[%s4894 + $0x50] sm:$0xff]
        %v4906 = vld [vmem:[%s4894 + $0x58] sm:$0xff]
        %v4907 = vld [vmem:[%s4894 + $0x60] sm:$0xff]
        %v4908 = vld [vmem:[%s4894 + $0x68] sm:$0xff]
        %v4909 = vld [vmem:[%s4894 + $0x70] sm:$0xff]
        %v4910 = vld [vmem:[%s4894 + $0x78] sm:$0xff]
        %v4911 = vld [vmem:[%s4894 + $0x80] sm:$0xff]
        %v4912 = vld [vmem:[%s4894 + $0x88] sm:$0xff]
        %v4913 = vld [vmem:[%s4894 + $0x90] sm:$0xff]
        %v4914 = vld [vmem:[%s4894 + $0x98] sm:$0xff]
        %v4915 = vld [vmem:[%s4894 + $0xa0] sm:$0xf]
        %v4916 = vld [vmem:[%s4894 + $0xa8] sm:$0xf]
        %v4918 = vsel %vm540, %v4915, 0
        %v4921 = vsel %vm540, %v4916, 0
        %4923 = vmatprep.subr.mxu0 %v4896
        %4924 = vmatpush1.msra.mxu0 %v4895
        %4925 = vmatprep.subr.mxu0 %v4898
        %4926 = vmatpush1.msra.mxu0 %v4897
        %4927 = vmatprep.subr.mxu0 %v4900
        %4928 = vmatpush1.msra.mxu0 %v4899
        %4929 = vmatprep.subr.mxu0 %v4902
        %4930 = vmatpush1.msra.mxu0 %v4901
        %4931 = vmatprep.subr.mxu0 %v4904
        %4932 = vmatpush1.msra.mxu0 %v4903
        %4933 = vmatprep.subr.mxu0 %v4906
        %4934 = vmatpush1.msra.mxu0 %v4905
        %4935 = vmatprep.subr.mxu0 %v4908
        %4936 = vmatpush1.msra.mxu0 %v4907
        %4937 = vmatprep.subr.mxu0 %v4910
        %4938 = vmatpush1.msra.mxu0 %v4909
        %4939 = vmatprep.subr.mxu0 %v4912
        %4940 = vmatpush1.msra.mxu0 %v4911
        %4941 = vmatprep.subr.mxu0 %v4914
        %4942 = vmatpush1.msra.mxu0 %v4913
        %4943 = vmatprep.subr.mxu0 %v4921
        %4944 = vmatpush1.msra.mxu0 %v4918
        %4945 = vmatprep.subr.mxu0 0.0
        %4946 = vmatpush1.msra.mxu0 0.0
        %4947 = vmatprep.subr.mxu0 0.0
        %4948 = vmatpush1.msra.mxu0 0.0
        %4949 = vmatprep.subr.mxu0 0.0
        %4950 = vmatpush1.msra.mxu0 0.0
        %4951 = vmatprep.subr.mxu0 0.0
        %4952 = vmatpush1.msra.mxu0 0.0
        %4953 = vmatprep.subr.mxu0 0.0
        %4954 = vmatpush1.msra.mxu0 0.0
        %4955 = vmatprep.subr.mxu0 0.0
        %4956 = vmatpush1.msra.mxu0 0.0
        %4957 = vmatprep.subr.mxu0 0.0
        %4958 = vmatpush1.msra.mxu0 0.0
        %4959 = vmatprep.subr.mxu0 0.0
        %4960 = vmatpush1.msra.mxu0 0.0
        %4961 = vmatprep.subr.mxu0 0.0
        %4962 = vmatpush1.msra.mxu0 0.0
        %4963 = vmatprep.subr.mxu0 0.0
        %4964 = vmatpush1.msra.mxu0 0.0
        %4965 = vmatprep.subr.mxu0 0.0
        %4966 = vmatpush1.msra.mxu0 0.0
        %4967 = vmatprep.subr.mxu0 0.0
        %4968 = vmatpush1.msra.mxu0 0.0
        %4969 = vmatprep.subr.mxu0 0.0
        %4970 = vmatpush1.msra.mxu0 0.0
        %4971 = vmatprep.subr.mxu0 0.0
        %4972 = vmatpush1.msra.mxu0 0.0
        %4973 = vmatprep.subr.mxu0 0.0
        %4974 = vmatpush1.msra.mxu0 0.0
        %4975 = vmatprep.subr.mxu0 0.0
        %4976 = vmatpush1.msra.mxu0 0.0
        %4977 = vmatprep.subr.mxu0 0.0
        %4978 = vmatpush1.msra.mxu0 0.0
        %4979 = vmatprep.subr.mxu0 0.0
        %4980 = vmatpush1.msra.mxu0 0.0
        %4981 = vmatprep.subr.mxu0 0.0
        %4982 = vmatpush1.msra.mxu0 0.0
        %4983 = vmatprep.subr.mxu0 0.0
        %4984 = vmatpush1.msra.mxu0 0.0
        %4985 = vmatprep.subr.mxu0 0.0
        %4986 = vmatpush1.msra.mxu0 0.0
        %4987 = vmatprep.mubr.f32.mxu0 0.0
        %4988 = vmatmul.mubr.f32.gmra.mrb[0].mxu0 %v4473
        %v4989 = vpop.f32.mrb[0].mxu0
        %v4990 = vadd.f32 0.0, %v4989
        %v4991 = vpop.f32.mrb[0].mxu0
        %v4992 = vadd.f32 0.0, %v4991
        %4993 = vmatprep.mubr.f32.mxu0 0.0
        %4994 = vmatmul.mubr.f32.gmra.mrb[0].mxu0 %v4475
        %v4995 = vpop.f32.mrb[0].mxu0
        %v4996 = vadd.f32 0.0, %v4995
        %v4997 = vpop.f32.mrb[0].mxu0
        %v4998 = vadd.f32 0.0, %v4997
        %4999 = vdwg.mxu0
        %v5000 = vadd.f32 %v4890, %v4990
        %v5001 = vadd.f32 %v4891, %v4992
        %v5002 = vadd.f32 %v4892, %v4996
        %v5003 = vadd.f32 %v4893, %v4998
        %s5004 = scalar_lea.vmem %s6, 1760
        %v5005 = vld [vmem:[%s5004] sm:$0xff]
        %v5006 = vld [vmem:[%s5004 + $0x8] sm:$0xff]
        %v5007 = vld [vmem:[%s5004 + $0x10] sm:$0xff]
        %v5008 = vld [vmem:[%s5004 + $0x18] sm:$0xff]
        %v5009 = vld [vmem:[%s5004 + $0x20] sm:$0xff]
        %v5010 = vld [vmem:[%s5004 + $0x28] sm:$0xff]
        %v5011 = vld [vmem:[%s5004 + $0x30] sm:$0xff]
        %v5012 = vld [vmem:[%s5004 + $0x38] sm:$0xff]
        %v5013 = vld [vmem:[%s5004 + $0x40] sm:$0xff]
        %v5014 = vld [vmem:[%s5004 + $0x48] sm:$0xff]
        %v5015 = vld [vmem:[%s5004 + $0x50] sm:$0xff]
        %v5016 = vld [vmem:[%s5004 + $0x58] sm:$0xff]
        %v5017 = vld [vmem:[%s5004 + $0x60] sm:$0xff]
        %v5018 = vld [vmem:[%s5004 + $0x68] sm:$0xff]
        %v5019 = vld [vmem:[%s5004 + $0x70] sm:$0xff]
        %v5020 = vld [vmem:[%s5004 + $0x78] sm:$0xff]
        %v5021 = vld [vmem:[%s5004 + $0x80] sm:$0xff]
        %v5022 = vld [vmem:[%s5004 + $0x88] sm:$0xff]
        %v5023 = vld [vmem:[%s5004 + $0x90] sm:$0xff]
        %v5024 = vld [vmem:[%s5004 + $0x98] sm:$0xff]
        %v5025 = vld [vmem:[%s5004 + $0xa0] sm:$0xf]
        %v5026 = vld [vmem:[%s5004 + $0xa8] sm:$0xf]
        %v5027 = vrot.slane %v3896, 2
        %v5028 = vrot.slane %v3897, 2
        %v5029 = vsel %vm1770, %v5027, %v5028
        %v5030 = vsel %vm3944, %v5029, 0
        %v5032 = vsel %vm3944, %v5028, 0
        %v5035 = vsel %vm540, %v5025, 0
        %v5038 = vsel %vm540, %v5026, 0
        %5040 = vmatprep.subr.mxu0 %v5006
        %5041 = vmatpush1.msra.mxu0 %v5005
        %5042 = vmatprep.subr.mxu0 %v5008
        %5043 = vmatpush1.msra.mxu0 %v5007
        %5044 = vmatprep.subr.mxu0 %v5010
        %5045 = vmatpush1.msra.mxu0 %v5009
        %5046 = vmatprep.subr.mxu0 %v5012
        %5047 = vmatpush1.msra.mxu0 %v5011
        %5048 = vmatprep.subr.mxu0 %v5014
        %5049 = vmatpush1.msra.mxu0 %v5013
        %5050 = vmatprep.subr.mxu0 %v5016
        %5051 = vmatpush1.msra.mxu0 %v5015
        %5052 = vmatprep.subr.mxu0 %v5018
        %5053 = vmatpush1.msra.mxu0 %v5017
        %5054 = vmatprep.subr.mxu0 %v5020
        %5055 = vmatpush1.msra.mxu0 %v5019
        %5056 = vmatprep.subr.mxu0 %v5022
        %5057 = vmatpush1.msra.mxu0 %v5021
        %5058 = vmatprep.subr.mxu0 %v5024
        %5059 = vmatpush1.msra.mxu0 %v5023
        %5060 = vmatprep.subr.mxu0 %v5038
        %5061 = vmatpush1.msra.mxu0 %v5035
        %5062 = vmatprep.subr.mxu0 0.0
        %5063 = vmatpush1.msra.mxu0 0.0
        %5064 = vmatprep.subr.mxu0 0.0
        %5065 = vmatpush1.msra.mxu0 0.0
        %5066 = vmatprep.subr.mxu0 0.0
        %5067 = vmatpush1.msra.mxu0 0.0
        %5068 = vmatprep.subr.mxu0 0.0
        %5069 = vmatpush1.msra.mxu0 0.0
        %5070 = vmatprep.subr.mxu0 0.0
        %5071 = vmatpush1.msra.mxu0 0.0
        %5072 = vmatprep.subr.mxu0 0.0
        %5073 = vmatpush1.msra.mxu0 0.0
        %5074 = vmatprep.subr.mxu0 0.0
        %5075 = vmatpush1.msra.mxu0 0.0
        %5076 = vmatprep.subr.mxu0 0.0
        %5077 = vmatpush1.msra.mxu0 0.0
        %5078 = vmatprep.subr.mxu0 0.0
        %5079 = vmatpush1.msra.mxu0 0.0
        %5080 = vmatprep.subr.mxu0 0.0
        %5081 = vmatpush1.msra.mxu0 0.0
        %5082 = vmatprep.subr.mxu0 0.0
        %5083 = vmatpush1.msra.mxu0 0.0
        %5084 = vmatprep.subr.mxu0 0.0
        %5085 = vmatpush1.msra.mxu0 0.0
        %5086 = vmatprep.subr.mxu0 0.0
        %5087 = vmatpush1.msra.mxu0 0.0
        %5088 = vmatprep.subr.mxu0 0.0
        %5089 = vmatpush1.msra.mxu0 0.0
        %5090 = vmatprep.subr.mxu0 0.0
        %5091 = vmatpush1.msra.mxu0 0.0
        %5092 = vmatprep.subr.mxu0 0.0
        %5093 = vmatpush1.msra.mxu0 0.0
        %5094 = vmatprep.subr.mxu0 0.0
        %5095 = vmatpush1.msra.mxu0 0.0
        %5096 = vmatprep.subr.mxu0 0.0
        %5097 = vmatpush1.msra.mxu0 0.0
        %5098 = vmatprep.subr.mxu0 0.0
        %5099 = vmatpush1.msra.mxu0 0.0
        %5100 = vmatprep.subr.mxu0 0.0
        %5101 = vmatpush1.msra.mxu0 0.0
        %5102 = vmatprep.subr.mxu0 0.0
        %5103 = vmatpush1.msra.mxu0 0.0
        %5104 = vmatprep.mubr.f32.mxu0 0.0
        %5105 = vmatmul.mubr.f32.gmra.mrb[0].mxu0 %v5030
        %v5106 = vpop.f32.mrb[0].mxu0
        %v5107 = vadd.f32 0.0, %v5106
        %v5108 = vpop.f32.mrb[0].mxu0
        %v5109 = vadd.f32 0.0, %v5108
        %5110 = vmatprep.mubr.f32.mxu0 0.0
        %5111 = vmatmul.mubr.f32.gmra.mrb[0].mxu0 %v5032
        %v5112 = vpop.f32.mrb[0].mxu0
        %v5113 = vadd.f32 0.0, %v5112
        %v5114 = vpop.f32.mrb[0].mxu0
        %v5115 = vadd.f32 0.0, %v5114
        %5116 = vdwg.mxu0
        %v5117 = vadd.f32 %v5000, %v5107
        %v5118 = vadd.f32 %v5001, %v5109
        %v5119 = vadd.f32 %v5002, %v5113
        %v5120 = vadd.f32 %v5003, %v5115
        %s5121 = scalar_lea.vmem %s6, 1936
        %v5122 = vld [vmem:[%s5121] sm:$0xff]
        %v5123 = vld [vmem:[%s5121 + $0x8] sm:$0xff]
        %v5124 = vld [vmem:[%s5121 + $0x10] sm:$0xff]
        %v5125 = vld [vmem:[%s5121 + $0x18] sm:$0xff]
        %v5126 = vld [vmem:[%s5121 + $0x20] sm:$0xff]
        %v5127 = vld [vmem:[%s5121 + $0x28] sm:$0xff]
        %v5128 = vld [vmem:[%s5121 + $0x30] sm:$0xff]
        %v5129 = vld [vmem:[%s5121 + $0x38] sm:$0xff]
        %v5130 = vld [vmem:[%s5121 + $0x40] sm:$0xff]
        %v5131 = vld [vmem:[%s5121 + $0x48] sm:$0xff]
        %v5132 = vld [vmem:[%s5121 + $0x50] sm:$0xff]
        %v5133 = vld [vmem:[%s5121 + $0x58] sm:$0xff]
        %v5134 = vld [vmem:[%s5121 + $0x60] sm:$0xff]
        %v5135 = vld [vmem:[%s5121 + $0x68] sm:$0xff]
        %v5136 = vld [vmem:[%s5121 + $0x70] sm:$0xff]
        %v5137 = vld [vmem:[%s5121 + $0x78] sm:$0xff]
        %v5138 = vld [vmem:[%s5121 + $0x80] sm:$0xff]
        %v5139 = vld [vmem:[%s5121 + $0x88] sm:$0xff]
        %v5140 = vld [vmem:[%s5121 + $0x90] sm:$0xff]
        %v5141 = vld [vmem:[%s5121 + $0x98] sm:$0xff]
        %v5142 = vld [vmem:[%s5121 + $0xa0] sm:$0xf]
        %v5143 = vld [vmem:[%s5121 + $0xa8] sm:$0xf]
        %v5145 = vsel %vm540, %v5142, 0
        %v5148 = vsel %vm540, %v5143, 0
        %5150 = vmatprep.subr.mxu0 %v5123
        %5151 = vmatpush1.msra.mxu0 %v5122
        %5152 = vmatprep.subr.mxu0 %v5125
        %5153 = vmatpush1.msra.mxu0 %v5124
        %5154 = vmatprep.subr.mxu0 %v5127
        %5155 = vmatpush1.msra.mxu0 %v5126
        %5156 = vmatprep.subr.mxu0 %v5129
        %5157 = vmatpush1.msra.mxu0 %v5128
        %5158 = vmatprep.subr.mxu0 %v5131
        %5159 = vmatpush1.msra.mxu0 %v5130
        %5160 = vmatprep.subr.mxu0 %v5133
        %5161 = vmatpush1.msra.mxu0 %v5132
        %5162 = vmatprep.subr.mxu0 %v5135
        %5163 = vmatpush1.msra.mxu0 %v5134
        %5164 = vmatprep.subr.mxu0 %v5137
        %5165 = vmatpush1.msra.mxu0 %v5136
        %5166 = vmatprep.subr.mxu0 %v5139
        %5167 = vmatpush1.msra.mxu0 %v5138
        %5168 = vmatprep.subr.mxu0 %v5141
        %5169 = vmatpush1.msra.mxu0 %v5140
        %5170 = vmatprep.subr.mxu0 %v5148
        %5171 = vmatpush1.msra.mxu0 %v5145
        %5172 = vmatprep.subr.mxu0 0.0
        %5173 = vmatpush1.msra.mxu0 0.0
        %5174 = vmatprep.subr.mxu0 0.0
        %5175 = vmatpush1.msra.mxu0 0.0
        %5176 = vmatprep.subr.mxu0 0.0
        %5177 = vmatpush1.msra.mxu0 0.0
        %5178 = vmatprep.subr.mxu0 0.0
        %5179 = vmatpush1.msra.mxu0 0.0
        %5180 = vmatprep.subr.mxu0 0.0
        %5181 = vmatpush1.msra.mxu0 0.0
        %5182 = vmatprep.subr.mxu0 0.0
        %5183 = vmatpush1.msra.mxu0 0.0
        %5184 = vmatprep.subr.mxu0 0.0
        %5185 = vmatpush1.msra.mxu0 0.0
        %5186 = vmatprep.subr.mxu0 0.0
        %5187 = vmatpush1.msra.mxu0 0.0
        %5188 = vmatprep.subr.mxu0 0.0
        %5189 = vmatpush1.msra.mxu0 0.0
        %5190 = vmatprep.subr.mxu0 0.0
        %5191 = vmatpush1.msra.mxu0 0.0
        %5192 = vmatprep.subr.mxu0 0.0
        %5193 = vmatpush1.msra.mxu0 0.0
        %5194 = vmatprep.subr.mxu0 0.0
        %5195 = vmatpush1.msra.mxu0 0.0
        %5196 = vmatprep.subr.mxu0 0.0
        %5197 = vmatpush1.msra.mxu0 0.0
        %5198 = vmatprep.subr.mxu0 0.0
        %5199 = vmatpush1.msra.mxu0 0.0
        %5200 = vmatprep.subr.mxu0 0.0
        %5201 = vmatpush1.msra.mxu0 0.0
        %5202 = vmatprep.subr.mxu0 0.0
        %5203 = vmatpush1.msra.mxu0 0.0
        %5204 = vmatprep.subr.mxu0 0.0
        %5205 = vmatpush1.msra.mxu0 0.0
        %5206 = vmatprep.subr.mxu0 0.0
        %5207 = vmatpush1.msra.mxu0 0.0
        %5208 = vmatprep.subr.mxu0 0.0
        %5209 = vmatpush1.msra.mxu0 0.0
        %5210 = vmatprep.subr.mxu0 0.0
        %5211 = vmatpush1.msra.mxu0 0.0
        %5212 = vmatprep.subr.mxu0 0.0
        %5213 = vmatpush1.msra.mxu0 0.0
        %5214 = vmatprep.mubr.f32.mxu0 0.0
        %5215 = vmatmul.mubr.f32.gmra.mrb[0].mxu0 %v5030
        %v5216 = vpop.f32.mrb[0].mxu0
        %v5217 = vadd.f32 0.0, %v5216
        %v5218 = vpop.f32.mrb[0].mxu0
        %v5219 = vadd.f32 0.0, %v5218
        %5220 = vmatprep.mubr.f32.mxu0 0.0
        %5221 = vmatmul.mubr.f32.gmra.mrb[0].mxu0 %v5032
        %v5222 = vpop.f32.mrb[0].mxu0
        %v5223 = vadd.f32 0.0, %v5222
        %v5224 = vpop.f32.mrb[0].mxu0
        %v5225 = vadd.f32 0.0, %v5224
        %5226 = vdwg.mxu0
        %v5227 = vadd.f32 %v5117, %v5217
        %v5228 = vadd.f32 %v5118, %v5219
        %v5229 = vadd.f32 %v5119, %v5223
        %v5230 = vadd.f32 %v5120, %v5225
        %s5231 = scalar_lea.vmem %s6, 2112
        %v5232 = vld [vmem:[%s5231] sm:$0xff]
        %v5233 = vld [vmem:[%s5231 + $0x8] sm:$0xff]
        %v5234 = vld [vmem:[%s5231 + $0x10] sm:$0xff]
        %v5235 = vld [vmem:[%s5231 + $0x18] sm:$0xff]
        %v5236 = vld [vmem:[%s5231 + $0x20] sm:$0xff]
        %v5237 = vld [vmem:[%s5231 + $0x28] sm:$0xff]
        %v5238 = vld [vmem:[%s5231 + $0x30] sm:$0xff]
        %v5239 = vld [vmem:[%s5231 + $0x38] sm:$0xff]
        %v5240 = vld [vmem:[%s5231 + $0x40] sm:$0xff]
        %v5241 = vld [vmem:[%s5231 + $0x48] sm:$0xff]
        %v5242 = vld [vmem:[%s5231 + $0x50] sm:$0xff]
        %v5243 = vld [vmem:[%s5231 + $0x58] sm:$0xff]
        %v5244 = vld [vmem:[%s5231 + $0x60] sm:$0xff]
        %v5245 = vld [vmem:[%s5231 + $0x68] sm:$0xff]
        %v5246 = vld [vmem:[%s5231 + $0x70] sm:$0xff]
        %v5247 = vld [vmem:[%s5231 + $0x78] sm:$0xff]
        %v5248 = vld [vmem:[%s5231 + $0x80] sm:$0xff]
        %v5249 = vld [vmem:[%s5231 + $0x88] sm:$0xff]
        %v5250 = vld [vmem:[%s5231 + $0x90] sm:$0xff]
        %v5251 = vld [vmem:[%s5231 + $0x98] sm:$0xff]
        %v5252 = vld [vmem:[%s5231 + $0xa0] sm:$0xf]
        %v5253 = vld [vmem:[%s5231 + $0xa8] sm:$0xf]
        %v5255 = vsel %vm540, %v5252, 0
        %v5258 = vsel %vm540, %v5253, 0
        %5260 = vmatprep.subr.mxu0 %v5233
        %5261 = vmatpush1.msra.mxu0 %v5232
        %5262 = vmatprep.subr.mxu0 %v5235
        %5263 = vmatpush1.msra.mxu0 %v5234
        %5264 = vmatprep.subr.mxu0 %v5237
        %5265 = vmatpush1.msra.mxu0 %v5236
        %5266 = vmatprep.subr.mxu0 %v5239
        %5267 = vmatpush1.msra.mxu0 %v5238
        %5268 = vmatprep.subr.mxu0 %v5241
        %5269 = vmatpush1.msra.mxu0 %v5240
        %5270 = vmatprep.subr.mxu0 %v5243
        %5271 = vmatpush1.msra.mxu0 %v5242
        %5272 = vmatprep.subr.mxu0 %v5245
        %5273 = vmatpush1.msra.mxu0 %v5244
        %5274 = vmatprep.subr.mxu0 %v5247
        %5275 = vmatpush1.msra.mxu0 %v5246
        %5276 = vmatprep.subr.mxu0 %v5249
        %5277 = vmatpush1.msra.mxu0 %v5248
        %5278 = vmatprep.subr.mxu0 %v5251
        %5279 = vmatpush1.msra.mxu0 %v5250
        %5280 = vmatprep.subr.mxu0 %v5258
        %5281 = vmatpush1.msra.mxu0 %v5255
        %5282 = vmatprep.subr.mxu0 0.0
        %5283 = vmatpush1.msra.mxu0 0.0
        %5284 = vmatprep.subr.mxu0 0.0
        %5285 = vmatpush1.msra.mxu0 0.0
        %5286 = vmatprep.subr.mxu0 0.0
        %5287 = vmatpush1.msra.mxu0 0.0
        %5288 = vmatprep.subr.mxu0 0.0
        %5289 = vmatpush1.msra.mxu0 0.0
        %5290 = vmatprep.subr.mxu0 0.0
        %5291 = vmatpush1.msra.mxu0 0.0
        %5292 = vmatprep.subr.mxu0 0.0
        %5293 = vmatpush1.msra.mxu0 0.0
        %5294 = vmatprep.subr.mxu0 0.0
        %5295 = vmatpush1.msra.mxu0 0.0
        %5296 = vmatprep.subr.mxu0 0.0
        %5297 = vmatpush1.msra.mxu0 0.0
        %5298 = vmatprep.subr.mxu0 0.0
        %5299 = vmatpush1.msra.mxu0 0.0
        %5300 = vmatprep.subr.mxu0 0.0
        %5301 = vmatpush1.msra.mxu0 0.0
        %5302 = vmatprep.subr.mxu0 0.0
        %5303 = vmatpush1.msra.mxu0 0.0
        %5304 = vmatprep.subr.mxu0 0.0
        %5305 = vmatpush1.msra.mxu0 0.0
        %5306 = vmatprep.subr.mxu0 0.0
        %5307 = vmatpush1.msra.mxu0 0.0
        %5308 = vmatprep.subr.mxu0 0.0
        %5309 = vmatpush1.msra.mxu0 0.0
        %5310 = vmatprep.subr.mxu0 0.0
        %5311 = vmatpush1.msra.mxu0 0.0
        %5312 = vmatprep.subr.mxu0 0.0
        %5313 = vmatpush1.msra.mxu0 0.0
        %5314 = vmatprep.subr.mxu0 0.0
        %5315 = vmatpush1.msra.mxu0 0.0
        %5316 = vmatprep.subr.mxu0 0.0
        %5317 = vmatpush1.msra.mxu0 0.0
        %5318 = vmatprep.subr.mxu0 0.0
        %5319 = vmatpush1.msra.mxu0 0.0
        %5320 = vmatprep.subr.mxu0 0.0
        %5321 = vmatpush1.msra.mxu0 0.0
        %5322 = vmatprep.subr.mxu0 0.0
        %5323 = vmatpush1.msra.mxu0 0.0
        %5324 = vmatprep.mubr.f32.mxu0 0.0
        %5325 = vmatmul.mubr.f32.gmra.mrb[0].mxu0 %v5030
        %v5326 = vpop.f32.mrb[0].mxu0
        %v5327 = vadd.f32 0.0, %v5326
        %v5328 = vpop.f32.mrb[0].mxu0
        %v5329 = vadd.f32 0.0, %v5328
        %5330 = vmatprep.mubr.f32.mxu0 0.0
        %5331 = vmatmul.mubr.f32.gmra.mrb[0].mxu0 %v5032
        %v5332 = vpop.f32.mrb[0].mxu0
        %v5333 = vadd.f32 0.0, %v5332
        %v5334 = vpop.f32.mrb[0].mxu0
        %v5335 = vadd.f32 0.0, %v5334
        %5336 = vdwg.mxu0
        %v5337 = vadd.f32 %v5227, %v5327
        %v5338 = vadd.f32 %v5228, %v5329
        %v5339 = vadd.f32 %v5229, %v5333
        %v5340 = vadd.f32 %v5230, %v5335
        %s5341 = scalar_lea.vmem %s6, 2288
        %v5342 = vld [vmem:[%s5341] sm:$0xff]
        %v5343 = vld [vmem:[%s5341 + $0x8] sm:$0xff]
        %v5344 = vld [vmem:[%s5341 + $0x10] sm:$0xff]
        %v5345 = vld [vmem:[%s5341 + $0x18] sm:$0xff]
        %v5346 = vld [vmem:[%s5341 + $0x20] sm:$0xff]
        %v5347 = vld [vmem:[%s5341 + $0x28] sm:$0xff]
        %v5348 = vld [vmem:[%s5341 + $0x30] sm:$0xff]
        %v5349 = vld [vmem:[%s5341 + $0x38] sm:$0xff]
        %v5350 = vld [vmem:[%s5341 + $0x40] sm:$0xff]
        %v5351 = vld [vmem:[%s5341 + $0x48] sm:$0xff]
        %v5352 = vld [vmem:[%s5341 + $0x50] sm:$0xff]
        %v5353 = vld [vmem:[%s5341 + $0x58] sm:$0xff]
        %v5354 = vld [vmem:[%s5341 + $0x60] sm:$0xff]
        %v5355 = vld [vmem:[%s5341 + $0x68] sm:$0xff]
        %v5356 = vld [vmem:[%s5341 + $0x70] sm:$0xff]
        %v5357 = vld [vmem:[%s5341 + $0x78] sm:$0xff]
        %v5358 = vld [vmem:[%s5341 + $0x80] sm:$0xff]
        %v5359 = vld [vmem:[%s5341 + $0x88] sm:$0xff]
        %v5360 = vld [vmem:[%s5341 + $0x90] sm:$0xff]
        %v5361 = vld [vmem:[%s5341 + $0x98] sm:$0xff]
        %v5362 = vld [vmem:[%s5341 + $0xa0] sm:$0xf]
        %v5363 = vld [vmem:[%s5341 + $0xa8] sm:$0xf]
        %v5365 = vsel %vm540, %v5362, 0
        %v5368 = vsel %vm540, %v5363, 0
        %5370 = vmatprep.subr.mxu0 %v5343
        %5371 = vmatpush1.msra.mxu0 %v5342
        %5372 = vmatprep.subr.mxu0 %v5345
        %5373 = vmatpush1.msra.mxu0 %v5344
        %5374 = vmatprep.subr.mxu0 %v5347
        %5375 = vmatpush1.msra.mxu0 %v5346
        %5376 = vmatprep.subr.mxu0 %v5349
        %5377 = vmatpush1.msra.mxu0 %v5348
        %5378 = vmatprep.subr.mxu0 %v5351
        %5379 = vmatpush1.msra.mxu0 %v5350
        %5380 = vmatprep.subr.mxu0 %v5353
        %5381 = vmatpush1.msra.mxu0 %v5352
        %5382 = vmatprep.subr.mxu0 %v5355
        %5383 = vmatpush1.msra.mxu0 %v5354
        %5384 = vmatprep.subr.mxu0 %v5357
        %5385 = vmatpush1.msra.mxu0 %v5356
        %5386 = vmatprep.subr.mxu0 %v5359
        %5387 = vmatpush1.msra.mxu0 %v5358
        %5388 = vmatprep.subr.mxu0 %v5361
        %5389 = vmatpush1.msra.mxu0 %v5360
        %5390 = vmatprep.subr.mxu0 %v5368
        %5391 = vmatpush1.msra.mxu0 %v5365
        %5392 = vmatprep.subr.mxu0 0.0
        %5393 = vmatpush1.msra.mxu0 0.0
        %5394 = vmatprep.subr.mxu0 0.0
        %5395 = vmatpush1.msra.mxu0 0.0
        %5396 = vmatprep.subr.mxu0 0.0
        %5397 = vmatpush1.msra.mxu0 0.0
        %5398 = vmatprep.subr.mxu0 0.0
        %5399 = vmatpush1.msra.mxu0 0.0
        %5400 = vmatprep.subr.mxu0 0.0
        %5401 = vmatpush1.msra.mxu0 0.0
        %5402 = vmatprep.subr.mxu0 0.0
        %5403 = vmatpush1.msra.mxu0 0.0
        %5404 = vmatprep.subr.mxu0 0.0
        %5405 = vmatpush1.msra.mxu0 0.0
        %5406 = vmatprep.subr.mxu0 0.0
        %5407 = vmatpush1.msra.mxu0 0.0
        %5408 = vmatprep.subr.mxu0 0.0
        %5409 = vmatpush1.msra.mxu0 0.0
        %5410 = vmatprep.subr.mxu0 0.0
        %5411 = vmatpush1.msra.mxu0 0.0
        %5412 = vmatprep.subr.mxu0 0.0
        %5413 = vmatpush1.msra.mxu0 0.0
        %5414 = vmatprep.subr.mxu0 0.0
        %5415 = vmatpush1.msra.mxu0 0.0
        %5416 = vmatprep.subr.mxu0 0.0
        %5417 = vmatpush1.msra.mxu0 0.0
        %5418 = vmatprep.subr.mxu0 0.0
        %5419 = vmatpush1.msra.mxu0 0.0
        %5420 = vmatprep.subr.mxu0 0.0
        %5421 = vmatpush1.msra.mxu0 0.0
        %5422 = vmatprep.subr.mxu0 0.0
        %5423 = vmatpush1.msra.mxu0 0.0
        %5424 = vmatprep.subr.mxu0 0.0
        %5425 = vmatpush1.msra.mxu0 0.0
        %5426 = vmatprep.subr.mxu0 0.0
        %5427 = vmatpush1.msra.mxu0 0.0
        %5428 = vmatprep.subr.mxu0 0.0
        %5429 = vmatpush1.msra.mxu0 0.0
        %5430 = vmatprep.subr.mxu0 0.0
        %5431 = vmatpush1.msra.mxu0 0.0
        %5432 = vmatprep.subr.mxu0 0.0
        %5433 = vmatpush1.msra.mxu0 0.0
        %5434 = vmatprep.mubr.f32.mxu0 0.0
        %5435 = vmatmul.mubr.f32.gmra.mrb[0].mxu0 %v5030
        %v5436 = vpop.f32.mrb[0].mxu0
        %v5437 = vadd.f32 0.0, %v5436
        %v5438 = vpop.f32.mrb[0].mxu0
        %v5439 = vadd.f32 0.0, %v5438
        %5440 = vmatprep.mubr.f32.mxu0 0.0
        %5441 = vmatmul.mubr.f32.gmra.mrb[0].mxu0 %v5032
        %v5442 = vpop.f32.mrb[0].mxu0
        %v5443 = vadd.f32 0.0, %v5442
        %v5444 = vpop.f32.mrb[0].mxu0
        %v5445 = vadd.f32 0.0, %v5444
        %5446 = vdwg.mxu0
        %v5447 = vadd.f32 %v5337, %v5437
        %v5448 = vadd.f32 %v5338, %v5439
        %v5449 = vadd.f32 %v5339, %v5443
        %v5450 = vadd.f32 %v5340, %v5445
        %s5451 = scalar_lea.vmem %s6, 2464
        %v5452 = vld [vmem:[%s5451] sm:$0xff]
        %v5453 = vld [vmem:[%s5451 + $0x8] sm:$0xff]
        %v5454 = vld [vmem:[%s5451 + $0x10] sm:$0xff]
        %v5455 = vld [vmem:[%s5451 + $0x18] sm:$0xff]
        %v5456 = vld [vmem:[%s5451 + $0x20] sm:$0xff]
        %v5457 = vld [vmem:[%s5451 + $0x28] sm:$0xff]
        %v5458 = vld [vmem:[%s5451 + $0x30] sm:$0xff]
        %v5459 = vld [vmem:[%s5451 + $0x38] sm:$0xff]
        %v5460 = vld [vmem:[%s5451 + $0x40] sm:$0xff]
        %v5461 = vld [vmem:[%s5451 + $0x48] sm:$0xff]
        %v5462 = vld [vmem:[%s5451 + $0x50] sm:$0xff]
        %v5463 = vld [vmem:[%s5451 + $0x58] sm:$0xff]
        %v5464 = vld [vmem:[%s5451 + $0x60] sm:$0xff]
        %v5465 = vld [vmem:[%s5451 + $0x68] sm:$0xff]
        %v5466 = vld [vmem:[%s5451 + $0x70] sm:$0xff]
        %v5467 = vld [vmem:[%s5451 + $0x78] sm:$0xff]
        %v5468 = vld [vmem:[%s5451 + $0x80] sm:$0xff]
        %v5469 = vld [vmem:[%s5451 + $0x88] sm:$0xff]
        %v5470 = vld [vmem:[%s5451 + $0x90] sm:$0xff]
        %v5471 = vld [vmem:[%s5451 + $0x98] sm:$0xff]
        %v5472 = vld [vmem:[%s5451 + $0xa0] sm:$0xf]
        %v5473 = vld [vmem:[%s5451 + $0xa8] sm:$0xf]
        %v5475 = vsel %vm540, %v5472, 0
        %v5478 = vsel %vm540, %v5473, 0
        %5480 = vmatprep.subr.mxu0 %v5453
        %5481 = vmatpush1.msra.mxu0 %v5452
        %5482 = vmatprep.subr.mxu0 %v5455
        %5483 = vmatpush1.msra.mxu0 %v5454
        %5484 = vmatprep.subr.mxu0 %v5457
        %5485 = vmatpush1.msra.mxu0 %v5456
        %5486 = vmatprep.subr.mxu0 %v5459
        %5487 = vmatpush1.msra.mxu0 %v5458
        %5488 = vmatprep.subr.mxu0 %v5461
        %5489 = vmatpush1.msra.mxu0 %v5460
        %5490 = vmatprep.subr.mxu0 %v5463
        %5491 = vmatpush1.msra.mxu0 %v5462
        %5492 = vmatprep.subr.mxu0 %v5465
        %5493 = vmatpush1.msra.mxu0 %v5464
        %5494 = vmatprep.subr.mxu0 %v5467
        %5495 = vmatpush1.msra.mxu0 %v5466
        %5496 = vmatprep.subr.mxu0 %v5469
        %5497 = vmatpush1.msra.mxu0 %v5468
        %5498 = vmatprep.subr.mxu0 %v5471
        %5499 = vmatpush1.msra.mxu0 %v5470
        %5500 = vmatprep.subr.mxu0 %v5478
        %5501 = vmatpush1.msra.mxu0 %v5475
        %5502 = vmatprep.subr.mxu0 0.0
        %5503 = vmatpush1.msra.mxu0 0.0
        %5504 = vmatprep.subr.mxu0 0.0
        %5505 = vmatpush1.msra.mxu0 0.0
        %5506 = vmatprep.subr.mxu0 0.0
        %5507 = vmatpush1.msra.mxu0 0.0
        %5508 = vmatprep.subr.mxu0 0.0
        %5509 = vmatpush1.msra.mxu0 0.0
        %5510 = vmatprep.subr.mxu0 0.0
        %5511 = vmatpush1.msra.mxu0 0.0
        %5512 = vmatprep.subr.mxu0 0.0
        %5513 = vmatpush1.msra.mxu0 0.0
        %5514 = vmatprep.subr.mxu0 0.0
        %5515 = vmatpush1.msra.mxu0 0.0
        %5516 = vmatprep.subr.mxu0 0.0
        %5517 = vmatpush1.msra.mxu0 0.0
        %5518 = vmatprep.subr.mxu0 0.0
        %5519 = vmatpush1.msra.mxu0 0.0
        %5520 = vmatprep.subr.mxu0 0.0
        %5521 = vmatpush1.msra.mxu0 0.0
        %5522 = vmatprep.subr.mxu0 0.0
        %5523 = vmatpush1.msra.mxu0 0.0
        %5524 = vmatprep.subr.mxu0 0.0
        %5525 = vmatpush1.msra.mxu0 0.0
        %5526 = vmatprep.subr.mxu0 0.0
        %5527 = vmatpush1.msra.mxu0 0.0
        %5528 = vmatprep.subr.mxu0 0.0
        %5529 = vmatpush1.msra.mxu0 0.0
        %5530 = vmatprep.subr.mxu0 0.0
        %5531 = vmatpush1.msra.mxu0 0.0
        %5532 = vmatprep.subr.mxu0 0.0
        %5533 = vmatpush1.msra.mxu0 0.0
        %5534 = vmatprep.subr.mxu0 0.0
        %5535 = vmatpush1.msra.mxu0 0.0
        %5536 = vmatprep.subr.mxu0 0.0
        %5537 = vmatpush1.msra.mxu0 0.0
        %5538 = vmatprep.subr.mxu0 0.0
        %5539 = vmatpush1.msra.mxu0 0.0
        %5540 = vmatprep.subr.mxu0 0.0
        %5541 = vmatpush1.msra.mxu0 0.0
        %5542 = vmatprep.subr.mxu0 0.0
        %5543 = vmatpush1.msra.mxu0 0.0
        %5544 = vmatprep.mubr.f32.mxu0 0.0
        %5545 = vmatmul.mubr.f32.gmra.mrb[0].mxu0 %v5030
        %v5546 = vpop.f32.mrb[0].mxu0
        %v5547 = vadd.f32 0.0, %v5546
        %v5548 = vpop.f32.mrb[0].mxu0
        %v5549 = vadd.f32 0.0, %v5548
        %5550 = vmatprep.mubr.f32.mxu0 0.0
        %5551 = vmatmul.mubr.f32.gmra.mrb[0].mxu0 %v5032
        %v5552 = vpop.f32.mrb[0].mxu0
        %v5553 = vadd.f32 0.0, %v5552
        %v5554 = vpop.f32.mrb[0].mxu0
        %v5555 = vadd.f32 0.0, %v5554
        %5556 = vdwg.mxu0
        %v5557 = vadd.f32 %v5447, %v5547
        %v5558 = vadd.f32 %v5448, %v5549
        %v5559 = vadd.f32 %v5449, %v5553
        %v5560 = vadd.f32 %v5450, %v5555
        %s5561 = scalar_lea.vmem %s6, 2640
        %v5562 = vld [vmem:[%s5561] sm:$0xff]
        %v5563 = vld [vmem:[%s5561 + $0x8] sm:$0xff]
        %v5564 = vld [vmem:[%s5561 + $0x10] sm:$0xff]
        %v5565 = vld [vmem:[%s5561 + $0x18] sm:$0xff]
        %v5566 = vld [vmem:[%s5561 + $0x20] sm:$0xff]
        %v5567 = vld [vmem:[%s5561 + $0x28] sm:$0xff]
        %v5568 = vld [vmem:[%s5561 + $0x30] sm:$0xff]
        %v5569 = vld [vmem:[%s5561 + $0x38] sm:$0xff]
        %v5570 = vld [vmem:[%s5561 + $0x40] sm:$0xff]
        %v5571 = vld [vmem:[%s5561 + $0x48] sm:$0xff]
        %v5572 = vld [vmem:[%s5561 + $0x50] sm:$0xff]
        %v5573 = vld [vmem:[%s5561 + $0x58] sm:$0xff]
        %v5574 = vld [vmem:[%s5561 + $0x60] sm:$0xff]
        %v5575 = vld [vmem:[%s5561 + $0x68] sm:$0xff]
        %v5576 = vld [vmem:[%s5561 + $0x70] sm:$0xff]
        %v5577 = vld [vmem:[%s5561 + $0x78] sm:$0xff]
        %v5578 = vld [vmem:[%s5561 + $0x80] sm:$0xff]
        %v5579 = vld [vmem:[%s5561 + $0x88] sm:$0xff]
        %v5580 = vld [vmem:[%s5561 + $0x90] sm:$0xff]
        %v5581 = vld [vmem:[%s5561 + $0x98] sm:$0xff]
        %v5582 = vld [vmem:[%s5561 + $0xa0] sm:$0xf]
        %v5583 = vld [vmem:[%s5561 + $0xa8] sm:$0xf]
        %v5584 = vrot.slane %v3896, 3
        %v5585 = vrot.slane %v3897, 3
        %v5586 = vsel %vm2346, %v5584, %v5585
        %v5587 = vsel %vm3944, %v5586, 0
        %v5589 = vsel %vm3944, %v5585, 0
        %v5592 = vsel %vm540, %v5582, 0
        %v5595 = vsel %vm540, %v5583, 0
        %5597 = vmatprep.subr.mxu0 %v5563
        %5598 = vmatpush1.msra.mxu0 %v5562
        %5599 = vmatprep.subr.mxu0 %v5565
        %5600 = vmatpush1.msra.mxu0 %v5564
        %5601 = vmatprep.subr.mxu0 %v5567
        %5602 = vmatpush1.msra.mxu0 %v5566
        %5603 = vmatprep.subr.mxu0 %v5569
        %5604 = vmatpush1.msra.mxu0 %v5568
        %5605 = vmatprep.subr.mxu0 %v5571
        %5606 = vmatpush1.msra.mxu0 %v5570
        %5607 = vmatprep.subr.mxu0 %v5573
        %5608 = vmatpush1.msra.mxu0 %v5572
        %5609 = vmatprep.subr.mxu0 %v5575
        %5610 = vmatpush1.msra.mxu0 %v5574
        %5611 = vmatprep.subr.mxu0 %v5577
        %5612 = vmatpush1.msra.mxu0 %v5576
        %5613 = vmatprep.subr.mxu0 %v5579
        %5614 = vmatpush1.msra.mxu0 %v5578
        %5615 = vmatprep.subr.mxu0 %v5581
        %5616 = vmatpush1.msra.mxu0 %v5580
        %5617 = vmatprep.subr.mxu0 %v5595
        %5618 = vmatpush1.msra.mxu0 %v5592
        %5619 = vmatprep.subr.mxu0 0.0
        %5620 = vmatpush1.msra.mxu0 0.0
        %5621 = vmatprep.subr.mxu0 0.0
        %5622 = vmatpush1.msra.mxu0 0.0
        %5623 = vmatprep.subr.mxu0 0.0
        %5624 = vmatpush1.msra.mxu0 0.0
        %5625 = vmatprep.subr.mxu0 0.0
        %5626 = vmatpush1.msra.mxu0 0.0
        %5627 = vmatprep.subr.mxu0 0.0
        %5628 = vmatpush1.msra.mxu0 0.0
        %5629 = vmatprep.subr.mxu0 0.0
        %5630 = vmatpush1.msra.mxu0 0.0
        %5631 = vmatprep.subr.mxu0 0.0
        %5632 = vmatpush1.msra.mxu0 0.0
        %5633 = vmatprep.subr.mxu0 0.0
        %5634 = vmatpush1.msra.mxu0 0.0
        %5635 = vmatprep.subr.mxu0 0.0
        %5636 = vmatpush1.msra.mxu0 0.0
        %5637 = vmatprep.subr.mxu0 0.0
        %5638 = vmatpush1.msra.mxu0 0.0
        %5639 = vmatprep.subr.mxu0 0.0
        %5640 = vmatpush1.msra.mxu0 0.0
        %5641 = vmatprep.subr.mxu0 0.0
        %5642 = vmatpush1.msra.mxu0 0.0
        %5643 = vmatprep.subr.mxu0 0.0
        %5644 = vmatpush1.msra.mxu0 0.0
        %5645 = vmatprep.subr.mxu0 0.0
        %5646 = vmatpush1.msra.mxu0 0.0
        %5647 = vmatprep.subr.mxu0 0.0
        %5648 = vmatpush1.msra.mxu0 0.0
        %5649 = vmatprep.subr.mxu0 0.0
        %5650 = vmatpush1.msra.mxu0 0.0
        %5651 = vmatprep.subr.mxu0 0.0
        %5652 = vmatpush1.msra.mxu0 0.0
        %5653 = vmatprep.subr.mxu0 0.0
        %5654 = vmatpush1.msra.mxu0 0.0
        %5655 = vmatprep.subr.mxu0 0.0
        %5656 = vmatpush1.msra.mxu0 0.0
        %5657 = vmatprep.subr.mxu0 0.0
        %5658 = vmatpush1.msra.mxu0 0.0
        %5659 = vmatprep.subr.mxu0 0.0
        %5660 = vmatpush1.msra.mxu0 0.0
        %5661 = vmatprep.mubr.f32.mxu0 0.0
        %5662 = vmatmul.mubr.f32.gmra.mrb[0].mxu0 %v5587
        %v5663 = vpop.f32.mrb[0].mxu0
        %v5664 = vadd.f32 0.0, %v5663
        %v5665 = vpop.f32.mrb[0].mxu0
        %v5666 = vadd.f32 0.0, %v5665
        %5667 = vmatprep.mubr.f32.mxu0 0.0
        %5668 = vmatmul.mubr.f32.gmra.mrb[0].mxu0 %v5589
        %v5669 = vpop.f32.mrb[0].mxu0
        %v5670 = vadd.f32 0.0, %v5669
        %v5671 = vpop.f32.mrb[0].mxu0
        %v5672 = vadd.f32 0.0, %v5671
        %5673 = vdwg.mxu0
        %v5674 = vadd.f32 %v5557, %v5664
        %v5675 = vadd.f32 %v5558, %v5666
        %v5676 = vadd.f32 %v5559, %v5670
        %v5677 = vadd.f32 %v5560, %v5672
        %s5678 = scalar_lea.vmem %s6, 2816
        %v5679 = vld [vmem:[%s5678] sm:$0xff]
        %v5680 = vld [vmem:[%s5678 + $0x8] sm:$0xff]
        %v5681 = vld [vmem:[%s5678 + $0x10] sm:$0xff]
        %v5682 = vld [vmem:[%s5678 + $0x18] sm:$0xff]
        %v5683 = vld [vmem:[%s5678 + $0x20] sm:$0xff]
        %v5684 = vld [vmem:[%s5678 + $0x28] sm:$0xff]
        %v5685 = vld [vmem:[%s5678 + $0x30] sm:$0xff]
        %v5686 = vld [vmem:[%s5678 + $0x38] sm:$0xff]
        %v5687 = vld [vmem:[%s5678 + $0x40] sm:$0xff]
        %v5688 = vld [vmem:[%s5678 + $0x48] sm:$0xff]
        %v5689 = vld [vmem:[%s5678 + $0x50] sm:$0xff]
        %v5690 = vld [vmem:[%s5678 + $0x58] sm:$0xff]
        %v5691 = vld [vmem:[%s5678 + $0x60] sm:$0xff]
        %v5692 = vld [vmem:[%s5678 + $0x68] sm:$0xff]
        %v5693 = vld [vmem:[%s5678 + $0x70] sm:$0xff]
        %v5694 = vld [vmem:[%s5678 + $0x78] sm:$0xff]
        %v5695 = vld [vmem:[%s5678 + $0x80] sm:$0xff]
        %v5696 = vld [vmem:[%s5678 + $0x88] sm:$0xff]
        %v5697 = vld [vmem:[%s5678 + $0x90] sm:$0xff]
        %v5698 = vld [vmem:[%s5678 + $0x98] sm:$0xff]
        %v5699 = vld [vmem:[%s5678 + $0xa0] sm:$0xf]
        %v5700 = vld [vmem:[%s5678 + $0xa8] sm:$0xf]
        %v5702 = vsel %vm540, %v5699, 0
        %v5705 = vsel %vm540, %v5700, 0
        %5707 = vmatprep.subr.mxu0 %v5680
        %5708 = vmatpush1.msra.mxu0 %v5679
        %5709 = vmatprep.subr.mxu0 %v5682
        %5710 = vmatpush1.msra.mxu0 %v5681
        %5711 = vmatprep.subr.mxu0 %v5684
        %5712 = vmatpush1.msra.mxu0 %v5683
        %5713 = vmatprep.subr.mxu0 %v5686
        %5714 = vmatpush1.msra.mxu0 %v5685
        %5715 = vmatprep.subr.mxu0 %v5688
        %5716 = vmatpush1.msra.mxu0 %v5687
        %5717 = vmatprep.subr.mxu0 %v5690
        %5718 = vmatpush1.msra.mxu0 %v5689
        %5719 = vmatprep.subr.mxu0 %v5692
        %5720 = vmatpush1.msra.mxu0 %v5691
        %5721 = vmatprep.subr.mxu0 %v5694
        %5722 = vmatpush1.msra.mxu0 %v5693
        %5723 = vmatprep.subr.mxu0 %v5696
        %5724 = vmatpush1.msra.mxu0 %v5695
        %5725 = vmatprep.subr.mxu0 %v5698
        %5726 = vmatpush1.msra.mxu0 %v5697
        %5727 = vmatprep.subr.mxu0 %v5705
        %5728 = vmatpush1.msra.mxu0 %v5702
        %5729 = vmatprep.subr.mxu0 0.0
        %5730 = vmatpush1.msra.mxu0 0.0
        %5731 = vmatprep.subr.mxu0 0.0
        %5732 = vmatpush1.msra.mxu0 0.0
        %5733 = vmatprep.subr.mxu0 0.0
        %5734 = vmatpush1.msra.mxu0 0.0
        %5735 = vmatprep.subr.mxu0 0.0
        %5736 = vmatpush1.msra.mxu0 0.0
        %5737 = vmatprep.subr.mxu0 0.0
        %5738 = vmatpush1.msra.mxu0 0.0
        %5739 = vmatprep.subr.mxu0 0.0
        %5740 = vmatpush1.msra.mxu0 0.0
        %5741 = vmatprep.subr.mxu0 0.0
        %5742 = vmatpush1.msra.mxu0 0.0
        %5743 = vmatprep.subr.mxu0 0.0
        %5744 = vmatpush1.msra.mxu0 0.0
        %5745 = vmatprep.subr.mxu0 0.0
        %5746 = vmatpush1.msra.mxu0 0.0
        %5747 = vmatprep.subr.mxu0 0.0
        %5748 = vmatpush1.msra.mxu0 0.0
        %5749 = vmatprep.subr.mxu0 0.0
        %5750 = vmatpush1.msra.mxu0 0.0
        %5751 = vmatprep.subr.mxu0 0.0
        %5752 = vmatpush1.msra.mxu0 0.0
        %5753 = vmatprep.subr.mxu0 0.0
        %5754 = vmatpush1.msra.mxu0 0.0
        %5755 = vmatprep.subr.mxu0 0.0
        %5756 = vmatpush1.msra.mxu0 0.0
        %5757 = vmatprep.subr.mxu0 0.0
        %5758 = vmatpush1.msra.mxu0 0.0
        %5759 = vmatprep.subr.mxu0 0.0
        %5760 = vmatpush1.msra.mxu0 0.0
        %5761 = vmatprep.subr.mxu0 0.0
        %5762 = vmatpush1.msra.mxu0 0.0
        %5763 = vmatprep.subr.mxu0 0.0
        %5764 = vmatpush1.msra.mxu0 0.0
        %5765 = vmatprep.subr.mxu0 0.0
        %5766 = vmatpush1.msra.mxu0 0.0
        %5767 = vmatprep.subr.mxu0 0.0
        %5768 = vmatpush1.msra.mxu0 0.0
        %5769 = vmatprep.subr.mxu0 0.0
        %5770 = vmatpush1.msra.mxu0 0.0
        %5771 = vmatprep.mubr.f32.mxu0 0.0
        %5772 = vmatmul.mubr.f32.gmra.mrb[0].mxu0 %v5587
        %v5773 = vpop.f32.mrb[0].mxu0
        %v5774 = vadd.f32 0.0, %v5773
        %v5775 = vpop.f32.mrb[0].mxu0
        %v5776 = vadd.f32 0.0, %v5775
        %5777 = vmatprep.mubr.f32.mxu0 0.0
        %5778 = vmatmul.mubr.f32.gmra.mrb[0].mxu0 %v5589
        %v5779 = vpop.f32.mrb[0].mxu0
        %v5780 = vadd.f32 0.0, %v5779
        %v5781 = vpop.f32.mrb[0].mxu0
        %v5782 = vadd.f32 0.0, %v5781
        %5783 = vdwg.mxu0
        %v5784 = vadd.f32 %v5674, %v5774
        %v5785 = vadd.f32 %v5675, %v5776
        %v5786 = vadd.f32 %v5676, %v5780
        %v5787 = vadd.f32 %v5677, %v5782
        %s5788 = scalar_lea.vmem %s6, 2992
        %v5789 = vld [vmem:[%s5788] sm:$0xff]
        %v5790 = vld [vmem:[%s5788 + $0x8] sm:$0xff]
        %v5791 = vld [vmem:[%s5788 + $0x10] sm:$0xff]
        %v5792 = vld [vmem:[%s5788 + $0x18] sm:$0xff]
        %v5793 = vld [vmem:[%s5788 + $0x20] sm:$0xff]
        %v5794 = vld [vmem:[%s5788 + $0x28] sm:$0xff]
        %v5795 = vld [vmem:[%s5788 + $0x30] sm:$0xff]
        %v5796 = vld [vmem:[%s5788 + $0x38] sm:$0xff]
        %v5797 = vld [vmem:[%s5788 + $0x40] sm:$0xff]
        %v5798 = vld [vmem:[%s5788 + $0x48] sm:$0xff]
        %v5799 = vld [vmem:[%s5788 + $0x50] sm:$0xff]
        %v5800 = vld [vmem:[%s5788 + $0x58] sm:$0xff]
        %v5801 = vld [vmem:[%s5788 + $0x60] sm:$0xff]
        %v5802 = vld [vmem:[%s5788 + $0x68] sm:$0xff]
        %v5803 = vld [vmem:[%s5788 + $0x70] sm:$0xff]
        %v5804 = vld [vmem:[%s5788 + $0x78] sm:$0xff]
        %v5805 = vld [vmem:[%s5788 + $0x80] sm:$0xff]
        %v5806 = vld [vmem:[%s5788 + $0x88] sm:$0xff]
        %v5807 = vld [vmem:[%s5788 + $0x90] sm:$0xff]
        %v5808 = vld [vmem:[%s5788 + $0x98] sm:$0xff]
        %v5809 = vld [vmem:[%s5788 + $0xa0] sm:$0xf]
        %v5810 = vld [vmem:[%s5788 + $0xa8] sm:$0xf]
        %v5812 = vsel %vm540, %v5809, 0
        %v5815 = vsel %vm540, %v5810, 0
        %5817 = vmatprep.subr.mxu0 %v5790
        %5818 = vmatpush1.msra.mxu0 %v5789
        %5819 = vmatprep.subr.mxu0 %v5792
        %5820 = vmatpush1.msra.mxu0 %v5791
        %5821 = vmatprep.subr.mxu0 %v5794
        %5822 = vmatpush1.msra.mxu0 %v5793
        %5823 = vmatprep.subr.mxu0 %v5796
        %5824 = vmatpush1.msra.mxu0 %v5795
        %5825 = vmatprep.subr.mxu0 %v5798
        %5826 = vmatpush1.msra.mxu0 %v5797
        %5827 = vmatprep.subr.mxu0 %v5800
        %5828 = vmatpush1.msra.mxu0 %v5799
        %5829 = vmatprep.subr.mxu0 %v5802
        %5830 = vmatpush1.msra.mxu0 %v5801
        %5831 = vmatprep.subr.mxu0 %v5804
        %5832 = vmatpush1.msra.mxu0 %v5803
        %5833 = vmatprep.subr.mxu0 %v5806
        %5834 = vmatpush1.msra.mxu0 %v5805
        %5835 = vmatprep.subr.mxu0 %v5808
        %5836 = vmatpush1.msra.mxu0 %v5807
        %5837 = vmatprep.subr.mxu0 %v5815
        %5838 = vmatpush1.msra.mxu0 %v5812
        %5839 = vmatprep.subr.mxu0 0.0
        %5840 = vmatpush1.msra.mxu0 0.0
        %5841 = vmatprep.subr.mxu0 0.0
        %5842 = vmatpush1.msra.mxu0 0.0
        %5843 = vmatprep.subr.mxu0 0.0
        %5844 = vmatpush1.msra.mxu0 0.0
        %5845 = vmatprep.subr.mxu0 0.0
        %5846 = vmatpush1.msra.mxu0 0.0
        %5847 = vmatprep.subr.mxu0 0.0
        %5848 = vmatpush1.msra.mxu0 0.0
        %5849 = vmatprep.subr.mxu0 0.0
        %5850 = vmatpush1.msra.mxu0 0.0
        %5851 = vmatprep.subr.mxu0 0.0
        %5852 = vmatpush1.msra.mxu0 0.0
        %5853 = vmatprep.subr.mxu0 0.0
        %5854 = vmatpush1.msra.mxu0 0.0
        %5855 = vmatprep.subr.mxu0 0.0
        %5856 = vmatpush1.msra.mxu0 0.0
        %5857 = vmatprep.subr.mxu0 0.0
        %5858 = vmatpush1.msra.mxu0 0.0
        %5859 = vmatprep.subr.mxu0 0.0
        %5860 = vmatpush1.msra.mxu0 0.0
        %5861 = vmatprep.subr.mxu0 0.0
        %5862 = vmatpush1.msra.mxu0 0.0
        %5863 = vmatprep.subr.mxu0 0.0
        %5864 = vmatpush1.msra.mxu0 0.0
        %5865 = vmatprep.subr.mxu0 0.0
        %5866 = vmatpush1.msra.mxu0 0.0
        %5867 = vmatprep.subr.mxu0 0.0
        %5868 = vmatpush1.msra.mxu0 0.0
        %5869 = vmatprep.subr.mxu0 0.0
        %5870 = vmatpush1.msra.mxu0 0.0
        %5871 = vmatprep.subr.mxu0 0.0
        %5872 = vmatpush1.msra.mxu0 0.0
        %5873 = vmatprep.subr.mxu0 0.0
        %5874 = vmatpush1.msra.mxu0 0.0
        %5875 = vmatprep.subr.mxu0 0.0
        %5876 = vmatpush1.msra.mxu0 0.0
        %5877 = vmatprep.subr.mxu0 0.0
        %5878 = vmatpush1.msra.mxu0 0.0
        %5879 = vmatprep.subr.mxu0 0.0
        %5880 = vmatpush1.msra.mxu0 0.0
        %5881 = vmatprep.mubr.f32.mxu0 0.0
        %5882 = vmatmul.mubr.f32.gmra.mrb[0].mxu0 %v5587
        %v5883 = vpop.f32.mrb[0].mxu0
        %v5884 = vadd.f32 0.0, %v5883
        %v5885 = vpop.f32.mrb[0].mxu0
        %v5886 = vadd.f32 0.0, %v5885
        %5887 = vmatprep.mubr.f32.mxu0 0.0
        %5888 = vmatmul.mubr.f32.gmra.mrb[0].mxu0 %v5589
        %v5889 = vpop.f32.mrb[0].mxu0
        %v5890 = vadd.f32 0.0, %v5889
        %v5891 = vpop.f32.mrb[0].mxu0
        %v5892 = vadd.f32 0.0, %v5891
        %5893 = vdwg.mxu0
        %v5894 = vadd.f32 %v5784, %v5884
        %v5895 = vadd.f32 %v5785, %v5886
        %v5896 = vadd.f32 %v5786, %v5890
        %v5897 = vadd.f32 %v5787, %v5892
        %s5898 = scalar_lea.vmem %s6, 3168
        %v5899 = vld [vmem:[%s5898] sm:$0xff]
        %v5900 = vld [vmem:[%s5898 + $0x8] sm:$0xff]
        %v5901 = vld [vmem:[%s5898 + $0x10] sm:$0xff]
        %v5902 = vld [vmem:[%s5898 + $0x18] sm:$0xff]
        %v5903 = vld [vmem:[%s5898 + $0x20] sm:$0xff]
        %v5904 = vld [vmem:[%s5898 + $0x28] sm:$0xff]
        %v5905 = vld [vmem:[%s5898 + $0x30] sm:$0xff]
        %v5906 = vld [vmem:[%s5898 + $0x38] sm:$0xff]
        %v5907 = vld [vmem:[%s5898 + $0x40] sm:$0xff]
        %v5908 = vld [vmem:[%s5898 + $0x48] sm:$0xff]
        %v5909 = vld [vmem:[%s5898 + $0x50] sm:$0xff]
        %v5910 = vld [vmem:[%s5898 + $0x58] sm:$0xff]
        %v5911 = vld [vmem:[%s5898 + $0x60] sm:$0xff]
        %v5912 = vld [vmem:[%s5898 + $0x68] sm:$0xff]
        %v5913 = vld [vmem:[%s5898 + $0x70] sm:$0xff]
        %v5914 = vld [vmem:[%s5898 + $0x78] sm:$0xff]
        %v5915 = vld [vmem:[%s5898 + $0x80] sm:$0xff]
        %v5916 = vld [vmem:[%s5898 + $0x88] sm:$0xff]
        %v5917 = vld [vmem:[%s5898 + $0x90] sm:$0xff]
        %v5918 = vld [vmem:[%s5898 + $0x98] sm:$0xff]
        %v5919 = vld [vmem:[%s5898 + $0xa0] sm:$0xf]
        %v5920 = vld [vmem:[%s5898 + $0xa8] sm:$0xf]
        %v5922 = vsel %vm540, %v5919, 0
        %v5925 = vsel %vm540, %v5920, 0
        %5927 = vmatprep.subr.mxu0 %v5900
        %5928 = vmatpush1.msra.mxu0 %v5899
        %5929 = vmatprep.subr.mxu0 %v5902
        %5930 = vmatpush1.msra.mxu0 %v5901
        %5931 = vmatprep.subr.mxu0 %v5904
        %5932 = vmatpush1.msra.mxu0 %v5903
        %5933 = vmatprep.subr.mxu0 %v5906
        %5934 = vmatpush1.msra.mxu0 %v5905
        %5935 = vmatprep.subr.mxu0 %v5908
        %5936 = vmatpush1.msra.mxu0 %v5907
        %5937 = vmatprep.subr.mxu0 %v5910
        %5938 = vmatpush1.msra.mxu0 %v5909
        %5939 = vmatprep.subr.mxu0 %v5912
        %5940 = vmatpush1.msra.mxu0 %v5911
        %5941 = vmatprep.subr.mxu0 %v5914
        %5942 = vmatpush1.msra.mxu0 %v5913
        %5943 = vmatprep.subr.mxu0 %v5916
        %5944 = vmatpush1.msra.mxu0 %v5915
        %5945 = vmatprep.subr.mxu0 %v5918
        %5946 = vmatpush1.msra.mxu0 %v5917
        %5947 = vmatprep.subr.mxu0 %v5925
        %5948 = vmatpush1.msra.mxu0 %v5922
        %5949 = vmatprep.subr.mxu0 0.0
        %5950 = vmatpush1.msra.mxu0 0.0
        %5951 = vmatprep.subr.mxu0 0.0
        %5952 = vmatpush1.msra.mxu0 0.0
        %5953 = vmatprep.subr.mxu0 0.0
        %5954 = vmatpush1.msra.mxu0 0.0
        %5955 = vmatprep.subr.mxu0 0.0
        %5956 = vmatpush1.msra.mxu0 0.0
        %5957 = vmatprep.subr.mxu0 0.0
        %5958 = vmatpush1.msra.mxu0 0.0
        %5959 = vmatprep.subr.mxu0 0.0
        %5960 = vmatpush1.msra.mxu0 0.0
        %5961 = vmatprep.subr.mxu0 0.0
        %5962 = vmatpush1.msra.mxu0 0.0
        %5963 = vmatprep.subr.mxu0 0.0
        %5964 = vmatpush1.msra.mxu0 0.0
        %5965 = vmatprep.subr.mxu0 0.0
        %5966 = vmatpush1.msra.mxu0 0.0
        %5967 = vmatprep.subr.mxu0 0.0
        %5968 = vmatpush1.msra.mxu0 0.0
        %5969 = vmatprep.subr.mxu0 0.0
        %5970 = vmatpush1.msra.mxu0 0.0
        %5971 = vmatprep.subr.mxu0 0.0
        %5972 = vmatpush1.msra.mxu0 0.0
        %5973 = vmatprep.subr.mxu0 0.0
        %5974 = vmatpush1.msra.mxu0 0.0
        %5975 = vmatprep.subr.mxu0 0.0
        %5976 = vmatpush1.msra.mxu0 0.0
        %5977 = vmatprep.subr.mxu0 0.0
        %5978 = vmatpush1.msra.mxu0 0.0
        %5979 = vmatprep.subr.mxu0 0.0
        %5980 = vmatpush1.msra.mxu0 0.0
        %5981 = vmatprep.subr.mxu0 0.0
        %5982 = vmatpush1.msra.mxu0 0.0
        %5983 = vmatprep.subr.mxu0 0.0
        %5984 = vmatpush1.msra.mxu0 0.0
        %5985 = vmatprep.subr.mxu0 0.0
        %5986 = vmatpush1.msra.mxu0 0.0
        %5987 = vmatprep.subr.mxu0 0.0
        %5988 = vmatpush1.msra.mxu0 0.0
        %5989 = vmatprep.subr.mxu0 0.0
        %5990 = vmatpush1.msra.mxu0 0.0
        %5991 = vmatprep.mubr.f32.mxu0 0.0
        %5992 = vmatmul.mubr.f32.gmra.mrb[0].mxu0 %v5587
        %v5993 = vpop.f32.mrb[0].mxu0
        %v5994 = vadd.f32 0.0, %v5993
        %v5995 = vpop.f32.mrb[0].mxu0
        %v5996 = vadd.f32 0.0, %v5995
        %5997 = vmatprep.mubr.f32.mxu0 0.0
        %5998 = vmatmul.mubr.f32.gmra.mrb[0].mxu0 %v5589
        %v5999 = vpop.f32.mrb[0].mxu0
        %v6000 = vadd.f32 0.0, %v5999
        %v6001 = vpop.f32.mrb[0].mxu0
        %v6002 = vadd.f32 0.0, %v6001
        %6003 = vdwg.mxu0
        %v6004 = vadd.f32 %v5894, %v5994
        %v6005 = vadd.f32 %v5895, %v5996
        %v6006 = vadd.f32 %v5896, %v6000
        %v6007 = vadd.f32 %v5897, %v6002
        %s6008 = scalar_lea.vmem %s6, 3344
        %v6009 = vld [vmem:[%s6008] sm:$0xff]
        %v6010 = vld [vmem:[%s6008 + $0x8] sm:$0xff]
        %v6011 = vld [vmem:[%s6008 + $0x10] sm:$0xff]
        %v6012 = vld [vmem:[%s6008 + $0x18] sm:$0xff]
        %v6013 = vld [vmem:[%s6008 + $0x20] sm:$0xff]
        %v6014 = vld [vmem:[%s6008 + $0x28] sm:$0xff]
        %v6015 = vld [vmem:[%s6008 + $0x30] sm:$0xff]
        %v6016 = vld [vmem:[%s6008 + $0x38] sm:$0xff]
        %v6017 = vld [vmem:[%s6008 + $0x40] sm:$0xff]
        %v6018 = vld [vmem:[%s6008 + $0x48] sm:$0xff]
        %v6019 = vld [vmem:[%s6008 + $0x50] sm:$0xff]
        %v6020 = vld [vmem:[%s6008 + $0x58] sm:$0xff]
        %v6021 = vld [vmem:[%s6008 + $0x60] sm:$0xff]
        %v6022 = vld [vmem:[%s6008 + $0x68] sm:$0xff]
        %v6023 = vld [vmem:[%s6008 + $0x70] sm:$0xff]
        %v6024 = vld [vmem:[%s6008 + $0x78] sm:$0xff]
        %v6025 = vld [vmem:[%s6008 + $0x80] sm:$0xff]
        %v6026 = vld [vmem:[%s6008 + $0x88] sm:$0xff]
        %v6027 = vld [vmem:[%s6008 + $0x90] sm:$0xff]
        %v6028 = vld [vmem:[%s6008 + $0x98] sm:$0xff]
        %v6029 = vld [vmem:[%s6008 + $0xa0] sm:$0xf]
        %v6030 = vld [vmem:[%s6008 + $0xa8] sm:$0xf]
        %v6032 = vsel %vm540, %v6029, 0
        %v6035 = vsel %vm540, %v6030, 0
        %6037 = vmatprep.subr.mxu0 %v6010
        %6038 = vmatpush1.msra.mxu0 %v6009
        %6039 = vmatprep.subr.mxu0 %v6012
        %6040 = vmatpush1.msra.mxu0 %v6011
        %6041 = vmatprep.subr.mxu0 %v6014
        %6042 = vmatpush1.msra.mxu0 %v6013
        %6043 = vmatprep.subr.mxu0 %v6016
        %6044 = vmatpush1.msra.mxu0 %v6015
        %6045 = vmatprep.subr.mxu0 %v6018
        %6046 = vmatpush1.msra.mxu0 %v6017
        %6047 = vmatprep.subr.mxu0 %v6020
        %6048 = vmatpush1.msra.mxu0 %v6019
        %6049 = vmatprep.subr.mxu0 %v6022
        %6050 = vmatpush1.msra.mxu0 %v6021
        %6051 = vmatprep.subr.mxu0 %v6024
        %6052 = vmatpush1.msra.mxu0 %v6023
        %6053 = vmatprep.subr.mxu0 %v6026
        %6054 = vmatpush1.msra.mxu0 %v6025
        %6055 = vmatprep.subr.mxu0 %v6028
        %6056 = vmatpush1.msra.mxu0 %v6027
        %6057 = vmatprep.subr.mxu0 %v6035
        %6058 = vmatpush1.msra.mxu0 %v6032
        %6059 = vmatprep.subr.mxu0 0.0
        %6060 = vmatpush1.msra.mxu0 0.0
        %6061 = vmatprep.subr.mxu0 0.0
        %6062 = vmatpush1.msra.mxu0 0.0
        %6063 = vmatprep.subr.mxu0 0.0
        %6064 = vmatpush1.msra.mxu0 0.0
        %6065 = vmatprep.subr.mxu0 0.0
        %6066 = vmatpush1.msra.mxu0 0.0
        %6067 = vmatprep.subr.mxu0 0.0
        %6068 = vmatpush1.msra.mxu0 0.0
        %6069 = vmatprep.subr.mxu0 0.0
        %6070 = vmatpush1.msra.mxu0 0.0
        %6071 = vmatprep.subr.mxu0 0.0
        %6072 = vmatpush1.msra.mxu0 0.0
        %6073 = vmatprep.subr.mxu0 0.0
        %6074 = vmatpush1.msra.mxu0 0.0
        %6075 = vmatprep.subr.mxu0 0.0
        %6076 = vmatpush1.msra.mxu0 0.0
        %6077 = vmatprep.subr.mxu0 0.0
        %6078 = vmatpush1.msra.mxu0 0.0
        %6079 = vmatprep.subr.mxu0 0.0
        %6080 = vmatpush1.msra.mxu0 0.0
        %6081 = vmatprep.subr.mxu0 0.0
        %6082 = vmatpush1.msra.mxu0 0.0
        %6083 = vmatprep.subr.mxu0 0.0
        %6084 = vmatpush1.msra.mxu0 0.0
        %6085 = vmatprep.subr.mxu0 0.0
        %6086 = vmatpush1.msra.mxu0 0.0
        %6087 = vmatprep.subr.mxu0 0.0
        %6088 = vmatpush1.msra.mxu0 0.0
        %6089 = vmatprep.subr.mxu0 0.0
        %6090 = vmatpush1.msra.mxu0 0.0
        %6091 = vmatprep.subr.mxu0 0.0
        %6092 = vmatpush1.msra.mxu0 0.0
        %6093 = vmatprep.subr.mxu0 0.0
        %6094 = vmatpush1.msra.mxu0 0.0
        %6095 = vmatprep.subr.mxu0 0.0
        %6096 = vmatpush1.msra.mxu0 0.0
        %6097 = vmatprep.subr.mxu0 0.0
        %6098 = vmatpush1.msra.mxu0 0.0
        %6099 = vmatprep.subr.mxu0 0.0
        %6100 = vmatpush1.msra.mxu0 0.0
        %6101 = vmatprep.mubr.f32.mxu0 0.0
        %6102 = vmatmul.mubr.f32.gmra.mrb[0].mxu0 %v5587
        %v6103 = vpop.f32.mrb[0].mxu0
        %v6104 = vadd.f32 0.0, %v6103
        %v6105 = vpop.f32.mrb[0].mxu0
        %v6106 = vadd.f32 0.0, %v6105
        %6107 = vmatprep.mubr.f32.mxu0 0.0
        %6108 = vmatmul.mubr.f32.gmra.mrb[0].mxu0 %v5589
        %v6109 = vpop.f32.mrb[0].mxu0
        %v6110 = vadd.f32 0.0, %v6109
        %v6111 = vpop.f32.mrb[0].mxu0
        %v6112 = vadd.f32 0.0, %v6111
        %6113 = vdwg.mxu0
        %v6114 = vadd.f32 %v6004, %v6104
        %v6115 = vadd.f32 %v6005, %v6106
        %v6116 = vadd.f32 %v6006, %v6110
        %v6117 = vadd.f32 %v6007, %v6112
        %s6118 = scalar_lea.vmem %s6, 3520
        %v6119 = vld [vmem:[%s6118] sm:$0xff]
        %v6120 = vld [vmem:[%s6118 + $0x8] sm:$0xff]
        %v6121 = vld [vmem:[%s6118 + $0x10] sm:$0xff]
        %v6122 = vld [vmem:[%s6118 + $0x18] sm:$0xff]
        %v6123 = vld [vmem:[%s6118 + $0x20] sm:$0xff]
        %v6124 = vld [vmem:[%s6118 + $0x28] sm:$0xff]
        %v6125 = vld [vmem:[%s6118 + $0x30] sm:$0xff]
        %v6126 = vld [vmem:[%s6118 + $0x38] sm:$0xff]
        %v6127 = vld [vmem:[%s6118 + $0x40] sm:$0xff]
        %v6128 = vld [vmem:[%s6118 + $0x48] sm:$0xff]
        %v6129 = vld [vmem:[%s6118 + $0x50] sm:$0xff]
        %v6130 = vld [vmem:[%s6118 + $0x58] sm:$0xff]
        %v6131 = vld [vmem:[%s6118 + $0x60] sm:$0xff]
        %v6132 = vld [vmem:[%s6118 + $0x68] sm:$0xff]
        %v6133 = vld [vmem:[%s6118 + $0x70] sm:$0xff]
        %v6134 = vld [vmem:[%s6118 + $0x78] sm:$0xff]
        %v6135 = vld [vmem:[%s6118 + $0x80] sm:$0xff]
        %v6136 = vld [vmem:[%s6118 + $0x88] sm:$0xff]
        %v6137 = vld [vmem:[%s6118 + $0x90] sm:$0xff]
        %v6138 = vld [vmem:[%s6118 + $0x98] sm:$0xff]
        %v6139 = vld [vmem:[%s6118 + $0xa0] sm:$0xf]
        %v6140 = vld [vmem:[%s6118 + $0xa8] sm:$0xf]
        %v6141 = vrot.slane %v3896, 4
        %v6142 = vrot.slane %v3897, 4
        %v6143 = vsel %vm540, %v6141, %v6142
        %v6144 = vsel %vm3944, %v6143, 0
        %v6146 = vsel %vm3944, %v6142, 0
        %v6149 = vsel %vm540, %v6139, 0
        %v6152 = vsel %vm540, %v6140, 0
        %6154 = vmatprep.subr.mxu0 %v6120
        %6155 = vmatpush1.msra.mxu0 %v6119
        %6156 = vmatprep.subr.mxu0 %v6122
        %6157 = vmatpush1.msra.mxu0 %v6121
        %6158 = vmatprep.subr.mxu0 %v6124
        %6159 = vmatpush1.msra.mxu0 %v6123
        %6160 = vmatprep.subr.mxu0 %v6126
        %6161 = vmatpush1.msra.mxu0 %v6125
        %6162 = vmatprep.subr.mxu0 %v6128
        %6163 = vmatpush1.msra.mxu0 %v6127
        %6164 = vmatprep.subr.mxu0 %v6130
        %6165 = vmatpush1.msra.mxu0 %v6129
        %6166 = vmatprep.subr.mxu0 %v6132
        %6167 = vmatpush1.msra.mxu0 %v6131
        %6168 = vmatprep.subr.mxu0 %v6134
        %6169 = vmatpush1.msra.mxu0 %v6133
        %6170 = vmatprep.subr.mxu0 %v6136
        %6171 = vmatpush1.msra.mxu0 %v6135
        %6172 = vmatprep.subr.mxu0 %v6138
        %6173 = vmatpush1.msra.mxu0 %v6137
        %6174 = vmatprep.subr.mxu0 %v6152
        %6175 = vmatpush1.msra.mxu0 %v6149
        %6176 = vmatprep.subr.mxu0 0.0
        %6177 = vmatpush1.msra.mxu0 0.0
        %6178 = vmatprep.subr.mxu0 0.0
        %6179 = vmatpush1.msra.mxu0 0.0
        %6180 = vmatprep.subr.mxu0 0.0
        %6181 = vmatpush1.msra.mxu0 0.0
        %6182 = vmatprep.subr.mxu0 0.0
        %6183 = vmatpush1.msra.mxu0 0.0
        %6184 = vmatprep.subr.mxu0 0.0
        %6185 = vmatpush1.msra.mxu0 0.0
        %6186 = vmatprep.subr.mxu0 0.0
        %6187 = vmatpush1.msra.mxu0 0.0
        %6188 = vmatprep.subr.mxu0 0.0
        %6189 = vmatpush1.msra.mxu0 0.0
        %6190 = vmatprep.subr.mxu0 0.0
        %6191 = vmatpush1.msra.mxu0 0.0
        %6192 = vmatprep.subr.mxu0 0.0
        %6193 = vmatpush1.msra.mxu0 0.0
        %6194 = vmatprep.subr.mxu0 0.0
        %6195 = vmatpush1.msra.mxu0 0.0
        %6196 = vmatprep.subr.mxu0 0.0
        %6197 = vmatpush1.msra.mxu0 0.0
        %6198 = vmatprep.subr.mxu0 0.0
        %6199 = vmatpush1.msra.mxu0 0.0
        %6200 = vmatprep.subr.mxu0 0.0
        %6201 = vmatpush1.msra.mxu0 0.0
        %6202 = vmatprep.subr.mxu0 0.0
        %6203 = vmatpush1.msra.mxu0 0.0
        %6204 = vmatprep.subr.mxu0 0.0
        %6205 = vmatpush1.msra.mxu0 0.0
        %6206 = vmatprep.subr.mxu0 0.0
        %6207 = vmatpush1.msra.mxu0 0.0
        %6208 = vmatprep.subr.mxu0 0.0
        %6209 = vmatpush1.msra.mxu0 0.0
        %6210 = vmatprep.subr.mxu0 0.0
        %6211 = vmatpush1.msra.mxu0 0.0
        %6212 = vmatprep.subr.mxu0 0.0
        %6213 = vmatpush1.msra.mxu0 0.0
        %6214 = vmatprep.subr.mxu0 0.0
        %6215 = vmatpush1.msra.mxu0 0.0
        %6216 = vmatprep.subr.mxu0 0.0
        %6217 = vmatpush1.msra.mxu0 0.0
        %6218 = vmatprep.mubr.f32.mxu0 0.0
        %6219 = vmatmul.mubr.f32.gmra.mrb[0].mxu0 %v6144
        %v6220 = vpop.f32.mrb[0].mxu0
        %v6221 = vadd.f32 0.0, %v6220
        %v6222 = vpop.f32.mrb[0].mxu0
        %v6223 = vadd.f32 0.0, %v6222
        %6224 = vmatprep.mubr.f32.mxu0 0.0
        %6225 = vmatmul.mubr.f32.gmra.mrb[0].mxu0 %v6146
        %v6226 = vpop.f32.mrb[0].mxu0
        %v6227 = vadd.f32 0.0, %v6226
        %v6228 = vpop.f32.mrb[0].mxu0
        %v6229 = vadd.f32 0.0, %v6228
        %6230 = vdwg.mxu0
        %v6231 = vadd.f32 %v6114, %v6221
        %v6232 = vadd.f32 %v6115, %v6223
        %v6233 = vadd.f32 %v6116, %v6227
        %v6234 = vadd.f32 %v6117, %v6229
        %s6235 = scalar_lea.vmem %s6, 3696
        %v6236 = vld [vmem:[%s6235] sm:$0xff]
        %v6237 = vld [vmem:[%s6235 + $0x8] sm:$0xff]
        %v6238 = vld [vmem:[%s6235 + $0x10] sm:$0xff]
        %v6239 = vld [vmem:[%s6235 + $0x18] sm:$0xff]
        %v6240 = vld [vmem:[%s6235 + $0x20] sm:$0xff]
        %v6241 = vld [vmem:[%s6235 + $0x28] sm:$0xff]
        %v6242 = vld [vmem:[%s6235 + $0x30] sm:$0xff]
        %v6243 = vld [vmem:[%s6235 + $0x38] sm:$0xff]
        %v6244 = vld [vmem:[%s6235 + $0x40] sm:$0xff]
        %v6245 = vld [vmem:[%s6235 + $0x48] sm:$0xff]
        %v6246 = vld [vmem:[%s6235 + $0x50] sm:$0xff]
        %v6247 = vld [vmem:[%s6235 + $0x58] sm:$0xff]
        %v6248 = vld [vmem:[%s6235 + $0x60] sm:$0xff]
        %v6249 = vld [vmem:[%s6235 + $0x68] sm:$0xff]
        %v6250 = vld [vmem:[%s6235 + $0x70] sm:$0xff]
        %v6251 = vld [vmem:[%s6235 + $0x78] sm:$0xff]
        %v6252 = vld [vmem:[%s6235 + $0x80] sm:$0xff]
        %v6253 = vld [vmem:[%s6235 + $0x88] sm:$0xff]
        %v6254 = vld [vmem:[%s6235 + $0x90] sm:$0xff]
        %v6255 = vld [vmem:[%s6235 + $0x98] sm:$0xff]
        %v6256 = vld [vmem:[%s6235 + $0xa0] sm:$0xf]
        %v6257 = vld [vmem:[%s6235 + $0xa8] sm:$0xf]
        %v6259 = vsel %vm540, %v6256, 0
        %v6262 = vsel %vm540, %v6257, 0
        %6264 = vmatprep.subr.mxu0 %v6237
        %6265 = vmatpush1.msra.mxu0 %v6236
        %6266 = vmatprep.subr.mxu0 %v6239
        %6267 = vmatpush1.msra.mxu0 %v6238
        %6268 = vmatprep.subr.mxu0 %v6241
        %6269 = vmatpush1.msra.mxu0 %v6240
        %6270 = vmatprep.subr.mxu0 %v6243
        %6271 = vmatpush1.msra.mxu0 %v6242
        %6272 = vmatprep.subr.mxu0 %v6245
        %6273 = vmatpush1.msra.mxu0 %v6244
        %6274 = vmatprep.subr.mxu0 %v6247
        %6275 = vmatpush1.msra.mxu0 %v6246
        %6276 = vmatprep.subr.mxu0 %v6249
        %6277 = vmatpush1.msra.mxu0 %v6248
        %6278 = vmatprep.subr.mxu0 %v6251
        %6279 = vmatpush1.msra.mxu0 %v6250
        %6280 = vmatprep.subr.mxu0 %v6253
        %6281 = vmatpush1.msra.mxu0 %v6252
        %6282 = vmatprep.subr.mxu0 %v6255
        %6283 = vmatpush1.msra.mxu0 %v6254
        %6284 = vmatprep.subr.mxu0 %v6262
        %6285 = vmatpush1.msra.mxu0 %v6259
        %6286 = vmatprep.subr.mxu0 0.0
        %6287 = vmatpush1.msra.mxu0 0.0
        %6288 = vmatprep.subr.mxu0 0.0
        %6289 = vmatpush1.msra.mxu0 0.0
        %6290 = vmatprep.subr.mxu0 0.0
        %6291 = vmatpush1.msra.mxu0 0.0
        %6292 = vmatprep.subr.mxu0 0.0
        %6293 = vmatpush1.msra.mxu0 0.0
        %6294 = vmatprep.subr.mxu0 0.0
        %6295 = vmatpush1.msra.mxu0 0.0
        %6296 = vmatprep.subr.mxu0 0.0
        %6297 = vmatpush1.msra.mxu0 0.0
        %6298 = vmatprep.subr.mxu0 0.0
        %6299 = vmatpush1.msra.mxu0 0.0
        %6300 = vmatprep.subr.mxu0 0.0
        %6301 = vmatpush1.msra.mxu0 0.0
        %6302 = vmatprep.subr.mxu0 0.0
        %6303 = vmatpush1.msra.mxu0 0.0
        %6304 = vmatprep.subr.mxu0 0.0
        %6305 = vmatpush1.msra.mxu0 0.0
        %6306 = vmatprep.subr.mxu0 0.0
        %6307 = vmatpush1.msra.mxu0 0.0
        %6308 = vmatprep.subr.mxu0 0.0
        %6309 = vmatpush1.msra.mxu0 0.0
        %6310 = vmatprep.subr.mxu0 0.0
        %6311 = vmatpush1.msra.mxu0 0.0
        %6312 = vmatprep.subr.mxu0 0.0
        %6313 = vmatpush1.msra.mxu0 0.0
        %6314 = vmatprep.subr.mxu0 0.0
        %6315 = vmatpush1.msra.mxu0 0.0
        %6316 = vmatprep.subr.mxu0 0.0
        %6317 = vmatpush1.msra.mxu0 0.0
        %6318 = vmatprep.subr.mxu0 0.0
        %6319 = vmatpush1.msra.mxu0 0.0
        %6320 = vmatprep.subr.mxu0 0.0
        %6321 = vmatpush1.msra.mxu0 0.0
        %6322 = vmatprep.subr.mxu0 0.0
        %6323 = vmatpush1.msra.mxu0 0.0
        %6324 = vmatprep.subr.mxu0 0.0
        %6325 = vmatpush1.msra.mxu0 0.0
        %6326 = vmatprep.subr.mxu0 0.0
        %6327 = vmatpush1.msra.mxu0 0.0
        %6328 = vmatprep.mubr.f32.mxu0 0.0
        %6329 = vmatmul.mubr.f32.gmra.mrb[0].mxu0 %v6144
        %v6330 = vpop.f32.mrb[0].mxu0
        %v6331 = vadd.f32 0.0, %v6330
        %v6332 = vpop.f32.mrb[0].mxu0
        %v6333 = vadd.f32 0.0, %v6332
        %6334 = vmatprep.mubr.f32.mxu0 0.0
        %6335 = vmatmul.mubr.f32.gmra.mrb[0].mxu0 %v6146
        %v6336 = vpop.f32.mrb[0].mxu0
        %v6337 = vadd.f32 0.0, %v6336
        %v6338 = vpop.f32.mrb[0].mxu0
        %v6339 = vadd.f32 0.0, %v6338
        %6340 = vdwg.mxu0
        %v6341 = vadd.f32 %v6231, %v6331
        %v6342 = vadd.f32 %v6232, %v6333
        %v6343 = vadd.f32 %v6233, %v6337
        %v6344 = vadd.f32 %v6234, %v6339
        %s6345 = scalar_lea.vmem %s6, 3872
        %v6346 = vld [vmem:[%s6345] sm:$0xff]
        %v6347 = vld [vmem:[%s6345 + $0x8] sm:$0xff]
        %v6348 = vld [vmem:[%s6345 + $0x10] sm:$0xff]
        %v6349 = vld [vmem:[%s6345 + $0x18] sm:$0xff]
        %v6350 = vld [vmem:[%s6345 + $0x20] sm:$0xff]
        %v6351 = vld [vmem:[%s6345 + $0x28] sm:$0xff]
        %v6352 = vld [vmem:[%s6345 + $0x30] sm:$0xff]
        %v6353 = vld [vmem:[%s6345 + $0x38] sm:$0xff]
        %v6354 = vld [vmem:[%s6345 + $0x40] sm:$0xff]
        %v6355 = vld [vmem:[%s6345 + $0x48] sm:$0xff]
        %v6356 = vld [vmem:[%s6345 + $0x50] sm:$0xff]
        %v6357 = vld [vmem:[%s6345 + $0x58] sm:$0xff]
        %v6358 = vld [vmem:[%s6345 + $0x60] sm:$0xff]
        %v6359 = vld [vmem:[%s6345 + $0x68] sm:$0xff]
        %v6360 = vld [vmem:[%s6345 + $0x70] sm:$0xff]
        %v6361 = vld [vmem:[%s6345 + $0x78] sm:$0xff]
        %v6362 = vld [vmem:[%s6345 + $0x80] sm:$0xff]
        %v6363 = vld [vmem:[%s6345 + $0x88] sm:$0xff]
        %v6364 = vld [vmem:[%s6345 + $0x90] sm:$0xff]
        %v6365 = vld [vmem:[%s6345 + $0x98] sm:$0xff]
        %v6366 = vld [vmem:[%s6345 + $0xa0] sm:$0xf]
        %v6367 = vld [vmem:[%s6345 + $0xa8] sm:$0xf]
        %v6369 = vsel %vm540, %v6366, 0
        %v6372 = vsel %vm540, %v6367, 0
        %6374 = vmatprep.subr.mxu0 %v6347
        %6375 = vmatpush1.msra.mxu0 %v6346
        %6376 = vmatprep.subr.mxu0 %v6349
        %6377 = vmatpush1.msra.mxu0 %v6348
        %6378 = vmatprep.subr.mxu0 %v6351
        %6379 = vmatpush1.msra.mxu0 %v6350
        %6380 = vmatprep.subr.mxu0 %v6353
        %6381 = vmatpush1.msra.mxu0 %v6352
        %6382 = vmatprep.subr.mxu0 %v6355
        %6383 = vmatpush1.msra.mxu0 %v6354
        %6384 = vmatprep.subr.mxu0 %v6357
        %6385 = vmatpush1.msra.mxu0 %v6356
        %6386 = vmatprep.subr.mxu0 %v6359
        %6387 = vmatpush1.msra.mxu0 %v6358
        %6388 = vmatprep.subr.mxu0 %v6361
        %6389 = vmatpush1.msra.mxu0 %v6360
        %6390 = vmatprep.subr.mxu0 %v6363
        %6391 = vmatpush1.msra.mxu0 %v6362
        %6392 = vmatprep.subr.mxu0 %v6365
        %6393 = vmatpush1.msra.mxu0 %v6364
        %6394 = vmatprep.subr.mxu0 %v6372
        %6395 = vmatpush1.msra.mxu0 %v6369
        %6396 = vmatprep.subr.mxu0 0.0
        %6397 = vmatpush1.msra.mxu0 0.0
        %6398 = vmatprep.subr.mxu0 0.0
        %6399 = vmatpush1.msra.mxu0 0.0
        %6400 = vmatprep.subr.mxu0 0.0
        %6401 = vmatpush1.msra.mxu0 0.0
        %6402 = vmatprep.subr.mxu0 0.0
        %6403 = vmatpush1.msra.mxu0 0.0
        %6404 = vmatprep.subr.mxu0 0.0
        %6405 = vmatpush1.msra.mxu0 0.0
        %6406 = vmatprep.subr.mxu0 0.0
        %6407 = vmatpush1.msra.mxu0 0.0
        %6408 = vmatprep.subr.mxu0 0.0
        %6409 = vmatpush1.msra.mxu0 0.0
        %6410 = vmatprep.subr.mxu0 0.0
        %6411 = vmatpush1.msra.mxu0 0.0
        %6412 = vmatprep.subr.mxu0 0.0
        %6413 = vmatpush1.msra.mxu0 0.0
        %6414 = vmatprep.subr.mxu0 0.0
        %6415 = vmatpush1.msra.mxu0 0.0
        %6416 = vmatprep.subr.mxu0 0.0
        %6417 = vmatpush1.msra.mxu0 0.0
        %6418 = vmatprep.subr.mxu0 0.0
        %6419 = vmatpush1.msra.mxu0 0.0
        %6420 = vmatprep.subr.mxu0 0.0
        %6421 = vmatpush1.msra.mxu0 0.0
        %6422 = vmatprep.subr.mxu0 0.0
        %6423 = vmatpush1.msra.mxu0 0.0
        %6424 = vmatprep.subr.mxu0 0.0
        %6425 = vmatpush1.msra.mxu0 0.0
        %6426 = vmatprep.subr.mxu0 0.0
        %6427 = vmatpush1.msra.mxu0 0.0
        %6428 = vmatprep.subr.mxu0 0.0
        %6429 = vmatpush1.msra.mxu0 0.0
        %6430 = vmatprep.subr.mxu0 0.0
        %6431 = vmatpush1.msra.mxu0 0.0
        %6432 = vmatprep.subr.mxu0 0.0
        %6433 = vmatpush1.msra.mxu0 0.0
        %6434 = vmatprep.subr.mxu0 0.0
        %6435 = vmatpush1.msra.mxu0 0.0
        %6436 = vmatprep.subr.mxu0 0.0
        %6437 = vmatpush1.msra.mxu0 0.0
        %6438 = vmatprep.mubr.f32.mxu0 0.0
        %6439 = vmatmul.mubr.f32.gmra.mrb[0].mxu0 %v6144
        %v6440 = vpop.f32.mrb[0].mxu0
        %v6441 = vadd.f32 0.0, %v6440
        %v6442 = vpop.f32.mrb[0].mxu0
        %v6443 = vadd.f32 0.0, %v6442
        %6444 = vmatprep.mubr.f32.mxu0 0.0
        %6445 = vmatmul.mubr.f32.gmra.mrb[0].mxu0 %v6146
        %v6446 = vpop.f32.mrb[0].mxu0
        %v6447 = vadd.f32 0.0, %v6446
        %v6448 = vpop.f32.mrb[0].mxu0
        %v6449 = vadd.f32 0.0, %v6448
        %6450 = vdwg.mxu0
        %v6451 = vadd.f32 %v6341, %v6441
        %v6452 = vadd.f32 %v6342, %v6443
        %v6453 = vadd.f32 %v6343, %v6447
        %v6454 = vadd.f32 %v6344, %v6449
        %s6455 = scalar_lea.vmem %s6, 4048
        %v6456 = vld [vmem:[%s6455] sm:$0xff]
        %v6457 = vld [vmem:[%s6455 + $0x8] sm:$0xff]
        %v6458 = vld [vmem:[%s6455 + $0x10] sm:$0xff]
        %v6459 = vld [vmem:[%s6455 + $0x18] sm:$0xff]
        %v6460 = vld [vmem:[%s6455 + $0x20] sm:$0xff]
        %v6461 = vld [vmem:[%s6455 + $0x28] sm:$0xff]
        %v6462 = vld [vmem:[%s6455 + $0x30] sm:$0xff]
        %v6463 = vld [vmem:[%s6455 + $0x38] sm:$0xff]
        %v6464 = vld [vmem:[%s6455 + $0x40] sm:$0xff]
        %v6465 = vld [vmem:[%s6455 + $0x48] sm:$0xff]
        %v6466 = vld [vmem:[%s6455 + $0x50] sm:$0xff]
        %v6467 = vld [vmem:[%s6455 + $0x58] sm:$0xff]
        %v6468 = vld [vmem:[%s6455 + $0x60] sm:$0xff]
        %v6469 = vld [vmem:[%s6455 + $0x68] sm:$0xff]
        %v6470 = vld [vmem:[%s6455 + $0x70] sm:$0xff]
        %v6471 = vld [vmem:[%s6455 + $0x78] sm:$0xff]
        %v6472 = vld [vmem:[%s6455 + $0x80] sm:$0xff]
        %v6473 = vld [vmem:[%s6455 + $0x88] sm:$0xff]
        %v6474 = vld [vmem:[%s6455 + $0x90] sm:$0xff]
        %v6475 = vld [vmem:[%s6455 + $0x98] sm:$0xff]
        %v6476 = vld [vmem:[%s6455 + $0xa0] sm:$0xf]
        %v6477 = vld [vmem:[%s6455 + $0xa8] sm:$0xf]
        %v6479 = vsel %vm540, %v6476, 0
        %v6482 = vsel %vm540, %v6477, 0
        %6484 = vmatprep.subr.mxu0 %v6457
        %6485 = vmatpush1.msra.mxu0 %v6456
        %6486 = vmatprep.subr.mxu0 %v6459
        %6487 = vmatpush1.msra.mxu0 %v6458
        %6488 = vmatprep.subr.mxu0 %v6461
        %6489 = vmatpush1.msra.mxu0 %v6460
        %6490 = vmatprep.subr.mxu0 %v6463
        %6491 = vmatpush1.msra.mxu0 %v6462
        %6492 = vmatprep.subr.mxu0 %v6465
        %6493 = vmatpush1.msra.mxu0 %v6464
        %6494 = vmatprep.subr.mxu0 %v6467
        %6495 = vmatpush1.msra.mxu0 %v6466
        %6496 = vmatprep.subr.mxu0 %v6469
        %6497 = vmatpush1.msra.mxu0 %v6468
        %6498 = vmatprep.subr.mxu0 %v6471
        %6499 = vmatpush1.msra.mxu0 %v6470
        %6500 = vmatprep.subr.mxu0 %v6473
        %6501 = vmatpush1.msra.mxu0 %v6472
        %6502 = vmatprep.subr.mxu0 %v6475
        %6503 = vmatpush1.msra.mxu0 %v6474
        %6504 = vmatprep.subr.mxu0 %v6482
        %6505 = vmatpush1.msra.mxu0 %v6479
        %6506 = vmatprep.subr.mxu0 0.0
        %6507 = vmatpush1.msra.mxu0 0.0
        %6508 = vmatprep.subr.mxu0 0.0
        %6509 = vmatpush1.msra.mxu0 0.0
        %6510 = vmatprep.subr.mxu0 0.0
        %6511 = vmatpush1.msra.mxu0 0.0
        %6512 = vmatprep.subr.mxu0 0.0
        %6513 = vmatpush1.msra.mxu0 0.0
        %6514 = vmatprep.subr.mxu0 0.0
        %6515 = vmatpush1.msra.mxu0 0.0
        %6516 = vmatprep.subr.mxu0 0.0
        %6517 = vmatpush1.msra.mxu0 0.0
        %6518 = vmatprep.subr.mxu0 0.0
        %6519 = vmatpush1.msra.mxu0 0.0
        %6520 = vmatprep.subr.mxu0 0.0
        %6521 = vmatpush1.msra.mxu0 0.0
        %6522 = vmatprep.subr.mxu0 0.0
        %6523 = vmatpush1.msra.mxu0 0.0
        %6524 = vmatprep.subr.mxu0 0.0
        %6525 = vmatpush1.msra.mxu0 0.0
        %6526 = vmatprep.subr.mxu0 0.0
        %6527 = vmatpush1.msra.mxu0 0.0
        %6528 = vmatprep.subr.mxu0 0.0
        %6529 = vmatpush1.msra.mxu0 0.0
        %6530 = vmatprep.subr.mxu0 0.0
        %6531 = vmatpush1.msra.mxu0 0.0
        %6532 = vmatprep.subr.mxu0 0.0
        %6533 = vmatpush1.msra.mxu0 0.0
        %6534 = vmatprep.subr.mxu0 0.0
        %6535 = vmatpush1.msra.mxu0 0.0
        %6536 = vmatprep.subr.mxu0 0.0
        %6537 = vmatpush1.msra.mxu0 0.0
        %6538 = vmatprep.subr.mxu0 0.0
        %6539 = vmatpush1.msra.mxu0 0.0
        %6540 = vmatprep.subr.mxu0 0.0
        %6541 = vmatpush1.msra.mxu0 0.0
        %6542 = vmatprep.subr.mxu0 0.0
        %6543 = vmatpush1.msra.mxu0 0.0
        %6544 = vmatprep.subr.mxu0 0.0
        %6545 = vmatpush1.msra.mxu0 0.0
        %6546 = vmatprep.subr.mxu0 0.0
        %6547 = vmatpush1.msra.mxu0 0.0
        %6548 = vmatprep.mubr.f32.mxu0 0.0
        %6549 = vmatmul.mubr.f32.gmra.mrb[0].mxu0 %v6144
        %v6550 = vpop.f32.mrb[0].mxu0
        %v6551 = vadd.f32 0.0, %v6550
        %v6552 = vpop.f32.mrb[0].mxu0
        %v6553 = vadd.f32 0.0, %v6552
        %6554 = vmatprep.mubr.f32.mxu0 0.0
        %6555 = vmatmul.mubr.f32.gmra.mrb[0].mxu0 %v6146
        %v6556 = vpop.f32.mrb[0].mxu0
        %v6557 = vadd.f32 0.0, %v6556
        %v6558 = vpop.f32.mrb[0].mxu0
        %v6559 = vadd.f32 0.0, %v6558
        %6560 = vdwg.mxu0
        %v6561 = vadd.f32 %v6451, %v6551
        %v6562 = vadd.f32 %v6452, %v6553
        %v6563 = vadd.f32 %v6453, %v6557
        %v6564 = vadd.f32 %v6454, %v6559
        %s6565 = scalar_lea.vmem %s6, 4224
        %v6566 = vld [vmem:[%s6565] sm:$0xff]
        %v6567 = vld [vmem:[%s6565 + $0x8] sm:$0xff]
        %v6568 = vld [vmem:[%s6565 + $0x10] sm:$0xff]
        %v6569 = vld [vmem:[%s6565 + $0x18] sm:$0xff]
        %v6570 = vld [vmem:[%s6565 + $0x20] sm:$0xff]
        %v6571 = vld [vmem:[%s6565 + $0x28] sm:$0xff]
        %v6572 = vld [vmem:[%s6565 + $0x30] sm:$0xff]
        %v6573 = vld [vmem:[%s6565 + $0x38] sm:$0xff]
        %v6574 = vld [vmem:[%s6565 + $0x40] sm:$0xff]
        %v6575 = vld [vmem:[%s6565 + $0x48] sm:$0xff]
        %v6576 = vld [vmem:[%s6565 + $0x50] sm:$0xff]
        %v6577 = vld [vmem:[%s6565 + $0x58] sm:$0xff]
        %v6578 = vld [vmem:[%s6565 + $0x60] sm:$0xff]
        %v6579 = vld [vmem:[%s6565 + $0x68] sm:$0xff]
        %v6580 = vld [vmem:[%s6565 + $0x70] sm:$0xff]
        %v6581 = vld [vmem:[%s6565 + $0x78] sm:$0xff]
        %v6582 = vld [vmem:[%s6565 + $0x80] sm:$0xff]
        %v6583 = vld [vmem:[%s6565 + $0x88] sm:$0xff]
        %v6584 = vld [vmem:[%s6565 + $0x90] sm:$0xff]
        %v6585 = vld [vmem:[%s6565 + $0x98] sm:$0xff]
        %v6586 = vld [vmem:[%s6565 + $0xa0] sm:$0xf]
        %v6587 = vld [vmem:[%s6565 + $0xa8] sm:$0xf]
        %v6589 = vsel %vm540, %v6586, 0
        %v6592 = vsel %vm540, %v6587, 0
        %6594 = vmatprep.subr.mxu0 %v6567
        %6595 = vmatpush1.msra.mxu0 %v6566
        %6596 = vmatprep.subr.mxu0 %v6569
        %6597 = vmatpush1.msra.mxu0 %v6568
        %6598 = vmatprep.subr.mxu0 %v6571
        %6599 = vmatpush1.msra.mxu0 %v6570
        %6600 = vmatprep.subr.mxu0 %v6573
        %6601 = vmatpush1.msra.mxu0 %v6572
        %6602 = vmatprep.subr.mxu0 %v6575
        %6603 = vmatpush1.msra.mxu0 %v6574
        %6604 = vmatprep.subr.mxu0 %v6577
        %6605 = vmatpush1.msra.mxu0 %v6576
        %6606 = vmatprep.subr.mxu0 %v6579
        %6607 = vmatpush1.msra.mxu0 %v6578
        %6608 = vmatprep.subr.mxu0 %v6581
        %6609 = vmatpush1.msra.mxu0 %v6580
        %6610 = vmatprep.subr.mxu0 %v6583
        %6611 = vmatpush1.msra.mxu0 %v6582
        %6612 = vmatprep.subr.mxu0 %v6585
        %6613 = vmatpush1.msra.mxu0 %v6584
        %6614 = vmatprep.subr.mxu0 %v6592
        %6615 = vmatpush1.msra.mxu0 %v6589
        %6616 = vmatprep.subr.mxu0 0.0
        %6617 = vmatpush1.msra.mxu0 0.0
        %6618 = vmatprep.subr.mxu0 0.0
        %6619 = vmatpush1.msra.mxu0 0.0
        %6620 = vmatprep.subr.mxu0 0.0
        %6621 = vmatpush1.msra.mxu0 0.0
        %6622 = vmatprep.subr.mxu0 0.0
        %6623 = vmatpush1.msra.mxu0 0.0
        %6624 = vmatprep.subr.mxu0 0.0
        %6625 = vmatpush1.msra.mxu0 0.0
        %6626 = vmatprep.subr.mxu0 0.0
        %6627 = vmatpush1.msra.mxu0 0.0
        %6628 = vmatprep.subr.mxu0 0.0
        %6629 = vmatpush1.msra.mxu0 0.0
        %6630 = vmatprep.subr.mxu0 0.0
        %6631 = vmatpush1.msra.mxu0 0.0
        %6632 = vmatprep.subr.mxu0 0.0
        %6633 = vmatpush1.msra.mxu0 0.0
        %6634 = vmatprep.subr.mxu0 0.0
        %6635 = vmatpush1.msra.mxu0 0.0
        %6636 = vmatprep.subr.mxu0 0.0
        %6637 = vmatpush1.msra.mxu0 0.0
        %6638 = vmatprep.subr.mxu0 0.0
        %6639 = vmatpush1.msra.mxu0 0.0
        %6640 = vmatprep.subr.mxu0 0.0
        %6641 = vmatpush1.msra.mxu0 0.0
        %6642 = vmatprep.subr.mxu0 0.0
        %6643 = vmatpush1.msra.mxu0 0.0
        %6644 = vmatprep.subr.mxu0 0.0
        %6645 = vmatpush1.msra.mxu0 0.0
        %6646 = vmatprep.subr.mxu0 0.0
        %6647 = vmatpush1.msra.mxu0 0.0
        %6648 = vmatprep.subr.mxu0 0.0
        %6649 = vmatpush1.msra.mxu0 0.0
        %6650 = vmatprep.subr.mxu0 0.0
        %6651 = vmatpush1.msra.mxu0 0.0
        %6652 = vmatprep.subr.mxu0 0.0
        %6653 = vmatpush1.msra.mxu0 0.0
        %6654 = vmatprep.subr.mxu0 0.0
        %6655 = vmatpush1.msra.mxu0 0.0
        %6656 = vmatprep.subr.mxu0 0.0
        %6657 = vmatpush1.msra.mxu0 0.0
        %6658 = vmatprep.mubr.f32.mxu0 0.0
        %6659 = vmatmul.mubr.f32.gmra.mrb[0].mxu0 %v6144
        %v6660 = vpop.f32.mrb[0].mxu0
        %v6661 = vadd.f32 0.0, %v6660
        %v6662 = vpop.f32.mrb[0].mxu0
        %v6663 = vadd.f32 0.0, %v6662
        %6664 = vmatprep.mubr.f32.mxu0 0.0
        %6665 = vmatmul.mubr.f32.gmra.mrb[0].mxu0 %v6146
        %v6666 = vpop.f32.mrb[0].mxu0
        %v6667 = vadd.f32 0.0, %v6666
        %v6668 = vpop.f32.mrb[0].mxu0
        %v6669 = vadd.f32 0.0, %v6668
        %6670 = vdwg.mxu0
        %v6671 = vadd.f32 %v6561, %v6661
        %v6672 = vadd.f32 %v6562, %v6663
        %v6673 = vadd.f32 %v6563, %v6667
        %v6674 = vadd.f32 %v6564, %v6669
        %v6676 = vlaneseq
        %v6677 = vshrl.u32 %v6676, 7
        %v6678 = vsub.s32 0, %v6677
        %v6679 = vrot.slane %v3898, %v6678
        %v6680 = vlaneseq
        %v6681 = vshrl.u32 %v6680, 7
        %v6682 = vsub.s32 1, %v6681
        %v6683 = vrot.slane %v3898, %v6682
        %v6686 = vadd.f32 %v6671, %v6679
        %v6687 = vadd.f32 %v6672, %v6683
        %v6688 = vadd.f32 %v6673, %v6679
        %v6689 = vadd.f32 %v6674, %v6683
        %v6690 = vmax.f32 %v6686, 0.0
        %v6691 = vmax.f32 %v6687, 0.0
        %v6692 = vmax.f32 %v6688, 0.0
        %v6693 = vmax.f32 %v6689, 0.0
        %v6694 = vld [vmem:[%s8] sm:$0x1f]
        %vm6695 = vcmask 80896
        %v6697 = vsel %vm6695, %v6694, 0
        %vm6699 = vcmask 1041408
        %v6701 = vsel %vm6699, %v6692, 0
        %v6704 = vsel %vm6699, %v6693, 0
        %6706 = vmatprep.subr.mxu0 %v6691
        %6707 = vmatpush1.msra.mxu0 %v6690
        %6708 = vmatprep.subr.mxu0 %v6704
        %6709 = vmatpush1.msra.mxu0 %v6701
        %6710 = vmatprep.subr.mxu0 0.0
        %6711 = vmatpush1.msra.mxu0 0.0
        %6712 = vmatprep.subr.mxu0 0.0
        %6713 = vmatpush1.msra.mxu0 0.0
        %6714 = vmatprep.subr.mxu0 0.0
        %6715 = vmatpush1.msra.mxu0 0.0
        %6716 = vmatprep.subr.mxu0 0.0
        %6717 = vmatpush1.msra.mxu0 0.0
        %6718 = vmatprep.subr.mxu0 0.0
        %6719 = vmatpush1.msra.mxu0 0.0
        %6720 = vmatprep.subr.mxu0 0.0
        %6721 = vmatpush1.msra.mxu0 0.0
        %6722 = vmatprep.subr.mxu0 0.0
        %6723 = vmatpush1.msra.mxu0 0.0
        %6724 = vmatprep.subr.mxu0 0.0
        %6725 = vmatpush1.msra.mxu0 0.0
        %6726 = vmatprep.subr.mxu0 0.0
        %6727 = vmatpush1.msra.mxu0 0.0
        %6728 = vmatprep.subr.mxu0 0.0
        %6729 = vmatpush1.msra.mxu0 0.0
        %6730 = vmatprep.subr.mxu0 0.0
        %6731 = vmatpush1.msra.mxu0 0.0
        %6732 = vmatprep.subr.mxu0 0.0
        %6733 = vmatpush1.msra.mxu0 0.0
        %6734 = vmatprep.subr.mxu0 0.0
        %6735 = vmatpush1.msra.mxu0 0.0
        %6736 = vmatprep.subr.mxu0 0.0
        %6737 = vmatpush1.msra.mxu0 0.0
        %6738 = vmatprep.subr.mxu0 0.0
        %6739 = vmatpush1.msra.mxu0 0.0
        %6740 = vmatprep.subr.mxu0 0.0
        %6741 = vmatpush1.msra.mxu0 0.0
        %6742 = vmatprep.subr.mxu0 0.0
        %6743 = vmatpush1.msra.mxu0 0.0
        %6744 = vmatprep.subr.mxu0 0.0
        %6745 = vmatpush1.msra.mxu0 0.0
        %6746 = vmatprep.subr.mxu0 0.0
        %6747 = vmatpush1.msra.mxu0 0.0
        %6748 = vmatprep.subr.mxu0 0.0
        %6749 = vmatpush1.msra.mxu0 0.0
        %6750 = vmatprep.subr.mxu0 0.0
        %6751 = vmatpush1.msra.mxu0 0.0
        %6752 = vmatprep.subr.mxu0 0.0
        %6753 = vmatpush1.msra.mxu0 0.0
        %6754 = vmatprep.subr.mxu0 0.0
        %6755 = vmatpush1.msra.mxu0 0.0
        %6756 = vmatprep.subr.mxu0 0.0
        %6757 = vmatpush1.msra.mxu0 0.0
        %6758 = vmatprep.subr.mxu0 0.0
        %6759 = vmatpush1.msra.mxu0 0.0
        %6760 = vmatprep.subr.mxu0 0.0
        %6761 = vmatpush1.msra.mxu0 0.0
        %6762 = vmatprep.subr.mxu0 0.0
        %6763 = vmatpush1.msra.mxu0 0.0
        %6764 = vmatprep.subr.mxu0 0.0
        %6765 = vmatpush1.msra.mxu0 0.0
        %6766 = vmatprep.subr.mxu0 0.0
        %6767 = vmatpush1.msra.mxu0 0.0
        %6768 = vmatprep.subr.mxu0 0.0
        %6769 = vmatpush1.msra.mxu0 0.0
        %6770 = vmatprep.mubr.f32.mxu0 0.0
        %6771 = vmatmul.mubr.f32.gmra.mrb[0].mxu0 %v6697
        %v6772 = vpop.f32.mrb[0].mxu0
        %v6773 = vadd.f32 0.0, %v6772
        %v6774 = vpop.f32.mrb[0].mxu0
        %v6775 = vadd.f32 0.0, %v6774
        %6776 = vdwg.mxu0
        %s6777 = scalar_lea.vmem %s8, 8
        %v6778 = vld [vmem:[%s6777] sm:$0x1f]
        %v6780 = vsel %vm6695, %v6778, 0
        %6782 = vmatprep.subr.mxu0 %v6691
        %6783 = vmatpush1.msra.mxu0 %v6690
        %6784 = vmatprep.subr.mxu0 %v6704
        %6785 = vmatpush1.msra.mxu0 %v6701
        %6786 = vmatprep.subr.mxu0 0.0
        %6787 = vmatpush1.msra.mxu0 0.0
        %6788 = vmatprep.subr.mxu0 0.0
        %6789 = vmatpush1.msra.mxu0 0.0
        %6790 = vmatprep.subr.mxu0 0.0
        %6791 = vmatpush1.msra.mxu0 0.0
        %6792 = vmatprep.subr.mxu0 0.0
        %6793 = vmatpush1.msra.mxu0 0.0
        %6794 = vmatprep.subr.mxu0 0.0
        %6795 = vmatpush1.msra.mxu0 0.0
        %6796 = vmatprep.subr.mxu0 0.0
        %6797 = vmatpush1.msra.mxu0 0.0
        %6798 = vmatprep.subr.mxu0 0.0
        %6799 = vmatpush1.msra.mxu0 0.0
        %6800 = vmatprep.subr.mxu0 0.0
        %6801 = vmatpush1.msra.mxu0 0.0
        %6802 = vmatprep.subr.mxu0 0.0
        %6803 = vmatpush1.msra.mxu0 0.0
        %6804 = vmatprep.subr.mxu0 0.0
        %6805 = vmatpush1.msra.mxu0 0.0
        %6806 = vmatprep.subr.mxu0 0.0
        %6807 = vmatpush1.msra.mxu0 0.0
        %6808 = vmatprep.subr.mxu0 0.0
        %6809 = vmatpush1.msra.mxu0 0.0
        %6810 = vmatprep.subr.mxu0 0.0
        %6811 = vmatpush1.msra.mxu0 0.0
        %6812 = vmatprep.subr.mxu0 0.0
        %6813 = vmatpush1.msra.mxu0 0.0
        %6814 = vmatprep.subr.mxu0 0.0
        %6815 = vmatpush1.msra.mxu0 0.0
        %6816 = vmatprep.subr.mxu0 0.0
        %6817 = vmatpush1.msra.mxu0 0.0
        %6818 = vmatprep.subr.mxu0 0.0
        %6819 = vmatpush1.msra.mxu0 0.0
        %6820 = vmatprep.subr.mxu0 0.0
        %6821 = vmatpush1.msra.mxu0 0.0
        %6822 = vmatprep.subr.mxu0 0.0
        %6823 = vmatpush1.msra.mxu0 0.0
        %6824 = vmatprep.subr.mxu0 0.0
        %6825 = vmatpush1.msra.mxu0 0.0
        %6826 = vmatprep.subr.mxu0 0.0
        %6827 = vmatpush1.msra.mxu0 0.0
        %6828 = vmatprep.subr.mxu0 0.0
        %6829 = vmatpush1.msra.mxu0 0.0
        %6830 = vmatprep.subr.mxu0 0.0
        %6831 = vmatpush1.msra.mxu0 0.0
        %6832 = vmatprep.subr.mxu0 0.0
        %6833 = vmatpush1.msra.mxu0 0.0
        %6834 = vmatprep.subr.mxu0 0.0
        %6835 = vmatpush1.msra.mxu0 0.0
        %6836 = vmatprep.subr.mxu0 0.0
        %6837 = vmatpush1.msra.mxu0 0.0
        %6838 = vmatprep.subr.mxu0 0.0
        %6839 = vmatpush1.msra.mxu0 0.0
        %6840 = vmatprep.subr.mxu0 0.0
        %6841 = vmatpush1.msra.mxu0 0.0
        %6842 = vmatprep.subr.mxu0 0.0
        %6843 = vmatpush1.msra.mxu0 0.0
        %6844 = vmatprep.subr.mxu0 0.0
        %6845 = vmatpush1.msra.mxu0 0.0
        %6846 = vmatprep.mubr.f32.mxu0 0.0
        %6847 = vmatmul.mubr.f32.gmra.mrb[0].mxu0 %v6780
        %v6848 = vpop.f32.mrb[0].mxu0
        %v6849 = vadd.f32 0.0, %v6848
        %v6850 = vpop.f32.mrb[0].mxu0
        %v6851 = vadd.f32 0.0, %v6850
        %6852 = vdwg.mxu0
        %v6853 = vmax.f32 %v6773, %v6849
        %v6854 = vmax.f32 %v6775, %v6851
        %v6855 = vld [vmem:[%s9] sm:$0xff]
        %v6856 = vld [vmem:[%s9 + $0x8] sm:$0xff]
        %v6857 = vld [vmem:[%s9 + $0x10] sm:$0xff]
        %v6858 = vld [vmem:[%s9 + $0x18] sm:$0xff]
        %v6859 = vld [vmem:[%s9 + $0x20] sm:$0xff]
        %v6860 = vld [vmem:[%s9 + $0x28] sm:$0xff]
        %v6861 = vld [vmem:[%s9 + $0x30] sm:$0xff]
        %v6862 = vld [vmem:[%s9 + $0x38] sm:$0xff]
        %v6863 = vld [vmem:[%s9 + $0x40] sm:$0xff]
        %v6864 = vld [vmem:[%s9 + $0x48] sm:$0xff]
        %v6865 = vld [vmem:[%s9 + $0x50] sm:$0xff]
        %v6866 = vld [vmem:[%s9 + $0x58] sm:$0xff]
        %v6867 = vld [vmem:[%s9 + $0x60] sm:$0xff]
        %v6868 = vld [vmem:[%s9 + $0x68] sm:$0xff]
        %v6869 = vld [vmem:[%s9 + $0x70] sm:$0xff]
        %v6870 = vld [vmem:[%s9 + $0x78] sm:$0xff]
        %v6871 = vld [vmem:[%s9 + $0x80] sm:$0xff]
        %v6872 = vld [vmem:[%s9 + $0x88] sm:$0xff]
        %v6873 = vld [vmem:[%s9 + $0x90] sm:$0xff]
        %v6874 = vld [vmem:[%s9 + $0x98] sm:$0xff]
        %vm6875 = vcmask 261120
        %v6877 = vsel %vm6875, %v6854, 0
        %6879 = vmatprep.subr.mxu0 0.0
        %6880 = vmatpush1.msra.mxu0 %v6855
        %6881 = vmatprep.subr.mxu0 0.0
        %6882 = vmatpush1.msra.mxu0 %v6856
        %6883 = vmatprep.subr.mxu0 0.0
        %6884 = vmatpush1.msra.mxu0 %v6857
        %6885 = vmatprep.subr.mxu0 0.0
        %6886 = vmatpush1.msra.mxu0 %v6858
        %6887 = vmatprep.subr.mxu0 0.0
        %6888 = vmatpush1.msra.mxu0 %v6859
        %6889 = vmatprep.subr.mxu0 0.0
        %6890 = vmatpush1.msra.mxu0 %v6860
        %6891 = vmatprep.subr.mxu0 0.0
        %6892 = vmatpush1.msra.mxu0 %v6861
        %6893 = vmatprep.subr.mxu0 0.0
        %6894 = vmatpush1.msra.mxu0 %v6862
        %6895 = vmatprep.subr.mxu0 0.0
        %6896 = vmatpush1.msra.mxu0 %v6863
        %6897 = vmatprep.subr.mxu0 0.0
        %6898 = vmatpush1.msra.mxu0 %v6864
        %6899 = vmatprep.subr.mxu0 0.0
        %6900 = vmatpush1.msra.mxu0 %v6865
        %6901 = vmatprep.subr.mxu0 0.0
        %6902 = vmatpush1.msra.mxu0 %v6866
        %6903 = vmatprep.subr.mxu0 0.0
        %6904 = vmatpush1.msra.mxu0 %v6867
        %6905 = vmatprep.subr.mxu0 0.0
        %6906 = vmatpush1.msra.mxu0 %v6868
        %6907 = vmatprep.subr.mxu0 0.0
        %6908 = vmatpush1.msra.mxu0 %v6869
        %6909 = vmatprep.subr.mxu0 0.0
        %6910 = vmatpush1.msra.mxu0 %v6870
        %6911 = vmatprep.subr.mxu0 0.0
        %6912 = vmatpush1.msra.mxu0 %v6871
        %6913 = vmatprep.subr.mxu0 0.0
        %6914 = vmatpush1.msra.mxu0 %v6872
        %6915 = vmatprep.subr.mxu0 0.0
        %6916 = vmatpush1.msra.mxu0 %v6873
        %6917 = vmatprep.subr.mxu0 0.0
        %6918 = vmatpush1.msra.mxu0 %v6874
        %6919 = vmatprep.subr.mxu0 0.0
        %6920 = vmatpush1.msra.mxu0 0.0
        %6921 = vmatprep.subr.mxu0 0.0
        %6922 = vmatpush1.msra.mxu0 0.0
        %6923 = vmatprep.subr.mxu0 0.0
        %6924 = vmatpush1.msra.mxu0 0.0
        %6925 = vmatprep.subr.mxu0 0.0
        %6926 = vmatpush1.msra.mxu0 0.0
        %6927 = vmatprep.subr.mxu0 0.0
        %6928 = vmatpush1.msra.mxu0 0.0
        %6929 = vmatprep.subr.mxu0 0.0
        %6930 = vmatpush1.msra.mxu0 0.0
        %6931 = vmatprep.subr.mxu0 0.0
        %6932 = vmatpush1.msra.mxu0 0.0
        %6933 = vmatprep.subr.mxu0 0.0
        %6934 = vmatpush1.msra.mxu0 0.0
        %6935 = vmatprep.subr.mxu0 0.0
        %6936 = vmatpush1.msra.mxu0 0.0
        %6937 = vmatprep.subr.mxu0 0.0
        %6938 = vmatpush1.msra.mxu0 0.0
        %6939 = vmatprep.subr.mxu0 0.0
        %6940 = vmatpush1.msra.mxu0 0.0
        %6941 = vmatprep.subr.mxu0 0.0
        %6942 = vmatpush1.msra.mxu0 0.0
        %6943 = vmatprep.mubr.f32.mxu0 %v6877
        %6944 = vmatmul.mubr.f32.gmra.mrb[0].mxu0 %v6853
        %v6945 = vpop.f32.mrb[0].mxu0
        %v6946 = vadd.f32 0.0, %v6945
        %v6947 = vpop.f32.mrb[0].mxu0
        %6948 = vdwg.mxu0
        %s6949 = scalar_lea.vmem %s9, 160
        %v6950 = vld [vmem:[%s6949] sm:$0xff]
        %v6951 = vld [vmem:[%s6949 + $0x8] sm:$0xff]
        %v6952 = vld [vmem:[%s6949 + $0x10] sm:$0xff]
        %v6953 = vld [vmem:[%s6949 + $0x18] sm:$0xff]
        %v6954 = vld [vmem:[%s6949 + $0x20] sm:$0xff]
        %v6955 = vld [vmem:[%s6949 + $0x28] sm:$0xff]
        %v6956 = vld [vmem:[%s6949 + $0x30] sm:$0xff]
        %v6957 = vld [vmem:[%s6949 + $0x38] sm:$0xff]
        %v6958 = vld [vmem:[%s6949 + $0x40] sm:$0xff]
        %v6959 = vld [vmem:[%s6949 + $0x48] sm:$0xff]
        %v6960 = vld [vmem:[%s6949 + $0x50] sm:$0xff]
        %v6961 = vld [vmem:[%s6949 + $0x58] sm:$0xff]
        %v6962 = vld [vmem:[%s6949 + $0x60] sm:$0xff]
        %v6963 = vld [vmem:[%s6949 + $0x68] sm:$0xff]
        %v6964 = vld [vmem:[%s6949 + $0x70] sm:$0xff]
        %v6965 = vld [vmem:[%s6949 + $0x78] sm:$0xff]
        %v6966 = vld [vmem:[%s6949 + $0x80] sm:$0xff]
        %v6967 = vld [vmem:[%s6949 + $0x88] sm:$0xff]
        %v6968 = vld [vmem:[%s6949 + $0x90] sm:$0xff]
        %v6969 = vld [vmem:[%s6949 + $0x98] sm:$0xff]
        %6970 = vmatprep.subr.mxu0 0.0
        %6971 = vmatpush1.msra.mxu0 %v6950
        %6972 = vmatprep.subr.mxu0 0.0
        %6973 = vmatpush1.msra.mxu0 %v6951
        %6974 = vmatprep.subr.mxu0 0.0
        %6975 = vmatpush1.msra.mxu0 %v6952
        %6976 = vmatprep.subr.mxu0 0.0
        %6977 = vmatpush1.msra.mxu0 %v6953
        %6978 = vmatprep.subr.mxu0 0.0
        %6979 = vmatpush1.msra.mxu0 %v6954
        %6980 = vmatprep.subr.mxu0 0.0
        %6981 = vmatpush1.msra.mxu0 %v6955
        %6982 = vmatprep.subr.mxu0 0.0
        %6983 = vmatpush1.msra.mxu0 %v6956
        %6984 = vmatprep.subr.mxu0 0.0
        %6985 = vmatpush1.msra.mxu0 %v6957
        %6986 = vmatprep.subr.mxu0 0.0
        %6987 = vmatpush1.msra.mxu0 %v6958
        %6988 = vmatprep.subr.mxu0 0.0
        %6989 = vmatpush1.msra.mxu0 %v6959
        %6990 = vmatprep.subr.mxu0 0.0
        %6991 = vmatpush1.msra.mxu0 %v6960
        %6992 = vmatprep.subr.mxu0 0.0
        %6993 = vmatpush1.msra.mxu0 %v6961
        %6994 = vmatprep.subr.mxu0 0.0
        %6995 = vmatpush1.msra.mxu0 %v6962
        %6996 = vmatprep.subr.mxu0 0.0
        %6997 = vmatpush1.msra.mxu0 %v6963
        %6998 = vmatprep.subr.mxu0 0.0
        %6999 = vmatpush1.msra.mxu0 %v6964
        %7000 = vmatprep.subr.mxu0 0.0
        %7001 = vmatpush1.msra.mxu0 %v6965
        %7002 = vmatprep.subr.mxu0 0.0
        %7003 = vmatpush1.msra.mxu0 %v6966
        %7004 = vmatprep.subr.mxu0 0.0
        %7005 = vmatpush1.msra.mxu0 %v6967
        %7006 = vmatprep.subr.mxu0 0.0
        %7007 = vmatpush1.msra.mxu0 %v6968
        %7008 = vmatprep.subr.mxu0 0.0
        %7009 = vmatpush1.msra.mxu0 %v6969
        %7010 = vmatprep.subr.mxu0 0.0
        %7011 = vmatpush1.msra.mxu0 0.0
        %7012 = vmatprep.subr.mxu0 0.0
        %7013 = vmatpush1.msra.mxu0 0.0
        %7014 = vmatprep.subr.mxu0 0.0
        %7015 = vmatpush1.msra.mxu0 0.0
        %7016 = vmatprep.subr.mxu0 0.0
        %7017 = vmatpush1.msra.mxu0 0.0
        %7018 = vmatprep.subr.mxu0 0.0
        %7019 = vmatpush1.msra.mxu0 0.0
        %7020 = vmatprep.subr.mxu0 0.0
        %7021 = vmatpush1.msra.mxu0 0.0
        %7022 = vmatprep.subr.mxu0 0.0
        %7023 = vmatpush1.msra.mxu0 0.0
        %7024 = vmatprep.subr.mxu0 0.0
        %7025 = vmatpush1.msra.mxu0 0.0
        %7026 = vmatprep.subr.mxu0 0.0
        %7027 = vmatpush1.msra.mxu0 0.0
        %7028 = vmatprep.subr.mxu0 0.0
        %7029 = vmatpush1.msra.mxu0 0.0
        %7030 = vmatprep.subr.mxu0 0.0
        %7031 = vmatpush1.msra.mxu0 0.0
        %7032 = vmatprep.subr.mxu0 0.0
        %7033 = vmatpush1.msra.mxu0 0.0
        %7034 = vmatprep.mubr.f32.mxu0 %v6877
        %7035 = vmatmul.mubr.f32.gmra.mrb[0].mxu0 %v6853
        %v7036 = vpop.f32.mrb[0].mxu0
        %v7037 = vadd.f32 0.0, %v7036
        %v7038 = vpop.f32.mrb[0].mxu0
        %7039 = vdwg.mxu0
        %v7040 = vmax.f32 %v6946, %v7037
        %v7042 = vrot.slane %v7040, 1
        %7043 = vrot.lane.b32.xlu0 %v7042, 80
        %v7044 = vpop.permute.xlu0 %7043
        %v7046 = vrot.slane %v7040, 2
        %7047 = vrot.lane.b32.xlu0 %v7046, 32
        %v7048 = vpop.permute.xlu0 %7047
        %v7050 = vrot.slane %v7040, 3
        %7051 = vrot.lane.b32.xlu0 %v7050, 112
        %v7052 = vpop.permute.xlu0 %7051
        %v7054 = vrot.slane %v7040, 4
        %7055 = vrot.lane.b32.xlu0 %v7054, 64
        %v7056 = vpop.permute.xlu0 %7055
        %vm7058 = vcmask 654336
        %v7059 = vsel %vm7058, %v7040, %v7044
        %v7060 = vsel %vm6875, %v7044, %v7048
        %vm7061 = vcmask 916480
        %v7062 = vsel %vm7061, %v7060, %v7052
        %vm7063 = vcmask 523264
        %v7064 = vsel %vm7063, %v7052, %v7056
        %v7065 = vld [vmem:[%s10] sm:$0xff]
        %v7066 = vld [vmem:[%s10 + $0x8] sm:$0xff]
        %v7067 = vld [vmem:[%s10 + $0x10] sm:$0xff]
        %v7068 = vld [vmem:[%s10 + $0x18] sm:$0xff]
        %v7069 = vld [vmem:[%s10 + $0x20] sm:$0xff]
        %v7070 = vld [vmem:[%s10 + $0x28] sm:$0xff]
        %v7071 = vld [vmem:[%s10 + $0x30] sm:$0xff]
        %v7072 = vld [vmem:[%s10 + $0x38] sm:$0xff]
        %v7073 = vld [vmem:[%s10 + $0x40] sm:$0xff]
        %v7074 = vld [vmem:[%s10 + $0x48] sm:$0xff]
        %v7075 = vld [vmem:[%s10 + $0x50] sm:$0xff]
        %v7076 = vld [vmem:[%s10 + $0x58] sm:$0xff]
        %v7077 = vld [vmem:[%s10 + $0x60] sm:$0xff]
        %v7078 = vld [vmem:[%s10 + $0x68] sm:$0xff]
        %v7079 = vld [vmem:[%s10 + $0x70] sm:$0xff]
        %v7080 = vld [vmem:[%s10 + $0x78] sm:$0xff]
        %v7081 = vld [vmem:[%s10 + $0x80] sm:$0xff]
        %v7082 = vld [vmem:[%s10 + $0x88] sm:$0xff]
        %v7083 = vld [vmem:[%s10 + $0x90] sm:$0xff]
        %v7084 = vld [vmem:[%s10 + $0x98] sm:$0xff]
        %v7085 = vld [vmem:[%s10 + $0xa0] sm:$0xff]
        %v7086 = vld [vmem:[%s10 + $0xa8] sm:$0xff]
        %v7087 = vld [vmem:[%s10 + $0xb0] sm:$0xff]
        %v7088 = vld [vmem:[%s10 + $0xb8] sm:$0xff]
        %v7089 = vld [vmem:[%s10 + $0xc0] sm:$0xff]
        %v7090 = vld [vmem:[%s10 + $0xc8] sm:$0xff]
        %v7091 = vld [vmem:[%s10 + $0xd0] sm:$0xff]
        %v7092 = vld [vmem:[%s10 + $0xd8] sm:$0xff]
        %v7093 = vld [vmem:[%s10 + $0xe0] sm:$0xff]
        %v7094 = vld [vmem:[%s10 + $0xe8] sm:$0xff]
        %v7095 = vld [vmem:[%s10 + $0xf0] sm:$0xff]
        %v7096 = vld [vmem:[%s10 + $0xf8] sm:$0xff]
        %v7097 = vld [vmem:[%s10 + $0x100] sm:$0xff]
        %v7098 = vld [vmem:[%s10 + $0x108] sm:$0xff]
        %v7099 = vld [vmem:[%s10 + $0x110] sm:$0xff]
        %v7100 = vld [vmem:[%s10 + $0x118] sm:$0xff]
        %v7101 = vld [vmem:[%s10 + $0x120] sm:$0xff]
        %v7102 = vld [vmem:[%s10 + $0x128] sm:$0xff]
        %v7103 = vld [vmem:[%s10 + $0x130] sm:$0xff]
        %v7104 = vld [vmem:[%s10 + $0x138] sm:$0xff]
        %v7105 = vld [vmem:[%s10 + $0x140] sm:$0xff]
        %v7106 = vld [vmem:[%s10 + $0x148] sm:$0xff]
        %v7107 = vld [vmem:[%s10 + $0x150] sm:$0xff]
        %v7108 = vld [vmem:[%s10 + $0x158] sm:$0xff]
        %v7109 = vld [vmem:[%s10 + $0x160] sm:$0xff]
        %v7110 = vld [vmem:[%s10 + $0x168] sm:$0xff]
        %v7111 = vld [vmem:[%s10 + $0x170] sm:$0xff]
        %v7112 = vld [vmem:[%s10 + $0x178] sm:$0xff]
        %v7113 = vld [vmem:[%s10 + $0x180] sm:$0xff]
        %v7114 = vld [vmem:[%s10 + $0x188] sm:$0xff]
        %v7115 = vld [vmem:[%s11] sm:$0x1]
        %vm7116 = vcmask 130048
        %v7117 = vsel %vm7116, %v7056, 0
        %7119 = vmatprep.subr.mxu0 0.0
        %7120 = vmatpush1.msra.mxu0 %v7065
        %7121 = vmatprep.subr.mxu0 0.0
        %7122 = vmatpush1.msra.mxu0 %v7066
        %7123 = vmatprep.subr.mxu0 0.0
        %7124 = vmatpush1.msra.mxu0 %v7067
        %7125 = vmatprep.subr.mxu0 0.0
        %7126 = vmatpush1.msra.mxu0 %v7068
        %7127 = vmatprep.subr.mxu0 0.0
        %7128 = vmatpush1.msra.mxu0 %v7069
        %7129 = vmatprep.subr.mxu0 0.0
        %7130 = vmatpush1.msra.mxu0 %v7070
        %7131 = vmatprep.subr.mxu0 0.0
        %7132 = vmatpush1.msra.mxu0 %v7071
        %7133 = vmatprep.subr.mxu0 0.0
        %7134 = vmatpush1.msra.mxu0 %v7072
        %7135 = vmatprep.subr.mxu0 0.0
        %7136 = vmatpush1.msra.mxu0 %v7073
        %7137 = vmatprep.subr.mxu0 0.0
        %7138 = vmatpush1.msra.mxu0 %v7074
        %7139 = vmatprep.subr.mxu0 0.0
        %7140 = vmatpush1.msra.mxu0 %v7075
        %7141 = vmatprep.subr.mxu0 0.0
        %7142 = vmatpush1.msra.mxu0 %v7076
        %7143 = vmatprep.subr.mxu0 0.0
        %7144 = vmatpush1.msra.mxu0 %v7077
        %7145 = vmatprep.subr.mxu0 0.0
        %7146 = vmatpush1.msra.mxu0 %v7078
        %7147 = vmatprep.subr.mxu0 0.0
        %7148 = vmatpush1.msra.mxu0 %v7079
        %7149 = vmatprep.subr.mxu0 0.0
        %7150 = vmatpush1.msra.mxu0 %v7080
        %7151 = vmatprep.subr.mxu0 0.0
        %7152 = vmatpush1.msra.mxu0 %v7081
        %7153 = vmatprep.subr.mxu0 0.0
        %7154 = vmatpush1.msra.mxu0 %v7082
        %7155 = vmatprep.subr.mxu0 0.0
        %7156 = vmatpush1.msra.mxu0 %v7083
        %7157 = vmatprep.subr.mxu0 0.0
        %7158 = vmatpush1.msra.mxu0 %v7084
        %7159 = vmatprep.subr.mxu0 0.0
        %7160 = vmatpush1.msra.mxu0 %v7085
        %7161 = vmatprep.subr.mxu0 0.0
        %7162 = vmatpush1.msra.mxu0 %v7086
        %7163 = vmatprep.subr.mxu0 0.0
        %7164 = vmatpush1.msra.mxu0 %v7087
        %7165 = vmatprep.subr.mxu0 0.0
        %7166 = vmatpush1.msra.mxu0 %v7088
        %7167 = vmatprep.subr.mxu0 0.0
        %7168 = vmatpush1.msra.mxu0 %v7089
        %7169 = vmatprep.subr.mxu0 0.0
        %7170 = vmatpush1.msra.mxu0 %v7090
        %7171 = vmatprep.subr.mxu0 0.0
        %7172 = vmatpush1.msra.mxu0 %v7091
        %7173 = vmatprep.subr.mxu0 0.0
        %7174 = vmatpush1.msra.mxu0 %v7092
        %7175 = vmatprep.subr.mxu0 0.0
        %7176 = vmatpush1.msra.mxu0 %v7093
        %7177 = vmatprep.subr.mxu0 0.0
        %7178 = vmatpush1.msra.mxu0 %v7094
        %7179 = vmatprep.subr.mxu0 0.0
        %7180 = vmatpush1.msra.mxu0 %v7095
        %7181 = vmatprep.subr.mxu0 0.0
        %7182 = vmatpush1.msra.mxu0 %v7096
        %7183 = vmatprep.mubr.f32.mxu0 %v7062
        %7184 = vmatmul.mubr.f32.gmra.mrb[0].mxu0 %v7059
        %v7185 = vpop.f32.mrb[0].mxu0
        %v7186 = vadd.f32 %v7115, %v7185
        %v7187 = vpop.f32.mrb[0].mxu0
        %7188 = vdwg.mxu0
        %7189 = vmatprep.subr.mxu0 0.0
        %7190 = vmatpush1.msra.mxu0 %v7097
        %7191 = vmatprep.subr.mxu0 0.0
        %7192 = vmatpush1.msra.mxu0 %v7098
        %7193 = vmatprep.subr.mxu0 0.0
        %7194 = vmatpush1.msra.mxu0 %v7099
        %7195 = vmatprep.subr.mxu0 0.0
        %7196 = vmatpush1.msra.mxu0 %v7100
        %7197 = vmatprep.subr.mxu0 0.0
        %7198 = vmatpush1.msra.mxu0 %v7101
        %7199 = vmatprep.subr.mxu0 0.0
        %7200 = vmatpush1.msra.mxu0 %v7102
        %7201 = vmatprep.subr.mxu0 0.0
        %7202 = vmatpush1.msra.mxu0 %v7103
        %7203 = vmatprep.subr.mxu0 0.0
        %7204 = vmatpush1.msra.mxu0 %v7104
        %7205 = vmatprep.subr.mxu0 0.0
        %7206 = vmatpush1.msra.mxu0 %v7105
        %7207 = vmatprep.subr.mxu0 0.0
        %7208 = vmatpush1.msra.mxu0 %v7106
        %7209 = vmatprep.subr.mxu0 0.0
        %7210 = vmatpush1.msra.mxu0 %v7107
        %7211 = vmatprep.subr.mxu0 0.0
        %7212 = vmatpush1.msra.mxu0 %v7108
        %7213 = vmatprep.subr.mxu0 0.0
        %7214 = vmatpush1.msra.mxu0 %v7109
        %7215 = vmatprep.subr.mxu0 0.0
        %7216 = vmatpush1.msra.mxu0 %v7110
        %7217 = vmatprep.subr.mxu0 0.0
        %7218 = vmatpush1.msra.mxu0 %v7111
        %7219 = vmatprep.subr.mxu0 0.0
        %7220 = vmatpush1.msra.mxu0 %v7112
        %7221 = vmatprep.subr.mxu0 0.0
        %7222 = vmatpush1.msra.mxu0 %v7113
        %7223 = vmatprep.subr.mxu0 0.0
        %7224 = vmatpush1.msra.mxu0 %v7114
        %7225 = vmatprep.subr.mxu0 0.0
        %7226 = vmatpush1.msra.mxu0 0.0
        %7227 = vmatprep.subr.mxu0 0.0
        %7228 = vmatpush1.msra.mxu0 0.0
        %7229 = vmatprep.subr.mxu0 0.0
        %7230 = vmatpush1.msra.mxu0 0.0
        %7231 = vmatprep.subr.mxu0 0.0
        %7232 = vmatpush1.msra.mxu0 0.0
        %7233 = vmatprep.subr.mxu0 0.0
        %7234 = vmatpush1.msra.mxu0 0.0
        %7235 = vmatprep.subr.mxu0 0.0
        %7236 = vmatpush1.msra.mxu0 0.0
        %7237 = vmatprep.subr.mxu0 0.0
        %7238 = vmatpush1.msra.mxu0 0.0
        %7239 = vmatprep.subr.mxu0 0.0
        %7240 = vmatpush1.msra.mxu0 0.0
        %7241 = vmatprep.subr.mxu0 0.0
        %7242 = vmatpush1.msra.mxu0 0.0
        %7243 = vmatprep.subr.mxu0 0.0
        %7244 = vmatpush1.msra.mxu0 0.0
        %7245 = vmatprep.subr.mxu0 0.0
        %7246 = vmatpush1.msra.mxu0 0.0
        %7247 = vmatprep.subr.mxu0 0.0
        %7248 = vmatpush1.msra.mxu0 0.0
        %7249 = vmatprep.subr.mxu0 0.0
        %7250 = vmatpush1.msra.mxu0 0.0
        %7251 = vmatprep.subr.mxu0 0.0
        %7252 = vmatpush1.msra.mxu0 0.0
        %7253 = vmatprep.mubr.f32.mxu0 %v7117
        %7254 = vmatmul.mubr.f32.gmra.mrb[0].mxu0 %v7064
        %v7255 = vpop.f32.mrb[0].mxu0
        %v7256 = vadd.f32 %v7186, %v7255
        %v7257 = vpop.f32.mrb[0].mxu0
        %7258 = vdwg.mxu0
        %v7259 = vmax.f32 %v7256, 0.0
        %v7260 = vld [vmem:[%s12] sm:$0xff]
        %v7261 = vld [vmem:[%s12 + $0x8] sm:$0xff]
        %v7262 = vld [vmem:[%s12 + $0x10] sm:$0xff]
        %v7263 = vld [vmem:[%s12 + $0x18] sm:$0xff]
        %v7264 = vld [vmem:[%s12 + $0x20] sm:$0xff]
        %v7265 = vld [vmem:[%s12 + $0x28] sm:$0xff]
        %v7266 = vld [vmem:[%s12 + $0x30] sm:$0xff]
        %v7267 = vld [vmem:[%s12 + $0x38] sm:$0xff]
        %v7268 = vld [vmem:[%s12 + $0x40] sm:$0xff]
        %v7269 = vld [vmem:[%s12 + $0x48] sm:$0xff]
        %v7270 = vld [vmem:[%s12 + $0x50] sm:$0xff]
        %v7271 = vld [vmem:[%s12 + $0x58] sm:$0xff]
        %v7272 = vld [vmem:[%s12 + $0x60] sm:$0xff]
        %v7273 = vld [vmem:[%s12 + $0x68] sm:$0xff]
        %v7274 = vld [vmem:[%s12 + $0x70] sm:$0xff]
        %v7275 = vld [vmem:[%s13] sm:$0x1]
        %vm7276 = vcmask 982016
        %v7278 = vsel %vm7276, %v7259, 0
        %7280 = vmatprep.subr.mxu0 0.0
        %7281 = vmatpush1.msra.mxu0 %v7260
        %7282 = vmatprep.subr.mxu0 0.0
        %7283 = vmatpush1.msra.mxu0 %v7261
        %7284 = vmatprep.subr.mxu0 0.0
        %7285 = vmatpush1.msra.mxu0 %v7262
        %7286 = vmatprep.subr.mxu0 0.0
        %7287 = vmatpush1.msra.mxu0 %v7263
        %7288 = vmatprep.subr.mxu0 0.0
        %7289 = vmatpush1.msra.mxu0 %v7264
        %7290 = vmatprep.subr.mxu0 0.0
        %7291 = vmatpush1.msra.mxu0 %v7265
        %7292 = vmatprep.subr.mxu0 0.0
        %7293 = vmatpush1.msra.mxu0 %v7266
        %7294 = vmatprep.subr.mxu0 0.0
        %7295 = vmatpush1.msra.mxu0 %v7267
        %7296 = vmatprep.subr.mxu0 0.0
        %7297 = vmatpush1.msra.mxu0 %v7268
        %7298 = vmatprep.subr.mxu0 0.0
        %7299 = vmatpush1.msra.mxu0 %v7269
        %7300 = vmatprep.subr.mxu0 0.0
        %7301 = vmatpush1.msra.mxu0 %v7270
        %7302 = vmatprep.subr.mxu0 0.0
        %7303 = vmatpush1.msra.mxu0 %v7271
        %7304 = vmatprep.subr.mxu0 0.0
        %7305 = vmatpush1.msra.mxu0 %v7272
        %7306 = vmatprep.subr.mxu0 0.0
        %7307 = vmatpush1.msra.mxu0 %v7273
        %7308 = vmatprep.subr.mxu0 0.0
        %7309 = vmatpush1.msra.mxu0 %v7274
        %7310 = vmatprep.subr.mxu0 0.0
        %7311 = vmatpush1.msra.mxu0 0.0
        %7312 = vmatprep.subr.mxu0 0.0
        %7313 = vmatpush1.msra.mxu0 0.0
        %7314 = vmatprep.subr.mxu0 0.0
        %7315 = vmatpush1.msra.mxu0 0.0
        %7316 = vmatprep.subr.mxu0 0.0
        %7317 = vmatpush1.msra.mxu0 0.0
        %7318 = vmatprep.subr.mxu0 0.0
        %7319 = vmatpush1.msra.mxu0 0.0
        %7320 = vmatprep.subr.mxu0 0.0
        %7321 = vmatpush1.msra.mxu0 0.0
        %7322 = vmatprep.subr.mxu0 0.0
        %7323 = vmatpush1.msra.mxu0 0.0
        %7324 = vmatprep.subr.mxu0 0.0
        %7325 = vmatpush1.msra.mxu0 0.0
        %7326 = vmatprep.subr.mxu0 0.0
        %7327 = vmatpush1.msra.mxu0 0.0
        %7328 = vmatprep.subr.mxu0 0.0
        %7329 = vmatpush1.msra.mxu0 0.0
        %7330 = vmatprep.subr.mxu0 0.0
        %7331 = vmatpush1.msra.mxu0 0.0
        %7332 = vmatprep.subr.mxu0 0.0
        %7333 = vmatpush1.msra.mxu0 0.0
        %7334 = vmatprep.subr.mxu0 0.0
        %7335 = vmatpush1.msra.mxu0 0.0
        %7336 = vmatprep.subr.mxu0 0.0
        %7337 = vmatpush1.msra.mxu0 0.0
        %7338 = vmatprep.subr.mxu0 0.0
        %7339 = vmatpush1.msra.mxu0 0.0
        %7340 = vmatprep.subr.mxu0 0.0
        %7341 = vmatpush1.msra.mxu0 0.0
        %7342 = vmatprep.subr.mxu0 0.0
        %7343 = vmatpush1.msra.mxu0 0.0
        %7344 = vmatprep.mubr.f32.mxu0 0.0
        %7345 = vmatmul.mubr.f32.gmra.mrb[0].mxu0 %v7278
        %v7346 = vpop.f32.mrb[0].mxu0
        %v7347 = vadd.f32 %v7275, %v7346
        %v7348 = vpop.f32.mrb[0].mxu0
        %7349 = vdwg.mxu0
        %v7350 = vmax.f32 %v7347, 0.0
        %v7351 = vld [vmem:[%s14] sm:$0xff]
        %v7352 = vld [vmem:[%s14 + $0x8] sm:$0xff]
        %v7353 = vld [vmem:[%s14 + $0x10] sm:$0xff]
        %v7354 = vld [vmem:[%s14 + $0x18] sm:$0xff]
        %v7355 = vld [vmem:[%s14 + $0x20] sm:$0xff]
        %v7356 = vld [vmem:[%s14 + $0x28] sm:$0xff]
        %v7357 = vld [vmem:[%s14 + $0x30] sm:$0xff]
        %v7358 = vld [vmem:[%s14 + $0x38] sm:$0xff]
        %v7359 = vld [vmem:[%s14 + $0x40] sm:$0xff]
        %v7360 = vld [vmem:[%s14 + $0x48] sm:$0xff]
        %v7361 = vld [vmem:[%s14 + $0x50] sm:$0xf]
        %v7362 = vld [vmem:[%s15] sm:$0x1]
        %v7364 = vsel %vm3944, %v7350, 0
        %v7367 = vsel %vm540, %v7361, 0
        %7369 = vmatprep.subr.mxu0 0.0
        %7370 = vmatpush1.msra.mxu0 %v7351
        %7371 = vmatprep.subr.mxu0 0.0
        %7372 = vmatpush1.msra.mxu0 %v7352
        %7373 = vmatprep.subr.mxu0 0.0
        %7374 = vmatpush1.msra.mxu0 %v7353
        %7375 = vmatprep.subr.mxu0 0.0
        %7376 = vmatpush1.msra.mxu0 %v7354
        %7377 = vmatprep.subr.mxu0 0.0
        %7378 = vmatpush1.msra.mxu0 %v7355
        %7379 = vmatprep.subr.mxu0 0.0
        %7380 = vmatpush1.msra.mxu0 %v7356
        %7381 = vmatprep.subr.mxu0 0.0
        %7382 = vmatpush1.msra.mxu0 %v7357
        %7383 = vmatprep.subr.mxu0 0.0
        %7384 = vmatpush1.msra.mxu0 %v7358
        %7385 = vmatprep.subr.mxu0 0.0
        %7386 = vmatpush1.msra.mxu0 %v7359
        %7387 = vmatprep.subr.mxu0 0.0
        %7388 = vmatpush1.msra.mxu0 %v7360
        %7389 = vmatprep.subr.mxu0 0.0
        %7390 = vmatpush1.msra.mxu0 %v7367
        %7391 = vmatprep.subr.mxu0 0.0
        %7392 = vmatpush1.msra.mxu0 0.0
        %7393 = vmatprep.subr.mxu0 0.0
        %7394 = vmatpush1.msra.mxu0 0.0
        %7395 = vmatprep.subr.mxu0 0.0
        %7396 = vmatpush1.msra.mxu0 0.0
        %7397 = vmatprep.subr.mxu0 0.0
        %7398 = vmatpush1.msra.mxu0 0.0
        %7399 = vmatprep.subr.mxu0 0.0
        %7400 = vmatpush1.msra.mxu0 0.0
        %7401 = vmatprep.subr.mxu0 0.0
        %7402 = vmatpush1.msra.mxu0 0.0
        %7403 = vmatprep.subr.mxu0 0.0
        %7404 = vmatpush1.msra.mxu0 0.0
        %7405 = vmatprep.subr.mxu0 0.0
        %7406 = vmatpush1.msra.mxu0 0.0
        %7407 = vmatprep.subr.mxu0 0.0
        %7408 = vmatpush1.msra.mxu0 0.0
        %7409 = vmatprep.subr.mxu0 0.0
        %7410 = vmatpush1.msra.mxu0 0.0
        %7411 = vmatprep.subr.mxu0 0.0
        %7412 = vmatpush1.msra.mxu0 0.0
        %7413 = vmatprep.subr.mxu0 0.0
        %7414 = vmatpush1.msra.mxu0 0.0
        %7415 = vmatprep.subr.mxu0 0.0
        %7416 = vmatpush1.msra.mxu0 0.0
        %7417 = vmatprep.subr.mxu0 0.0
        %7418 = vmatpush1.msra.mxu0 0.0
        %7419 = vmatprep.subr.mxu0 0.0
        %7420 = vmatpush1.msra.mxu0 0.0
        %7421 = vmatprep.subr.mxu0 0.0
        %7422 = vmatpush1.msra.mxu0 0.0
        %7423 = vmatprep.subr.mxu0 0.0
        %7424 = vmatpush1.msra.mxu0 0.0
        %7425 = vmatprep.subr.mxu0 0.0
        %7426 = vmatpush1.msra.mxu0 0.0
        %7427 = vmatprep.subr.mxu0 0.0
        %7428 = vmatpush1.msra.mxu0 0.0
        %7429 = vmatprep.subr.mxu0 0.0
        %7430 = vmatpush1.msra.mxu0 0.0
        %7431 = vmatprep.subr.mxu0 0.0
        %7432 = vmatpush1.msra.mxu0 0.0
        %7433 = vmatprep.mubr.f32.mxu0 0.0
        %7434 = vmatmul.mubr.f32.gmra.mrb[0].mxu0 %v7364
        %v7435 = vpop.f32.mrb[0].mxu0
        %v7436 = vadd.f32 %v7362, %v7435
        %v7437 = vpop.f32.mrb[0].mxu0
        %7438 = vdwg.mxu0
        %vm7439 = vcmask 73728
        %7440 = vst.msk [vmem:[%s513] sm:$0x1] %vm7439, %v7436
        %s7441 = sand.u32 %s379, 1
        %s7442 = scalar_lea.sflag [#allocation3], %s7441
        %s7443 = sand.u32 %s379, 1
        %s7444 = scalar_lea.vmem [#allocation2], %s7443
        // Predicated region
        $region85: #{lenet_forward.1} parent=83 // pred_check
          %p7445 = pneg %p389
        $region86: #{lenet_forward.1} parent=83 // pred_check_branch
          %7447 = sbr.rel (%p7445) target = $region88
        $region87: #{lenet_forward.1} parent=83 // pred_region
          %s7449 = ssub.s32 16, 16
          %7450 = vsyncadd %s7442, %s7449
          %s7451 = smul.addr %s30, 16
          %s7452 = scalar_lea.hbm %s16, %s7451
          %s7454 = sshll.u32 %s7444, 4
          %s7455 = int_to_ptr.vmem [resolvable:$true] %s7454
          %7457 = dma.vmem_to_hbm [thread:$0]  %s7455, 16, %s7452, %s7442
        $region88: #{lenet_forward.1} parent=83 // pred_fallthru
          _
      $region84: #{lenet_forward.1} parent=5 // pred_fallthru
        _
      %p7458 = scmp.le.s32.totalorder 2, %s25
      // Predicated region
      $region89: #{lenet_forward.1} parent=5 // pred_check
        %p7459 = pneg %p7458
      $region90: #{lenet_forward.1} parent=5 // pred_check_branch
        %7461 = sbr.rel (%p7459) target = $region92
      $region91: #{lenet_forward.1} parent=5 // pred_region
        %s7462 = ssub.s32 %s25, 2
        // Predicated region
        $region93: #{lenet_forward.1} parent=91 // pred_check
          %p7463 = pneg %p395
        $region94: #{lenet_forward.1} parent=91 // pred_check_branch
          %7465 = sbr.rel (%p7463) target = $region96
        $region95: #{lenet_forward.1} parent=91 // pred_region
          %s7466 = sand.u32 %s380, 1
          %s7467 = scalar_lea.sflag [#allocation3], %s7466
          %s7468 = sand.u32 %s380, 1
          %s7469 = scalar_lea.vmem [#allocation2], %s7468
          %7470 = dma.done %s7467, 16
        $region96: #{lenet_forward.1} parent=91 // pred_fallthru
          _
      $region92: #{lenet_forward.1} parent=5 // pred_fallthru
        _
    $region6: #{lenet_forward.1} parent=1 // loop_footer
      %s29 = sadd.s32 1, %s25
    $region7: #{lenet_forward.1} parent=1 // loop_footer_branch
      %24 = sbr.rel target = $region3
    $region8: #{lenet_forward.1} parent=1 // loop_exit
      _
    %7471 = vsyncpa [#allocation3], 1
    %s7472 = scalar_lea.sflag [#allocation3], 1
    %7473 = vsyncpa %s7472, 1

</llo_original>
